<compile_context>
chip_gen: v5e
topology: v5e:2x2
jax: 0.10.0
libtpu: 0.0.40
codegen_flags: <defaults>
</compile_context>

<pallas_src>
from functools import partial

import numpy as np
import jax
import jax.numpy as jnp
from jax import lax
from jax.experimental import pallas as pl
from jax.experimental.pallas import tpu as pltpu

LRELU_SLOPE = 0.2
BN_EPS = 1e-5
STRIDES = (1, 1, 2, 2, 1)
BN_LAYERS = (1, 2, 3)      # BatchNorm2d after convs 2,3,4 (0-based layer ids)
ACT_LAYERS = (0, 1, 2, 3)  # LeakyReLU(0.2) after convs 1..4
LANE = 256                 # padded lane width of every activation matrix (mult of 128)


def _round_up(x, m):
    return ((x + m - 1) // m) * m


def _static_config(conv_shapes, h0, w0):
    """Per-layer static geometry (batch independent)."""
    cfg = []
    hin, win, rs = h0, w0, 1
    for l, (cout, cin, kh, kw) in enumerate(conv_shapes):
        s = STRIDES[l]
        cpin = _round_up(cin, 8)
        cpout = _round_up(cout, 8)
        hout = (hin - kh) // s + 1
        wout = (win - kw) // s + 1
        assert win * cpin <= LANE and wout * cpout <= LANE, "lane budget exceeded"
        cfg.append(dict(l=l, s=s, k=kh, hin=hin, win=win, hout=hout, wout=wout,
                        cin=cin, cout=cout, cpin=cpin, cpout=cpout,
                        rs_in=rs, rs_out=rs * s,
                        use_bn=(l in BN_LAYERS), use_act=(l in ACT_LAYERS)))
        hin, win, rs = hout, wout, rs * s
    return cfg


def init_params(key, in_channels, mid_channels, out_channels):
    """Deterministic weight init matching the module's conv shapes (bias=False)."""
    ks = jax.random.split(key, 5)
    shapes = [
        (mid_channels, in_channels, 4, 4),
        (mid_channels * 2, mid_channels, 4, 4),
        (mid_channels * 4, mid_channels * 2, 4, 4),
        (mid_channels * 8, mid_channels * 4, 4, 4),
        (out_channels, mid_channels * 8, 4, 4),
    ]
    return [0.05 * jax.random.normal(k, s, dtype=jnp.float32)
            for k, s in zip(ks, shapes)]


def prepare_params(params, image_hw=(28, 28)):
    """One-time weight preprocessing into a stacked bf16 banded-weight tensor.

    BigW[l, kh, w*Cpin + ci, wo*Cpout + co] = W_l[co, ci, kh, w - s*wo] if in-band
    (folds the W-direction taps + stride into one matmul per kh tap); rows and
    cols are zero-padded to LANE so all slabs share one (k, LANE, LANE) shape.
    """
    conv_shapes = tuple(w.shape for w in params)
    cfg = _static_config(conv_shapes, *image_hw)
    slabs = []
    for w, c in zip(params, cfg):
        cout, cin, k, _ = w.shape
        sel = np.zeros((k, c['win'], c['wout']), np.float32)
        for kw in range(k):
            for wo in range(c['wout']):
                sel[kw, c['s'] * wo + kw, wo] = 1.0
        wt = jnp.transpose(w, (2, 3, 1, 0))                          # (kh, kw, ci, co)
        big = jnp.einsum('xwo,hxic->hwioc', jnp.asarray(sel), wt)    # (kh, w, ci, wo, co)
        big = jnp.pad(big, ((0, 0), (0, 0), (0, c['cpin'] - cin),
                            (0, 0), (0, c['cpout'] - cout)))
        big = big.reshape(k, c['win'] * c['cpin'], c['wout'] * c['cpout'])
        big = jnp.pad(big, ((0, 0),
                            (0, LANE - c['win'] * c['cpin']),
                            (0, LANE - c['wout'] * c['cpout'])))
        slabs.append(big)
    return jnp.stack(slabs).astype(jnp.bfloat16)                     # (5, 4, 256, 256)


def _fused_cnn_kernel(*refs, plan, bn_ids):
    """Entire 5-layer forward in one kernel invocation.

    refs = (a0, w_hbm, poolc_[bn], spread_[bn], mask_[bn], out,
            w_vmem, dma_sems, act_ping, act_pong)
    """
    nl = len(plan)
    nb = len(bn_ids)
    a0_ref = refs[0]
    w_hbm = refs[1]
    poolc = dict(zip(bn_ids, refs[2:2 + nb]))
    spread = dict(zip(bn_ids, refs[2 + nb:2 + 2 * nb]))
    mask = dict(zip(bn_ids, refs[2 + 2 * nb:2 + 3 * nb]))
    out_ref = refs[2 + 3 * nb]
    w_vmem, sems, s_ping, s_pong = refs[2 + 3 * nb + 1:]

    # Kick off all per-layer weight-slab DMAs (HBM -> VMEM).  Layer l waits on its
    # slab just before its matmuls, so slabs 1..nl-1 stream in behind compute.
    copies = []
    for l in range(nl):
        cp = pltpu.make_async_copy(w_hbm.at[l], w_vmem.at[l], sems.at[l])
        cp.start()
        copies.append(cp)

    src = a0_ref                                     # layer-0 input lives in the VMEM input ref
    act_bufs = (s_ping, s_pong)
    for p in plan:
        l, k, rs, rows_out = p['l'], p['k'], p['rs_in'], p['rows_out']
        copies[l].wait()

        # ---- implicit-GEMM conv: one bf16 MXU matmul per kh tap, taps read straight
        # ---- from VMEM at a row offset; f32 accumulation.
        acc = None
        for kh in range(k):
            lhs = src[pl.ds(rs * kh, rows_out), :].astype(jnp.bfloat16)
            part = jnp.dot(lhs, w_vmem[l, kh], preferred_element_type=jnp.float32)
            acc = part if acc is None else acc + part
        a = acc                                       # (rows_out, LANE) f32

        if p['use_bn']:
            # Zero rows with no valid (b, h) conv output so batch stats only see
            # real activations (padded channel / tail lanes are already exactly 0).
            a = a * mask[l][...]
            inv_n = 1.0 / p['bn_count']
            rsum = jnp.sum(a, axis=0, keepdims=True)         # (1, LANE) f32 row sums
            rsq = jnp.sum(a * a, axis=0, keepdims=True)      # (1, LANE) f32
            mean_c = jnp.dot(rsum, poolc[l][...],
                             preferred_element_type=jnp.float32) * inv_n   # (1, Cp)
            ex2_c = jnp.dot(rsq, poolc[l][...],
                            preferred_element_type=jnp.float32) * inv_n
            var_c = jnp.maximum(ex2_c - mean_c * mean_c, 0.0)
            scale_c = lax.rsqrt(var_c + BN_EPS)
            mean_f = jnp.dot(mean_c, spread[l][...],
                             preferred_element_type=jnp.float32)           # (1, LANE)
            scale_f = jnp.dot(scale_c, spread[l][...],
                              preferred_element_type=jnp.float32)
            a = (a - mean_f) * scale_f
            a = a * mask[l][...]                     # keep garbage rows exactly zero

        if p['use_act']:
            a = jnp.maximum(a, LRELU_SLOPE * a)      # LeakyReLU(0.2)

        if l == nl - 1:
            out_ref[...] = a.astype(out_ref.dtype)
        else:
            dst = act_bufs[l % 2]
            dst[0:rows_out, :] = a                   # next layer reads taps from here
            src = dst


def make_forward(conv_shapes, image_hw=(28, 28)):
    h0, w0 = image_hw
    cfg = _static_config(conv_shapes, h0, w0)
    nl = len(cfg)
    ktap = cfg[0]['k']
    bn_ids = [c['l'] for c in cfg if c['use_bn']]
    nb = len(bn_ids)

    @jax.jit
    def forward(x, w_stack):
        B = x.shape[0]

        # ---- batch-dependent row bookkeeping (trace-time Python) ----
        plan, rows = [], B * h0
        for c in cfg:
            p = dict(c)
            p['rows_in'] = rows
            p['rows_out'] = rows - (c['k'] - 1) * c['rs_in']
            p['bn_count'] = float(B * c['hout'] * c['wout'])
            plan.append(p)
            rows = p['rows_out']
        last = plan[-1]
        rows0 = B * h0

        # ---- pack the image: A0[b*H0 + h, w*Cp0 + c] = x[b, c, h, w]; lane-pad ----
        cp0, cin0 = cfg[0]['cpin'], cfg[0]['cin']
        a0 = jnp.transpose(x, (0, 2, 3, 1)).astype(jnp.float32)      # NCHW -> NHWC
        a0 = jnp.pad(a0, ((0, 0), (0, 0), (0, 0), (0, cp0 - cin0)))
        a0 = a0.reshape(rows0, w0 * cp0)
        a0 = jnp.pad(a0, ((0, 0), (0, LANE - w0 * cp0)))

        # ---- small BN constants: channel pool / spread matrices + valid-row masks ----
        poolcs, spreads, masks = [], [], []
        for p in plan:
            if not p['use_bn']:
                continue
            cp, wo = p['cpout'], p['wout']
            pc = np.zeros((LANE, cp), np.float32)
            for w in range(wo):
                pc[w * cp:(w + 1) * cp, :] = np.eye(cp, dtype=np.float32)
            poolcs.append(jnp.asarray(pc))                           # (LANE, Cp)
            spreads.append(jnp.asarray(np.ascontiguousarray(pc.T)))  # (Cp, LANE)
            r = np.arange(p['rows_out'])
            hh = r % h0
            valid = ((hh % p['rs_out']) == 0) & ((hh // p['rs_out']) < p['hout'])
            masks.append(jnp.asarray(valid.astype(np.float32)[:, None]))

        out_shape = jax.ShapeDtypeStruct((last['rows_out'], LANE), jnp.float32)
        in_specs = ([pl.BlockSpec(memory_space=pltpu.MemorySpace.VMEM),   # a0 (small)
                     pl.BlockSpec(memory_space=pl.ANY)]                   # weight slabs (HBM)
                    + [pl.BlockSpec(memory_space=pltpu.MemorySpace.VMEM)] * (3 * nb))
        scratch_shapes = [
            pltpu.VMEM((nl, ktap, LANE, LANE), jnp.bfloat16),  # weight slabs in VMEM
            pltpu.SemaphoreType.DMA((nl,)),                    # one DMA sem per layer slab
            pltpu.VMEM((rows0, LANE), jnp.float32),            # activation ping
            pltpu.VMEM((rows0, LANE), jnp.float32),            # activation pong
        ]

        out_mat = pl.pallas_call(
            partial(_fused_cnn_kernel, plan=plan, bn_ids=bn_ids),
            out_shape=out_shape,
            in_specs=in_specs,
            out_specs=pl.BlockSpec(memory_space=pltpu.MemorySpace.VMEM),
            scratch_shapes=scratch_shapes,
        )(a0, w_stack, *poolcs, *spreads, *masks)

        # valid output rows sit at b*H0 (final H_out = W_out = 1); real channels first
        out = out_mat[0::h0][:B, :last['cout']]
        return out.reshape(B, -1)                    # == output.view(x.size(0), -1)

    return forward


def reference_forward(x, params):
    """Pure-JAX reference (XLA convs, f32 HIGHEST) for correctness validation."""
    h = x
    for l, w in enumerate(params):
        s = STRIDES[l]
        h = lax.conv_general_dilated(h, w, (s, s), 'VALID',
                                     dimension_numbers=('NCHW', 'OIHW', 'NCHW'),
                                     precision=lax.Precision.HIGHEST)
        if l in BN_LAYERS:
            mean = jnp.mean(h, axis=(0, 2, 3), keepdims=True)
            var = jnp.mean(jnp.square(h - mean), axis=(0, 2, 3), keepdims=True)
            h = (h - mean) * lax.rsqrt(var + BN_EPS)
        if l in ACT_LAYERS:
            h = jnp.where(h >= 0, h, LRELU_SLOPE * h)
    return h.reshape(x.shape[0], -1)


if __name__ == "__main__":
    key = jax.random.PRNGKey(0)
    k_x, k_w = jax.random.split(key)

    B, in_channels, mid_channels, out_channels = 2, 1, 4, 1
    # 28x28 input is required for the 4/4/4(s2)/4(s2)/4 conv stack to end at 1x1.
    x = jax.random.normal(k_x, (B, in_channels, 28, 28), dtype=jnp.float32)
    params = init_params(k_w, in_channels, mid_channels, out_channels)

    w_stack = prepare_params(params, image_hw=(28, 28))        # one-time weight prep (bf16)
    forward = make_forward(tuple(w.shape for w in params), image_hw=(28, 28))

    out = forward(x, w_stack)
    jax.block_until_ready(out)
    assert out.shape == (B, out_channels), out.shape

    # correctness check vs pure-JAX f32 reference (tolerance covers bf16 MXU operands)
    ref = reference_forward(x, params)
    err = float(jnp.max(jnp.abs(out - ref)))
    assert err < 5e-2, f"mismatch vs reference: max abs err {err}"

    print("KERNEL_OK")
</pallas_src>

<mosaic_0001>
module attributes {stable_mosaic.version = 11 : i64} {
  func.func @_fused_cnn_kernel(%arg0: memref<56x256xf32, #tpu.memory_space<vmem>>, %arg1: memref<5x4x256x256xbf16, #tpu.memory_space<any>>, %arg2: memref<256x8xf32, #tpu.memory_space<vmem>>, %arg3: memref<256x16xf32, #tpu.memory_space<vmem>>, %arg4: memref<256x32xf32, #tpu.memory_space<vmem>>, %arg5: memref<8x256xf32, #tpu.memory_space<vmem>>, %arg6: memref<16x256xf32, #tpu.memory_space<vmem>>, %arg7: memref<32x256xf32, #tpu.memory_space<vmem>>, %arg8: memref<50x1xf32, #tpu.memory_space<vmem>>, %arg9: memref<47x1xf32, #tpu.memory_space<vmem>>, %arg10: memref<41x1xf32, #tpu.memory_space<vmem>>, %arg11: memref<29x256xf32, #tpu.memory_space<vmem>>, %arg12: memref<5x4x256x256xbf16, #tpu.memory_space<vmem>>, %arg13: memref<5x!tpu.dma_semaphore, #tpu.memory_space<semaphore_mem>>, %arg14: memref<56x256xf32, #tpu.memory_space<vmem>>, %arg15: memref<56x256xf32, #tpu.memory_space<vmem>>) attributes {dimension_semantics = [], scalar_prefetch = 0 : i64, scratch_operands = 4 : i64, tpu.core_type = #tpu.core_type<tc>} {
    %c0_i32 = arith.constant 0 : i32
    %c0_i32_0 = arith.constant 0 : i32
    %c0_i32_1 = arith.constant 0 : i32
    %c0_i32_2 = arith.constant 0 : i32
    %c0_i32_3 = arith.constant 0 : i32
    %c0_i32_4 = arith.constant 0 : i32
    %0 = tpu.memref_slice %arg1[%c0_i32, %c0_i32_2, %c0_i32_3, %c0_i32_4] : memref<5x4x256x256xbf16, #tpu.memory_space<any>> -> memref<1x4x256x256xbf16, #tpu.memory_space<any>>
    %1 = tpu.memref_squeeze %0 : memref<1x4x256x256xbf16, #tpu.memory_space<any>> -> memref<4x256x256xbf16, #tpu.memory_space<any>>
    %c0_i32_5 = arith.constant 0 : i32
    %c0_i32_6 = arith.constant 0 : i32
    %c0_i32_7 = arith.constant 0 : i32
    %2 = tpu.memref_slice %arg12[%c0_i32_0, %c0_i32_5, %c0_i32_6, %c0_i32_7] : memref<5x4x256x256xbf16, #tpu.memory_space<vmem>> -> memref<1x4x256x256xbf16, #tpu.memory_space<vmem>>
    %3 = tpu.memref_squeeze %2 : memref<1x4x256x256xbf16, #tpu.memory_space<vmem>> -> memref<4x256x256xbf16, #tpu.memory_space<vmem>>
    %4 = tpu.memref_slice %arg13[%c0_i32_1] : memref<5x!tpu.dma_semaphore, #tpu.memory_space<semaphore_mem>> -> memref<1x!tpu.dma_semaphore, #tpu.memory_space<semaphore_mem>>
    %5 = tpu.memref_squeeze %4 : memref<1x!tpu.dma_semaphore, #tpu.memory_space<semaphore_mem>> -> memref<!tpu.dma_semaphore, #tpu.memory_space<semaphore_mem>>
    tpu.enqueue_dma source(%1 : memref<4x256x256xbf16, #tpu.memory_space<any>>) target(%3 : memref<4x256x256xbf16, #tpu.memory_space<vmem>>) target_semaphore(%5 : memref<!tpu.dma_semaphore, #tpu.memory_space<semaphore_mem>>)
    %c1_i32 = arith.constant 1 : i32
    %c1_i32_8 = arith.constant 1 : i32
    %c1_i32_9 = arith.constant 1 : i32
    %c0_i32_10 = arith.constant 0 : i32
    %c0_i32_11 = arith.constant 0 : i32
    %c0_i32_12 = arith.constant 0 : i32
    %6 = tpu.memref_slice %arg1[%c1_i32, %c0_i32_10, %c0_i32_11, %c0_i32_12] : memref<5x4x256x256xbf16, #tpu.memory_space<any>> -> memref<1x4x256x256xbf16, #tpu.memory_space<any>>
    %7 = tpu.memref_squeeze %6 : memref<1x4x256x256xbf16, #tpu.memory_space<any>> -> memref<4x256x256xbf16, #tpu.memory_space<any>>
    %c0_i32_13 = arith.constant 0 : i32
    %c0_i32_14 = arith.constant 0 : i32
    %c0_i32_15 = arith.constant 0 : i32
    %8 = tpu.memref_slice %arg12[%c1_i32_8, %c0_i32_13, %c0_i32_14, %c0_i32_15] : memref<5x4x256x256xbf16, #tpu.memory_space<vmem>> -> memref<1x4x256x256xbf16, #tpu.memory_space<vmem>>
    %9 = tpu.memref_squeeze %8 : memref<1x4x256x256xbf16, #tpu.memory_space<vmem>> -> memref<4x256x256xbf16, #tpu.memory_space<vmem>>
    %10 = tpu.memref_slice %arg13[%c1_i32_9] : memref<5x!tpu.dma_semaphore, #tpu.memory_space<semaphore_mem>> -> memref<1x!tpu.dma_semaphore, #tpu.memory_space<semaphore_mem>>
    %11 = tpu.memref_squeeze %10 : memref<1x!tpu.dma_semaphore, #tpu.memory_space<semaphore_mem>> -> memref<!tpu.dma_semaphore, #tpu.memory_space<semaphore_mem>>
    tpu.enqueue_dma source(%7 : memref<4x256x256xbf16, #tpu.memory_space<any>>) target(%9 : memref<4x256x256xbf16, #tpu.memory_space<vmem>>) target_semaphore(%11 : memref<!tpu.dma_semaphore, #tpu.memory_space<semaphore_mem>>)
    %c2_i32 = arith.constant 2 : i32
    %c2_i32_16 = arith.constant 2 : i32
    %c2_i32_17 = arith.constant 2 : i32
    %c0_i32_18 = arith.constant 0 : i32
    %c0_i32_19 = arith.constant 0 : i32
    %c0_i32_20 = arith.constant 0 : i32
    %12 = tpu.memref_slice %arg1[%c2_i32, %c0_i32_18, %c0_i32_19, %c0_i32_20] : memref<5x4x256x256xbf16, #tpu.memory_space<any>> -> memref<1x4x256x256xbf16, #tpu.memory_space<any>>
    %13 = tpu.memref_squeeze %12 : memref<1x4x256x256xbf16, #tpu.memory_space<any>> -> memref<4x256x256xbf16, #tpu.memory_space<any>>
    %c0_i32_21 = arith.constant 0 : i32
    %c0_i32_22 = arith.constant 0 : i32
    %c0_i32_23 = arith.constant 0 : i32
    %14 = tpu.memref_slice %arg12[%c2_i32_16, %c0_i32_21, %c0_i32_22, %c0_i32_23] : memref<5x4x256x256xbf16, #tpu.memory_space<vmem>> -> memref<1x4x256x256xbf16, #tpu.memory_space<vmem>>
    %15 = tpu.memref_squeeze %14 : memref<1x4x256x256xbf16, #tpu.memory_space<vmem>> -> memref<4x256x256xbf16, #tpu.memory_space<vmem>>
    %16 = tpu.memref_slice %arg13[%c2_i32_17] : memref<5x!tpu.dma_semaphore, #tpu.memory_space<semaphore_mem>> -> memref<1x!tpu.dma_semaphore, #tpu.memory_space<semaphore_mem>>
    %17 = tpu.memref_squeeze %16 : memref<1x!tpu.dma_semaphore, #tpu.memory_space<semaphore_mem>> -> memref<!tpu.dma_semaphore, #tpu.memory_space<semaphore_mem>>
    tpu.enqueue_dma source(%13 : memref<4x256x256xbf16, #tpu.memory_space<any>>) target(%15 : memref<4x256x256xbf16, #tpu.memory_space<vmem>>) target_semaphore(%17 : memref<!tpu.dma_semaphore, #tpu.memory_space<semaphore_mem>>)
    %c3_i32 = arith.constant 3 : i32
    %c3_i32_24 = arith.constant 3 : i32
    %c3_i32_25 = arith.constant 3 : i32
    %c0_i32_26 = arith.constant 0 : i32
    %c0_i32_27 = arith.constant 0 : i32
    %c0_i32_28 = arith.constant 0 : i32
    %18 = tpu.memref_slice %arg1[%c3_i32, %c0_i32_26, %c0_i32_27, %c0_i32_28] : memref<5x4x256x256xbf16, #tpu.memory_space<any>> -> memref<1x4x256x256xbf16, #tpu.memory_space<any>>
    %19 = tpu.memref_squeeze %18 : memref<1x4x256x256xbf16, #tpu.memory_space<any>> -> memref<4x256x256xbf16, #tpu.memory_space<any>>
    %c0_i32_29 = arith.constant 0 : i32
    %c0_i32_30 = arith.constant 0 : i32
    %c0_i32_31 = arith.constant 0 : i32
    %20 = tpu.memref_slice %arg12[%c3_i32_24, %c0_i32_29, %c0_i32_30, %c0_i32_31] : memref<5x4x256x256xbf16, #tpu.memory_space<vmem>> -> memref<1x4x256x256xbf16, #tpu.memory_space<vmem>>
    %21 = tpu.memref_squeeze %20 : memref<1x4x256x256xbf16, #tpu.memory_space<vmem>> -> memref<4x256x256xbf16, #tpu.memory_space<vmem>>
    %22 = tpu.memref_slice %arg13[%c3_i32_25] : memref<5x!tpu.dma_semaphore, #tpu.memory_space<semaphore_mem>> -> memref<1x!tpu.dma_semaphore, #tpu.memory_space<semaphore_mem>>
    %23 = tpu.memref_squeeze %22 : memref<1x!tpu.dma_semaphore, #tpu.memory_space<semaphore_mem>> -> memref<!tpu.dma_semaphore, #tpu.memory_space<semaphore_mem>>
    tpu.enqueue_dma source(%19 : memref<4x256x256xbf16, #tpu.memory_space<any>>) target(%21 : memref<4x256x256xbf16, #tpu.memory_space<vmem>>) target_semaphore(%23 : memref<!tpu.dma_semaphore, #tpu.memory_space<semaphore_mem>>)
    %c4_i32 = arith.constant 4 : i32
    %c4_i32_32 = arith.constant 4 : i32
    %c4_i32_33 = arith.constant 4 : i32
    %c0_i32_34 = arith.constant 0 : i32
    %c0_i32_35 = arith.constant 0 : i32
    %c0_i32_36 = arith.constant 0 : i32
    %24 = tpu.memref_slice %arg1[%c4_i32, %c0_i32_34, %c0_i32_35, %c0_i32_36] : memref<5x4x256x256xbf16, #tpu.memory_space<any>> -> memref<1x4x256x256xbf16, #tpu.memory_space<any>>
    %25 = tpu.memref_squeeze %24 : memref<1x4x256x256xbf16, #tpu.memory_space<any>> -> memref<4x256x256xbf16, #tpu.memory_space<any>>
    %c0_i32_37 = arith.constant 0 : i32
    %c0_i32_38 = arith.constant 0 : i32
    %c0_i32_39 = arith.constant 0 : i32
    %26 = tpu.memref_slice %arg12[%c4_i32_32, %c0_i32_37, %c0_i32_38, %c0_i32_39] : memref<5x4x256x256xbf16, #tpu.memory_space<vmem>> -> memref<1x4x256x256xbf16, #tpu.memory_space<vmem>>
    %27 = tpu.memref_squeeze %26 : memref<1x4x256x256xbf16, #tpu.memory_space<vmem>> -> memref<4x256x256xbf16, #tpu.memory_space<vmem>>
    %28 = tpu.memref_slice %arg13[%c4_i32_33] : memref<5x!tpu.dma_semaphore, #tpu.memory_space<semaphore_mem>> -> memref<1x!tpu.dma_semaphore, #tpu.memory_space<semaphore_mem>>
    %29 = tpu.memref_squeeze %28 : memref<1x!tpu.dma_semaphore, #tpu.memory_space<semaphore_mem>> -> memref<!tpu.dma_semaphore, #tpu.memory_space<semaphore_mem>>
    tpu.enqueue_dma source(%25 : memref<4x256x256xbf16, #tpu.memory_space<any>>) target(%27 : memref<4x256x256xbf16, #tpu.memory_space<vmem>>) target_semaphore(%29 : memref<!tpu.dma_semaphore, #tpu.memory_space<semaphore_mem>>)
    %c0_i32_40 = arith.constant 0 : i32
    %c0_i32_41 = arith.constant 0 : i32
    %c0_i32_42 = arith.constant 0 : i32
    %c0_i32_43 = arith.constant 0 : i32
    %c0_i32_44 = arith.constant 0 : i32
    %c0_i32_45 = arith.constant 0 : i32
    %30 = tpu.memref_slice %arg1[%c0_i32_40, %c0_i32_43, %c0_i32_44, %c0_i32_45] : memref<5x4x256x256xbf16, #tpu.memory_space<any>> -> memref<1x4x256x256xbf16, #tpu.memory_space<any>>
    %31 = tpu.memref_squeeze %30 : memref<1x4x256x256xbf16, #tpu.memory_space<any>> -> memref<4x256x256xbf16, #tpu.memory_space<any>>
    %c0_i32_46 = arith.constant 0 : i32
    %c0_i32_47 = arith.constant 0 : i32
    %c0_i32_48 = arith.constant 0 : i32
    %32 = tpu.memref_slice %arg12[%c0_i32_41, %c0_i32_46, %c0_i32_47, %c0_i32_48] : memref<5x4x256x256xbf16, #tpu.memory_space<vmem>> -> memref<1x4x256x256xbf16, #tpu.memory_space<vmem>>
    %33 = tpu.memref_squeeze %32 : memref<1x4x256x256xbf16, #tpu.memory_space<vmem>> -> memref<4x256x256xbf16, #tpu.memory_space<vmem>>
    %34 = tpu.memref_slice %arg13[%c0_i32_42] : memref<5x!tpu.dma_semaphore, #tpu.memory_space<semaphore_mem>> -> memref<1x!tpu.dma_semaphore, #tpu.memory_space<semaphore_mem>>
    %35 = tpu.memref_squeeze %34 : memref<1x!tpu.dma_semaphore, #tpu.memory_space<semaphore_mem>> -> memref<!tpu.dma_semaphore, #tpu.memory_space<semaphore_mem>>
    tpu.wait_dma2 semaphore(%35 : memref<!tpu.dma_semaphore, #tpu.memory_space<semaphore_mem>>) src(%31 : memref<4x256x256xbf16, #tpu.memory_space<any>>) dst(%33 : memref<4x256x256xbf16, #tpu.memory_space<vmem>>)
    %c0 = arith.constant 0 : index
    %c0_49 = arith.constant 0 : index
    %36 = vector.load %arg0[%c0, %c0_49] : memref<56x256xf32, #tpu.memory_space<vmem>>, vector<53x256xf32>
    %37 = arith.truncf %36 : vector<53x256xf32> to vector<53x256xbf16>
    %c0_50 = arith.constant 0 : index
    %c0_51 = arith.constant 0 : index
    %c0_52 = arith.constant 0 : index
    %c0_53 = arith.constant 0 : index
    %38 = vector.load %arg12[%c0_50, %c0_51, %c0_52, %c0_53] : memref<5x4x256x256xbf16, #tpu.memory_space<vmem>>, vector<1x1x256x256xbf16>
    %39 = vector.shape_cast %38 : vector<1x1x256x256xbf16> to vector<256x256xbf16>
    %cst = arith.constant dense<0.000000e+00> : vector<53x256xf32>
    %40 = tpu.matmul %37, %39, %cst {dimension_numbers = #tpu.dot_dimension_numbers<[1], [0], [0], [1], [0, 0, 1, 1], [], []>} : vector<53x256xbf16>, vector<256x256xbf16>, vector<53x256xf32> -> vector<53x256xf32>
    %c1 = arith.constant 1 : index
    %c0_54 = arith.constant 0 : index
    %41 = vector.load %arg0[%c1, %c0_54] : memref<56x256xf32, #tpu.memory_space<vmem>>, vector<53x256xf32>
    %42 = arith.truncf %41 : vector<53x256xf32> to vector<53x256xbf16>
    %c0_55 = arith.constant 0 : index
    %c1_56 = arith.constant 1 : index
    %c0_57 = arith.constant 0 : index
    %c0_58 = arith.constant 0 : index
    %43 = vector.load %arg12[%c0_55, %c1_56, %c0_57, %c0_58] : memref<5x4x256x256xbf16, #tpu.memory_space<vmem>>, vector<1x1x256x256xbf16>
    %44 = vector.shape_cast %43 : vector<1x1x256x256xbf16> to vector<256x256xbf16>
    %cst_59 = arith.constant dense<0.000000e+00> : vector<53x256xf32>
    %45 = tpu.matmul %42, %44, %cst_59 {dimension_numbers = #tpu.dot_dimension_numbers<[1], [0], [0], [1], [0, 0, 1, 1], [], []>} : vector<53x256xbf16>, vector<256x256xbf16>, vector<53x256xf32> -> vector<53x256xf32>
    %46 = arith.addf %40, %45 : vector<53x256xf32>
    %c2 = arith.constant 2 : index
    %c0_60 = arith.constant 0 : index
    %47 = vector.load %arg0[%c2, %c0_60] : memref<56x256xf32, #tpu.memory_space<vmem>>, vector<53x256xf32>
    %48 = arith.truncf %47 : vector<53x256xf32> to vector<53x256xbf16>
    %c0_61 = arith.constant 0 : index
    %c2_62 = arith.constant 2 : index
    %c0_63 = arith.constant 0 : index
    %c0_64 = arith.constant 0 : index
    %49 = vector.load %arg12[%c0_61, %c2_62, %c0_63, %c0_64] : memref<5x4x256x256xbf16, #tpu.memory_space<vmem>>, vector<1x1x256x256xbf16>
    %50 = vector.shape_cast %49 : vector<1x1x256x256xbf16> to vector<256x256xbf16>
    %cst_65 = arith.constant dense<0.000000e+00> : vector<53x256xf32>
    %51 = tpu.matmul %48, %50, %cst_65 {dimension_numbers = #tpu.dot_dimension_numbers<[1], [0], [0], [1], [0, 0, 1, 1], [], []>} : vector<53x256xbf16>, vector<256x256xbf16>, vector<53x256xf32> -> vector<53x256xf32>
    %52 = arith.addf %46, %51 : vector<53x256xf32>
    %c3 = arith.constant 3 : index
    %c0_66 = arith.constant 0 : index
    %53 = vector.load %arg0[%c3, %c0_66] : memref<56x256xf32, #tpu.memory_space<vmem>>, vector<53x256xf32>
    %54 = arith.truncf %53 : vector<53x256xf32> to vector<53x256xbf16>
    %c0_67 = arith.constant 0 : index
    %c3_68 = arith.constant 3 : index
    %c0_69 = arith.constant 0 : index
    %c0_70 = arith.constant 0 : index
    %55 = vector.load %arg12[%c0_67, %c3_68, %c0_69, %c0_70] : memref<5x4x256x256xbf16, #tpu.memory_space<vmem>>, vector<1x1x256x256xbf16>
    %56 = vector.shape_cast %55 : vector<1x1x256x256xbf16> to vector<256x256xbf16>
    %cst_71 = arith.constant dense<0.000000e+00> : vector<53x256xf32>
    %57 = tpu.matmul %54, %56, %cst_71 {dimension_numbers = #tpu.dot_dimension_numbers<[1], [0], [0], [1], [0, 0, 1, 1], [], []>} : vector<53x256xbf16>, vector<256x256xbf16>, vector<53x256xf32> -> vector<53x256xf32>
    %58 = arith.addf %52, %57 : vector<53x256xf32>
    %cst_72 = arith.constant 2.000000e-01 : f32
    %59 = vector.broadcast %cst_72 : f32 to vector<53x256xf32>
    %60 = arith.mulf %59, %58 : vector<53x256xf32>
    %61 = arith.maximumf %58, %60 : vector<53x256xf32>
    %c0_73 = arith.constant 0 : index
    %c0_74 = arith.constant 0 : index
    %62 = vector.load %arg14[%c0_73, %c0_74] : memref<56x256xf32, #tpu.memory_space<vmem>>, vector<53x256xf32>
    tpu.vector_store %arg14[%c0_73, %c0_74], %61 {strides = array<i32>} : memref<56x256xf32, #tpu.memory_space<vmem>>, vector<53x256xf32>,
    %c1_i32_75 = arith.constant 1 : i32
    %c1_i32_76 = arith.constant 1 : i32
    %c1_i32_77 = arith.constant 1 : i32
    %c0_i32_78 = arith.constant 0 : i32
    %c0_i32_79 = arith.constant 0 : i32
    %c0_i32_80 = arith.constant 0 : i32
    %63 = tpu.memref_slice %arg1[%c1_i32_75, %c0_i32_78, %c0_i32_79, %c0_i32_80] : memref<5x4x256x256xbf16, #tpu.memory_space<any>> -> memref<1x4x256x256xbf16, #tpu.memory_space<any>>
    %64 = tpu.memref_squeeze %63 : memref<1x4x256x256xbf16, #tpu.memory_space<any>> -> memref<4x256x256xbf16, #tpu.memory_space<any>>
    %c0_i32_81 = arith.constant 0 : i32
    %c0_i32_82 = arith.constant 0 : i32
    %c0_i32_83 = arith.constant 0 : i32
    %65 = tpu.memref_slice %arg12[%c1_i32_76, %c0_i32_81, %c0_i32_82, %c0_i32_83] : memref<5x4x256x256xbf16, #tpu.memory_space<vmem>> -> memref<1x4x256x256xbf16, #tpu.memory_space<vmem>>
    %66 = tpu.memref_squeeze %65 : memref<1x4x256x256xbf16, #tpu.memory_space<vmem>> -> memref<4x256x256xbf16, #tpu.memory_space<vmem>>
    %67 = tpu.memref_slice %arg13[%c1_i32_77] : memref<5x!tpu.dma_semaphore, #tpu.memory_space<semaphore_mem>> -> memref<1x!tpu.dma_semaphore, #tpu.memory_space<semaphore_mem>>
    %68 = tpu.memref_squeeze %67 : memref<1x!tpu.dma_semaphore, #tpu.memory_space<semaphore_mem>> -> memref<!tpu.dma_semaphore, #tpu.memory_space<semaphore_mem>>
    tpu.wait_dma2 semaphore(%68 : memref<!tpu.dma_semaphore, #tpu.memory_space<semaphore_mem>>) src(%64 : memref<4x256x256xbf16, #tpu.memory_space<any>>) dst(%66 : memref<4x256x256xbf16, #tpu.memory_space<vmem>>)
    %c0_84 = arith.constant 0 : index
    %c0_85 = arith.constant 0 : index
    %69 = vector.load %arg14[%c0_84, %c0_85] : memref<56x256xf32, #tpu.memory_space<vmem>>, vector<50x256xf32>
    %70 = arith.truncf %69 : vector<50x256xf32> to vector<50x256xbf16>
    %c1_86 = arith.constant 1 : index
    %c0_87 = arith.constant 0 : index
    %c0_88 = arith.constant 0 : index
    %c0_89 = arith.constant 0 : index
    %71 = vector.load %arg12[%c1_86, %c0_87, %c0_88, %c0_89] : memref<5x4x256x256xbf16, #tpu.memory_space<vmem>>, vector<1x1x256x256xbf16>
    %72 = vector.shape_cast %71 : vector<1x1x256x256xbf16> to vector<256x256xbf16>
    %cst_90 = arith.constant dense<0.000000e+00> : vector<50x256xf32>
    %73 = tpu.matmul %70, %72, %cst_90 {dimension_numbers = #tpu.dot_dimension_numbers<[1], [0], [0], [1], [0, 0, 1, 1], [], []>} : vector<50x256xbf16>, vector<256x256xbf16>, vector<50x256xf32> -> vector<50x256xf32>
    %c1_91 = arith.constant 1 : index
    %c0_92 = arith.constant 0 : index
    %74 = vector.load %arg14[%c1_91, %c0_92] : memref<56x256xf32, #tpu.memory_space<vmem>>, vector<50x256xf32>
    %75 = arith.truncf %74 : vector<50x256xf32> to vector<50x256xbf16>
    %c1_93 = arith.constant 1 : index
    %c1_94 = arith.constant 1 : index
    %c0_95 = arith.constant 0 : index
    %c0_96 = arith.constant 0 : index
    %76 = vector.load %arg12[%c1_93, %c1_94, %c0_95, %c0_96] : memref<5x4x256x256xbf16, #tpu.memory_space<vmem>>, vector<1x1x256x256xbf16>
    %77 = vector.shape_cast %76 : vector<1x1x256x256xbf16> to vector<256x256xbf16>
    %cst_97 = arith.constant dense<0.000000e+00> : vector<50x256xf32>
    %78 = tpu.matmul %75, %77, %cst_97 {dimension_numbers = #tpu.dot_dimension_numbers<[1], [0], [0], [1], [0, 0, 1, 1], [], []>} : vector<50x256xbf16>, vector<256x256xbf16>, vector<50x256xf32> -> vector<50x256xf32>
    %79 = arith.addf %73, %78 : vector<50x256xf32>
    %c2_98 = arith.constant 2 : index
    %c0_99 = arith.constant 0 : index
    %80 = vector.load %arg14[%c2_98, %c0_99] : memref<56x256xf32, #tpu.memory_space<vmem>>, vector<50x256xf32>
    %81 = arith.truncf %80 : vector<50x256xf32> to vector<50x256xbf16>
    %c1_100 = arith.constant 1 : index
    %c2_101 = arith.constant 2 : index
    %c0_102 = arith.constant 0 : index
    %c0_103 = arith.constant 0 : index
    %82 = vector.load %arg12[%c1_100, %c2_101, %c0_102, %c0_103] : memref<5x4x256x256xbf16, #tpu.memory_space<vmem>>, vector<1x1x256x256xbf16>
    %83 = vector.shape_cast %82 : vector<1x1x256x256xbf16> to vector<256x256xbf16>
    %cst_104 = arith.constant dense<0.000000e+00> : vector<50x256xf32>
    %84 = tpu.matmul %81, %83, %cst_104 {dimension_numbers = #tpu.dot_dimension_numbers<[1], [0], [0], [1], [0, 0, 1, 1], [], []>} : vector<50x256xbf16>, vector<256x256xbf16>, vector<50x256xf32> -> vector<50x256xf32>
    %85 = arith.addf %79, %84 : vector<50x256xf32>
    %c3_105 = arith.constant 3 : index
    %c0_106 = arith.constant 0 : index
    %86 = vector.load %arg14[%c3_105, %c0_106] : memref<56x256xf32, #tpu.memory_space<vmem>>, vector<50x256xf32>
    %87 = arith.truncf %86 : vector<50x256xf32> to vector<50x256xbf16>
    %c1_107 = arith.constant 1 : index
    %c3_108 = arith.constant 3 : index
    %c0_109 = arith.constant 0 : index
    %c0_110 = arith.constant 0 : index
    %88 = vector.load %arg12[%c1_107, %c3_108, %c0_109, %c0_110] : memref<5x4x256x256xbf16, #tpu.memory_space<vmem>>, vector<1x1x256x256xbf16>
    %89 = vector.shape_cast %88 : vector<1x1x256x256xbf16> to vector<256x256xbf16>
    %cst_111 = arith.constant dense<0.000000e+00> : vector<50x256xf32>
    %90 = tpu.matmul %87, %89, %cst_111 {dimension_numbers = #tpu.dot_dimension_numbers<[1], [0], [0], [1], [0, 0, 1, 1], [], []>} : vector<50x256xbf16>, vector<256x256xbf16>, vector<50x256xf32> -> vector<50x256xf32>
    %91 = arith.addf %85, %90 : vector<50x256xf32>
    %c0_112 = arith.constant 0 : index
    %c0_113 = arith.constant 0 : index
    %92 = vector.load %arg8[%c0_112, %c0_113] : memref<50x1xf32, #tpu.memory_space<vmem>>, vector<50x1xf32>
    %93 = vector.broadcast %92 : vector<50x1xf32> to vector<50x256xf32>
    %94 = arith.mulf %91, %93 : vector<50x256xf32>
    %cst_114 = arith.constant dense<0.000000e+00> : vector<256xf32>
    %95 = vector.multi_reduction <add>, %94, %cst_114 [0] : vector<50x256xf32> to vector<256xf32>
    %96 = vector.shape_cast %95 : vector<256xf32> to vector<1x256xf32>
    %97 = arith.mulf %94, %94 : vector<50x256xf32>
    %cst_115 = arith.constant dense<0.000000e+00> : vector<256xf32>
    %98 = vector.multi_reduction <add>, %97, %cst_115 [0] : vector<50x256xf32> to vector<256xf32>
    %99 = vector.shape_cast %98 : vector<256xf32> to vector<1x256xf32>
    %c0_116 = arith.constant 0 : index
    %c0_117 = arith.constant 0 : index
    %100 = vector.load %arg2[%c0_116, %c0_117] : memref<256x8xf32, #tpu.memory_space<vmem>>, vector<256x8xf32>
    %cst_118 = arith.constant dense<0.000000e+00> : vector<1x8xf32>
    %101 = tpu.matmul %96, %100, %cst_118 {dimension_numbers = #tpu.dot_dimension_numbers<[1], [0], [0], [1], [0, 0, 1, 1], [], []>} : vector<1x256xf32>, vector<256x8xf32>, vector<1x8xf32> -> vector<1x8xf32>
    %cst_119 = arith.constant 0.00103305781 : f32
    %102 = vector.broadcast %cst_119 : f32 to vector<1x8xf32>
    %103 = arith.mulf %101, %102 : vector<1x8xf32>
    %c0_120 = arith.constant 0 : index
    %c0_121 = arith.constant 0 : index
    %104 = vector.load %arg2[%c0_120, %c0_121] : memref<256x8xf32, #tpu.memory_space<vmem>>, vector<256x8xf32>
    %cst_122 = arith.constant dense<0.000000e+00> : vector<1x8xf32>
    %105 = tpu.matmul %99, %104, %cst_122 {dimension_numbers = #tpu.dot_dimension_numbers<[1], [0], [0], [1], [0, 0, 1, 1], [], []>} : vector<1x256xf32>, vector<256x8xf32>, vector<1x8xf32> -> vector<1x8xf32>
    %cst_123 = arith.constant 0.00103305781 : f32
    %106 = vector.broadcast %cst_123 : f32 to vector<1x8xf32>
    %107 = arith.mulf %105, %106 : vector<1x8xf32>
    %108 = arith.mulf %103, %103 : vector<1x8xf32>
    %109 = arith.subf %107, %108 : vector<1x8xf32>
    %cst_124 = arith.constant 0.000000e+00 : f32
    %110 = vector.broadcast %cst_124 : f32 to vector<1x8xf32>
    %111 = arith.maximumf %109, %110 : vector<1x8xf32>
    %cst_125 = arith.constant 9.99999974E-6 : f32
    %112 = vector.broadcast %cst_125 : f32 to vector<1x8xf32>
    %113 = arith.addf %111, %112 : vector<1x8xf32>
    %114 = math.rsqrt %113 : vector<1x8xf32>
    %c0_126 = arith.constant 0 : index
    %c0_127 = arith.constant 0 : index
    %115 = vector.load %arg5[%c0_126, %c0_127] : memref<8x256xf32, #tpu.memory_space<vmem>>, vector<8x256xf32>
    %cst_128 = arith.constant dense<0.000000e+00> : vector<1x256xf32>
    %116 = tpu.matmul %103, %115, %cst_128 {dimension_numbers = #tpu.dot_dimension_numbers<[1], [0], [0], [1], [0, 0, 1, 1], [], []>} : vector<1x8xf32>, vector<8x256xf32>, vector<1x256xf32> -> vector<1x256xf32>
    %c0_129 = arith.constant 0 : index
    %c0_130 = arith.constant 0 : index
    %117 = vector.load %arg5[%c0_129, %c0_130] : memref<8x256xf32, #tpu.memory_space<vmem>>, vector<8x256xf32>
    %cst_131 = arith.constant dense<0.000000e+00> : vector<1x256xf32>
    %118 = tpu.matmul %114, %117, %cst_131 {dimension_numbers = #tpu.dot_dimension_numbers<[1], [0], [0], [1], [0, 0, 1, 1], [], []>} : vector<1x8xf32>, vector<8x256xf32>, vector<1x256xf32> -> vector<1x256xf32>
    %119 = vector.broadcast %116 : vector<1x256xf32> to vector<50x256xf32>
    %120 = arith.subf %94, %119 : vector<50x256xf32>
    %121 = vector.broadcast %118 : vector<1x256xf32> to vector<50x256xf32>
    %122 = arith.mulf %120, %121 : vector<50x256xf32>
    %c0_132 = arith.constant 0 : index
    %c0_133 = arith.constant 0 : index
    %123 = vector.load %arg8[%c0_132, %c0_133] : memref<50x1xf32, #tpu.memory_space<vmem>>, vector<50x1xf32>
    %124 = vector.broadcast %123 : vector<50x1xf32> to vector<50x256xf32>
    %125 = arith.mulf %122, %124 : vector<50x256xf32>
    %cst_134 = arith.constant 2.000000e-01 : f32
    %126 = vector.broadcast %cst_134 : f32 to vector<50x256xf32>
    %127 = arith.mulf %126, %125 : vector<50x256xf32>
    %128 = arith.maximumf %125, %127 : vector<50x256xf32>
    %c0_135 = arith.constant 0 : index
    %c0_136 = arith.constant 0 : index
    %129 = vector.load %arg15[%c0_135, %c0_136] : memref<56x256xf32, #tpu.memory_space<vmem>>, vector<50x256xf32>
    tpu.vector_store %arg15[%c0_135, %c0_136], %128 {strides = array<i32>} : memref<56x256xf32, #tpu.memory_space<vmem>>, vector<50x256xf32>,
    %c2_i32_137 = arith.constant 2 : i32
    %c2_i32_138 = arith.constant 2 : i32
    %c2_i32_139 = arith.constant 2 : i32
    %c0_i32_140 = arith.constant 0 : i32
    %c0_i32_141 = arith.constant 0 : i32
    %c0_i32_142 = arith.constant 0 : i32
    %130 = tpu.memref_slice %arg1[%c2_i32_137, %c0_i32_140, %c0_i32_141, %c0_i32_142] : memref<5x4x256x256xbf16, #tpu.memory_space<any>> -> memref<1x4x256x256xbf16, #tpu.memory_space<any>>
    %131 = tpu.memref_squeeze %130 : memref<1x4x256x256xbf16, #tpu.memory_space<any>> -> memref<4x256x256xbf16, #tpu.memory_space<any>>
    %c0_i32_143 = arith.constant 0 : i32
    %c0_i32_144 = arith.constant 0 : i32
    %c0_i32_145 = arith.constant 0 : i32
    %132 = tpu.memref_slice %arg12[%c2_i32_138, %c0_i32_143, %c0_i32_144, %c0_i32_145] : memref<5x4x256x256xbf16, #tpu.memory_space<vmem>> -> memref<1x4x256x256xbf16, #tpu.memory_space<vmem>>
    %133 = tpu.memref_squeeze %132 : memref<1x4x256x256xbf16, #tpu.memory_space<vmem>> -> memref<4x256x256xbf16, #tpu.memory_space<vmem>>
    %134 = tpu.memref_slice %arg13[%c2_i32_139] : memref<5x!tpu.dma_semaphore, #tpu.memory_space<semaphore_mem>> -> memref<1x!tpu.dma_semaphore, #tpu.memory_space<semaphore_mem>>
    %135 = tpu.memref_squeeze %134 : memref<1x!tpu.dma_semaphore, #tpu.memory_space<semaphore_mem>> -> memref<!tpu.dma_semaphore, #tpu.memory_space<semaphore_mem>>
    tpu.wait_dma2 semaphore(%135 : memref<!tpu.dma_semaphore, #tpu.memory_space<semaphore_mem>>) src(%131 : memref<4x256x256xbf16, #tpu.memory_space<any>>) dst(%133 : memref<4x256x256xbf16, #tpu.memory_space<vmem>>)
    %c0_146 = arith.constant 0 : index
    %c0_147 = arith.constant 0 : index
    %136 = vector.load %arg15[%c0_146, %c0_147] : memref<56x256xf32, #tpu.memory_space<vmem>>, vector<47x256xf32>
    %137 = arith.truncf %136 : vector<47x256xf32> to vector<47x256xbf16>
    %c2_148 = arith.constant 2 : index
    %c0_149 = arith.constant 0 : index
    %c0_150 = arith.constant 0 : index
    %c0_151 = arith.constant 0 : index
    %138 = vector.load %arg12[%c2_148, %c0_149, %c0_150, %c0_151] : memref<5x4x256x256xbf16, #tpu.memory_space<vmem>>, vector<1x1x256x256xbf16>
    %139 = vector.shape_cast %138 : vector<1x1x256x256xbf16> to vector<256x256xbf16>
    %cst_152 = arith.constant dense<0.000000e+00> : vector<47x256xf32>
    %140 = tpu.matmul %137, %139, %cst_152 {dimension_numbers = #tpu.dot_dimension_numbers<[1], [0], [0], [1], [0, 0, 1, 1], [], []>} : vector<47x256xbf16>, vector<256x256xbf16>, vector<47x256xf32> -> vector<47x256xf32>
    %c1_153 = arith.constant 1 : index
    %c0_154 = arith.constant 0 : index
    %141 = vector.load %arg15[%c1_153, %c0_154] : memref<56x256xf32, #tpu.memory_space<vmem>>, vector<47x256xf32>
    %142 = arith.truncf %141 : vector<47x256xf32> to vector<47x256xbf16>
    %c2_155 = arith.constant 2 : index
    %c1_156 = arith.constant 1 : index
    %c0_157 = arith.constant 0 : index
    %c0_158 = arith.constant 0 : index
    %143 = vector.load %arg12[%c2_155, %c1_156, %c0_157, %c0_158] : memref<5x4x256x256xbf16, #tpu.memory_space<vmem>>, vector<1x1x256x256xbf16>
    %144 = vector.shape_cast %143 : vector<1x1x256x256xbf16> to vector<256x256xbf16>
    %cst_159 = arith.constant dense<0.000000e+00> : vector<47x256xf32>
    %145 = tpu.matmul %142, %144, %cst_159 {dimension_numbers = #tpu.dot_dimension_numbers<[1], [0], [0], [1], [0, 0, 1, 1], [], []>} : vector<47x256xbf16>, vector<256x256xbf16>, vector<47x256xf32> -> vector<47x256xf32>
    %146 = arith.addf %140, %145 : vector<47x256xf32>
    %c2_160 = arith.constant 2 : index
    %c0_161 = arith.constant 0 : index
    %147 = vector.load %arg15[%c2_160, %c0_161] : memref<56x256xf32, #tpu.memory_space<vmem>>, vector<47x256xf32>
    %148 = arith.truncf %147 : vector<47x256xf32> to vector<47x256xbf16>
    %c2_162 = arith.constant 2 : index
    %c2_163 = arith.constant 2 : index
    %c0_164 = arith.constant 0 : index
    %c0_165 = arith.constant 0 : index
    %149 = vector.load %arg12[%c2_162, %c2_163, %c0_164, %c0_165] : memref<5x4x256x256xbf16, #tpu.memory_space<vmem>>, vector<1x1x256x256xbf16>
    %150 = vector.shape_cast %149 : vector<1x1x256x256xbf16> to vector<256x256xbf16>
    %cst_166 = arith.constant dense<0.000000e+00> : vector<47x256xf32>
    %151 = tpu.matmul %148, %150, %cst_166 {dimension_numbers = #tpu.dot_dimension_numbers<[1], [0], [0], [1], [0, 0, 1, 1], [], []>} : vector<47x256xbf16>, vector<256x256xbf16>, vector<47x256xf32> -> vector<47x256xf32>
    %152 = arith.addf %146, %151 : vector<47x256xf32>
    %c3_167 = arith.constant 3 : index
    %c0_168 = arith.constant 0 : index
    %153 = vector.load %arg15[%c3_167, %c0_168] : memref<56x256xf32, #tpu.memory_space<vmem>>, vector<47x256xf32>
    %154 = arith.truncf %153 : vector<47x256xf32> to vector<47x256xbf16>
    %c2_169 = arith.constant 2 : index
    %c3_170 = arith.constant 3 : index
    %c0_171 = arith.constant 0 : index
    %c0_172 = arith.constant 0 : index
    %155 = vector.load %arg12[%c2_169, %c3_170, %c0_171, %c0_172] : memref<5x4x256x256xbf16, #tpu.memory_space<vmem>>, vector<1x1x256x256xbf16>
    %156 = vector.shape_cast %155 : vector<1x1x256x256xbf16> to vector<256x256xbf16>
    %cst_173 = arith.constant dense<0.000000e+00> : vector<47x256xf32>
    %157 = tpu.matmul %154, %156, %cst_173 {dimension_numbers = #tpu.dot_dimension_numbers<[1], [0], [0], [1], [0, 0, 1, 1], [], []>} : vector<47x256xbf16>, vector<256x256xbf16>, vector<47x256xf32> -> vector<47x256xf32>
    %158 = arith.addf %152, %157 : vector<47x256xf32>
    %c0_174 = arith.constant 0 : index
    %c0_175 = arith.constant 0 : index
    %159 = vector.load %arg9[%c0_174, %c0_175] : memref<47x1xf32, #tpu.memory_space<vmem>>, vector<47x1xf32>
    %160 = vector.broadcast %159 : vector<47x1xf32> to vector<47x256xf32>
    %161 = arith.mulf %158, %160 : vector<47x256xf32>
    %cst_176 = arith.constant dense<0.000000e+00> : vector<256xf32>
    %162 = vector.multi_reduction <add>, %161, %cst_176 [0] : vector<47x256xf32> to vector<256xf32>
    %163 = vector.shape_cast %162 : vector<256xf32> to vector<1x256xf32>
    %164 = arith.mulf %161, %161 : vector<47x256xf32>
    %cst_177 = arith.constant dense<0.000000e+00> : vector<256xf32>
    %165 = vector.multi_reduction <add>, %164, %cst_177 [0] : vector<47x256xf32> to vector<256xf32>
    %166 = vector.shape_cast %165 : vector<256xf32> to vector<1x256xf32>
    %c0_178 = arith.constant 0 : index
    %c0_179 = arith.constant 0 : index
    %167 = vector.load %arg3[%c0_178, %c0_179] : memref<256x16xf32, #tpu.memory_space<vmem>>, vector<256x16xf32>
    %cst_180 = arith.constant dense<0.000000e+00> : vector<1x16xf32>
    %168 = tpu.matmul %163, %167, %cst_180 {dimension_numbers = #tpu.dot_dimension_numbers<[1], [0], [0], [1], [0, 0, 1, 1], [], []>} : vector<1x256xf32>, vector<256x16xf32>, vector<1x16xf32> -> vector<1x16xf32>
    %cst_181 = arith.constant 5.000000e-03 : f32
    %169 = vector.broadcast %cst_181 : f32 to vector<1x16xf32>
    %170 = arith.mulf %168, %169 : vector<1x16xf32>
    %c0_182 = arith.constant 0 : index
    %c0_183 = arith.constant 0 : index
    %171 = vector.load %arg3[%c0_182, %c0_183] : memref<256x16xf32, #tpu.memory_space<vmem>>, vector<256x16xf32>
    %cst_184 = arith.constant dense<0.000000e+00> : vector<1x16xf32>
    %172 = tpu.matmul %166, %171, %cst_184 {dimension_numbers = #tpu.dot_dimension_numbers<[1], [0], [0], [1], [0, 0, 1, 1], [], []>} : vector<1x256xf32>, vector<256x16xf32>, vector<1x16xf32> -> vector<1x16xf32>
    %cst_185 = arith.constant 5.000000e-03 : f32
    %173 = vector.broadcast %cst_185 : f32 to vector<1x16xf32>
    %174 = arith.mulf %172, %173 : vector<1x16xf32>
    %175 = arith.mulf %170, %170 : vector<1x16xf32>
    %176 = arith.subf %174, %175 : vector<1x16xf32>
    %cst_186 = arith.constant 0.000000e+00 : f32
    %177 = vector.broadcast %cst_186 : f32 to vector<1x16xf32>
    %178 = arith.maximumf %176, %177 : vector<1x16xf32>
    %cst_187 = arith.constant 9.99999974E-6 : f32
    %179 = vector.broadcast %cst_187 : f32 to vector<1x16xf32>
    %180 = arith.addf %178, %179 : vector<1x16xf32>
    %181 = math.rsqrt %180 : vector<1x16xf32>
    %c0_188 = arith.constant 0 : index
    %c0_189 = arith.constant 0 : index
    %182 = vector.load %arg6[%c0_188, %c0_189] : memref<16x256xf32, #tpu.memory_space<vmem>>, vector<16x256xf32>
    %cst_190 = arith.constant dense<0.000000e+00> : vector<1x256xf32>
    %183 = tpu.matmul %170, %182, %cst_190 {dimension_numbers = #tpu.dot_dimension_numbers<[1], [0], [0], [1], [0, 0, 1, 1], [], []>} : vector<1x16xf32>, vector<16x256xf32>, vector<1x256xf32> -> vector<1x256xf32>
    %c0_191 = arith.constant 0 : index
    %c0_192 = arith.constant 0 : index
    %184 = vector.load %arg6[%c0_191, %c0_192] : memref<16x256xf32, #tpu.memory_space<vmem>>, vector<16x256xf32>
    %cst_193 = arith.constant dense<0.000000e+00> : vector<1x256xf32>
    %185 = tpu.matmul %181, %184, %cst_193 {dimension_numbers = #tpu.dot_dimension_numbers<[1], [0], [0], [1], [0, 0, 1, 1], [], []>} : vector<1x16xf32>, vector<16x256xf32>, vector<1x256xf32> -> vector<1x256xf32>
    %186 = vector.broadcast %183 : vector<1x256xf32> to vector<47x256xf32>
    %187 = arith.subf %161, %186 : vector<47x256xf32>
    %188 = vector.broadcast %185 : vector<1x256xf32> to vector<47x256xf32>
    %189 = arith.mulf %187, %188 : vector<47x256xf32>
    %c0_194 = arith.constant 0 : index
    %c0_195 = arith.constant 0 : index
    %190 = vector.load %arg9[%c0_194, %c0_195] : memref<47x1xf32, #tpu.memory_space<vmem>>, vector<47x1xf32>
    %191 = vector.broadcast %190 : vector<47x1xf32> to vector<47x256xf32>
    %192 = arith.mulf %189, %191 : vector<47x256xf32>
    %cst_196 = arith.constant 2.000000e-01 : f32
    %193 = vector.broadcast %cst_196 : f32 to vector<47x256xf32>
    %194 = arith.mulf %193, %192 : vector<47x256xf32>
    %195 = arith.maximumf %192, %194 : vector<47x256xf32>
    %c0_197 = arith.constant 0 : index
    %c0_198 = arith.constant 0 : index
    %196 = vector.load %arg14[%c0_197, %c0_198] : memref<56x256xf32, #tpu.memory_space<vmem>>, vector<47x256xf32>
    tpu.vector_store %arg14[%c0_197, %c0_198], %195 {strides = array<i32>} : memref<56x256xf32, #tpu.memory_space<vmem>>, vector<47x256xf32>,
    %c3_i32_199 = arith.constant 3 : i32
    %c3_i32_200 = arith.constant 3 : i32
    %c3_i32_201 = arith.constant 3 : i32
    %c0_i32_202 = arith.constant 0 : i32
    %c0_i32_203 = arith.constant 0 : i32
    %c0_i32_204 = arith.constant 0 : i32
    %197 = tpu.memref_slice %arg1[%c3_i32_199, %c0_i32_202, %c0_i32_203, %c0_i32_204] : memref<5x4x256x256xbf16, #tpu.memory_space<any>> -> memref<1x4x256x256xbf16, #tpu.memory_space<any>>
    %198 = tpu.memref_squeeze %197 : memref<1x4x256x256xbf16, #tpu.memory_space<any>> -> memref<4x256x256xbf16, #tpu.memory_space<any>>
    %c0_i32_205 = arith.constant 0 : i32
    %c0_i32_206 = arith.constant 0 : i32
    %c0_i32_207 = arith.constant 0 : i32
    %199 = tpu.memref_slice %arg12[%c3_i32_200, %c0_i32_205, %c0_i32_206, %c0_i32_207] : memref<5x4x256x256xbf16, #tpu.memory_space<vmem>> -> memref<1x4x256x256xbf16, #tpu.memory_space<vmem>>
    %200 = tpu.memref_squeeze %199 : memref<1x4x256x256xbf16, #tpu.memory_space<vmem>> -> memref<4x256x256xbf16, #tpu.memory_space<vmem>>
    %201 = tpu.memref_slice %arg13[%c3_i32_201] : memref<5x!tpu.dma_semaphore, #tpu.memory_space<semaphore_mem>> -> memref<1x!tpu.dma_semaphore, #tpu.memory_space<semaphore_mem>>
    %202 = tpu.memref_squeeze %201 : memref<1x!tpu.dma_semaphore, #tpu.memory_space<semaphore_mem>> -> memref<!tpu.dma_semaphore, #tpu.memory_space<semaphore_mem>>
    tpu.wait_dma2 semaphore(%202 : memref<!tpu.dma_semaphore, #tpu.memory_space<semaphore_mem>>) src(%198 : memref<4x256x256xbf16, #tpu.memory_space<any>>) dst(%200 : memref<4x256x256xbf16, #tpu.memory_space<vmem>>)
    %c0_208 = arith.constant 0 : index
    %c0_209 = arith.constant 0 : index
    %203 = vector.load %arg14[%c0_208, %c0_209] : memref<56x256xf32, #tpu.memory_space<vmem>>, vector<41x256xf32>
    %204 = arith.truncf %203 : vector<41x256xf32> to vector<41x256xbf16>
    %c3_210 = arith.constant 3 : index
    %c0_211 = arith.constant 0 : index
    %c0_212 = arith.constant 0 : index
    %c0_213 = arith.constant 0 : index
    %205 = vector.load %arg12[%c3_210, %c0_211, %c0_212, %c0_213] : memref<5x4x256x256xbf16, #tpu.memory_space<vmem>>, vector<1x1x256x256xbf16>
    %206 = vector.shape_cast %205 : vector<1x1x256x256xbf16> to vector<256x256xbf16>
    %cst_214 = arith.constant dense<0.000000e+00> : vector<41x256xf32>
    %207 = tpu.matmul %204, %206, %cst_214 {dimension_numbers = #tpu.dot_dimension_numbers<[1], [0], [0], [1], [0, 0, 1, 1], [], []>} : vector<41x256xbf16>, vector<256x256xbf16>, vector<41x256xf32> -> vector<41x256xf32>
    %c2_215 = arith.constant 2 : index
    %c0_216 = arith.constant 0 : index
    %208 = vector.load %arg14[%c2_215, %c0_216] : memref<56x256xf32, #tpu.memory_space<vmem>>, vector<41x256xf32>
    %209 = arith.truncf %208 : vector<41x256xf32> to vector<41x256xbf16>
    %c3_217 = arith.constant 3 : index
    %c1_218 = arith.constant 1 : index
    %c0_219 = arith.constant 0 : index
    %c0_220 = arith.constant 0 : index
    %210 = vector.load %arg12[%c3_217, %c1_218, %c0_219, %c0_220] : memref<5x4x256x256xbf16, #tpu.memory_space<vmem>>, vector<1x1x256x256xbf16>
    %211 = vector.shape_cast %210 : vector<1x1x256x256xbf16> to vector<256x256xbf16>
    %cst_221 = arith.constant dense<0.000000e+00> : vector<41x256xf32>
    %212 = tpu.matmul %209, %211, %cst_221 {dimension_numbers = #tpu.dot_dimension_numbers<[1], [0], [0], [1], [0, 0, 1, 1], [], []>} : vector<41x256xbf16>, vector<256x256xbf16>, vector<41x256xf32> -> vector<41x256xf32>
    %213 = arith.addf %207, %212 : vector<41x256xf32>
    %c4 = arith.constant 4 : index
    %c0_222 = arith.constant 0 : index
    %214 = vector.load %arg14[%c4, %c0_222] : memref<56x256xf32, #tpu.memory_space<vmem>>, vector<41x256xf32>
    %215 = arith.truncf %214 : vector<41x256xf32> to vector<41x256xbf16>
    %c3_223 = arith.constant 3 : index
    %c2_224 = arith.constant 2 : index
    %c0_225 = arith.constant 0 : index
    %c0_226 = arith.constant 0 : index
    %216 = vector.load %arg12[%c3_223, %c2_224, %c0_225, %c0_226] : memref<5x4x256x256xbf16, #tpu.memory_space<vmem>>, vector<1x1x256x256xbf16>
    %217 = vector.shape_cast %216 : vector<1x1x256x256xbf16> to vector<256x256xbf16>
    %cst_227 = arith.constant dense<0.000000e+00> : vector<41x256xf32>
    %218 = tpu.matmul %215, %217, %cst_227 {dimension_numbers = #tpu.dot_dimension_numbers<[1], [0], [0], [1], [0, 0, 1, 1], [], []>} : vector<41x256xbf16>, vector<256x256xbf16>, vector<41x256xf32> -> vector<41x256xf32>
    %219 = arith.addf %213, %218 : vector<41x256xf32>
    %c6 = arith.constant 6 : index
    %c0_228 = arith.constant 0 : index
    %220 = vector.load %arg14[%c6, %c0_228] : memref<56x256xf32, #tpu.memory_space<vmem>>, vector<41x256xf32>
    %221 = arith.truncf %220 : vector<41x256xf32> to vector<41x256xbf16>
    %c3_229 = arith.constant 3 : index
    %c3_230 = arith.constant 3 : index
    %c0_231 = arith.constant 0 : index
    %c0_232 = arith.constant 0 : index
    %222 = vector.load %arg12[%c3_229, %c3_230, %c0_231, %c0_232] : memref<5x4x256x256xbf16, #tpu.memory_space<vmem>>, vector<1x1x256x256xbf16>
    %223 = vector.shape_cast %222 : vector<1x1x256x256xbf16> to vector<256x256xbf16>
    %cst_233 = arith.constant dense<0.000000e+00> : vector<41x256xf32>
    %224 = tpu.matmul %221, %223, %cst_233 {dimension_numbers = #tpu.dot_dimension_numbers<[1], [0], [0], [1], [0, 0, 1, 1], [], []>} : vector<41x256xbf16>, vector<256x256xbf16>, vector<41x256xf32> -> vector<41x256xf32>
    %225 = arith.addf %219, %224 : vector<41x256xf32>
    %c0_234 = arith.constant 0 : index
    %c0_235 = arith.constant 0 : index
    %226 = vector.load %arg10[%c0_234, %c0_235] : memref<41x1xf32, #tpu.memory_space<vmem>>, vector<41x1xf32>
    %227 = vector.broadcast %226 : vector<41x1xf32> to vector<41x256xf32>
    %228 = arith.mulf %225, %227 : vector<41x256xf32>
    %cst_236 = arith.constant dense<0.000000e+00> : vector<256xf32>
    %229 = vector.multi_reduction <add>, %228, %cst_236 [0] : vector<41x256xf32> to vector<256xf32>
    %230 = vector.shape_cast %229 : vector<256xf32> to vector<1x256xf32>
    %231 = arith.mulf %228, %228 : vector<41x256xf32>
    %cst_237 = arith.constant dense<0.000000e+00> : vector<256xf32>
    %232 = vector.multi_reduction <add>, %231, %cst_237 [0] : vector<41x256xf32> to vector<256xf32>
    %233 = vector.shape_cast %232 : vector<256xf32> to vector<1x256xf32>
    %c0_238 = arith.constant 0 : index
    %c0_239 = arith.constant 0 : index
    %234 = vector.load %arg4[%c0_238, %c0_239] : memref<256x32xf32, #tpu.memory_space<vmem>>, vector<256x32xf32>
    %cst_240 = arith.constant dense<0.000000e+00> : vector<1x32xf32>
    %235 = tpu.matmul %230, %234, %cst_240 {dimension_numbers = #tpu.dot_dimension_numbers<[1], [0], [0], [1], [0, 0, 1, 1], [], []>} : vector<1x256xf32>, vector<256x32xf32>, vector<1x32xf32> -> vector<1x32xf32>
    %cst_241 = arith.constant 3.125000e-02 : f32
    %236 = vector.broadcast %cst_241 : f32 to vector<1x32xf32>
    %237 = arith.mulf %235, %236 : vector<1x32xf32>
    %c0_242 = arith.constant 0 : index
    %c0_243 = arith.constant 0 : index
    %238 = vector.load %arg4[%c0_242, %c0_243] : memref<256x32xf32, #tpu.memory_space<vmem>>, vector<256x32xf32>
    %cst_244 = arith.constant dense<0.000000e+00> : vector<1x32xf32>
    %239 = tpu.matmul %233, %238, %cst_244 {dimension_numbers = #tpu.dot_dimension_numbers<[1], [0], [0], [1], [0, 0, 1, 1], [], []>} : vector<1x256xf32>, vector<256x32xf32>, vector<1x32xf32> -> vector<1x32xf32>
    %cst_245 = arith.constant 3.125000e-02 : f32
    %240 = vector.broadcast %cst_245 : f32 to vector<1x32xf32>
    %241 = arith.mulf %239, %240 : vector<1x32xf32>
    %242 = arith.mulf %237, %237 : vector<1x32xf32>
    %243 = arith.subf %241, %242 : vector<1x32xf32>
    %cst_246 = arith.constant 0.000000e+00 : f32
    %244 = vector.broadcast %cst_246 : f32 to vector<1x32xf32>
    %245 = arith.maximumf %243, %244 : vector<1x32xf32>
    %cst_247 = arith.constant 9.99999974E-6 : f32
    %246 = vector.broadcast %cst_247 : f32 to vector<1x32xf32>
    %247 = arith.addf %245, %246 : vector<1x32xf32>
    %248 = math.rsqrt %247 : vector<1x32xf32>
    %c0_248 = arith.constant 0 : index
    %c0_249 = arith.constant 0 : index
    %249 = vector.load %arg7[%c0_248, %c0_249] : memref<32x256xf32, #tpu.memory_space<vmem>>, vector<32x256xf32>
    %cst_250 = arith.constant dense<0.000000e+00> : vector<1x256xf32>
    %250 = tpu.matmul %237, %249, %cst_250 {dimension_numbers = #tpu.dot_dimension_numbers<[1], [0], [0], [1], [0, 0, 1, 1], [], []>} : vector<1x32xf32>, vector<32x256xf32>, vector<1x256xf32> -> vector<1x256xf32>
    %c0_251 = arith.constant 0 : index
    %c0_252 = arith.constant 0 : index
    %251 = vector.load %arg7[%c0_251, %c0_252] : memref<32x256xf32, #tpu.memory_space<vmem>>, vector<32x256xf32>
    %cst_253 = arith.constant dense<0.000000e+00> : vector<1x256xf32>
    %252 = tpu.matmul %248, %251, %cst_253 {dimension_numbers = #tpu.dot_dimension_numbers<[1], [0], [0], [1], [0, 0, 1, 1], [], []>} : vector<1x32xf32>, vector<32x256xf32>, vector<1x256xf32> -> vector<1x256xf32>
    %253 = vector.broadcast %250 : vector<1x256xf32> to vector<41x256xf32>
    %254 = arith.subf %228, %253 : vector<41x256xf32>
    %255 = vector.broadcast %252 : vector<1x256xf32> to vector<41x256xf32>
    %256 = arith.mulf %254, %255 : vector<41x256xf32>
    %c0_254 = arith.constant 0 : index
    %c0_255 = arith.constant 0 : index
    %257 = vector.load %arg10[%c0_254, %c0_255] : memref<41x1xf32, #tpu.memory_space<vmem>>, vector<41x1xf32>
    %258 = vector.broadcast %257 : vector<41x1xf32> to vector<41x256xf32>
    %259 = arith.mulf %256, %258 : vector<41x256xf32>
    %cst_256 = arith.constant 2.000000e-01 : f32
    %260 = vector.broadcast %cst_256 : f32 to vector<41x256xf32>
    %261 = arith.mulf %260, %259 : vector<41x256xf32>
    %262 = arith.maximumf %259, %261 : vector<41x256xf32>
    %c0_257 = arith.constant 0 : index
    %c0_258 = arith.constant 0 : index
    %263 = vector.load %arg15[%c0_257, %c0_258] : memref<56x256xf32, #tpu.memory_space<vmem>>, vector<41x256xf32>
    tpu.vector_store %arg15[%c0_257, %c0_258], %262 {strides = array<i32>} : memref<56x256xf32, #tpu.memory_space<vmem>>, vector<41x256xf32>,
    %c4_i32_259 = arith.constant 4 : i32
    %c4_i32_260 = arith.constant 4 : i32
    %c4_i32_261 = arith.constant 4 : i32
    %c0_i32_262 = arith.constant 0 : i32
    %c0_i32_263 = arith.constant 0 : i32
    %c0_i32_264 = arith.constant 0 : i32
    %264 = tpu.memref_slice %arg1[%c4_i32_259, %c0_i32_262, %c0_i32_263, %c0_i32_264] : memref<5x4x256x256xbf16, #tpu.memory_space<any>> -> memref<1x4x256x256xbf16, #tpu.memory_space<any>>
    %265 = tpu.memref_squeeze %264 : memref<1x4x256x256xbf16, #tpu.memory_space<any>> -> memref<4x256x256xbf16, #tpu.memory_space<any>>
    %c0_i32_265 = arith.constant 0 : i32
    %c0_i32_266 = arith.constant 0 : i32
    %c0_i32_267 = arith.constant 0 : i32
    %266 = tpu.memref_slice %arg12[%c4_i32_260, %c0_i32_265, %c0_i32_266, %c0_i32_267] : memref<5x4x256x256xbf16, #tpu.memory_space<vmem>> -> memref<1x4x256x256xbf16, #tpu.memory_space<vmem>>
    %267 = tpu.memref_squeeze %266 : memref<1x4x256x256xbf16, #tpu.memory_space<vmem>> -> memref<4x256x256xbf16, #tpu.memory_space<vmem>>
    %268 = tpu.memref_slice %arg13[%c4_i32_261] : memref<5x!tpu.dma_semaphore, #tpu.memory_space<semaphore_mem>> -> memref<1x!tpu.dma_semaphore, #tpu.memory_space<semaphore_mem>>
    %269 = tpu.memref_squeeze %268 : memref<1x!tpu.dma_semaphore, #tpu.memory_space<semaphore_mem>> -> memref<!tpu.dma_semaphore, #tpu.memory_space<semaphore_mem>>
    tpu.wait_dma2 semaphore(%269 : memref<!tpu.dma_semaphore, #tpu.memory_space<semaphore_mem>>) src(%265 : memref<4x256x256xbf16, #tpu.memory_space<any>>) dst(%267 : memref<4x256x256xbf16, #tpu.memory_space<vmem>>)
    %c0_268 = arith.constant 0 : index
    %c0_269 = arith.constant 0 : index
    %270 = vector.load %arg15[%c0_268, %c0_269] : memref<56x256xf32, #tpu.memory_space<vmem>>, vector<29x256xf32>
    %271 = arith.truncf %270 : vector<29x256xf32> to vector<29x256xbf16>
    %c4_270 = arith.constant 4 : index
    %c0_271 = arith.constant 0 : index
    %c0_272 = arith.constant 0 : index
    %c0_273 = arith.constant 0 : index
    %272 = vector.load %arg12[%c4_270, %c0_271, %c0_272, %c0_273] : memref<5x4x256x256xbf16, #tpu.memory_space<vmem>>, vector<1x1x256x256xbf16>
    %273 = vector.shape_cast %272 : vector<1x1x256x256xbf16> to vector<256x256xbf16>
    %cst_274 = arith.constant dense<0.000000e+00> : vector<29x256xf32>
    %274 = tpu.matmul %271, %273, %cst_274 {dimension_numbers = #tpu.dot_dimension_numbers<[1], [0], [0], [1], [0, 0, 1, 1], [], []>} : vector<29x256xbf16>, vector<256x256xbf16>, vector<29x256xf32> -> vector<29x256xf32>
    %c4_275 = arith.constant 4 : index
    %c0_276 = arith.constant 0 : index
    %275 = vector.load %arg15[%c4_275, %c0_276] : memref<56x256xf32, #tpu.memory_space<vmem>>, vector<29x256xf32>
    %276 = arith.truncf %275 : vector<29x256xf32> to vector<29x256xbf16>
    %c4_277 = arith.constant 4 : index
    %c1_278 = arith.constant 1 : index
    %c0_279 = arith.constant 0 : index
    %c0_280 = arith.constant 0 : index
    %277 = vector.load %arg12[%c4_277, %c1_278, %c0_279, %c0_280] : memref<5x4x256x256xbf16, #tpu.memory_space<vmem>>, vector<1x1x256x256xbf16>
    %278 = vector.shape_cast %277 : vector<1x1x256x256xbf16> to vector<256x256xbf16>
    %cst_281 = arith.constant dense<0.000000e+00> : vector<29x256xf32>
    %279 = tpu.matmul %276, %278, %cst_281 {dimension_numbers = #tpu.dot_dimension_numbers<[1], [0], [0], [1], [0, 0, 1, 1], [], []>} : vector<29x256xbf16>, vector<256x256xbf16>, vector<29x256xf32> -> vector<29x256xf32>
    %280 = arith.addf %274, %279 : vector<29x256xf32>
    %c8 = arith.constant 8 : index
    %c0_282 = arith.constant 0 : index
    %281 = vector.load %arg15[%c8, %c0_282] : memref<56x256xf32, #tpu.memory_space<vmem>>, vector<29x256xf32>
    %282 = arith.truncf %281 : vector<29x256xf32> to vector<29x256xbf16>
    %c4_283 = arith.constant 4 : index
    %c2_284 = arith.constant 2 : index
    %c0_285 = arith.constant 0 : index
    %c0_286 = arith.constant 0 : index
    %283 = vector.load %arg12[%c4_283, %c2_284, %c0_285, %c0_286] : memref<5x4x256x256xbf16, #tpu.memory_space<vmem>>, vector<1x1x256x256xbf16>
    %284 = vector.shape_cast %283 : vector<1x1x256x256xbf16> to vector<256x256xbf16>
    %cst_287 = arith.constant dense<0.000000e+00> : vector<29x256xf32>
    %285 = tpu.matmul %282, %284, %cst_287 {dimension_numbers = #tpu.dot_dimension_numbers<[1], [0], [0], [1], [0, 0, 1, 1], [], []>} : vector<29x256xbf16>, vector<256x256xbf16>, vector<29x256xf32> -> vector<29x256xf32>
    %286 = arith.addf %280, %285 : vector<29x256xf32>
    %c12 = arith.constant 12 : index
    %c0_288 = arith.constant 0 : index
    %287 = vector.load %arg15[%c12, %c0_288] : memref<56x256xf32, #tpu.memory_space<vmem>>, vector<29x256xf32>
    %288 = arith.truncf %287 : vector<29x256xf32> to vector<29x256xbf16>
    %c4_289 = arith.constant 4 : index
    %c3_290 = arith.constant 3 : index
    %c0_291 = arith.constant 0 : index
    %c0_292 = arith.constant 0 : index
    %289 = vector.load %arg12[%c4_289, %c3_290, %c0_291, %c0_292] : memref<5x4x256x256xbf16, #tpu.memory_space<vmem>>, vector<1x1x256x256xbf16>
    %290 = vector.shape_cast %289 : vector<1x1x256x256xbf16> to vector<256x256xbf16>
    %cst_293 = arith.constant dense<0.000000e+00> : vector<29x256xf32>
    %291 = tpu.matmul %288, %290, %cst_293 {dimension_numbers = #tpu.dot_dimension_numbers<[1], [0], [0], [1], [0, 0, 1, 1], [], []>} : vector<29x256xbf16>, vector<256x256xbf16>, vector<29x256xf32> -> vector<29x256xf32>
    %292 = arith.addf %286, %291 : vector<29x256xf32>
    %c0_294 = arith.constant 0 : index
    %c0_295 = arith.constant 0 : index
    %293 = vector.load %arg11[%c0_294, %c0_295] : memref<29x256xf32, #tpu.memory_space<vmem>>, vector<29x256xf32>
    tpu.vector_store %arg11[%c0_294, %c0_295], %292 {strides = array<i32>} : memref<29x256xf32, #tpu.memory_space<vmem>>, vector<29x256xf32>,
    return
  }
}

</mosaic_0001>

<llo_original>
// kernel: forward.1
$region0: #{forward.1}
  #allocation0 [shape = 'u32[]', space=smem, size = 0x4, offset = 0x4, fixed_abs, tag = 'smem constant byte address 0x4 - core index']
  #allocation1 [shape = 'u32[72,128]{1,0:T(1,128)}', space=vmem, size = 0x9000, scoped, tag = 'internal scratch']
  #allocation2 [shape = 'bf16[5,4,256,256]{3,2,1,0:T(8,128)(2,1)}', space=vmem, size = 0x280000, scoped, tag = 'scratch operand']
  #allocation3 [shape = 's32[5]{0}', space=sflag, size = 0x14, scoped, tag = 'scratch operand']
  #allocation4 [shape = 'f32[56,256]{1,0:T(8,128)}', space=vmem, size = 0xe000, scoped, tag = 'scratch operand']
  #allocation5 [shape = 'f32[56,256]{1,0:T(8,128)}', space=vmem, size = 0xe000, scoped, tag = 'scratch operand']
  #allocation20 [shape = 's32[]', space=sflag, size = 0x4, offset = 0, fixed_abs, tag = 'sflag constant byte address 0x0 - dummy sync flag']
  #allocation21 [shape = 's32[]', space=sflag, size = 0x4, offset = 0, fixed_abs, tag = 'sflag constant byte address 0x0 - dummy sync flag']
  #allocation22 [shape = 'u32[]', space=smem, size = 0x4, offset = 0x44, fixed_abs, tag = 'smem constant byte address 0x44 - assertion arg 0']
  #allocation23 [shape = 'u32[]', space=smem, size = 0x4, offset = 0x48, fixed_abs, tag = 'smem constant byte address 0x48 - assertion arg 1']
  #allocation24 [shape = 's32[]', space=sflag, size = 0x4, offset = 0, fixed_abs, tag = 'sflag constant byte address 0x0 - dummy sync flag']
  #allocation25 [shape = 's32[]', space=sflag, size = 0x4, offset = 0, fixed_abs, tag = 'sflag constant byte address 0x0 - dummy sync flag']
  #allocation26 [shape = 's32[]', space=sflag, size = 0x4, offset = 0, fixed_abs, tag = 'sflag constant byte address 0x0 - dummy sync flag']
  #allocation27 [shape = 's32[]', space=sflag, size = 0x4, offset = 0, fixed_abs, tag = 'sflag constant byte address 0x0 - dummy sync flag']
  #allocation28 [shape = 's32[]', space=sflag, size = 0x4, offset = 0, fixed_abs, tag = 'sflag constant byte address 0x0 - dummy sync flag']
  #allocation29 [shape = 's32[]', space=sflag, size = 0x4, offset = 0, fixed_abs, tag = 'sflag constant byte address 0x0 - dummy sync flag']
  #allocation30 [shape = 's32[]', space=sflag, size = 0x4, offset = 0, fixed_abs, tag = 'sflag constant byte address 0x0 - dummy sync flag']
  #allocation31 [shape = 's32[]', space=sflag, size = 0x4, offset = 0, fixed_abs, tag = 'sflag constant byte address 0x0 - dummy sync flag']
  %s0 = inlined_call_operand.vmem [shape: f32[56,256], index: 0, kind: input, shape index: {}]
  %s1 = inlined_call_operand.hbm [shape: bf16[5,4,256,256], index: 1, kind: input, shape index: {}]
  %s2 = inlined_call_operand.hbm [shape: f32[256,8], index: 2, kind: input, shape index: {}]
  %s3 = inlined_call_operand.hbm [shape: f32[256,16], index: 3, kind: input, shape index: {}]
  %s4 = inlined_call_operand.hbm [shape: f32[256,32], index: 4, kind: input, shape index: {}]
  %s5 = inlined_call_operand.hbm [shape: f32[8,256], index: 5, kind: input, shape index: {}]
  %s6 = inlined_call_operand.hbm [shape: f32[16,256], index: 6, kind: input, shape index: {}]
  %s7 = inlined_call_operand.hbm [shape: f32[32,256], index: 7, kind: input, shape index: {}]
  %s8 = inlined_call_operand.hbm [shape: f32[50,1], index: 8, kind: input, shape index: {}]
  %s9 = inlined_call_operand.hbm [shape: f32[47,1], index: 9, kind: input, shape index: {}]
  %s10 = inlined_call_operand.hbm [shape: f32[41,1], index: 10, kind: input, shape index: {}]
  %s11 = inlined_call_operand.vmem [shape: f32[29,256], index: 11, kind: output, shape index: {}]
  %s12 = sld [smem:[#allocation0]]
  $region106: #{forward.1} parent=0
    _
  %s14 = ssub.s32 1, %s12
  %s15 = scalar_select 0, %s14, %s12
  $region1: #{forward.1} parent=0
    #allocation6 [shape = 'u8[131072]{0}', space=vmem, size = 0x20000, scoped, tag = 'input window, operand 2, single buffered']
    #allocation7 [shape = 's32[1]{0}', space=sflag, size = 0x4, scoped, tag = 'scoped memory for forward.1']
    #allocation8 [shape = 'u8[131072]{0}', space=vmem, size = 0x20000, scoped, tag = 'input window, operand 3, single buffered']
    #allocation9 [shape = 's32[1]{0}', space=sflag, size = 0x4, scoped, tag = 'scoped memory for forward.1']
    #allocation10 [shape = 'u8[131072]{0}', space=vmem, size = 0x20000, scoped, tag = 'input window, operand 4, single buffered']
    #allocation11 [shape = 'u8[8192]{0}', space=vmem, size = 0x2000, scoped, tag = 'input window, operand 5, single buffered']
    #allocation12 [shape = 's32[1]{0}', space=sflag, size = 0x4, scoped, tag = 'scoped memory for forward.1']
    #allocation13 [shape = 'u8[16384]{0}', space=vmem, size = 0x4000, scoped, tag = 'input window, operand 6, single buffered']
    #allocation14 [shape = 'u8[32768]{0}', space=vmem, size = 0x8000, scoped, tag = 'input window, operand 7, single buffered']
    #allocation15 [shape = 's32[1]{0}', space=sflag, size = 0x4, scoped, tag = 'scoped memory for forward.1']
    #allocation16 [shape = 'u8[28672]{0}', space=vmem, size = 0x7000, scoped, tag = 'input window, operand 8, single buffered']
    #allocation17 [shape = 'u8[24576]{0}', space=vmem, size = 0x6000, scoped, tag = 'input window, operand 9, single buffered']
    #allocation18 [shape = 's32[1]{0}', space=sflag, size = 0x4, scoped, tag = 'scoped memory for forward.1']
    #allocation19 [shape = 'u8[24576]{0}', space=vmem, size = 0x6000, scoped, tag = 'input window, operand 10, single buffered']
    %16 = vsyncpa [#allocation7], 0
    %17 = vsyncpa [#allocation9], 0
    %18 = vsyncpa [#allocation12], 0
    %19 = vsyncpa [#allocation15], 0
    %20 = vsyncpa [#allocation18], 0
    // Predicated region
    $region2: #{forward.1} parent=1 // pred_check
      _
    $region3: #{forward.1} parent=1 // pred_check_branch
      %22 = sbr.rel (0) target = $region5
    $region4: #{forward.1} parent=1 // pred_region
      _
    $region5: #{forward.1} parent=1 // pred_fallthru
      _
    // Predicated region
    $region6: #{forward.1} parent=1 // pred_check
      _
    $region7: #{forward.1} parent=1 // pred_check_branch
      %24 = sbr.rel (0) target = $region9
    $region8: #{forward.1} parent=1 // pred_region
      %26 = vsyncadd [#allocation7], 0
      %s27 = sshll.u32 %s2, 4
      %s28 = int_to_ptr.hbm [resolvable:$true] %s27
      %s29 = sshll.u32 [#allocation6], 4
      %s30 = int_to_ptr.vmem [resolvable:$true] %s29
      %35 = dma.hbm_to_vmem [thread:$0]  %s28, 4096, %s30, [#allocation7], 128, 128, 8
    $region9: #{forward.1} parent=1 // pred_fallthru
      _
    // Predicated region
    $region10: #{forward.1} parent=1 // pred_check
      _
    $region11: #{forward.1} parent=1 // pred_check_branch
      %37 = sbr.rel (0) target = $region13
    $region12: #{forward.1} parent=1 // pred_region
      %39 = vsyncadd [#allocation9], 0
      %s40 = sshll.u32 %s3, 4
      %s41 = int_to_ptr.hbm [resolvable:$true] %s40
      %s42 = sshll.u32 [#allocation8], 4
      %s43 = int_to_ptr.vmem [resolvable:$true] %s42
      %48 = dma.hbm_to_vmem [thread:$0]  %s41, 4096, %s43, [#allocation9], 128, 128, 8
    $region13: #{forward.1} parent=1 // pred_fallthru
      _
    // Predicated region
    $region14: #{forward.1} parent=1 // pred_check
      _
    $region15: #{forward.1} parent=1 // pred_check_branch
      %50 = sbr.rel (0) target = $region17
    $region16: #{forward.1} parent=1 // pred_region
      %52 = vsyncadd [#allocation9], 0
      %s53 = sshll.u32 %s4, 4
      %s54 = int_to_ptr.hbm [resolvable:$true] %s53
      %s55 = sshll.u32 [#allocation10], 4
      %s56 = int_to_ptr.vmem [resolvable:$true] %s55
      %61 = dma.hbm_to_vmem [thread:$0]  %s54, 4096, %s56, [#allocation9], 128, 128, 8
    $region17: #{forward.1} parent=1 // pred_fallthru
      _
    // Predicated region
    $region18: #{forward.1} parent=1 // pred_check
      _
    $region19: #{forward.1} parent=1 // pred_check_branch
      %63 = sbr.rel (0) target = $region21
    $region20: #{forward.1} parent=1 // pred_region
      %65 = vsyncadd [#allocation12], 0
      %s67 = sshll.u32 %s5, 4
      %s68 = int_to_ptr.hbm [resolvable:$true] %s67
      %s69 = sshll.u32 [#allocation11], 4
      %s70 = int_to_ptr.vmem [resolvable:$true] %s69
      %72 = dma.hbm_to_vmem [thread:$0]  %s68, 256, %s70, [#allocation12]
    $region21: #{forward.1} parent=1 // pred_fallthru
      _
    // Predicated region
    $region22: #{forward.1} parent=1 // pred_check
      _
    $region23: #{forward.1} parent=1 // pred_check_branch
      %74 = sbr.rel (0) target = $region25
    $region24: #{forward.1} parent=1 // pred_region
      %76 = vsyncadd [#allocation12], 0
      %s77 = sshll.u32 %s6, 4
      %s78 = int_to_ptr.hbm [resolvable:$true] %s77
      %s79 = sshll.u32 [#allocation13], 4
      %s80 = int_to_ptr.vmem [resolvable:$true] %s79
      %85 = dma.hbm_to_vmem [thread:$0]  %s78, 512, %s80, [#allocation12], 256, 256, 16
    $region25: #{forward.1} parent=1 // pred_fallthru
      _
    // Predicated region
    $region26: #{forward.1} parent=1 // pred_check
      _
    $region27: #{forward.1} parent=1 // pred_check_branch
      %87 = sbr.rel (0) target = $region29
    $region28: #{forward.1} parent=1 // pred_region
      %89 = vsyncadd [#allocation15], 0
      %s90 = sshll.u32 %s7, 4
      %s91 = int_to_ptr.hbm [resolvable:$true] %s90
      %s92 = sshll.u32 [#allocation14], 4
      %s93 = int_to_ptr.vmem [resolvable:$true] %s92
      %98 = dma.hbm_to_vmem [thread:$0]  %s91, 1024, %s93, [#allocation15], 256, 256, 16
    $region29: #{forward.1} parent=1 // pred_fallthru
      _
    // Predicated region
    $region30: #{forward.1} parent=1 // pred_check
      _
    $region31: #{forward.1} parent=1 // pred_check_branch
      %100 = sbr.rel (0) target = $region33
    $region32: #{forward.1} parent=1 // pred_region
      %102 = vsyncadd [#allocation15], 0
      %s103 = sshll.u32 %s8, 4
      %s104 = int_to_ptr.hbm [resolvable:$true] %s103
      %s105 = sshll.u32 [#allocation16], 4
      %s106 = int_to_ptr.vmem [resolvable:$true] %s105
      %111 = dma.hbm_to_vmem [thread:$0]  %s104, 896, %s106, [#allocation15], 128, 128, 8
    $region33: #{forward.1} parent=1 // pred_fallthru
      _
    // Predicated region
    $region34: #{forward.1} parent=1 // pred_check
      _
    $region35: #{forward.1} parent=1 // pred_check_branch
      %113 = sbr.rel (0) target = $region37
    $region36: #{forward.1} parent=1 // pred_region
      %115 = vsyncadd [#allocation18], 0
      %s116 = sshll.u32 %s9, 4
      %s117 = int_to_ptr.hbm [resolvable:$true] %s116
      %s118 = sshll.u32 [#allocation17], 4
      %s119 = int_to_ptr.vmem [resolvable:$true] %s118
      %124 = dma.hbm_to_vmem [thread:$0]  %s117, 768, %s119, [#allocation18], 128, 128, 8
    $region37: #{forward.1} parent=1 // pred_fallthru
      _
    // Predicated region
    $region38: #{forward.1} parent=1 // pred_check
      _
    $region39: #{forward.1} parent=1 // pred_check_branch
      %126 = sbr.rel (0) target = $region41
    $region40: #{forward.1} parent=1 // pred_region
      %128 = vsyncadd [#allocation18], 0
      %s129 = sshll.u32 %s10, 4
      %s130 = int_to_ptr.hbm [resolvable:$true] %s129
      %s131 = sshll.u32 [#allocation19], 4
      %s132 = int_to_ptr.vmem [resolvable:$true] %s131
      %137 = dma.hbm_to_vmem [thread:$0]  %s130, 768, %s132, [#allocation18], 128, 128, 8
    $region41: #{forward.1} parent=1 // pred_fallthru
      _
    // Predicated region
    $region42: #{forward.1} parent=1 // pred_check
      _
    $region43: #{forward.1} parent=1 // pred_check_branch
      %139 = sbr.rel (0) target = $region45
    $region44: #{forward.1} parent=1 // pred_region
      %141 = dma.done [#allocation7], 4096
    $region45: #{forward.1} parent=1 // pred_fallthru
      _
    // Predicated region
    $region46: #{forward.1} parent=1 // pred_check
      _
    $region47: #{forward.1} parent=1 // pred_check_branch
      %143 = sbr.rel (0) target = $region49
    $region48: #{forward.1} parent=1 // pred_region
      %145 = dma.done [#allocation9], 4096
    $region49: #{forward.1} parent=1 // pred_fallthru
      _
    // Predicated region
    $region50: #{forward.1} parent=1 // pred_check
      _
    $region51: #{forward.1} parent=1 // pred_check_branch
      %147 = sbr.rel (0) target = $region53
    $region52: #{forward.1} parent=1 // pred_region
      %149 = dma.done [#allocation9], 4096
    $region53: #{forward.1} parent=1 // pred_fallthru
      _
    // Predicated region
    $region54: #{forward.1} parent=1 // pred_check
      _
    $region55: #{forward.1} parent=1 // pred_check_branch
      %151 = sbr.rel (0) target = $region57
    $region56: #{forward.1} parent=1 // pred_region
      %153 = dma.done [#allocation12], 256
    $region57: #{forward.1} parent=1 // pred_fallthru
      _
    // Predicated region
    $region58: #{forward.1} parent=1 // pred_check
      _
    $region59: #{forward.1} parent=1 // pred_check_branch
      %155 = sbr.rel (0) target = $region61
    $region60: #{forward.1} parent=1 // pred_region
      %157 = dma.done [#allocation12], 512
    $region61: #{forward.1} parent=1 // pred_fallthru
      _
    // Predicated region
    $region62: #{forward.1} parent=1 // pred_check
      _
    $region63: #{forward.1} parent=1 // pred_check_branch
      %159 = sbr.rel (0) target = $region65
    $region64: #{forward.1} parent=1 // pred_region
      %161 = dma.done [#allocation15], 1024
    $region65: #{forward.1} parent=1 // pred_fallthru
      _
    // Predicated region
    $region66: #{forward.1} parent=1 // pred_check
      _
    $region67: #{forward.1} parent=1 // pred_check_branch
      %163 = sbr.rel (0) target = $region69
    $region68: #{forward.1} parent=1 // pred_region
      %165 = dma.done [#allocation15], 896
    $region69: #{forward.1} parent=1 // pred_fallthru
      _
    // Predicated region
    $region70: #{forward.1} parent=1 // pred_check
      _
    $region71: #{forward.1} parent=1 // pred_check_branch
      %167 = sbr.rel (0) target = $region73
    $region72: #{forward.1} parent=1 // pred_region
      %169 = dma.done [#allocation18], 768
    $region73: #{forward.1} parent=1 // pred_fallthru
      _
    // Predicated region
    $region74: #{forward.1} parent=1 // pred_check
      _
    $region75: #{forward.1} parent=1 // pred_check_branch
      %171 = sbr.rel (0) target = $region77
    $region76: #{forward.1} parent=1 // pred_region
      %173 = dma.done [#allocation18], 768
    $region77: #{forward.1} parent=1 // pred_fallthru
      _
    // Predicated region
    $region78: #{forward.1} parent=1 // pred_check
      _
    $region79: #{forward.1} parent=1 // pred_check_branch
      %175 = sbr.rel target = $region81
    $region80: #{forward.1} parent=1 // pred_region
      %176 = sst [smem:[#allocation22]] [#allocation21]
      %177 = sst [smem:[#allocation23]] [#allocation20]
    $region81: #{forward.1} parent=1 // pred_fallthru
      _
    %179 = shalt.err (0)
    %s181 = sshll.u32 %s1, 4
    %s182 = int_to_ptr.hbm [resolvable:$true] %s181
    %s183 = sshll.u32 [#allocation2], 4
    %s184 = int_to_ptr.vmem [resolvable:$true] %s183
    %186 = dma.hbm_to_vmem [thread:$0]  %s182, 16384, %s184, [#allocation3]
    %s187 = scalar_lea.hbm %s1, 1024
    %s188 = scalar_lea.vmem [#allocation2], 1024
    %s189 = scalar_lea.sflag [#allocation3], 1
    // Predicated region
    $region82: #{forward.1} parent=1 // pred_check
      _
    $region83: #{forward.1} parent=1 // pred_check_branch
      %191 = sbr.rel target = $region85
    $region84: #{forward.1} parent=1 // pred_region
      %192 = sst [smem:[#allocation22]] [#allocation25]
      %193 = sst [smem:[#allocation23]] [#allocation24]
    $region85: #{forward.1} parent=1 // pred_fallthru
      _
    %195 = shalt.err (0)
    %s197 = sshll.u32 %s187, 4
    %s198 = int_to_ptr.hbm [resolvable:$true] %s197
    %s199 = sshll.u32 %s188, 4
    %s200 = int_to_ptr.vmem [resolvable:$true] %s199
    %202 = dma.hbm_to_vmem [thread:$0]  %s198, 16384, %s200, %s189
    %s203 = scalar_lea.hbm %s1, 2048
    %s204 = scalar_lea.vmem [#allocation2], 2048
    %s205 = scalar_lea.sflag [#allocation3], 2
    // Predicated region
    $region86: #{forward.1} parent=1 // pred_check
      _
    $region87: #{forward.1} parent=1 // pred_check_branch
      %207 = sbr.rel target = $region89
    $region88: #{forward.1} parent=1 // pred_region
      %208 = sst [smem:[#allocation22]] [#allocation27]
      %209 = sst [smem:[#allocation23]] [#allocation26]
    $region89: #{forward.1} parent=1 // pred_fallthru
      _
    %211 = shalt.err (0)
    %s213 = sshll.u32 %s203, 4
    %s214 = int_to_ptr.hbm [resolvable:$true] %s213
    %s215 = sshll.u32 %s204, 4
    %s216 = int_to_ptr.vmem [resolvable:$true] %s215
    %218 = dma.hbm_to_vmem [thread:$0]  %s214, 16384, %s216, %s205
    %s219 = scalar_lea.hbm %s1, 3072
    %s220 = scalar_lea.vmem [#allocation2], 3072
    %s221 = scalar_lea.sflag [#allocation3], 3
    // Predicated region
    $region90: #{forward.1} parent=1 // pred_check
      _
    $region91: #{forward.1} parent=1 // pred_check_branch
      %223 = sbr.rel target = $region93
    $region92: #{forward.1} parent=1 // pred_region
      %224 = sst [smem:[#allocation22]] [#allocation29]
      %225 = sst [smem:[#allocation23]] [#allocation28]
    $region93: #{forward.1} parent=1 // pred_fallthru
      _
    %227 = shalt.err (0)
    %s229 = sshll.u32 %s219, 4
    %s230 = int_to_ptr.hbm [resolvable:$true] %s229
    %s231 = sshll.u32 %s220, 4
    %s232 = int_to_ptr.vmem [resolvable:$true] %s231
    %234 = dma.hbm_to_vmem [thread:$0]  %s230, 16384, %s232, %s221
    %s235 = scalar_lea.hbm %s1, 4096
    %s236 = scalar_lea.vmem [#allocation2], 4096
    %s237 = scalar_lea.sflag [#allocation3], 4
    // Predicated region
    $region94: #{forward.1} parent=1 // pred_check
      _
    $region95: #{forward.1} parent=1 // pred_check_branch
      %239 = sbr.rel target = $region97
    $region96: #{forward.1} parent=1 // pred_region
      %240 = sst [smem:[#allocation22]] [#allocation31]
      %241 = sst [smem:[#allocation23]] [#allocation30]
    $region97: #{forward.1} parent=1 // pred_fallthru
      _
    %243 = shalt.err (0)
    %s245 = sshll.u32 %s235, 4
    %s246 = int_to_ptr.hbm [resolvable:$true] %s245
    %s247 = sshll.u32 %s236, 4
    %s248 = int_to_ptr.vmem [resolvable:$true] %s247
    %250 = dma.hbm_to_vmem [thread:$0]  %s246, 16384, %s248, %s237
    %s251 = smul.u32 4, 4
    %s252 = smul.u32 %s251, 32
    %s253 = smul.u32 %s252, 2
    %s254 = sshll.u32 %s253, 4
    %255 = dma.done [#allocation3], %s254
    %v256 = vld [vmem:[%s0] sm:$0xff]
    %v257 = vld [vmem:[%s0 + $0x8] sm:$0xff]
    %v258 = vld [vmem:[%s0 + $0x10] sm:$0xff]
    %v259 = vld [vmem:[%s0 + $0x18] sm:$0xff]
    %v260 = vld [vmem:[%s0 + $0x20] sm:$0xff]
    %v261 = vld [vmem:[%s0 + $0x28] sm:$0xff]
    %v262 = vld [vmem:[%s0 + $0x30] sm:$0xff]
    %v263 = vld [vmem:[%s0 + $0x38] sm:$0xff]
    %v264 = vld [vmem:[%s0 + $0x40] sm:$0xff]
    %v265 = vld [vmem:[%s0 + $0x48] sm:$0xff]
    %v266 = vld [vmem:[%s0 + $0x50] sm:$0xff]
    %v267 = vld [vmem:[%s0 + $0x58] sm:$0xff]
    %v268 = vld [vmem:[%s0 + $0x60] sm:$0x1f]
    %v269 = vld [vmem:[%s0 + $0x68] sm:$0x1f]
    %v270 = vpack.c.bf16 %v258, %v256
    %v271 = vpack.c.bf16 %v259, %v257
    %v272 = vpack.c.bf16 %v262, %v260
    %v273 = vpack.c.bf16 %v263, %v261
    %v274 = vpack.c.bf16 %v266, %v264
    %v275 = vpack.c.bf16 %v267, %v265
    %v276 = vpack.c.bf16 %v268, %v268
    %v277 = vpack.c.bf16 %v269, %v269
    %v278 = vld [vmem:[#allocation2] sm:$0xff]
    %v279 = vld [vmem:[#allocation2 + $0x8] sm:$0xff]
    %v280 = vld [vmem:[#allocation2 + $0x10] sm:$0xff]
    %v281 = vld [vmem:[#allocation2 + $0x18] sm:$0xff]
    %v282 = vld [vmem:[#allocation2 + $0x20] sm:$0xff]
    %v283 = vld [vmem:[#allocation2 + $0x28] sm:$0xff]
    %v284 = vld [vmem:[#allocation2 + $0x30] sm:$0xff]
    %v285 = vld [vmem:[#allocation2 + $0x38] sm:$0xff]
    %v286 = vld [vmem:[#allocation2 + $0x40] sm:$0xff]
    %v287 = vld [vmem:[#allocation2 + $0x48] sm:$0xff]
    %v288 = vld [vmem:[#allocation2 + $0x50] sm:$0xff]
    %v289 = vld [vmem:[#allocation2 + $0x58] sm:$0xff]
    %v290 = vld [vmem:[#allocation2 + $0x60] sm:$0xff]
    %v291 = vld [vmem:[#allocation2 + $0x68] sm:$0xff]
    %v292 = vld [vmem:[#allocation2 + $0x70] sm:$0xff]
    %v293 = vld [vmem:[#allocation2 + $0x78] sm:$0xff]
    %v294 = vld [vmem:[#allocation2 + $0x80] sm:$0xff]
    %v295 = vld [vmem:[#allocation2 + $0x88] sm:$0xff]
    %v296 = vld [vmem:[#allocation2 + $0x90] sm:$0xff]
    %v297 = vld [vmem:[#allocation2 + $0x98] sm:$0xff]
    %v298 = vld [vmem:[#allocation2 + $0xa0] sm:$0xff]
    %v299 = vld [vmem:[#allocation2 + $0xa8] sm:$0xff]
    %v300 = vld [vmem:[#allocation2 + $0xb0] sm:$0xff]
    %v301 = vld [vmem:[#allocation2 + $0xb8] sm:$0xff]
    %v302 = vld [vmem:[#allocation2 + $0xc0] sm:$0xff]
    %v303 = vld [vmem:[#allocation2 + $0xc8] sm:$0xff]
    %v304 = vld [vmem:[#allocation2 + $0xd0] sm:$0xff]
    %v305 = vld [vmem:[#allocation2 + $0xd8] sm:$0xff]
    %v306 = vld [vmem:[#allocation2 + $0xe0] sm:$0xff]
    %v307 = vld [vmem:[#allocation2 + $0xe8] sm:$0xff]
    %v308 = vld [vmem:[#allocation2 + $0xf0] sm:$0xff]
    %v309 = vld [vmem:[#allocation2 + $0xf8] sm:$0xff]
    %v310 = vld [vmem:[%s0] sm:$0xfe]
    %v311 = vld [vmem:[%s0 + $0x8] sm:$0xfe]
    %v312 = vld [vmem:[%s0 + $0x60] sm:$0x3f]
    %v313 = vld [vmem:[%s0 + $0x68] sm:$0x3f]
    %v314 = vpack.c.bf16 %v258, %v310
    %v315 = vpack.c.bf16 %v259, %v311
    %v316 = vpack.c.bf16 %v312, %v312
    %v317 = vpack.c.bf16 %v313, %v313
    %s318 = scalar_lea.vmem [#allocation2], 256
    %v319 = vld [vmem:[%s318] sm:$0xff]
    %v320 = vld [vmem:[%s318 + $0x8] sm:$0xff]
    %v321 = vld [vmem:[%s318 + $0x10] sm:$0xff]
    %v322 = vld [vmem:[%s318 + $0x18] sm:$0xff]
    %v323 = vld [vmem:[%s318 + $0x20] sm:$0xff]
    %v324 = vld [vmem:[%s318 + $0x28] sm:$0xff]
    %v325 = vld [vmem:[%s318 + $0x30] sm:$0xff]
    %v326 = vld [vmem:[%s318 + $0x38] sm:$0xff]
    %v327 = vld [vmem:[%s318 + $0x40] sm:$0xff]
    %v328 = vld [vmem:[%s318 + $0x48] sm:$0xff]
    %v329 = vld [vmem:[%s318 + $0x50] sm:$0xff]
    %v330 = vld [vmem:[%s318 + $0x58] sm:$0xff]
    %v331 = vld [vmem:[%s318 + $0x60] sm:$0xff]
    %v332 = vld [vmem:[%s318 + $0x68] sm:$0xff]
    %v333 = vld [vmem:[%s318 + $0x70] sm:$0xff]
    %v334 = vld [vmem:[%s318 + $0x78] sm:$0xff]
    %v335 = vld [vmem:[%s318 + $0x80] sm:$0xff]
    %v336 = vld [vmem:[%s318 + $0x88] sm:$0xff]
    %v337 = vld [vmem:[%s318 + $0x90] sm:$0xff]
    %v338 = vld [vmem:[%s318 + $0x98] sm:$0xff]
    %v339 = vld [vmem:[%s318 + $0xa0] sm:$0xff]
    %v340 = vld [vmem:[%s318 + $0xa8] sm:$0xff]
    %v341 = vld [vmem:[%s318 + $0xb0] sm:$0xff]
    %v342 = vld [vmem:[%s318 + $0xb8] sm:$0xff]
    %v343 = vld [vmem:[%s318 + $0xc0] sm:$0xff]
    %v344 = vld [vmem:[%s318 + $0xc8] sm:$0xff]
    %v345 = vld [vmem:[%s318 + $0xd0] sm:$0xff]
    %v346 = vld [vmem:[%s318 + $0xd8] sm:$0xff]
    %v347 = vld [vmem:[%s318 + $0xe0] sm:$0xff]
    %v348 = vld [vmem:[%s318 + $0xe8] sm:$0xff]
    %v349 = vld [vmem:[%s318 + $0xf0] sm:$0xff]
    %v350 = vld [vmem:[%s318 + $0xf8] sm:$0xff]
    %vm351 = vsmask.f32 7424
    %v353 = vshrl.u32 %v314, 16
    %v355 = vshll.u32 %v314, 16
    %v357 = vrot.slane %v355, 1
    %v358 = vor.u32 %v353, %v357
    %v360 = vshll.u32 %v272, 16
    %v362 = vrot.slane %v360, 1
    %v363 = vsel %vm351, %v358, %v362
    %v365 = vshrl.u32 %v315, 16
    %v367 = vshll.u32 %v315, 16
    %v369 = vrot.slane %v367, 1
    %v370 = vor.u32 %v365, %v369
    %v372 = vshll.u32 %v273, 16
    %v374 = vrot.slane %v372, 1
    %v375 = vsel %vm351, %v370, %v374
    %v376 = vshrl.u32 %v272, 16
    %v378 = vor.u32 %v376, %v362
    %v380 = vshll.u32 %v274, 16
    %v382 = vrot.slane %v380, 1
    %v383 = vsel %vm351, %v378, %v382
    %v384 = vshrl.u32 %v273, 16
    %v386 = vor.u32 %v384, %v374
    %v388 = vshll.u32 %v275, 16
    %v390 = vrot.slane %v388, 1
    %v391 = vsel %vm351, %v386, %v390
    %v392 = vshrl.u32 %v274, 16
    %v394 = vor.u32 %v392, %v382
    %v396 = vshll.u32 %v316, 16
    %v398 = vrot.slane %v396, 1
    %v399 = vsel %vm351, %v394, %v398
    %v400 = vshrl.u32 %v275, 16
    %v402 = vor.u32 %v400, %v390
    %v404 = vshll.u32 %v317, 16
    %v406 = vrot.slane %v404, 1
    %v407 = vsel %vm351, %v402, %v406
    %v408 = vshrl.u32 %v316, 16
    %v410 = vor.u32 %v408, %v398
    %v411 = vshrl.u32 %v317, 16
    %v413 = vor.u32 %v411, %v406
    %v454 = vunpack.c.l.b16 %v319
    %v455 = vunpack.c.h.b16 %v319
    %v456 = vunpack.c.l.b16 %v320
    %v457 = vunpack.c.h.b16 %v320
    %v458 = vunpack.c.l.b16 %v321
    %v459 = vunpack.c.h.b16 %v321
    %v460 = vunpack.c.l.b16 %v322
    %v461 = vunpack.c.h.b16 %v322
    %v462 = vunpack.c.l.b16 %v323
    %v463 = vunpack.c.h.b16 %v323
    %v464 = vunpack.c.l.b16 %v324
    %v465 = vunpack.c.h.b16 %v324
    %v466 = vunpack.c.l.b16 %v325
    %v467 = vunpack.c.h.b16 %v325
    %v468 = vunpack.c.l.b16 %v326
    %v469 = vunpack.c.h.b16 %v326
    %v470 = vunpack.c.l.b16 %v327
    %v471 = vunpack.c.h.b16 %v327
    %v472 = vunpack.c.l.b16 %v328
    %v473 = vunpack.c.h.b16 %v328
    %v474 = vunpack.c.l.b16 %v329
    %v475 = vunpack.c.h.b16 %v329
    %v476 = vunpack.c.l.b16 %v330
    %v477 = vunpack.c.h.b16 %v330
    %v478 = vunpack.c.l.b16 %v331
    %v479 = vunpack.c.h.b16 %v331
    %v480 = vunpack.c.l.b16 %v332
    %v481 = vunpack.c.h.b16 %v332
    %v482 = vunpack.c.l.b16 %v333
    %v483 = vunpack.c.h.b16 %v333
    %v484 = vunpack.c.l.b16 %v334
    %v485 = vunpack.c.h.b16 %v334
    %v486 = vunpack.c.l.b16 %v335
    %v487 = vunpack.c.h.b16 %v335
    %v488 = vunpack.c.l.b16 %v336
    %v489 = vunpack.c.h.b16 %v336
    %v490 = vunpack.c.l.b16 %v337
    %v491 = vunpack.c.h.b16 %v337
    %v492 = vunpack.c.l.b16 %v338
    %v493 = vunpack.c.h.b16 %v338
    %v494 = vunpack.c.l.b16 %v339
    %v495 = vunpack.c.h.b16 %v339
    %v496 = vunpack.c.l.b16 %v340
    %v497 = vunpack.c.h.b16 %v340
    %v498 = vunpack.c.l.b16 %v341
    %v499 = vunpack.c.h.b16 %v341
    %v500 = vunpack.c.l.b16 %v342
    %v501 = vunpack.c.h.b16 %v342
    %v502 = vunpack.c.l.b16 %v343
    %v503 = vunpack.c.h.b16 %v343
    %v504 = vunpack.c.l.b16 %v344
    %v505 = vunpack.c.h.b16 %v344
    %v506 = vunpack.c.l.b16 %v345
    %v507 = vunpack.c.h.b16 %v345
    %v508 = vunpack.c.l.b16 %v346
    %v509 = vunpack.c.h.b16 %v346
    %v510 = vunpack.c.l.b16 %v347
    %v511 = vunpack.c.h.b16 %v347
    %v512 = vunpack.c.l.b16 %v348
    %v513 = vunpack.c.h.b16 %v348
    %v514 = vunpack.c.l.b16 %v349
    %v515 = vunpack.c.h.b16 %v349
    %v516 = vunpack.c.l.b16 %v350
    %v517 = vunpack.c.h.b16 %v350
    %v518 = vpack.c.b16 %v456, %v454
    %v519 = vpack.c.b16 %v457, %v455
    %v520 = vpack.c.b16 %v460, %v458
    %v521 = vpack.c.b16 %v461, %v459
    %v522 = vpack.c.b16 %v464, %v462
    %v523 = vpack.c.b16 %v465, %v463
    %v524 = vpack.c.b16 %v468, %v466
    %v525 = vpack.c.b16 %v469, %v467
    %v526 = vpack.c.b16 %v472, %v470
    %v527 = vpack.c.b16 %v473, %v471
    %v528 = vpack.c.b16 %v476, %v474
    %v529 = vpack.c.b16 %v477, %v475
    %v530 = vpack.c.b16 %v480, %v478
    %v531 = vpack.c.b16 %v481, %v479
    %v532 = vpack.c.b16 %v484, %v482
    %v533 = vpack.c.b16 %v485, %v483
    %v534 = vpack.c.b16 %v488, %v486
    %v535 = vpack.c.b16 %v489, %v487
    %v536 = vpack.c.b16 %v492, %v490
    %v537 = vpack.c.b16 %v493, %v491
    %v538 = vpack.c.b16 %v496, %v494
    %v539 = vpack.c.b16 %v497, %v495
    %v540 = vpack.c.b16 %v500, %v498
    %v541 = vpack.c.b16 %v501, %v499
    %v542 = vpack.c.b16 %v504, %v502
    %v543 = vpack.c.b16 %v505, %v503
    %v544 = vpack.c.b16 %v508, %v506
    %v545 = vpack.c.b16 %v509, %v507
    %v546 = vpack.c.b16 %v512, %v510
    %v547 = vpack.c.b16 %v513, %v511
    %v548 = vpack.c.b16 %v516, %v514
    %v549 = vpack.c.b16 %v517, %v515
    %582 = vmatpush.bf16.msra.mxu0 %v532
    %583 = vmatpush.bf16.msra.mxu0 %v530
    %584 = vmatpush.bf16.msra.mxu0 %v528
    %585 = vmatpush.bf16.msra.mxu0 %v526
    %586 = vmatpush.bf16.msra.mxu0 %v524
    %587 = vmatpush.bf16.msra.mxu0 %v522
    %588 = vmatpush.bf16.msra.mxu0 %v520
    %589 = vmatpush.bf16.msra.mxu0 %v518
    %590 = vmatmul.bf16.gmra.mxu0 %v363
    %v591 = vpop.f32.mrf.mxu0
    %v592 = vadd.f32 0.0, %v591
    %v593 = vpop.f32.mrf.mxu0
    %v594 = vadd.f32 0.0, %v593
    %595 = vmatmul.bf16.gmra.mxu0 %v383
    %v596 = vpop.f32.mrf.mxu0
    %v597 = vadd.f32 0.0, %v596
    %v598 = vpop.f32.mrf.mxu0
    %v599 = vadd.f32 0.0, %v598
    %600 = vmatmul.bf16.gmra.mxu0 %v399
    %v601 = vpop.f32.mrf.mxu0
    %v602 = vadd.f32 0.0, %v601
    %v603 = vpop.f32.mrf.mxu0
    %v604 = vadd.f32 0.0, %v603
    %605 = vmatmul.bf16.gmra.mxu0 %v410
    %v606 = vpop.f32.mrf.mxu0
    %v607 = vadd.f32 0.0, %v606
    %v608 = vpop.f32.mrf.mxu0
    %609 = vdwg.mxu0
    %610 = vmatpush.bf16.msra.mxu0 %v548
    %611 = vmatpush.bf16.msra.mxu0 %v546
    %612 = vmatpush.bf16.msra.mxu0 %v544
    %613 = vmatpush.bf16.msra.mxu0 %v542
    %614 = vmatpush.bf16.msra.mxu0 %v540
    %615 = vmatpush.bf16.msra.mxu0 %v538
    %616 = vmatpush.bf16.msra.mxu0 %v536
    %617 = vmatpush.bf16.msra.mxu0 %v534
    %618 = vmatmul.bf16.gmra.mxu0 %v375
    %v619 = vpop.f32.mrf.mxu0
    %v620 = vadd.f32 %v592, %v619
    %v621 = vpop.f32.mrf.mxu0
    %v622 = vadd.f32 %v594, %v621
    %623 = vmatmul.bf16.gmra.mxu0 %v391
    %v624 = vpop.f32.mrf.mxu0
    %v625 = vadd.f32 %v597, %v624
    %v626 = vpop.f32.mrf.mxu0
    %v627 = vadd.f32 %v599, %v626
    %628 = vmatmul.bf16.gmra.mxu0 %v407
    %v629 = vpop.f32.mrf.mxu0
    %v630 = vadd.f32 %v602, %v629
    %v631 = vpop.f32.mrf.mxu0
    %v632 = vadd.f32 %v604, %v631
    %633 = vmatmul.bf16.gmra.mxu0 %v413
    %v634 = vpop.f32.mrf.mxu0
    %v635 = vadd.f32 %v607, %v634
    %v636 = vpop.f32.mrf.mxu0
    %637 = vdwg.mxu0
    %638 = vmatpush.bf16.msra.mxu0 %v533
    %639 = vmatpush.bf16.msra.mxu0 %v531
    %640 = vmatpush.bf16.msra.mxu0 %v529
    %641 = vmatpush.bf16.msra.mxu0 %v527
    %642 = vmatpush.bf16.msra.mxu0 %v525
    %643 = vmatpush.bf16.msra.mxu0 %v523
    %644 = vmatpush.bf16.msra.mxu0 %v521
    %645 = vmatpush.bf16.msra.mxu0 %v519
    %646 = vmatmul.bf16.gmra.mxu0 %v363
    %v647 = vpop.f32.mrf.mxu0
    %v648 = vadd.f32 0.0, %v647
    %v649 = vpop.f32.mrf.mxu0
    %v650 = vadd.f32 0.0, %v649
    %651 = vmatmul.bf16.gmra.mxu0 %v383
    %v652 = vpop.f32.mrf.mxu0
    %v653 = vadd.f32 0.0, %v652
    %v654 = vpop.f32.mrf.mxu0
    %v655 = vadd.f32 0.0, %v654
    %656 = vmatmul.bf16.gmra.mxu0 %v399
    %v657 = vpop.f32.mrf.mxu0
    %v658 = vadd.f32 0.0, %v657
    %v659 = vpop.f32.mrf.mxu0
    %v660 = vadd.f32 0.0, %v659
    %661 = vmatmul.bf16.gmra.mxu0 %v410
    %v662 = vpop.f32.mrf.mxu0
    %v663 = vadd.f32 0.0, %v662
    %v664 = vpop.f32.mrf.mxu0
    %665 = vdwg.mxu0
    %666 = vmatpush.bf16.msra.mxu0 %v549
    %667 = vmatpush.bf16.msra.mxu0 %v547
    %668 = vmatpush.bf16.msra.mxu0 %v545
    %669 = vmatpush.bf16.msra.mxu0 %v543
    %670 = vmatpush.bf16.msra.mxu0 %v541
    %671 = vmatpush.bf16.msra.mxu0 %v539
    %672 = vmatpush.bf16.msra.mxu0 %v537
    %673 = vmatpush.bf16.msra.mxu0 %v535
    %674 = vmatmul.bf16.gmra.mxu0 %v375
    %v675 = vpop.f32.mrf.mxu0
    %v676 = vadd.f32 %v648, %v675
    %v677 = vpop.f32.mrf.mxu0
    %v678 = vadd.f32 %v650, %v677
    %679 = vmatmul.bf16.gmra.mxu0 %v391
    %v680 = vpop.f32.mrf.mxu0
    %v681 = vadd.f32 %v653, %v680
    %v682 = vpop.f32.mrf.mxu0
    %v683 = vadd.f32 %v655, %v682
    %684 = vmatmul.bf16.gmra.mxu0 %v407
    %v685 = vpop.f32.mrf.mxu0
    %v686 = vadd.f32 %v658, %v685
    %v687 = vpop.f32.mrf.mxu0
    %v688 = vadd.f32 %v660, %v687
    %689 = vmatmul.bf16.gmra.mxu0 %v413
    %v690 = vpop.f32.mrf.mxu0
    %v691 = vadd.f32 %v663, %v690
    %v692 = vpop.f32.mrf.mxu0
    %693 = vdwg.mxu0
    %v726 = vunpack.c.l.b16 %v278
    %v727 = vunpack.c.h.b16 %v278
    %v728 = vunpack.c.l.b16 %v279
    %v729 = vunpack.c.h.b16 %v279
    %v730 = vunpack.c.l.b16 %v280
    %v731 = vunpack.c.h.b16 %v280
    %v732 = vunpack.c.l.b16 %v281
    %v733 = vunpack.c.h.b16 %v281
    %v734 = vunpack.c.l.b16 %v282
    %v735 = vunpack.c.h.b16 %v282
    %v736 = vunpack.c.l.b16 %v283
    %v737 = vunpack.c.h.b16 %v283
    %v738 = vunpack.c.l.b16 %v284
    %v739 = vunpack.c.h.b16 %v284
    %v740 = vunpack.c.l.b16 %v285
    %v741 = vunpack.c.h.b16 %v285
    %v742 = vunpack.c.l.b16 %v286
    %v743 = vunpack.c.h.b16 %v286
    %v744 = vunpack.c.l.b16 %v287
    %v745 = vunpack.c.h.b16 %v287
    %v746 = vunpack.c.l.b16 %v288
    %v747 = vunpack.c.h.b16 %v288
    %v748 = vunpack.c.l.b16 %v289
    %v749 = vunpack.c.h.b16 %v289
    %v750 = vunpack.c.l.b16 %v290
    %v751 = vunpack.c.h.b16 %v290
    %v752 = vunpack.c.l.b16 %v291
    %v753 = vunpack.c.h.b16 %v291
    %v754 = vunpack.c.l.b16 %v292
    %v755 = vunpack.c.h.b16 %v292
    %v756 = vunpack.c.l.b16 %v293
    %v757 = vunpack.c.h.b16 %v293
    %v758 = vunpack.c.l.b16 %v294
    %v759 = vunpack.c.h.b16 %v294
    %v760 = vunpack.c.l.b16 %v295
    %v761 = vunpack.c.h.b16 %v295
    %v762 = vunpack.c.l.b16 %v296
    %v763 = vunpack.c.h.b16 %v296
    %v764 = vunpack.c.l.b16 %v297
    %v765 = vunpack.c.h.b16 %v297
    %v766 = vunpack.c.l.b16 %v298
    %v767 = vunpack.c.h.b16 %v298
    %v768 = vunpack.c.l.b16 %v299
    %v769 = vunpack.c.h.b16 %v299
    %v770 = vunpack.c.l.b16 %v300
    %v771 = vunpack.c.h.b16 %v300
    %v772 = vunpack.c.l.b16 %v301
    %v773 = vunpack.c.h.b16 %v301
    %v774 = vunpack.c.l.b16 %v302
    %v775 = vunpack.c.h.b16 %v302
    %v776 = vunpack.c.l.b16 %v303
    %v777 = vunpack.c.h.b16 %v303
    %v778 = vunpack.c.l.b16 %v304
    %v779 = vunpack.c.h.b16 %v304
    %v780 = vunpack.c.l.b16 %v305
    %v781 = vunpack.c.h.b16 %v305
    %v782 = vunpack.c.l.b16 %v306
    %v783 = vunpack.c.h.b16 %v306
    %v784 = vunpack.c.l.b16 %v307
    %v785 = vunpack.c.h.b16 %v307
    %v786 = vunpack.c.l.b16 %v308
    %v787 = vunpack.c.h.b16 %v308
    %v788 = vunpack.c.l.b16 %v309
    %v789 = vunpack.c.h.b16 %v309
    %v790 = vpack.c.b16 %v728, %v726
    %v791 = vpack.c.b16 %v729, %v727
    %v792 = vpack.c.b16 %v732, %v730
    %v793 = vpack.c.b16 %v733, %v731
    %v794 = vpack.c.b16 %v736, %v734
    %v795 = vpack.c.b16 %v737, %v735
    %v796 = vpack.c.b16 %v740, %v738
    %v797 = vpack.c.b16 %v741, %v739
    %v798 = vpack.c.b16 %v744, %v742
    %v799 = vpack.c.b16 %v745, %v743
    %v800 = vpack.c.b16 %v748, %v746
    %v801 = vpack.c.b16 %v749, %v747
    %v802 = vpack.c.b16 %v752, %v750
    %v803 = vpack.c.b16 %v753, %v751
    %v804 = vpack.c.b16 %v756, %v754
    %v805 = vpack.c.b16 %v757, %v755
    %v806 = vpack.c.b16 %v760, %v758
    %v807 = vpack.c.b16 %v761, %v759
    %v808 = vpack.c.b16 %v764, %v762
    %v809 = vpack.c.b16 %v765, %v763
    %v810 = vpack.c.b16 %v768, %v766
    %v811 = vpack.c.b16 %v769, %v767
    %v812 = vpack.c.b16 %v772, %v770
    %v813 = vpack.c.b16 %v773, %v771
    %v814 = vpack.c.b16 %v776, %v774
    %v815 = vpack.c.b16 %v777, %v775
    %v816 = vpack.c.b16 %v780, %v778
    %v817 = vpack.c.b16 %v781, %v779
    %v818 = vpack.c.b16 %v784, %v782
    %v819 = vpack.c.b16 %v785, %v783
    %v820 = vpack.c.b16 %v788, %v786
    %v821 = vpack.c.b16 %v789, %v787
    %854 = vmatpush.bf16.msra.mxu0 %v804
    %855 = vmatpush.bf16.msra.mxu0 %v802
    %856 = vmatpush.bf16.msra.mxu0 %v800
    %857 = vmatpush.bf16.msra.mxu0 %v798
    %858 = vmatpush.bf16.msra.mxu0 %v796
    %859 = vmatpush.bf16.msra.mxu0 %v794
    %860 = vmatpush.bf16.msra.mxu0 %v792
    %861 = vmatpush.bf16.msra.mxu0 %v790
    %862 = vmatmul.bf16.gmra.mxu0 %v270
    %v863 = vpop.f32.mrf.mxu0
    %v864 = vadd.f32 %v620, %v863
    %v865 = vpop.f32.mrf.mxu0
    %v866 = vadd.f32 %v622, %v865
    %867 = vmatmul.bf16.gmra.mxu0 %v272
    %v868 = vpop.f32.mrf.mxu0
    %v869 = vadd.f32 %v625, %v868
    %v870 = vpop.f32.mrf.mxu0
    %v871 = vadd.f32 %v627, %v870
    %872 = vmatmul.bf16.gmra.mxu0 %v274
    %v873 = vpop.f32.mrf.mxu0
    %v874 = vadd.f32 %v630, %v873
    %v875 = vpop.f32.mrf.mxu0
    %v876 = vadd.f32 %v632, %v875
    %877 = vmatmul.bf16.gmra.mxu0 %v276
    %v878 = vpop.f32.mrf.mxu0
    %v879 = vadd.f32 %v635, %v878
    %v880 = vpop.f32.mrf.mxu0
    %881 = vdwg.mxu0
    %882 = vmatpush.bf16.msra.mxu0 %v820
    %883 = vmatpush.bf16.msra.mxu0 %v818
    %884 = vmatpush.bf16.msra.mxu0 %v816
    %885 = vmatpush.bf16.msra.mxu0 %v814
    %886 = vmatpush.bf16.msra.mxu0 %v812
    %887 = vmatpush.bf16.msra.mxu0 %v810
    %888 = vmatpush.bf16.msra.mxu0 %v808
    %889 = vmatpush.bf16.msra.mxu0 %v806
    %890 = vmatmul.bf16.gmra.mxu0 %v271
    %v891 = vpop.f32.mrf.mxu0
    %v892 = vadd.f32 %v864, %v891
    %v893 = vpop.f32.mrf.mxu0
    %v894 = vadd.f32 %v866, %v893
    %895 = vmatmul.bf16.gmra.mxu0 %v273
    %v896 = vpop.f32.mrf.mxu0
    %v897 = vadd.f32 %v869, %v896
    %v898 = vpop.f32.mrf.mxu0
    %v899 = vadd.f32 %v871, %v898
    %900 = vmatmul.bf16.gmra.mxu0 %v275
    %v901 = vpop.f32.mrf.mxu0
    %v902 = vadd.f32 %v874, %v901
    %v903 = vpop.f32.mrf.mxu0
    %v904 = vadd.f32 %v876, %v903
    %905 = vmatmul.bf16.gmra.mxu0 %v277
    %v906 = vpop.f32.mrf.mxu0
    %v907 = vadd.f32 %v879, %v906
    %v908 = vpop.f32.mrf.mxu0
    %909 = vdwg.mxu0
    %910 = vmatpush.bf16.msra.mxu0 %v805
    %911 = vmatpush.bf16.msra.mxu0 %v803
    %912 = vmatpush.bf16.msra.mxu0 %v801
    %913 = vmatpush.bf16.msra.mxu0 %v799
    %914 = vmatpush.bf16.msra.mxu0 %v797
    %915 = vmatpush.bf16.msra.mxu0 %v795
    %916 = vmatpush.bf16.msra.mxu0 %v793
    %917 = vmatpush.bf16.msra.mxu0 %v791
    %918 = vmatmul.bf16.gmra.mxu0 %v270
    %v919 = vpop.f32.mrf.mxu0
    %v920 = vadd.f32 %v676, %v919
    %v921 = vpop.f32.mrf.mxu0
    %v922 = vadd.f32 %v678, %v921
    %923 = vmatmul.bf16.gmra.mxu0 %v272
    %v924 = vpop.f32.mrf.mxu0
    %v925 = vadd.f32 %v681, %v924
    %v926 = vpop.f32.mrf.mxu0
    %v927 = vadd.f32 %v683, %v926
    %928 = vmatmul.bf16.gmra.mxu0 %v274
    %v929 = vpop.f32.mrf.mxu0
    %v930 = vadd.f32 %v686, %v929
    %v931 = vpop.f32.mrf.mxu0
    %v932 = vadd.f32 %v688, %v931
    %933 = vmatmul.bf16.gmra.mxu0 %v276
    %v934 = vpop.f32.mrf.mxu0
    %v935 = vadd.f32 %v691, %v934
    %v936 = vpop.f32.mrf.mxu0
    %937 = vdwg.mxu0
    %938 = vmatpush.bf16.msra.mxu0 %v821
    %939 = vmatpush.bf16.msra.mxu0 %v819
    %940 = vmatpush.bf16.msra.mxu0 %v817
    %941 = vmatpush.bf16.msra.mxu0 %v815
    %942 = vmatpush.bf16.msra.mxu0 %v813
    %943 = vmatpush.bf16.msra.mxu0 %v811
    %944 = vmatpush.bf16.msra.mxu0 %v809
    %945 = vmatpush.bf16.msra.mxu0 %v807
    %946 = vmatmul.bf16.gmra.mxu0 %v271
    %v947 = vpop.f32.mrf.mxu0
    %v948 = vadd.f32 %v920, %v947
    %v949 = vpop.f32.mrf.mxu0
    %v950 = vadd.f32 %v922, %v949
    %951 = vmatmul.bf16.gmra.mxu0 %v273
    %v952 = vpop.f32.mrf.mxu0
    %v953 = vadd.f32 %v925, %v952
    %v954 = vpop.f32.mrf.mxu0
    %v955 = vadd.f32 %v927, %v954
    %956 = vmatmul.bf16.gmra.mxu0 %v275
    %v957 = vpop.f32.mrf.mxu0
    %v958 = vadd.f32 %v930, %v957
    %v959 = vpop.f32.mrf.mxu0
    %v960 = vadd.f32 %v932, %v959
    %961 = vmatmul.bf16.gmra.mxu0 %v277
    %v962 = vpop.f32.mrf.mxu0
    %v963 = vadd.f32 %v935, %v962
    %v964 = vpop.f32.mrf.mxu0
    %965 = vdwg.mxu0
    %v966 = vld [vmem:[%s0] sm:$0xfc]
    %v967 = vld [vmem:[%s0 + $0x8] sm:$0xfc]
    %v968 = vld [vmem:[%s0 + $0x60] sm:$0x7f]
    %v969 = vld [vmem:[%s0 + $0x68] sm:$0x7f]
    %v970 = vpack.c.bf16 %v258, %v966
    %v971 = vpack.c.bf16 %v259, %v967
    %v972 = vpack.c.bf16 %v968, %v968
    %v973 = vpack.c.bf16 %v969, %v969
    %s974 = scalar_lea.vmem [#allocation2], 512
    %v975 = vld [vmem:[%s974] sm:$0xff]
    %v976 = vld [vmem:[%s974 + $0x8] sm:$0xff]
    %v977 = vld [vmem:[%s974 + $0x10] sm:$0xff]
    %v978 = vld [vmem:[%s974 + $0x18] sm:$0xff]
    %v979 = vld [vmem:[%s974 + $0x20] sm:$0xff]
    %v980 = vld [vmem:[%s974 + $0x28] sm:$0xff]
    %v981 = vld [vmem:[%s974 + $0x30] sm:$0xff]
    %v982 = vld [vmem:[%s974 + $0x38] sm:$0xff]
    %v983 = vld [vmem:[%s974 + $0x40] sm:$0xff]
    %v984 = vld [vmem:[%s974 + $0x48] sm:$0xff]
    %v985 = vld [vmem:[%s974 + $0x50] sm:$0xff]
    %v986 = vld [vmem:[%s974 + $0x58] sm:$0xff]
    %v987 = vld [vmem:[%s974 + $0x60] sm:$0xff]
    %v988 = vld [vmem:[%s974 + $0x68] sm:$0xff]
    %v989 = vld [vmem:[%s974 + $0x70] sm:$0xff]
    %v990 = vld [vmem:[%s974 + $0x78] sm:$0xff]
    %v991 = vld [vmem:[%s974 + $0x80] sm:$0xff]
    %v992 = vld [vmem:[%s974 + $0x88] sm:$0xff]
    %v993 = vld [vmem:[%s974 + $0x90] sm:$0xff]
    %v994 = vld [vmem:[%s974 + $0x98] sm:$0xff]
    %v995 = vld [vmem:[%s974 + $0xa0] sm:$0xff]
    %v996 = vld [vmem:[%s974 + $0xa8] sm:$0xff]
    %v997 = vld [vmem:[%s974 + $0xb0] sm:$0xff]
    %v998 = vld [vmem:[%s974 + $0xb8] sm:$0xff]
    %v999 = vld [vmem:[%s974 + $0xc0] sm:$0xff]
    %v1000 = vld [vmem:[%s974 + $0xc8] sm:$0xff]
    %v1001 = vld [vmem:[%s974 + $0xd0] sm:$0xff]
    %v1002 = vld [vmem:[%s974 + $0xd8] sm:$0xff]
    %v1003 = vld [vmem:[%s974 + $0xe0] sm:$0xff]
    %v1004 = vld [vmem:[%s974 + $0xe8] sm:$0xff]
    %v1005 = vld [vmem:[%s974 + $0xf0] sm:$0xff]
    %v1006 = vld [vmem:[%s974 + $0xf8] sm:$0xff]
    %vm1015 = vcmask 1046528
    %v1016 = vrot.slane %v970, 1
    %v1017 = vrot.slane %v272, 1
    %v1018 = vsel %vm1015, %v1016, %v1017
    %v1019 = vrot.slane %v971, 1
    %v1020 = vrot.slane %v273, 1
    %v1021 = vsel %vm1015, %v1019, %v1020
    %v1022 = vrot.slane %v274, 1
    %v1023 = vsel %vm1015, %v1017, %v1022
    %v1024 = vrot.slane %v275, 1
    %v1025 = vsel %vm1015, %v1020, %v1024
    %v1026 = vrot.slane %v972, 1
    %v1027 = vsel %vm1015, %v1022, %v1026
    %v1028 = vrot.slane %v973, 1
    %v1029 = vsel %vm1015, %v1024, %v1028
    %v1070 = vunpack.c.l.b16 %v975
    %v1071 = vunpack.c.h.b16 %v975
    %v1072 = vunpack.c.l.b16 %v976
    %v1073 = vunpack.c.h.b16 %v976
    %v1074 = vunpack.c.l.b16 %v977
    %v1075 = vunpack.c.h.b16 %v977
    %v1076 = vunpack.c.l.b16 %v978
    %v1077 = vunpack.c.h.b16 %v978
    %v1078 = vunpack.c.l.b16 %v979
    %v1079 = vunpack.c.h.b16 %v979
    %v1080 = vunpack.c.l.b16 %v980
    %v1081 = vunpack.c.h.b16 %v980
    %v1082 = vunpack.c.l.b16 %v981
    %v1083 = vunpack.c.h.b16 %v981
    %v1084 = vunpack.c.l.b16 %v982
    %v1085 = vunpack.c.h.b16 %v982
    %v1086 = vunpack.c.l.b16 %v983
    %v1087 = vunpack.c.h.b16 %v983
    %v1088 = vunpack.c.l.b16 %v984
    %v1089 = vunpack.c.h.b16 %v984
    %v1090 = vunpack.c.l.b16 %v985
    %v1091 = vunpack.c.h.b16 %v985
    %v1092 = vunpack.c.l.b16 %v986
    %v1093 = vunpack.c.h.b16 %v986
    %v1094 = vunpack.c.l.b16 %v987
    %v1095 = vunpack.c.h.b16 %v987
    %v1096 = vunpack.c.l.b16 %v988
    %v1097 = vunpack.c.h.b16 %v988
    %v1098 = vunpack.c.l.b16 %v989
    %v1099 = vunpack.c.h.b16 %v989
    %v1100 = vunpack.c.l.b16 %v990
    %v1101 = vunpack.c.h.b16 %v990
    %v1102 = vunpack.c.l.b16 %v991
    %v1103 = vunpack.c.h.b16 %v991
    %v1104 = vunpack.c.l.b16 %v992
    %v1105 = vunpack.c.h.b16 %v992
    %v1106 = vunpack.c.l.b16 %v993
    %v1107 = vunpack.c.h.b16 %v993
    %v1108 = vunpack.c.l.b16 %v994
    %v1109 = vunpack.c.h.b16 %v994
    %v1110 = vunpack.c.l.b16 %v995
    %v1111 = vunpack.c.h.b16 %v995
    %v1112 = vunpack.c.l.b16 %v996
    %v1113 = vunpack.c.h.b16 %v996
    %v1114 = vunpack.c.l.b16 %v997
    %v1115 = vunpack.c.h.b16 %v997
    %v1116 = vunpack.c.l.b16 %v998
    %v1117 = vunpack.c.h.b16 %v998
    %v1118 = vunpack.c.l.b16 %v999
    %v1119 = vunpack.c.h.b16 %v999
    %v1120 = vunpack.c.l.b16 %v1000
    %v1121 = vunpack.c.h.b16 %v1000
    %v1122 = vunpack.c.l.b16 %v1001
    %v1123 = vunpack.c.h.b16 %v1001
    %v1124 = vunpack.c.l.b16 %v1002
    %v1125 = vunpack.c.h.b16 %v1002
    %v1126 = vunpack.c.l.b16 %v1003
    %v1127 = vunpack.c.h.b16 %v1003
    %v1128 = vunpack.c.l.b16 %v1004
    %v1129 = vunpack.c.h.b16 %v1004
    %v1130 = vunpack.c.l.b16 %v1005
    %v1131 = vunpack.c.h.b16 %v1005
    %v1132 = vunpack.c.l.b16 %v1006
    %v1133 = vunpack.c.h.b16 %v1006
    %v1134 = vpack.c.b16 %v1072, %v1070
    %v1135 = vpack.c.b16 %v1073, %v1071
    %v1136 = vpack.c.b16 %v1076, %v1074
    %v1137 = vpack.c.b16 %v1077, %v1075
    %v1138 = vpack.c.b16 %v1080, %v1078
    %v1139 = vpack.c.b16 %v1081, %v1079
    %v1140 = vpack.c.b16 %v1084, %v1082
    %v1141 = vpack.c.b16 %v1085, %v1083
    %v1142 = vpack.c.b16 %v1088, %v1086
    %v1143 = vpack.c.b16 %v1089, %v1087
    %v1144 = vpack.c.b16 %v1092, %v1090
    %v1145 = vpack.c.b16 %v1093, %v1091
    %v1146 = vpack.c.b16 %v1096, %v1094
    %v1147 = vpack.c.b16 %v1097, %v1095
    %v1148 = vpack.c.b16 %v1100, %v1098
    %v1149 = vpack.c.b16 %v1101, %v1099
    %v1150 = vpack.c.b16 %v1104, %v1102
    %v1151 = vpack.c.b16 %v1105, %v1103
    %v1152 = vpack.c.b16 %v1108, %v1106
    %v1153 = vpack.c.b16 %v1109, %v1107
    %v1154 = vpack.c.b16 %v1112, %v1110
    %v1155 = vpack.c.b16 %v1113, %v1111
    %v1156 = vpack.c.b16 %v1116, %v1114
    %v1157 = vpack.c.b16 %v1117, %v1115
    %v1158 = vpack.c.b16 %v1120, %v1118
    %v1159 = vpack.c.b16 %v1121, %v1119
    %v1160 = vpack.c.b16 %v1124, %v1122
    %v1161 = vpack.c.b16 %v1125, %v1123
    %v1162 = vpack.c.b16 %v1128, %v1126
    %v1163 = vpack.c.b16 %v1129, %v1127
    %v1164 = vpack.c.b16 %v1132, %v1130
    %v1165 = vpack.c.b16 %v1133, %v1131
    %1198 = vmatpush.bf16.msra.mxu0 %v1148
    %1199 = vmatpush.bf16.msra.mxu0 %v1146
    %1200 = vmatpush.bf16.msra.mxu0 %v1144
    %1201 = vmatpush.bf16.msra.mxu0 %v1142
    %1202 = vmatpush.bf16.msra.mxu0 %v1140
    %1203 = vmatpush.bf16.msra.mxu0 %v1138
    %1204 = vmatpush.bf16.msra.mxu0 %v1136
    %1205 = vmatpush.bf16.msra.mxu0 %v1134
    %1206 = vmatmul.bf16.gmra.mxu0 %v1018
    %v1207 = vpop.f32.mrf.mxu0
    %v1208 = vadd.f32 0.0, %v1207
    %v1209 = vpop.f32.mrf.mxu0
    %v1210 = vadd.f32 0.0, %v1209
    %1211 = vmatmul.bf16.gmra.mxu0 %v1023
    %v1212 = vpop.f32.mrf.mxu0
    %v1213 = vadd.f32 0.0, %v1212
    %v1214 = vpop.f32.mrf.mxu0
    %v1215 = vadd.f32 0.0, %v1214
    %1216 = vmatmul.bf16.gmra.mxu0 %v1027
    %v1217 = vpop.f32.mrf.mxu0
    %v1218 = vadd.f32 0.0, %v1217
    %v1219 = vpop.f32.mrf.mxu0
    %v1220 = vadd.f32 0.0, %v1219
    %1221 = vmatmul.bf16.gmra.mxu0 %v1026
    %v1222 = vpop.f32.mrf.mxu0
    %v1223 = vadd.f32 0.0, %v1222
    %v1224 = vpop.f32.mrf.mxu0
    %1225 = vdwg.mxu0
    %1226 = vmatpush.bf16.msra.mxu0 %v1164
    %1227 = vmatpush.bf16.msra.mxu0 %v1162
    %1228 = vmatpush.bf16.msra.mxu0 %v1160
    %1229 = vmatpush.bf16.msra.mxu0 %v1158
    %1230 = vmatpush.bf16.msra.mxu0 %v1156
    %1231 = vmatpush.bf16.msra.mxu0 %v1154
    %1232 = vmatpush.bf16.msra.mxu0 %v1152
    %1233 = vmatpush.bf16.msra.mxu0 %v1150
    %1234 = vmatmul.bf16.gmra.mxu0 %v1021
    %v1235 = vpop.f32.mrf.mxu0
    %v1236 = vadd.f32 %v1208, %v1235
    %v1237 = vpop.f32.mrf.mxu0
    %v1238 = vadd.f32 %v1210, %v1237
    %1239 = vmatmul.bf16.gmra.mxu0 %v1025
    %v1240 = vpop.f32.mrf.mxu0
    %v1241 = vadd.f32 %v1213, %v1240
    %v1242 = vpop.f32.mrf.mxu0
    %v1243 = vadd.f32 %v1215, %v1242
    %1244 = vmatmul.bf16.gmra.mxu0 %v1029
    %v1245 = vpop.f32.mrf.mxu0
    %v1246 = vadd.f32 %v1218, %v1245
    %v1247 = vpop.f32.mrf.mxu0
    %v1248 = vadd.f32 %v1220, %v1247
    %1249 = vmatmul.bf16.gmra.mxu0 %v1028
    %v1250 = vpop.f32.mrf.mxu0
    %v1251 = vadd.f32 %v1223, %v1250
    %v1252 = vpop.f32.mrf.mxu0
    %1253 = vdwg.mxu0
    %1254 = vmatpush.bf16.msra.mxu0 %v1149
    %1255 = vmatpush.bf16.msra.mxu0 %v1147
    %1256 = vmatpush.bf16.msra.mxu0 %v1145
    %1257 = vmatpush.bf16.msra.mxu0 %v1143
    %1258 = vmatpush.bf16.msra.mxu0 %v1141
    %1259 = vmatpush.bf16.msra.mxu0 %v1139
    %1260 = vmatpush.bf16.msra.mxu0 %v1137
    %1261 = vmatpush.bf16.msra.mxu0 %v1135
    %1262 = vmatmul.bf16.gmra.mxu0 %v1018
    %v1263 = vpop.f32.mrf.mxu0
    %v1264 = vadd.f32 0.0, %v1263
    %v1265 = vpop.f32.mrf.mxu0
    %v1266 = vadd.f32 0.0, %v1265
    %1267 = vmatmul.bf16.gmra.mxu0 %v1023
    %v1268 = vpop.f32.mrf.mxu0
    %v1269 = vadd.f32 0.0, %v1268
    %v1270 = vpop.f32.mrf.mxu0
    %v1271 = vadd.f32 0.0, %v1270
    %1272 = vmatmul.bf16.gmra.mxu0 %v1027
    %v1273 = vpop.f32.mrf.mxu0
    %v1274 = vadd.f32 0.0, %v1273
    %v1275 = vpop.f32.mrf.mxu0
    %v1276 = vadd.f32 0.0, %v1275
    %1277 = vmatmul.bf16.gmra.mxu0 %v1026
    %v1278 = vpop.f32.mrf.mxu0
    %v1279 = vadd.f32 0.0, %v1278
    %v1280 = vpop.f32.mrf.mxu0
    %1281 = vdwg.mxu0
    %1282 = vmatpush.bf16.msra.mxu0 %v1165
    %1283 = vmatpush.bf16.msra.mxu0 %v1163
    %1284 = vmatpush.bf16.msra.mxu0 %v1161
    %1285 = vmatpush.bf16.msra.mxu0 %v1159
    %1286 = vmatpush.bf16.msra.mxu0 %v1157
    %1287 = vmatpush.bf16.msra.mxu0 %v1155
    %1288 = vmatpush.bf16.msra.mxu0 %v1153
    %1289 = vmatpush.bf16.msra.mxu0 %v1151
    %1290 = vmatmul.bf16.gmra.mxu0 %v1021
    %v1291 = vpop.f32.mrf.mxu0
    %v1292 = vadd.f32 %v1264, %v1291
    %v1293 = vpop.f32.mrf.mxu0
    %v1294 = vadd.f32 %v1266, %v1293
    %1295 = vmatmul.bf16.gmra.mxu0 %v1025
    %v1296 = vpop.f32.mrf.mxu0
    %v1297 = vadd.f32 %v1269, %v1296
    %v1298 = vpop.f32.mrf.mxu0
    %v1299 = vadd.f32 %v1271, %v1298
    %1300 = vmatmul.bf16.gmra.mxu0 %v1029
    %v1301 = vpop.f32.mrf.mxu0
    %v1302 = vadd.f32 %v1274, %v1301
    %v1303 = vpop.f32.mrf.mxu0
    %v1304 = vadd.f32 %v1276, %v1303
    %1305 = vmatmul.bf16.gmra.mxu0 %v1028
    %v1306 = vpop.f32.mrf.mxu0
    %v1307 = vadd.f32 %v1279, %v1306
    %v1308 = vpop.f32.mrf.mxu0
    %1309 = vdwg.mxu0
    %v1310 = vadd.f32 %v892, %v1236
    %v1311 = vadd.f32 %v948, %v1292
    %v1312 = vadd.f32 %v894, %v1238
    %v1313 = vadd.f32 %v950, %v1294
    %v1314 = vadd.f32 %v897, %v1241
    %v1315 = vadd.f32 %v953, %v1297
    %v1316 = vadd.f32 %v899, %v1243
    %v1317 = vadd.f32 %v955, %v1299
    %v1318 = vadd.f32 %v902, %v1246
    %v1319 = vadd.f32 %v958, %v1302
    %v1320 = vadd.f32 %v904, %v1248
    %v1321 = vadd.f32 %v960, %v1304
    %v1322 = vadd.f32 %v907, %v1251
    %v1323 = vadd.f32 %v963, %v1307
    %v1324 = vld [vmem:[%s0] sm:$0xf8]
    %v1325 = vld [vmem:[%s0 + $0x8] sm:$0xf8]
    %v1326 = vld [vmem:[%s0 + $0x60] sm:$0xff]
    %v1327 = vld [vmem:[%s0 + $0x68] sm:$0xff]
    %v1328 = vpack.c.bf16 %v258, %v1324
    %v1329 = vpack.c.bf16 %v259, %v1325
    %v1330 = vpack.c.bf16 %v1326, %v1326
    %v1331 = vpack.c.bf16 %v1327, %v1327
    %s1332 = scalar_lea.vmem [#allocation2], 768
    %v1333 = vld [vmem:[%s1332] sm:$0xff]
    %v1334 = vld [vmem:[%s1332 + $0x8] sm:$0xff]
    %v1335 = vld [vmem:[%s1332 + $0x10] sm:$0xff]
    %v1336 = vld [vmem:[%s1332 + $0x18] sm:$0xff]
    %v1337 = vld [vmem:[%s1332 + $0x20] sm:$0xff]
    %v1338 = vld [vmem:[%s1332 + $0x28] sm:$0xff]
    %v1339 = vld [vmem:[%s1332 + $0x30] sm:$0xff]
    %v1340 = vld [vmem:[%s1332 + $0x38] sm:$0xff]
    %v1341 = vld [vmem:[%s1332 + $0x40] sm:$0xff]
    %v1342 = vld [vmem:[%s1332 + $0x48] sm:$0xff]
    %v1343 = vld [vmem:[%s1332 + $0x50] sm:$0xff]
    %v1344 = vld [vmem:[%s1332 + $0x58] sm:$0xff]
    %v1345 = vld [vmem:[%s1332 + $0x60] sm:$0xff]
    %v1346 = vld [vmem:[%s1332 + $0x68] sm:$0xff]
    %v1347 = vld [vmem:[%s1332 + $0x70] sm:$0xff]
    %v1348 = vld [vmem:[%s1332 + $0x78] sm:$0xff]
    %v1349 = vld [vmem:[%s1332 + $0x80] sm:$0xff]
    %v1350 = vld [vmem:[%s1332 + $0x88] sm:$0xff]
    %v1351 = vld [vmem:[%s1332 + $0x90] sm:$0xff]
    %v1352 = vld [vmem:[%s1332 + $0x98] sm:$0xff]
    %v1353 = vld [vmem:[%s1332 + $0xa0] sm:$0xff]
    %v1354 = vld [vmem:[%s1332 + $0xa8] sm:$0xff]
    %v1355 = vld [vmem:[%s1332 + $0xb0] sm:$0xff]
    %v1356 = vld [vmem:[%s1332 + $0xb8] sm:$0xff]
    %v1357 = vld [vmem:[%s1332 + $0xc0] sm:$0xff]
    %v1358 = vld [vmem:[%s1332 + $0xc8] sm:$0xff]
    %v1359 = vld [vmem:[%s1332 + $0xd0] sm:$0xff]
    %v1360 = vld [vmem:[%s1332 + $0xd8] sm:$0xff]
    %v1361 = vld [vmem:[%s1332 + $0xe0] sm:$0xff]
    %v1362 = vld [vmem:[%s1332 + $0xe8] sm:$0xff]
    %v1363 = vld [vmem:[%s1332 + $0xf0] sm:$0xff]
    %v1364 = vld [vmem:[%s1332 + $0xf8] sm:$0xff]
    %vm1365 = vsmask.f32 6400
    %v1367 = vshrl.u32 %v1328, 16
    %v1369 = vrot.slane %v1367, 1
    %v1370 = vshll.u32 %v1328, 16
    %v1372 = vrot.slane %v1370, 2
    %v1373 = vor.u32 %v1369, %v1372
    %v1374 = vrot.slane %v376, 1
    %v1375 = vrot.slane %v360, 2
    %v1376 = vor.u32 %v1374, %v1375
    %v1377 = vsel %vm1365, %v1373, %v1376
    %v1379 = vshrl.u32 %v1329, 16
    %v1381 = vrot.slane %v1379, 1
    %v1382 = vshll.u32 %v1329, 16
    %v1384 = vrot.slane %v1382, 2
    %v1385 = vor.u32 %v1381, %v1384
    %v1386 = vrot.slane %v384, 1
    %v1387 = vrot.slane %v372, 2
    %v1388 = vor.u32 %v1386, %v1387
    %v1389 = vsel %vm1365, %v1385, %v1388
    %v1390 = vrot.slane %v392, 1
    %v1391 = vrot.slane %v380, 2
    %v1392 = vor.u32 %v1390, %v1391
    %v1393 = vsel %vm1365, %v1376, %v1392
    %v1394 = vrot.slane %v400, 1
    %v1395 = vrot.slane %v388, 2
    %v1396 = vor.u32 %v1394, %v1395
    %v1397 = vsel %vm1365, %v1388, %v1396
    %v1399 = vshrl.u32 %v1330, 16
    %v1401 = vrot.slane %v1399, 1
    %v1402 = vshll.u32 %v1330, 16
    %v1404 = vrot.slane %v1402, 2
    %v1405 = vor.u32 %v1401, %v1404
    %v1406 = vsel %vm1365, %v1392, %v1405
    %v1408 = vshrl.u32 %v1331, 16
    %v1410 = vrot.slane %v1408, 1
    %v1411 = vshll.u32 %v1331, 16
    %v1413 = vrot.slane %v1411, 2
    %v1414 = vor.u32 %v1410, %v1413
    %v1415 = vsel %vm1365, %v1396, %v1414
    %v1456 = vunpack.c.l.b16 %v1333
    %v1457 = vunpack.c.h.b16 %v1333
    %v1458 = vunpack.c.l.b16 %v1334
    %v1459 = vunpack.c.h.b16 %v1334
    %v1460 = vunpack.c.l.b16 %v1335
    %v1461 = vunpack.c.h.b16 %v1335
    %v1462 = vunpack.c.l.b16 %v1336
    %v1463 = vunpack.c.h.b16 %v1336
    %v1464 = vunpack.c.l.b16 %v1337
    %v1465 = vunpack.c.h.b16 %v1337
    %v1466 = vunpack.c.l.b16 %v1338
    %v1467 = vunpack.c.h.b16 %v1338
    %v1468 = vunpack.c.l.b16 %v1339
    %v1469 = vunpack.c.h.b16 %v1339
    %v1470 = vunpack.c.l.b16 %v1340
    %v1471 = vunpack.c.h.b16 %v1340
    %v1472 = vunpack.c.l.b16 %v1341
    %v1473 = vunpack.c.h.b16 %v1341
    %v1474 = vunpack.c.l.b16 %v1342
    %v1475 = vunpack.c.h.b16 %v1342
    %v1476 = vunpack.c.l.b16 %v1343
    %v1477 = vunpack.c.h.b16 %v1343
    %v1478 = vunpack.c.l.b16 %v1344
    %v1479 = vunpack.c.h.b16 %v1344
    %v1480 = vunpack.c.l.b16 %v1345
    %v1481 = vunpack.c.h.b16 %v1345
    %v1482 = vunpack.c.l.b16 %v1346
    %v1483 = vunpack.c.h.b16 %v1346
    %v1484 = vunpack.c.l.b16 %v1347
    %v1485 = vunpack.c.h.b16 %v1347
    %v1486 = vunpack.c.l.b16 %v1348
    %v1487 = vunpack.c.h.b16 %v1348
    %v1488 = vunpack.c.l.b16 %v1349
    %v1489 = vunpack.c.h.b16 %v1349
    %v1490 = vunpack.c.l.b16 %v1350
    %v1491 = vunpack.c.h.b16 %v1350
    %v1492 = vunpack.c.l.b16 %v1351
    %v1493 = vunpack.c.h.b16 %v1351
    %v1494 = vunpack.c.l.b16 %v1352
    %v1495 = vunpack.c.h.b16 %v1352
    %v1496 = vunpack.c.l.b16 %v1353
    %v1497 = vunpack.c.h.b16 %v1353
    %v1498 = vunpack.c.l.b16 %v1354
    %v1499 = vunpack.c.h.b16 %v1354
    %v1500 = vunpack.c.l.b16 %v1355
    %v1501 = vunpack.c.h.b16 %v1355
    %v1502 = vunpack.c.l.b16 %v1356
    %v1503 = vunpack.c.h.b16 %v1356
    %v1504 = vunpack.c.l.b16 %v1357
    %v1505 = vunpack.c.h.b16 %v1357
    %v1506 = vunpack.c.l.b16 %v1358
    %v1507 = vunpack.c.h.b16 %v1358
    %v1508 = vunpack.c.l.b16 %v1359
    %v1509 = vunpack.c.h.b16 %v1359
    %v1510 = vunpack.c.l.b16 %v1360
    %v1511 = vunpack.c.h.b16 %v1360
    %v1512 = vunpack.c.l.b16 %v1361
    %v1513 = vunpack.c.h.b16 %v1361
    %v1514 = vunpack.c.l.b16 %v1362
    %v1515 = vunpack.c.h.b16 %v1362
    %v1516 = vunpack.c.l.b16 %v1363
    %v1517 = vunpack.c.h.b16 %v1363
    %v1518 = vunpack.c.l.b16 %v1364
    %v1519 = vunpack.c.h.b16 %v1364
    %v1520 = vpack.c.b16 %v1458, %v1456
    %v1521 = vpack.c.b16 %v1459, %v1457
    %v1522 = vpack.c.b16 %v1462, %v1460
    %v1523 = vpack.c.b16 %v1463, %v1461
    %v1524 = vpack.c.b16 %v1466, %v1464
    %v1525 = vpack.c.b16 %v1467, %v1465
    %v1526 = vpack.c.b16 %v1470, %v1468
    %v1527 = vpack.c.b16 %v1471, %v1469
    %v1528 = vpack.c.b16 %v1474, %v1472
    %v1529 = vpack.c.b16 %v1475, %v1473
    %v1530 = vpack.c.b16 %v1478, %v1476
    %v1531 = vpack.c.b16 %v1479, %v1477
    %v1532 = vpack.c.b16 %v1482, %v1480
    %v1533 = vpack.c.b16 %v1483, %v1481
    %v1534 = vpack.c.b16 %v1486, %v1484
    %v1535 = vpack.c.b16 %v1487, %v1485
    %v1536 = vpack.c.b16 %v1490, %v1488
    %v1537 = vpack.c.b16 %v1491, %v1489
    %v1538 = vpack.c.b16 %v1494, %v1492
    %v1539 = vpack.c.b16 %v1495, %v1493
    %v1540 = vpack.c.b16 %v1498, %v1496
    %v1541 = vpack.c.b16 %v1499, %v1497
    %v1542 = vpack.c.b16 %v1502, %v1500
    %v1543 = vpack.c.b16 %v1503, %v1501
    %v1544 = vpack.c.b16 %v1506, %v1504
    %v1545 = vpack.c.b16 %v1507, %v1505
    %v1546 = vpack.c.b16 %v1510, %v1508
    %v1547 = vpack.c.b16 %v1511, %v1509
    %v1548 = vpack.c.b16 %v1514, %v1512
    %v1549 = vpack.c.b16 %v1515, %v1513
    %v1550 = vpack.c.b16 %v1518, %v1516
    %v1551 = vpack.c.b16 %v1519, %v1517
    %1584 = vmatpush.bf16.msra.mxu0 %v1534
    %1585 = vmatpush.bf16.msra.mxu0 %v1532
    %1586 = vmatpush.bf16.msra.mxu0 %v1530
    %1587 = vmatpush.bf16.msra.mxu0 %v1528
    %1588 = vmatpush.bf16.msra.mxu0 %v1526
    %1589 = vmatpush.bf16.msra.mxu0 %v1524
    %1590 = vmatpush.bf16.msra.mxu0 %v1522
    %1591 = vmatpush.bf16.msra.mxu0 %v1520
    %1592 = vmatmul.bf16.gmra.mxu0 %v1377
    %v1593 = vpop.f32.mrf.mxu0
    %v1594 = vadd.f32 0.0, %v1593
    %v1595 = vpop.f32.mrf.mxu0
    %v1596 = vadd.f32 0.0, %v1595
    %1597 = vmatmul.bf16.gmra.mxu0 %v1393
    %v1598 = vpop.f32.mrf.mxu0
    %v1599 = vadd.f32 0.0, %v1598
    %v1600 = vpop.f32.mrf.mxu0
    %v1601 = vadd.f32 0.0, %v1600
    %1602 = vmatmul.bf16.gmra.mxu0 %v1406
    %v1603 = vpop.f32.mrf.mxu0
    %v1604 = vadd.f32 0.0, %v1603
    %v1605 = vpop.f32.mrf.mxu0
    %v1606 = vadd.f32 0.0, %v1605
    %1607 = vmatmul.bf16.gmra.mxu0 %v1405
    %v1608 = vpop.f32.mrf.mxu0
    %v1609 = vadd.f32 0.0, %v1608
    %v1610 = vpop.f32.mrf.mxu0
    %1611 = vdwg.mxu0
    %1612 = vmatpush.bf16.msra.mxu0 %v1550
    %1613 = vmatpush.bf16.msra.mxu0 %v1548
    %1614 = vmatpush.bf16.msra.mxu0 %v1546
    %1615 = vmatpush.bf16.msra.mxu0 %v1544
    %1616 = vmatpush.bf16.msra.mxu0 %v1542
    %1617 = vmatpush.bf16.msra.mxu0 %v1540
    %1618 = vmatpush.bf16.msra.mxu0 %v1538
    %1619 = vmatpush.bf16.msra.mxu0 %v1536
    %1620 = vmatmul.bf16.gmra.mxu0 %v1389
    %v1621 = vpop.f32.mrf.mxu0
    %v1622 = vadd.f32 %v1594, %v1621
    %v1623 = vpop.f32.mrf.mxu0
    %v1624 = vadd.f32 %v1596, %v1623
    %1625 = vmatmul.bf16.gmra.mxu0 %v1397
    %v1626 = vpop.f32.mrf.mxu0
    %v1627 = vadd.f32 %v1599, %v1626
    %v1628 = vpop.f32.mrf.mxu0
    %v1629 = vadd.f32 %v1601, %v1628
    %1630 = vmatmul.bf16.gmra.mxu0 %v1415
    %v1631 = vpop.f32.mrf.mxu0
    %v1632 = vadd.f32 %v1604, %v1631
    %v1633 = vpop.f32.mrf.mxu0
    %v1634 = vadd.f32 %v1606, %v1633
    %1635 = vmatmul.bf16.gmra.mxu0 %v1414
    %v1636 = vpop.f32.mrf.mxu0
    %v1637 = vadd.f32 %v1609, %v1636
    %v1638 = vpop.f32.mrf.mxu0
    %1639 = vdwg.mxu0
    %1640 = vmatpush.bf16.msra.mxu0 %v1535
    %1641 = vmatpush.bf16.msra.mxu0 %v1533
    %1642 = vmatpush.bf16.msra.mxu0 %v1531
    %1643 = vmatpush.bf16.msra.mxu0 %v1529
    %1644 = vmatpush.bf16.msra.mxu0 %v1527
    %1645 = vmatpush.bf16.msra.mxu0 %v1525
    %1646 = vmatpush.bf16.msra.mxu0 %v1523
    %1647 = vmatpush.bf16.msra.mxu0 %v1521
    %1648 = vmatmul.bf16.gmra.mxu0 %v1377
    %v1649 = vpop.f32.mrf.mxu0
    %v1650 = vadd.f32 0.0, %v1649
    %v1651 = vpop.f32.mrf.mxu0
    %v1652 = vadd.f32 0.0, %v1651
    %1653 = vmatmul.bf16.gmra.mxu0 %v1393
    %v1654 = vpop.f32.mrf.mxu0
    %v1655 = vadd.f32 0.0, %v1654
    %v1656 = vpop.f32.mrf.mxu0
    %v1657 = vadd.f32 0.0, %v1656
    %1658 = vmatmul.bf16.gmra.mxu0 %v1406
    %v1659 = vpop.f32.mrf.mxu0
    %v1660 = vadd.f32 0.0, %v1659
    %v1661 = vpop.f32.mrf.mxu0
    %v1662 = vadd.f32 0.0, %v1661
    %1663 = vmatmul.bf16.gmra.mxu0 %v1405
    %v1664 = vpop.f32.mrf.mxu0
    %v1665 = vadd.f32 0.0, %v1664
    %v1666 = vpop.f32.mrf.mxu0
    %1667 = vdwg.mxu0
    %1668 = vmatpush.bf16.msra.mxu0 %v1551
    %1669 = vmatpush.bf16.msra.mxu0 %v1549
    %1670 = vmatpush.bf16.msra.mxu0 %v1547
    %1671 = vmatpush.bf16.msra.mxu0 %v1545
    %1672 = vmatpush.bf16.msra.mxu0 %v1543
    %1673 = vmatpush.bf16.msra.mxu0 %v1541
    %1674 = vmatpush.bf16.msra.mxu0 %v1539
    %1675 = vmatpush.bf16.msra.mxu0 %v1537
    %1676 = vmatmul.bf16.gmra.mxu0 %v1389
    %v1677 = vpop.f32.mrf.mxu0
    %v1678 = vadd.f32 %v1650, %v1677
    %v1679 = vpop.f32.mrf.mxu0
    %v1680 = vadd.f32 %v1652, %v1679
    %1681 = vmatmul.bf16.gmra.mxu0 %v1397
    %v1682 = vpop.f32.mrf.mxu0
    %v1683 = vadd.f32 %v1655, %v1682
    %v1684 = vpop.f32.mrf.mxu0
    %v1685 = vadd.f32 %v1657, %v1684
    %1686 = vmatmul.bf16.gmra.mxu0 %v1415
    %v1687 = vpop.f32.mrf.mxu0
    %v1688 = vadd.f32 %v1660, %v1687
    %v1689 = vpop.f32.mrf.mxu0
    %v1690 = vadd.f32 %v1662, %v1689
    %1691 = vmatmul.bf16.gmra.mxu0 %v1414
    %v1692 = vpop.f32.mrf.mxu0
    %v1693 = vadd.f32 %v1665, %v1692
    %v1694 = vpop.f32.mrf.mxu0
    %1695 = vdwg.mxu0
    %v1696 = vadd.f32 %v1310, %v1622
    %v1697 = vadd.f32 %v1311, %v1678
    %v1698 = vadd.f32 %v1312, %v1624
    %v1699 = vadd.f32 %v1313, %v1680
    %v1700 = vadd.f32 %v1314, %v1627
    %v1701 = vadd.f32 %v1315, %v1683
    %v1702 = vadd.f32 %v1316, %v1629
    %v1703 = vadd.f32 %v1317, %v1685
    %v1704 = vadd.f32 %v1318, %v1632
    %v1705 = vadd.f32 %v1319, %v1688
    %v1706 = vadd.f32 %v1320, %v1634
    %v1707 = vadd.f32 %v1321, %v1690
    %v1708 = vadd.f32 %v1322, %v1637
    %v1709 = vadd.f32 %v1323, %v1693
    %v1710 = vmul.f32 %v1696, 0.2
    %v1711 = vmul.f32 %v1697, 0.2
    %v1712 = vmul.f32 %v1698, 0.2
    %v1713 = vmul.f32 %v1699, 0.2
    %v1714 = vmul.f32 %v1700, 0.2
    %v1715 = vmul.f32 %v1701, 0.2
    %v1716 = vmul.f32 %v1702, 0.2
    %v1717 = vmul.f32 %v1703, 0.2
    %v1718 = vmul.f32 %v1704, 0.2
    %v1719 = vmul.f32 %v1705, 0.2
    %v1720 = vmul.f32 %v1706, 0.2
    %v1721 = vmul.f32 %v1707, 0.2
    %v1722 = vmul.f32 %v1708, 0.2
    %v1723 = vmul.f32 %v1709, 0.2
    %v1724 = vmax.f32 %v1696, %v1710
    %v1725 = vmax.f32 %v1697, %v1711
    %v1726 = vmax.f32 %v1698, %v1712
    %v1727 = vmax.f32 %v1699, %v1713
    %v1728 = vmax.f32 %v1700, %v1714
    %v1729 = vmax.f32 %v1701, %v1715
    %v1730 = vmax.f32 %v1702, %v1716
    %v1731 = vmax.f32 %v1703, %v1717
    %v1732 = vmax.f32 %v1704, %v1718
    %v1733 = vmax.f32 %v1705, %v1719
    %v1734 = vmax.f32 %v1706, %v1720
    %v1735 = vmax.f32 %v1707, %v1721
    %v1736 = vmax.f32 %v1708, %v1722
    %v1737 = vmax.f32 %v1709, %v1723
    %1738 = vst [vmem:[#allocation4] sm:$0xff] %v1724
    %1739 = vst [vmem:[#allocation4 + $0x8] sm:$0xff] %v1725
    %1740 = vst [vmem:[#allocation4 + $0x10] sm:$0xff] %v1726
    %1741 = vst [vmem:[#allocation4 + $0x18] sm:$0xff] %v1727
    %1742 = vst [vmem:[#allocation4 + $0x20] sm:$0xff] %v1728
    %1743 = vst [vmem:[#allocation4 + $0x28] sm:$0xff] %v1729
    %1744 = vst [vmem:[#allocation4 + $0x30] sm:$0xff] %v1730
    %1745 = vst [vmem:[#allocation4 + $0x38] sm:$0xff] %v1731
    %1746 = vst [vmem:[#allocation4 + $0x40] sm:$0xff] %v1732
    %1747 = vst [vmem:[#allocation4 + $0x48] sm:$0xff] %v1733
    %1748 = vst [vmem:[#allocation4 + $0x50] sm:$0xff] %v1734
    %1749 = vst [vmem:[#allocation4 + $0x58] sm:$0xff] %v1735
    %1750 = vst [vmem:[#allocation4 + $0x60] sm:$0x1f] %v1736
    %1751 = vst [vmem:[#allocation4 + $0x68] sm:$0x1f] %v1737
    %s1752 = sshll.u32 %s253, 4
    %1753 = dma.done %s189, %s1752
    %v1754 = vld [vmem:[#allocation4] sm:$0xff]
    %v1755 = vld [vmem:[#allocation4 + $0x8] sm:$0xff]
    %v1756 = vld [vmem:[#allocation4 + $0x10] sm:$0xff]
    %v1757 = vld [vmem:[#allocation4 + $0x18] sm:$0xff]
    %v1758 = vld [vmem:[#allocation4 + $0x20] sm:$0xff]
    %v1759 = vld [vmem:[#allocation4 + $0x28] sm:$0xff]
    %v1760 = vld [vmem:[#allocation4 + $0x30] sm:$0xff]
    %v1761 = vld [vmem:[#allocation4 + $0x38] sm:$0xff]
    %v1762 = vld [vmem:[#allocation4 + $0x40] sm:$0xff]
    %v1763 = vld [vmem:[#allocation4 + $0x48] sm:$0xff]
    %v1764 = vld [vmem:[#allocation4 + $0x50] sm:$0xff]
    %v1765 = vld [vmem:[#allocation4 + $0x58] sm:$0xff]
    %v1766 = vld [vmem:[#allocation4 + $0x60] sm:$0x3]
    %v1767 = vld [vmem:[#allocation4 + $0x68] sm:$0x3]
    %v1768 = vpack.c.bf16 %v1756, %v1754
    %v1769 = vpack.c.bf16 %v1757, %v1755
    %v1770 = vpack.c.bf16 %v1760, %v1758
    %v1771 = vpack.c.bf16 %v1761, %v1759
    %v1772 = vpack.c.bf16 %v1764, %v1762
    %v1773 = vpack.c.bf16 %v1765, %v1763
    %v1774 = vpack.c.bf16 %v1766, %v1766
    %v1775 = vpack.c.bf16 %v1767, %v1767
    %v1776 = vld [vmem:[%s188] sm:$0xff]
    %v1777 = vld [vmem:[%s188 + $0x8] sm:$0xff]
    %v1778 = vld [vmem:[%s188 + $0x10] sm:$0xff]
    %v1779 = vld [vmem:[%s188 + $0x18] sm:$0xff]
    %v1780 = vld [vmem:[%s188 + $0x20] sm:$0xff]
    %v1781 = vld [vmem:[%s188 + $0x28] sm:$0xff]
    %v1782 = vld [vmem:[%s188 + $0x30] sm:$0xff]
    %v1783 = vld [vmem:[%s188 + $0x38] sm:$0xff]
    %v1784 = vld [vmem:[%s188 + $0x40] sm:$0xff]
    %v1785 = vld [vmem:[%s188 + $0x48] sm:$0xff]
    %v1786 = vld [vmem:[%s188 + $0x50] sm:$0xff]
    %v1787 = vld [vmem:[%s188 + $0x58] sm:$0xff]
    %v1788 = vld [vmem:[%s188 + $0x60] sm:$0xff]
    %v1789 = vld [vmem:[%s188 + $0x68] sm:$0xff]
    %v1790 = vld [vmem:[%s188 + $0x70] sm:$0xff]
    %v1791 = vld [vmem:[%s188 + $0x78] sm:$0xff]
    %v1792 = vld [vmem:[%s188 + $0x80] sm:$0xff]
    %v1793 = vld [vmem:[%s188 + $0x88] sm:$0xff]
    %v1794 = vld [vmem:[%s188 + $0x90] sm:$0xff]
    %v1795 = vld [vmem:[%s188 + $0x98] sm:$0xff]
    %v1796 = vld [vmem:[%s188 + $0xa0] sm:$0xff]
    %v1797 = vld [vmem:[%s188 + $0xa8] sm:$0xff]
    %v1798 = vld [vmem:[%s188 + $0xb0] sm:$0xff]
    %v1799 = vld [vmem:[%s188 + $0xb8] sm:$0xff]
    %v1800 = vld [vmem:[%s188 + $0xc0] sm:$0xff]
    %v1801 = vld [vmem:[%s188 + $0xc8] sm:$0xff]
    %v1802 = vld [vmem:[%s188 + $0xd0] sm:$0xff]
    %v1803 = vld [vmem:[%s188 + $0xd8] sm:$0xff]
    %v1804 = vld [vmem:[%s188 + $0xe0] sm:$0xff]
    %v1805 = vld [vmem:[%s188 + $0xe8] sm:$0xff]
    %v1806 = vld [vmem:[%s188 + $0xf0] sm:$0xff]
    %v1807 = vld [vmem:[%s188 + $0xf8] sm:$0xff]
    %v1808 = vld [vmem:[#allocation4] sm:$0xfe]
    %v1809 = vld [vmem:[#allocation4 + $0x8] sm:$0xfe]
    %v1810 = vld [vmem:[#allocation4 + $0x60] sm:$0x7]
    %v1811 = vld [vmem:[#allocation4 + $0x68] sm:$0x7]
    %v1812 = vpack.c.bf16 %v1756, %v1808
    %v1813 = vpack.c.bf16 %v1757, %v1809
    %v1814 = vpack.c.bf16 %v1810, %v1810
    %v1815 = vpack.c.bf16 %v1811, %v1811
    %s1816 = scalar_lea.vmem [#allocation2], 1280
    %v1817 = vld [vmem:[%s1816] sm:$0xff]
    %v1818 = vld [vmem:[%s1816 + $0x8] sm:$0xff]
    %v1819 = vld [vmem:[%s1816 + $0x10] sm:$0xff]
    %v1820 = vld [vmem:[%s1816 + $0x18] sm:$0xff]
    %v1821 = vld [vmem:[%s1816 + $0x20] sm:$0xff]
    %v1822 = vld [vmem:[%s1816 + $0x28] sm:$0xff]
    %v1823 = vld [vmem:[%s1816 + $0x30] sm:$0xff]
    %v1824 = vld [vmem:[%s1816 + $0x38] sm:$0xff]
    %v1825 = vld [vmem:[%s1816 + $0x40] sm:$0xff]
    %v1826 = vld [vmem:[%s1816 + $0x48] sm:$0xff]
    %v1827 = vld [vmem:[%s1816 + $0x50] sm:$0xff]
    %v1828 = vld [vmem:[%s1816 + $0x58] sm:$0xff]
    %v1829 = vld [vmem:[%s1816 + $0x60] sm:$0xff]
    %v1830 = vld [vmem:[%s1816 + $0x68] sm:$0xff]
    %v1831 = vld [vmem:[%s1816 + $0x70] sm:$0xff]
    %v1832 = vld [vmem:[%s1816 + $0x78] sm:$0xff]
    %v1833 = vld [vmem:[%s1816 + $0x80] sm:$0xff]
    %v1834 = vld [vmem:[%s1816 + $0x88] sm:$0xff]
    %v1835 = vld [vmem:[%s1816 + $0x90] sm:$0xff]
    %v1836 = vld [vmem:[%s1816 + $0x98] sm:$0xff]
    %v1837 = vld [vmem:[%s1816 + $0xa0] sm:$0xff]
    %v1838 = vld [vmem:[%s1816 + $0xa8] sm:$0xff]
    %v1839 = vld [vmem:[%s1816 + $0xb0] sm:$0xff]
    %v1840 = vld [vmem:[%s1816 + $0xb8] sm:$0xff]
    %v1841 = vld [vmem:[%s1816 + $0xc0] sm:$0xff]
    %v1842 = vld [vmem:[%s1816 + $0xc8] sm:$0xff]
    %v1843 = vld [vmem:[%s1816 + $0xd0] sm:$0xff]
    %v1844 = vld [vmem:[%s1816 + $0xd8] sm:$0xff]
    %v1845 = vld [vmem:[%s1816 + $0xe0] sm:$0xff]
    %v1846 = vld [vmem:[%s1816 + $0xe8] sm:$0xff]
    %v1847 = vld [vmem:[%s1816 + $0xf0] sm:$0xff]
    %v1848 = vld [vmem:[%s1816 + $0xf8] sm:$0xff]
    %v1850 = vshrl.u32 %v1812, 16
    %v1852 = vshll.u32 %v1812, 16
    %v1854 = vrot.slane %v1852, 1
    %v1855 = vor.u32 %v1850, %v1854
    %v1857 = vshll.u32 %v1770, 16
    %v1859 = vrot.slane %v1857, 1
    %v1860 = vsel %vm351, %v1855, %v1859
    %v1862 = vshrl.u32 %v1813, 16
    %v1864 = vshll.u32 %v1813, 16
    %v1866 = vrot.slane %v1864, 1
    %v1867 = vor.u32 %v1862, %v1866
    %v1869 = vshll.u32 %v1771, 16
    %v1871 = vrot.slane %v1869, 1
    %v1872 = vsel %vm351, %v1867, %v1871
    %v1873 = vshrl.u32 %v1770, 16
    %v1875 = vor.u32 %v1873, %v1859
    %v1877 = vshll.u32 %v1772, 16
    %v1879 = vrot.slane %v1877, 1
    %v1880 = vsel %vm351, %v1875, %v1879
    %v1881 = vshrl.u32 %v1771, 16
    %v1883 = vor.u32 %v1881, %v1871
    %v1885 = vshll.u32 %v1773, 16
    %v1887 = vrot.slane %v1885, 1
    %v1888 = vsel %vm351, %v1883, %v1887
    %v1889 = vshrl.u32 %v1772, 16
    %v1891 = vor.u32 %v1889, %v1879
    %v1893 = vshll.u32 %v1814, 16
    %v1895 = vrot.slane %v1893, 1
    %v1896 = vsel %vm351, %v1891, %v1895
    %v1897 = vshrl.u32 %v1773, 16
    %v1899 = vor.u32 %v1897, %v1887
    %v1901 = vshll.u32 %v1815, 16
    %v1903 = vrot.slane %v1901, 1
    %v1904 = vsel %vm351, %v1899, %v1903
    %v1905 = vshrl.u32 %v1814, 16
    %v1907 = vor.u32 %v1905, %v1895
    %v1908 = vshrl.u32 %v1815, 16
    %v1910 = vor.u32 %v1908, %v1903
    %v1951 = vunpack.c.l.b16 %v1817
    %v1952 = vunpack.c.h.b16 %v1817
    %v1953 = vunpack.c.l.b16 %v1818
    %v1954 = vunpack.c.h.b16 %v1818
    %v1955 = vunpack.c.l.b16 %v1819
    %v1956 = vunpack.c.h.b16 %v1819
    %v1957 = vunpack.c.l.b16 %v1820
    %v1958 = vunpack.c.h.b16 %v1820
    %v1959 = vunpack.c.l.b16 %v1821
    %v1960 = vunpack.c.h.b16 %v1821
    %v1961 = vunpack.c.l.b16 %v1822
    %v1962 = vunpack.c.h.b16 %v1822
    %v1963 = vunpack.c.l.b16 %v1823
    %v1964 = vunpack.c.h.b16 %v1823
    %v1965 = vunpack.c.l.b16 %v1824
    %v1966 = vunpack.c.h.b16 %v1824
    %v1967 = vunpack.c.l.b16 %v1825
    %v1968 = vunpack.c.h.b16 %v1825
    %v1969 = vunpack.c.l.b16 %v1826
    %v1970 = vunpack.c.h.b16 %v1826
    %v1971 = vunpack.c.l.b16 %v1827
    %v1972 = vunpack.c.h.b16 %v1827
    %v1973 = vunpack.c.l.b16 %v1828
    %v1974 = vunpack.c.h.b16 %v1828
    %v1975 = vunpack.c.l.b16 %v1829
    %v1976 = vunpack.c.h.b16 %v1829
    %v1977 = vunpack.c.l.b16 %v1830
    %v1978 = vunpack.c.h.b16 %v1830
    %v1979 = vunpack.c.l.b16 %v1831
    %v1980 = vunpack.c.h.b16 %v1831
    %v1981 = vunpack.c.l.b16 %v1832
    %v1982 = vunpack.c.h.b16 %v1832
    %v1983 = vunpack.c.l.b16 %v1833
    %v1984 = vunpack.c.h.b16 %v1833
    %v1985 = vunpack.c.l.b16 %v1834
    %v1986 = vunpack.c.h.b16 %v1834
    %v1987 = vunpack.c.l.b16 %v1835
    %v1988 = vunpack.c.h.b16 %v1835
    %v1989 = vunpack.c.l.b16 %v1836
    %v1990 = vunpack.c.h.b16 %v1836
    %v1991 = vunpack.c.l.b16 %v1837
    %v1992 = vunpack.c.h.b16 %v1837
    %v1993 = vunpack.c.l.b16 %v1838
    %v1994 = vunpack.c.h.b16 %v1838
    %v1995 = vunpack.c.l.b16 %v1839
    %v1996 = vunpack.c.h.b16 %v1839
    %v1997 = vunpack.c.l.b16 %v1840
    %v1998 = vunpack.c.h.b16 %v1840
    %v1999 = vunpack.c.l.b16 %v1841
    %v2000 = vunpack.c.h.b16 %v1841
    %v2001 = vunpack.c.l.b16 %v1842
    %v2002 = vunpack.c.h.b16 %v1842
    %v2003 = vunpack.c.l.b16 %v1843
    %v2004 = vunpack.c.h.b16 %v1843
    %v2005 = vunpack.c.l.b16 %v1844
    %v2006 = vunpack.c.h.b16 %v1844
    %v2007 = vunpack.c.l.b16 %v1845
    %v2008 = vunpack.c.h.b16 %v1845
    %v2009 = vunpack.c.l.b16 %v1846
    %v2010 = vunpack.c.h.b16 %v1846
    %v2011 = vunpack.c.l.b16 %v1847
    %v2012 = vunpack.c.h.b16 %v1847
    %v2013 = vunpack.c.l.b16 %v1848
    %v2014 = vunpack.c.h.b16 %v1848
    %v2015 = vpack.c.b16 %v1953, %v1951
    %v2016 = vpack.c.b16 %v1954, %v1952
    %v2017 = vpack.c.b16 %v1957, %v1955
    %v2018 = vpack.c.b16 %v1958, %v1956
    %v2019 = vpack.c.b16 %v1961, %v1959
    %v2020 = vpack.c.b16 %v1962, %v1960
    %v2021 = vpack.c.b16 %v1965, %v1963
    %v2022 = vpack.c.b16 %v1966, %v1964
    %v2023 = vpack.c.b16 %v1969, %v1967
    %v2024 = vpack.c.b16 %v1970, %v1968
    %v2025 = vpack.c.b16 %v1973, %v1971
    %v2026 = vpack.c.b16 %v1974, %v1972
    %v2027 = vpack.c.b16 %v1977, %v1975
    %v2028 = vpack.c.b16 %v1978, %v1976
    %v2029 = vpack.c.b16 %v1981, %v1979
    %v2030 = vpack.c.b16 %v1982, %v1980
    %v2031 = vpack.c.b16 %v1985, %v1983
    %v2032 = vpack.c.b16 %v1986, %v1984
    %v2033 = vpack.c.b16 %v1989, %v1987
    %v2034 = vpack.c.b16 %v1990, %v1988
    %v2035 = vpack.c.b16 %v1993, %v1991
    %v2036 = vpack.c.b16 %v1994, %v1992
    %v2037 = vpack.c.b16 %v1997, %v1995
    %v2038 = vpack.c.b16 %v1998, %v1996
    %v2039 = vpack.c.b16 %v2001, %v1999
    %v2040 = vpack.c.b16 %v2002, %v2000
    %v2041 = vpack.c.b16 %v2005, %v2003
    %v2042 = vpack.c.b16 %v2006, %v2004
    %v2043 = vpack.c.b16 %v2009, %v2007
    %v2044 = vpack.c.b16 %v2010, %v2008
    %v2045 = vpack.c.b16 %v2013, %v2011
    %v2046 = vpack.c.b16 %v2014, %v2012
    %2079 = vmatpush.bf16.msra.mxu0 %v2029
    %2080 = vmatpush.bf16.msra.mxu0 %v2027
    %2081 = vmatpush.bf16.msra.mxu0 %v2025
    %2082 = vmatpush.bf16.msra.mxu0 %v2023
    %2083 = vmatpush.bf16.msra.mxu0 %v2021
    %2084 = vmatpush.bf16.msra.mxu0 %v2019
    %2085 = vmatpush.bf16.msra.mxu0 %v2017
    %2086 = vmatpush.bf16.msra.mxu0 %v2015
    %2087 = vmatmul.bf16.gmra.mxu0 %v1860
    %v2088 = vpop.f32.mrf.mxu0
    %v2089 = vadd.f32 0.0, %v2088
    %v2090 = vpop.f32.mrf.mxu0
    %v2091 = vadd.f32 0.0, %v2090
    %2092 = vmatmul.bf16.gmra.mxu0 %v1880
    %v2093 = vpop.f32.mrf.mxu0
    %v2094 = vadd.f32 0.0, %v2093
    %v2095 = vpop.f32.mrf.mxu0
    %v2096 = vadd.f32 0.0, %v2095
    %2097 = vmatmul.bf16.gmra.mxu0 %v1896
    %v2098 = vpop.f32.mrf.mxu0
    %v2099 = vadd.f32 0.0, %v2098
    %v2100 = vpop.f32.mrf.mxu0
    %v2101 = vadd.f32 0.0, %v2100
    %2102 = vmatmul.bf16.gmra.mxu0 %v1907
    %v2103 = vpop.f32.mrf.mxu0
    %v2104 = vadd.f32 0.0, %v2103
    %v2105 = vpop.f32.mrf.mxu0
    %2106 = vdwg.mxu0
    %2107 = vmatpush.bf16.msra.mxu0 %v2045
    %2108 = vmatpush.bf16.msra.mxu0 %v2043
    %2109 = vmatpush.bf16.msra.mxu0 %v2041
    %2110 = vmatpush.bf16.msra.mxu0 %v2039
    %2111 = vmatpush.bf16.msra.mxu0 %v2037
    %2112 = vmatpush.bf16.msra.mxu0 %v2035
    %2113 = vmatpush.bf16.msra.mxu0 %v2033
    %2114 = vmatpush.bf16.msra.mxu0 %v2031
    %2115 = vmatmul.bf16.gmra.mxu0 %v1872
    %v2116 = vpop.f32.mrf.mxu0
    %v2117 = vadd.f32 %v2089, %v2116
    %v2118 = vpop.f32.mrf.mxu0
    %v2119 = vadd.f32 %v2091, %v2118
    %2120 = vmatmul.bf16.gmra.mxu0 %v1888
    %v2121 = vpop.f32.mrf.mxu0
    %v2122 = vadd.f32 %v2094, %v2121
    %v2123 = vpop.f32.mrf.mxu0
    %v2124 = vadd.f32 %v2096, %v2123
    %2125 = vmatmul.bf16.gmra.mxu0 %v1904
    %v2126 = vpop.f32.mrf.mxu0
    %v2127 = vadd.f32 %v2099, %v2126
    %v2128 = vpop.f32.mrf.mxu0
    %v2129 = vadd.f32 %v2101, %v2128
    %2130 = vmatmul.bf16.gmra.mxu0 %v1910
    %v2131 = vpop.f32.mrf.mxu0
    %v2132 = vadd.f32 %v2104, %v2131
    %v2133 = vpop.f32.mrf.mxu0
    %2134 = vdwg.mxu0
    %2135 = vmatpush.bf16.msra.mxu0 %v2030
    %2136 = vmatpush.bf16.msra.mxu0 %v2028
    %2137 = vmatpush.bf16.msra.mxu0 %v2026
    %2138 = vmatpush.bf16.msra.mxu0 %v2024
    %2139 = vmatpush.bf16.msra.mxu0 %v2022
    %2140 = vmatpush.bf16.msra.mxu0 %v2020
    %2141 = vmatpush.bf16.msra.mxu0 %v2018
    %2142 = vmatpush.bf16.msra.mxu0 %v2016
    %2143 = vmatmul.bf16.gmra.mxu0 %v1860
    %v2144 = vpop.f32.mrf.mxu0
    %v2145 = vadd.f32 0.0, %v2144
    %v2146 = vpop.f32.mrf.mxu0
    %v2147 = vadd.f32 0.0, %v2146
    %2148 = vmatmul.bf16.gmra.mxu0 %v1880
    %v2149 = vpop.f32.mrf.mxu0
    %v2150 = vadd.f32 0.0, %v2149
    %v2151 = vpop.f32.mrf.mxu0
    %v2152 = vadd.f32 0.0, %v2151
    %2153 = vmatmul.bf16.gmra.mxu0 %v1896
    %v2154 = vpop.f32.mrf.mxu0
    %v2155 = vadd.f32 0.0, %v2154
    %v2156 = vpop.f32.mrf.mxu0
    %v2157 = vadd.f32 0.0, %v2156
    %2158 = vmatmul.bf16.gmra.mxu0 %v1907
    %v2159 = vpop.f32.mrf.mxu0
    %v2160 = vadd.f32 0.0, %v2159
    %v2161 = vpop.f32.mrf.mxu0
    %2162 = vdwg.mxu0
    %2163 = vmatpush.bf16.msra.mxu0 %v2046
    %2164 = vmatpush.bf16.msra.mxu0 %v2044
    %2165 = vmatpush.bf16.msra.mxu0 %v2042
    %2166 = vmatpush.bf16.msra.mxu0 %v2040
    %2167 = vmatpush.bf16.msra.mxu0 %v2038
    %2168 = vmatpush.bf16.msra.mxu0 %v2036
    %2169 = vmatpush.bf16.msra.mxu0 %v2034
    %2170 = vmatpush.bf16.msra.mxu0 %v2032
    %2171 = vmatmul.bf16.gmra.mxu0 %v1872
    %v2172 = vpop.f32.mrf.mxu0
    %v2173 = vadd.f32 %v2145, %v2172
    %v2174 = vpop.f32.mrf.mxu0
    %v2175 = vadd.f32 %v2147, %v2174
    %2176 = vmatmul.bf16.gmra.mxu0 %v1888
    %v2177 = vpop.f32.mrf.mxu0
    %v2178 = vadd.f32 %v2150, %v2177
    %v2179 = vpop.f32.mrf.mxu0
    %v2180 = vadd.f32 %v2152, %v2179
    %2181 = vmatmul.bf16.gmra.mxu0 %v1904
    %v2182 = vpop.f32.mrf.mxu0
    %v2183 = vadd.f32 %v2155, %v2182
    %v2184 = vpop.f32.mrf.mxu0
    %v2185 = vadd.f32 %v2157, %v2184
    %2186 = vmatmul.bf16.gmra.mxu0 %v1910
    %v2187 = vpop.f32.mrf.mxu0
    %v2188 = vadd.f32 %v2160, %v2187
    %v2189 = vpop.f32.mrf.mxu0
    %2190 = vdwg.mxu0
    %v2223 = vunpack.c.l.b16 %v1776
    %v2224 = vunpack.c.h.b16 %v1776
    %v2225 = vunpack.c.l.b16 %v1777
    %v2226 = vunpack.c.h.b16 %v1777
    %v2227 = vunpack.c.l.b16 %v1778
    %v2228 = vunpack.c.h.b16 %v1778
    %v2229 = vunpack.c.l.b16 %v1779
    %v2230 = vunpack.c.h.b16 %v1779
    %v2231 = vunpack.c.l.b16 %v1780
    %v2232 = vunpack.c.h.b16 %v1780
    %v2233 = vunpack.c.l.b16 %v1781
    %v2234 = vunpack.c.h.b16 %v1781
    %v2235 = vunpack.c.l.b16 %v1782
    %v2236 = vunpack.c.h.b16 %v1782
    %v2237 = vunpack.c.l.b16 %v1783
    %v2238 = vunpack.c.h.b16 %v1783
    %v2239 = vunpack.c.l.b16 %v1784
    %v2240 = vunpack.c.h.b16 %v1784
    %v2241 = vunpack.c.l.b16 %v1785
    %v2242 = vunpack.c.h.b16 %v1785
    %v2243 = vunpack.c.l.b16 %v1786
    %v2244 = vunpack.c.h.b16 %v1786
    %v2245 = vunpack.c.l.b16 %v1787
    %v2246 = vunpack.c.h.b16 %v1787
    %v2247 = vunpack.c.l.b16 %v1788
    %v2248 = vunpack.c.h.b16 %v1788
    %v2249 = vunpack.c.l.b16 %v1789
    %v2250 = vunpack.c.h.b16 %v1789
    %v2251 = vunpack.c.l.b16 %v1790
    %v2252 = vunpack.c.h.b16 %v1790
    %v2253 = vunpack.c.l.b16 %v1791
    %v2254 = vunpack.c.h.b16 %v1791
    %v2255 = vunpack.c.l.b16 %v1792
    %v2256 = vunpack.c.h.b16 %v1792
    %v2257 = vunpack.c.l.b16 %v1793
    %v2258 = vunpack.c.h.b16 %v1793
    %v2259 = vunpack.c.l.b16 %v1794
    %v2260 = vunpack.c.h.b16 %v1794
    %v2261 = vunpack.c.l.b16 %v1795
    %v2262 = vunpack.c.h.b16 %v1795
    %v2263 = vunpack.c.l.b16 %v1796
    %v2264 = vunpack.c.h.b16 %v1796
    %v2265 = vunpack.c.l.b16 %v1797
    %v2266 = vunpack.c.h.b16 %v1797
    %v2267 = vunpack.c.l.b16 %v1798
    %v2268 = vunpack.c.h.b16 %v1798
    %v2269 = vunpack.c.l.b16 %v1799
    %v2270 = vunpack.c.h.b16 %v1799
    %v2271 = vunpack.c.l.b16 %v1800
    %v2272 = vunpack.c.h.b16 %v1800
    %v2273 = vunpack.c.l.b16 %v1801
    %v2274 = vunpack.c.h.b16 %v1801
    %v2275 = vunpack.c.l.b16 %v1802
    %v2276 = vunpack.c.h.b16 %v1802
    %v2277 = vunpack.c.l.b16 %v1803
    %v2278 = vunpack.c.h.b16 %v1803
    %v2279 = vunpack.c.l.b16 %v1804
    %v2280 = vunpack.c.h.b16 %v1804
    %v2281 = vunpack.c.l.b16 %v1805
    %v2282 = vunpack.c.h.b16 %v1805
    %v2283 = vunpack.c.l.b16 %v1806
    %v2284 = vunpack.c.h.b16 %v1806
    %v2285 = vunpack.c.l.b16 %v1807
    %v2286 = vunpack.c.h.b16 %v1807
    %v2287 = vpack.c.b16 %v2225, %v2223
    %v2288 = vpack.c.b16 %v2226, %v2224
    %v2289 = vpack.c.b16 %v2229, %v2227
    %v2290 = vpack.c.b16 %v2230, %v2228
    %v2291 = vpack.c.b16 %v2233, %v2231
    %v2292 = vpack.c.b16 %v2234, %v2232
    %v2293 = vpack.c.b16 %v2237, %v2235
    %v2294 = vpack.c.b16 %v2238, %v2236
    %v2295 = vpack.c.b16 %v2241, %v2239
    %v2296 = vpack.c.b16 %v2242, %v2240
    %v2297 = vpack.c.b16 %v2245, %v2243
    %v2298 = vpack.c.b16 %v2246, %v2244
    %v2299 = vpack.c.b16 %v2249, %v2247
    %v2300 = vpack.c.b16 %v2250, %v2248
    %v2301 = vpack.c.b16 %v2253, %v2251
    %v2302 = vpack.c.b16 %v2254, %v2252
    %v2303 = vpack.c.b16 %v2257, %v2255
    %v2304 = vpack.c.b16 %v2258, %v2256
    %v2305 = vpack.c.b16 %v2261, %v2259
    %v2306 = vpack.c.b16 %v2262, %v2260
    %v2307 = vpack.c.b16 %v2265, %v2263
    %v2308 = vpack.c.b16 %v2266, %v2264
    %v2309 = vpack.c.b16 %v2269, %v2267
    %v2310 = vpack.c.b16 %v2270, %v2268
    %v2311 = vpack.c.b16 %v2273, %v2271
    %v2312 = vpack.c.b16 %v2274, %v2272
    %v2313 = vpack.c.b16 %v2277, %v2275
    %v2314 = vpack.c.b16 %v2278, %v2276
    %v2315 = vpack.c.b16 %v2281, %v2279
    %v2316 = vpack.c.b16 %v2282, %v2280
    %v2317 = vpack.c.b16 %v2285, %v2283
    %v2318 = vpack.c.b16 %v2286, %v2284
    %2351 = vmatpush.bf16.msra.mxu0 %v2301
    %2352 = vmatpush.bf16.msra.mxu0 %v2299
    %2353 = vmatpush.bf16.msra.mxu0 %v2297
    %2354 = vmatpush.bf16.msra.mxu0 %v2295
    %2355 = vmatpush.bf16.msra.mxu0 %v2293
    %2356 = vmatpush.bf16.msra.mxu0 %v2291
    %2357 = vmatpush.bf16.msra.mxu0 %v2289
    %2358 = vmatpush.bf16.msra.mxu0 %v2287
    %2359 = vmatmul.bf16.gmra.mxu0 %v1768
    %v2360 = vpop.f32.mrf.mxu0
    %v2361 = vadd.f32 %v2117, %v2360
    %v2362 = vpop.f32.mrf.mxu0
    %v2363 = vadd.f32 %v2119, %v2362
    %2364 = vmatmul.bf16.gmra.mxu0 %v1770
    %v2365 = vpop.f32.mrf.mxu0
    %v2366 = vadd.f32 %v2122, %v2365
    %v2367 = vpop.f32.mrf.mxu0
    %v2368 = vadd.f32 %v2124, %v2367
    %2369 = vmatmul.bf16.gmra.mxu0 %v1772
    %v2370 = vpop.f32.mrf.mxu0
    %v2371 = vadd.f32 %v2127, %v2370
    %v2372 = vpop.f32.mrf.mxu0
    %v2373 = vadd.f32 %v2129, %v2372
    %2374 = vmatmul.bf16.gmra.mxu0 %v1774
    %v2375 = vpop.f32.mrf.mxu0
    %v2376 = vadd.f32 %v2132, %v2375
    %v2377 = vpop.f32.mrf.mxu0
    %2378 = vdwg.mxu0
    %2379 = vmatpush.bf16.msra.mxu0 %v2317
    %2380 = vmatpush.bf16.msra.mxu0 %v2315
    %2381 = vmatpush.bf16.msra.mxu0 %v2313
    %2382 = vmatpush.bf16.msra.mxu0 %v2311
    %2383 = vmatpush.bf16.msra.mxu0 %v2309
    %2384 = vmatpush.bf16.msra.mxu0 %v2307
    %2385 = vmatpush.bf16.msra.mxu0 %v2305
    %2386 = vmatpush.bf16.msra.mxu0 %v2303
    %2387 = vmatmul.bf16.gmra.mxu0 %v1769
    %v2388 = vpop.f32.mrf.mxu0
    %v2389 = vadd.f32 %v2361, %v2388
    %v2390 = vpop.f32.mrf.mxu0
    %v2391 = vadd.f32 %v2363, %v2390
    %2392 = vmatmul.bf16.gmra.mxu0 %v1771
    %v2393 = vpop.f32.mrf.mxu0
    %v2394 = vadd.f32 %v2366, %v2393
    %v2395 = vpop.f32.mrf.mxu0
    %v2396 = vadd.f32 %v2368, %v2395
    %2397 = vmatmul.bf16.gmra.mxu0 %v1773
    %v2398 = vpop.f32.mrf.mxu0
    %v2399 = vadd.f32 %v2371, %v2398
    %v2400 = vpop.f32.mrf.mxu0
    %v2401 = vadd.f32 %v2373, %v2400
    %2402 = vmatmul.bf16.gmra.mxu0 %v1775
    %v2403 = vpop.f32.mrf.mxu0
    %v2404 = vadd.f32 %v2376, %v2403
    %v2405 = vpop.f32.mrf.mxu0
    %2406 = vdwg.mxu0
    %2407 = vmatpush.bf16.msra.mxu0 %v2302
    %2408 = vmatpush.bf16.msra.mxu0 %v2300
    %2409 = vmatpush.bf16.msra.mxu0 %v2298
    %2410 = vmatpush.bf16.msra.mxu0 %v2296
    %2411 = vmatpush.bf16.msra.mxu0 %v2294
    %2412 = vmatpush.bf16.msra.mxu0 %v2292
    %2413 = vmatpush.bf16.msra.mxu0 %v2290
    %2414 = vmatpush.bf16.msra.mxu0 %v2288
    %2415 = vmatmul.bf16.gmra.mxu0 %v1768
    %v2416 = vpop.f32.mrf.mxu0
    %v2417 = vadd.f32 %v2173, %v2416
    %v2418 = vpop.f32.mrf.mxu0
    %v2419 = vadd.f32 %v2175, %v2418
    %2420 = vmatmul.bf16.gmra.mxu0 %v1770
    %v2421 = vpop.f32.mrf.mxu0
    %v2422 = vadd.f32 %v2178, %v2421
    %v2423 = vpop.f32.mrf.mxu0
    %v2424 = vadd.f32 %v2180, %v2423
    %2425 = vmatmul.bf16.gmra.mxu0 %v1772
    %v2426 = vpop.f32.mrf.mxu0
    %v2427 = vadd.f32 %v2183, %v2426
    %v2428 = vpop.f32.mrf.mxu0
    %v2429 = vadd.f32 %v2185, %v2428
    %2430 = vmatmul.bf16.gmra.mxu0 %v1774
    %v2431 = vpop.f32.mrf.mxu0
    %v2432 = vadd.f32 %v2188, %v2431
    %v2433 = vpop.f32.mrf.mxu0
    %2434 = vdwg.mxu0
    %2435 = vmatpush.bf16.msra.mxu0 %v2318
    %2436 = vmatpush.bf16.msra.mxu0 %v2316
    %2437 = vmatpush.bf16.msra.mxu0 %v2314
    %2438 = vmatpush.bf16.msra.mxu0 %v2312
    %2439 = vmatpush.bf16.msra.mxu0 %v2310
    %2440 = vmatpush.bf16.msra.mxu0 %v2308
    %2441 = vmatpush.bf16.msra.mxu0 %v2306
    %2442 = vmatpush.bf16.msra.mxu0 %v2304
    %2443 = vmatmul.bf16.gmra.mxu0 %v1769
    %v2444 = vpop.f32.mrf.mxu0
    %v2445 = vadd.f32 %v2417, %v2444
    %v2446 = vpop.f32.mrf.mxu0
    %v2447 = vadd.f32 %v2419, %v2446
    %2448 = vmatmul.bf16.gmra.mxu0 %v1771
    %v2449 = vpop.f32.mrf.mxu0
    %v2450 = vadd.f32 %v2422, %v2449
    %v2451 = vpop.f32.mrf.mxu0
    %v2452 = vadd.f32 %v2424, %v2451
    %2453 = vmatmul.bf16.gmra.mxu0 %v1773
    %v2454 = vpop.f32.mrf.mxu0
    %v2455 = vadd.f32 %v2427, %v2454
    %v2456 = vpop.f32.mrf.mxu0
    %v2457 = vadd.f32 %v2429, %v2456
    %2458 = vmatmul.bf16.gmra.mxu0 %v1775
    %v2459 = vpop.f32.mrf.mxu0
    %v2460 = vadd.f32 %v2432, %v2459
    %v2461 = vpop.f32.mrf.mxu0
    %2462 = vdwg.mxu0
    %v2463 = vld [vmem:[#allocation4] sm:$0xfc]
    %v2464 = vld [vmem:[#allocation4 + $0x8] sm:$0xfc]
    %v2465 = vld [vmem:[#allocation4 + $0x60] sm:$0xf]
    %v2466 = vld [vmem:[#allocation4 + $0x68] sm:$0xf]
    %v2467 = vpack.c.bf16 %v1756, %v2463
    %v2468 = vpack.c.bf16 %v1757, %v2464
    %v2469 = vpack.c.bf16 %v2465, %v2465
    %v2470 = vpack.c.bf16 %v2466, %v2466
    %s2471 = scalar_lea.vmem [#allocation2], 1536
    %v2472 = vld [vmem:[%s2471] sm:$0xff]
    %v2473 = vld [vmem:[%s2471 + $0x8] sm:$0xff]
    %v2474 = vld [vmem:[%s2471 + $0x10] sm:$0xff]
    %v2475 = vld [vmem:[%s2471 + $0x18] sm:$0xff]
    %v2476 = vld [vmem:[%s2471 + $0x20] sm:$0xff]
    %v2477 = vld [vmem:[%s2471 + $0x28] sm:$0xff]
    %v2478 = vld [vmem:[%s2471 + $0x30] sm:$0xff]
    %v2479 = vld [vmem:[%s2471 + $0x38] sm:$0xff]
    %v2480 = vld [vmem:[%s2471 + $0x40] sm:$0xff]
    %v2481 = vld [vmem:[%s2471 + $0x48] sm:$0xff]
    %v2482 = vld [vmem:[%s2471 + $0x50] sm:$0xff]
    %v2483 = vld [vmem:[%s2471 + $0x58] sm:$0xff]
    %v2484 = vld [vmem:[%s2471 + $0x60] sm:$0xff]
    %v2485 = vld [vmem:[%s2471 + $0x68] sm:$0xff]
    %v2486 = vld [vmem:[%s2471 + $0x70] sm:$0xff]
    %v2487 = vld [vmem:[%s2471 + $0x78] sm:$0xff]
    %v2488 = vld [vmem:[%s2471 + $0x80] sm:$0xff]
    %v2489 = vld [vmem:[%s2471 + $0x88] sm:$0xff]
    %v2490 = vld [vmem:[%s2471 + $0x90] sm:$0xff]
    %v2491 = vld [vmem:[%s2471 + $0x98] sm:$0xff]
    %v2492 = vld [vmem:[%s2471 + $0xa0] sm:$0xff]
    %v2493 = vld [vmem:[%s2471 + $0xa8] sm:$0xff]
    %v2494 = vld [vmem:[%s2471 + $0xb0] sm:$0xff]
    %v2495 = vld [vmem:[%s2471 + $0xb8] sm:$0xff]
    %v2496 = vld [vmem:[%s2471 + $0xc0] sm:$0xff]
    %v2497 = vld [vmem:[%s2471 + $0xc8] sm:$0xff]
    %v2498 = vld [vmem:[%s2471 + $0xd0] sm:$0xff]
    %v2499 = vld [vmem:[%s2471 + $0xd8] sm:$0xff]
    %v2500 = vld [vmem:[%s2471 + $0xe0] sm:$0xff]
    %v2501 = vld [vmem:[%s2471 + $0xe8] sm:$0xff]
    %v2502 = vld [vmem:[%s2471 + $0xf0] sm:$0xff]
    %v2503 = vld [vmem:[%s2471 + $0xf8] sm:$0xff]
    %v2512 = vrot.slane %v2467, 1
    %v2513 = vrot.slane %v1770, 1
    %v2514 = vsel %vm1015, %v2512, %v2513
    %v2515 = vrot.slane %v2468, 1
    %v2516 = vrot.slane %v1771, 1
    %v2517 = vsel %vm1015, %v2515, %v2516
    %v2518 = vrot.slane %v1772, 1
    %v2519 = vsel %vm1015, %v2513, %v2518
    %v2520 = vrot.slane %v1773, 1
    %v2521 = vsel %vm1015, %v2516, %v2520
    %v2522 = vrot.slane %v2469, 1
    %v2523 = vsel %vm1015, %v2518, %v2522
    %v2524 = vrot.slane %v2470, 1
    %v2525 = vsel %vm1015, %v2520, %v2524
    %v2566 = vunpack.c.l.b16 %v2472
    %v2567 = vunpack.c.h.b16 %v2472
    %v2568 = vunpack.c.l.b16 %v2473
    %v2569 = vunpack.c.h.b16 %v2473
    %v2570 = vunpack.c.l.b16 %v2474
    %v2571 = vunpack.c.h.b16 %v2474
    %v2572 = vunpack.c.l.b16 %v2475
    %v2573 = vunpack.c.h.b16 %v2475
    %v2574 = vunpack.c.l.b16 %v2476
    %v2575 = vunpack.c.h.b16 %v2476
    %v2576 = vunpack.c.l.b16 %v2477
    %v2577 = vunpack.c.h.b16 %v2477
    %v2578 = vunpack.c.l.b16 %v2478
    %v2579 = vunpack.c.h.b16 %v2478
    %v2580 = vunpack.c.l.b16 %v2479
    %v2581 = vunpack.c.h.b16 %v2479
    %v2582 = vunpack.c.l.b16 %v2480
    %v2583 = vunpack.c.h.b16 %v2480
    %v2584 = vunpack.c.l.b16 %v2481
    %v2585 = vunpack.c.h.b16 %v2481
    %v2586 = vunpack.c.l.b16 %v2482
    %v2587 = vunpack.c.h.b16 %v2482
    %v2588 = vunpack.c.l.b16 %v2483
    %v2589 = vunpack.c.h.b16 %v2483
    %v2590 = vunpack.c.l.b16 %v2484
    %v2591 = vunpack.c.h.b16 %v2484
    %v2592 = vunpack.c.l.b16 %v2485
    %v2593 = vunpack.c.h.b16 %v2485
    %v2594 = vunpack.c.l.b16 %v2486
    %v2595 = vunpack.c.h.b16 %v2486
    %v2596 = vunpack.c.l.b16 %v2487
    %v2597 = vunpack.c.h.b16 %v2487
    %v2598 = vunpack.c.l.b16 %v2488
    %v2599 = vunpack.c.h.b16 %v2488
    %v2600 = vunpack.c.l.b16 %v2489
    %v2601 = vunpack.c.h.b16 %v2489
    %v2602 = vunpack.c.l.b16 %v2490
    %v2603 = vunpack.c.h.b16 %v2490
    %v2604 = vunpack.c.l.b16 %v2491
    %v2605 = vunpack.c.h.b16 %v2491
    %v2606 = vunpack.c.l.b16 %v2492
    %v2607 = vunpack.c.h.b16 %v2492
    %v2608 = vunpack.c.l.b16 %v2493
    %v2609 = vunpack.c.h.b16 %v2493
    %v2610 = vunpack.c.l.b16 %v2494
    %v2611 = vunpack.c.h.b16 %v2494
    %v2612 = vunpack.c.l.b16 %v2495
    %v2613 = vunpack.c.h.b16 %v2495
    %v2614 = vunpack.c.l.b16 %v2496
    %v2615 = vunpack.c.h.b16 %v2496
    %v2616 = vunpack.c.l.b16 %v2497
    %v2617 = vunpack.c.h.b16 %v2497
    %v2618 = vunpack.c.l.b16 %v2498
    %v2619 = vunpack.c.h.b16 %v2498
    %v2620 = vunpack.c.l.b16 %v2499
    %v2621 = vunpack.c.h.b16 %v2499
    %v2622 = vunpack.c.l.b16 %v2500
    %v2623 = vunpack.c.h.b16 %v2500
    %v2624 = vunpack.c.l.b16 %v2501
    %v2625 = vunpack.c.h.b16 %v2501
    %v2626 = vunpack.c.l.b16 %v2502
    %v2627 = vunpack.c.h.b16 %v2502
    %v2628 = vunpack.c.l.b16 %v2503
    %v2629 = vunpack.c.h.b16 %v2503
    %v2630 = vpack.c.b16 %v2568, %v2566
    %v2631 = vpack.c.b16 %v2569, %v2567
    %v2632 = vpack.c.b16 %v2572, %v2570
    %v2633 = vpack.c.b16 %v2573, %v2571
    %v2634 = vpack.c.b16 %v2576, %v2574
    %v2635 = vpack.c.b16 %v2577, %v2575
    %v2636 = vpack.c.b16 %v2580, %v2578
    %v2637 = vpack.c.b16 %v2581, %v2579
    %v2638 = vpack.c.b16 %v2584, %v2582
    %v2639 = vpack.c.b16 %v2585, %v2583
    %v2640 = vpack.c.b16 %v2588, %v2586
    %v2641 = vpack.c.b16 %v2589, %v2587
    %v2642 = vpack.c.b16 %v2592, %v2590
    %v2643 = vpack.c.b16 %v2593, %v2591
    %v2644 = vpack.c.b16 %v2596, %v2594
    %v2645 = vpack.c.b16 %v2597, %v2595
    %v2646 = vpack.c.b16 %v2600, %v2598
    %v2647 = vpack.c.b16 %v2601, %v2599
    %v2648 = vpack.c.b16 %v2604, %v2602
    %v2649 = vpack.c.b16 %v2605, %v2603
    %v2650 = vpack.c.b16 %v2608, %v2606
    %v2651 = vpack.c.b16 %v2609, %v2607
    %v2652 = vpack.c.b16 %v2612, %v2610
    %v2653 = vpack.c.b16 %v2613, %v2611
    %v2654 = vpack.c.b16 %v2616, %v2614
    %v2655 = vpack.c.b16 %v2617, %v2615
    %v2656 = vpack.c.b16 %v2620, %v2618
    %v2657 = vpack.c.b16 %v2621, %v2619
    %v2658 = vpack.c.b16 %v2624, %v2622
    %v2659 = vpack.c.b16 %v2625, %v2623
    %v2660 = vpack.c.b16 %v2628, %v2626
    %v2661 = vpack.c.b16 %v2629, %v2627
    %2694 = vmatpush.bf16.msra.mxu0 %v2644
    %2695 = vmatpush.bf16.msra.mxu0 %v2642
    %2696 = vmatpush.bf16.msra.mxu0 %v2640
    %2697 = vmatpush.bf16.msra.mxu0 %v2638
    %2698 = vmatpush.bf16.msra.mxu0 %v2636
    %2699 = vmatpush.bf16.msra.mxu0 %v2634
    %2700 = vmatpush.bf16.msra.mxu0 %v2632
    %2701 = vmatpush.bf16.msra.mxu0 %v2630
    %2702 = vmatmul.bf16.gmra.mxu0 %v2514
    %v2703 = vpop.f32.mrf.mxu0
    %v2704 = vadd.f32 0.0, %v2703
    %v2705 = vpop.f32.mrf.mxu0
    %v2706 = vadd.f32 0.0, %v2705
    %2707 = vmatmul.bf16.gmra.mxu0 %v2519
    %v2708 = vpop.f32.mrf.mxu0
    %v2709 = vadd.f32 0.0, %v2708
    %v2710 = vpop.f32.mrf.mxu0
    %v2711 = vadd.f32 0.0, %v2710
    %2712 = vmatmul.bf16.gmra.mxu0 %v2523
    %v2713 = vpop.f32.mrf.mxu0
    %v2714 = vadd.f32 0.0, %v2713
    %v2715 = vpop.f32.mrf.mxu0
    %v2716 = vadd.f32 0.0, %v2715
    %2717 = vmatmul.bf16.gmra.mxu0 %v2522
    %v2718 = vpop.f32.mrf.mxu0
    %v2719 = vadd.f32 0.0, %v2718
    %v2720 = vpop.f32.mrf.mxu0
    %2721 = vdwg.mxu0
    %2722 = vmatpush.bf16.msra.mxu0 %v2660
    %2723 = vmatpush.bf16.msra.mxu0 %v2658
    %2724 = vmatpush.bf16.msra.mxu0 %v2656
    %2725 = vmatpush.bf16.msra.mxu0 %v2654
    %2726 = vmatpush.bf16.msra.mxu0 %v2652
    %2727 = vmatpush.bf16.msra.mxu0 %v2650
    %2728 = vmatpush.bf16.msra.mxu0 %v2648
    %2729 = vmatpush.bf16.msra.mxu0 %v2646
    %2730 = vmatmul.bf16.gmra.mxu0 %v2517
    %v2731 = vpop.f32.mrf.mxu0
    %v2732 = vadd.f32 %v2704, %v2731
    %v2733 = vpop.f32.mrf.mxu0
    %v2734 = vadd.f32 %v2706, %v2733
    %2735 = vmatmul.bf16.gmra.mxu0 %v2521
    %v2736 = vpop.f32.mrf.mxu0
    %v2737 = vadd.f32 %v2709, %v2736
    %v2738 = vpop.f32.mrf.mxu0
    %v2739 = vadd.f32 %v2711, %v2738
    %2740 = vmatmul.bf16.gmra.mxu0 %v2525
    %v2741 = vpop.f32.mrf.mxu0
    %v2742 = vadd.f32 %v2714, %v2741
    %v2743 = vpop.f32.mrf.mxu0
    %v2744 = vadd.f32 %v2716, %v2743
    %2745 = vmatmul.bf16.gmra.mxu0 %v2524
    %v2746 = vpop.f32.mrf.mxu0
    %v2747 = vadd.f32 %v2719, %v2746
    %v2748 = vpop.f32.mrf.mxu0
    %2749 = vdwg.mxu0
    %2750 = vmatpush.bf16.msra.mxu0 %v2645
    %2751 = vmatpush.bf16.msra.mxu0 %v2643
    %2752 = vmatpush.bf16.msra.mxu0 %v2641
    %2753 = vmatpush.bf16.msra.mxu0 %v2639
    %2754 = vmatpush.bf16.msra.mxu0 %v2637
    %2755 = vmatpush.bf16.msra.mxu0 %v2635
    %2756 = vmatpush.bf16.msra.mxu0 %v2633
    %2757 = vmatpush.bf16.msra.mxu0 %v2631
    %2758 = vmatmul.bf16.gmra.mxu0 %v2514
    %v2759 = vpop.f32.mrf.mxu0
    %v2760 = vadd.f32 0.0, %v2759
    %v2761 = vpop.f32.mrf.mxu0
    %v2762 = vadd.f32 0.0, %v2761
    %2763 = vmatmul.bf16.gmra.mxu0 %v2519
    %v2764 = vpop.f32.mrf.mxu0
    %v2765 = vadd.f32 0.0, %v2764
    %v2766 = vpop.f32.mrf.mxu0
    %v2767 = vadd.f32 0.0, %v2766
    %2768 = vmatmul.bf16.gmra.mxu0 %v2523
    %v2769 = vpop.f32.mrf.mxu0
    %v2770 = vadd.f32 0.0, %v2769
    %v2771 = vpop.f32.mrf.mxu0
    %v2772 = vadd.f32 0.0, %v2771
    %2773 = vmatmul.bf16.gmra.mxu0 %v2522
    %v2774 = vpop.f32.mrf.mxu0
    %v2775 = vadd.f32 0.0, %v2774
    %v2776 = vpop.f32.mrf.mxu0
    %2777 = vdwg.mxu0
    %2778 = vmatpush.bf16.msra.mxu0 %v2661
    %2779 = vmatpush.bf16.msra.mxu0 %v2659
    %2780 = vmatpush.bf16.msra.mxu0 %v2657
    %2781 = vmatpush.bf16.msra.mxu0 %v2655
    %2782 = vmatpush.bf16.msra.mxu0 %v2653
    %2783 = vmatpush.bf16.msra.mxu0 %v2651
    %2784 = vmatpush.bf16.msra.mxu0 %v2649
    %2785 = vmatpush.bf16.msra.mxu0 %v2647
    %2786 = vmatmul.bf16.gmra.mxu0 %v2517
    %v2787 = vpop.f32.mrf.mxu0
    %v2788 = vadd.f32 %v2760, %v2787
    %v2789 = vpop.f32.mrf.mxu0
    %v2790 = vadd.f32 %v2762, %v2789
    %2791 = vmatmul.bf16.gmra.mxu0 %v2521
    %v2792 = vpop.f32.mrf.mxu0
    %v2793 = vadd.f32 %v2765, %v2792
    %v2794 = vpop.f32.mrf.mxu0
    %v2795 = vadd.f32 %v2767, %v2794
    %2796 = vmatmul.bf16.gmra.mxu0 %v2525
    %v2797 = vpop.f32.mrf.mxu0
    %v2798 = vadd.f32 %v2770, %v2797
    %v2799 = vpop.f32.mrf.mxu0
    %v2800 = vadd.f32 %v2772, %v2799
    %2801 = vmatmul.bf16.gmra.mxu0 %v2524
    %v2802 = vpop.f32.mrf.mxu0
    %v2803 = vadd.f32 %v2775, %v2802
    %v2804 = vpop.f32.mrf.mxu0
    %2805 = vdwg.mxu0
    %v2806 = vadd.f32 %v2389, %v2732
    %v2807 = vadd.f32 %v2445, %v2788
    %v2808 = vadd.f32 %v2391, %v2734
    %v2809 = vadd.f32 %v2447, %v2790
    %v2810 = vadd.f32 %v2394, %v2737
    %v2811 = vadd.f32 %v2450, %v2793
    %v2812 = vadd.f32 %v2396, %v2739
    %v2813 = vadd.f32 %v2452, %v2795
    %v2814 = vadd.f32 %v2399, %v2742
    %v2815 = vadd.f32 %v2455, %v2798
    %v2816 = vadd.f32 %v2401, %v2744
    %v2817 = vadd.f32 %v2457, %v2800
    %v2818 = vadd.f32 %v2404, %v2747
    %v2819 = vadd.f32 %v2460, %v2803
    %v2820 = vld [vmem:[#allocation4] sm:$0xf8]
    %v2821 = vld [vmem:[#allocation4 + $0x8] sm:$0xf8]
    %v2822 = vld [vmem:[#allocation4 + $0x60] sm:$0x1f]
    %v2823 = vld [vmem:[#allocation4 + $0x68] sm:$0x1f]
    %v2824 = vpack.c.bf16 %v1756, %v2820
    %v2825 = vpack.c.bf16 %v1757, %v2821
    %v2826 = vpack.c.bf16 %v2822, %v2822
    %v2827 = vpack.c.bf16 %v2823, %v2823
    %s2828 = scalar_lea.vmem [#allocation2], 1792
    %v2829 = vld [vmem:[%s2828] sm:$0xff]
    %v2830 = vld [vmem:[%s2828 + $0x8] sm:$0xff]
    %v2831 = vld [vmem:[%s2828 + $0x10] sm:$0xff]
    %v2832 = vld [vmem:[%s2828 + $0x18] sm:$0xff]
    %v2833 = vld [vmem:[%s2828 + $0x20] sm:$0xff]
    %v2834 = vld [vmem:[%s2828 + $0x28] sm:$0xff]
    %v2835 = vld [vmem:[%s2828 + $0x30] sm:$0xff]
    %v2836 = vld [vmem:[%s2828 + $0x38] sm:$0xff]
    %v2837 = vld [vmem:[%s2828 + $0x40] sm:$0xff]
    %v2838 = vld [vmem:[%s2828 + $0x48] sm:$0xff]
    %v2839 = vld [vmem:[%s2828 + $0x50] sm:$0xff]
    %v2840 = vld [vmem:[%s2828 + $0x58] sm:$0xff]
    %v2841 = vld [vmem:[%s2828 + $0x60] sm:$0xff]
    %v2842 = vld [vmem:[%s2828 + $0x68] sm:$0xff]
    %v2843 = vld [vmem:[%s2828 + $0x70] sm:$0xff]
    %v2844 = vld [vmem:[%s2828 + $0x78] sm:$0xff]
    %v2845 = vld [vmem:[%s2828 + $0x80] sm:$0xff]
    %v2846 = vld [vmem:[%s2828 + $0x88] sm:$0xff]
    %v2847 = vld [vmem:[%s2828 + $0x90] sm:$0xff]
    %v2848 = vld [vmem:[%s2828 + $0x98] sm:$0xff]
    %v2849 = vld [vmem:[%s2828 + $0xa0] sm:$0xff]
    %v2850 = vld [vmem:[%s2828 + $0xa8] sm:$0xff]
    %v2851 = vld [vmem:[%s2828 + $0xb0] sm:$0xff]
    %v2852 = vld [vmem:[%s2828 + $0xb8] sm:$0xff]
    %v2853 = vld [vmem:[%s2828 + $0xc0] sm:$0xff]
    %v2854 = vld [vmem:[%s2828 + $0xc8] sm:$0xff]
    %v2855 = vld [vmem:[%s2828 + $0xd0] sm:$0xff]
    %v2856 = vld [vmem:[%s2828 + $0xd8] sm:$0xff]
    %v2857 = vld [vmem:[%s2828 + $0xe0] sm:$0xff]
    %v2858 = vld [vmem:[%s2828 + $0xe8] sm:$0xff]
    %v2859 = vld [vmem:[%s2828 + $0xf0] sm:$0xff]
    %v2860 = vld [vmem:[%s2828 + $0xf8] sm:$0xff]
    %v2862 = vshrl.u32 %v2824, 16
    %v2864 = vrot.slane %v2862, 1
    %v2865 = vshll.u32 %v2824, 16
    %v2867 = vrot.slane %v2865, 2
    %v2868 = vor.u32 %v2864, %v2867
    %v2869 = vrot.slane %v1873, 1
    %v2870 = vrot.slane %v1857, 2
    %v2871 = vor.u32 %v2869, %v2870
    %v2872 = vsel %vm1365, %v2868, %v2871
    %v2874 = vshrl.u32 %v2825, 16
    %v2876 = vrot.slane %v2874, 1
    %v2877 = vshll.u32 %v2825, 16
    %v2879 = vrot.slane %v2877, 2
    %v2880 = vor.u32 %v2876, %v2879
    %v2881 = vrot.slane %v1881, 1
    %v2882 = vrot.slane %v1869, 2
    %v2883 = vor.u32 %v2881, %v2882
    %v2884 = vsel %vm1365, %v2880, %v2883
    %v2885 = vrot.slane %v1889, 1
    %v2886 = vrot.slane %v1877, 2
    %v2887 = vor.u32 %v2885, %v2886
    %v2888 = vsel %vm1365, %v2871, %v2887
    %v2889 = vrot.slane %v1897, 1
    %v2890 = vrot.slane %v1885, 2
    %v2891 = vor.u32 %v2889, %v2890
    %v2892 = vsel %vm1365, %v2883, %v2891
    %v2894 = vshrl.u32 %v2826, 16
    %v2896 = vrot.slane %v2894, 1
    %v2897 = vshll.u32 %v2826, 16
    %v2899 = vrot.slane %v2897, 2
    %v2900 = vor.u32 %v2896, %v2899
    %v2901 = vsel %vm1365, %v2887, %v2900
    %v2903 = vshrl.u32 %v2827, 16
    %v2905 = vrot.slane %v2903, 1
    %v2906 = vshll.u32 %v2827, 16
    %v2908 = vrot.slane %v2906, 2
    %v2909 = vor.u32 %v2905, %v2908
    %v2910 = vsel %vm1365, %v2891, %v2909
    %v2951 = vunpack.c.l.b16 %v2829
    %v2952 = vunpack.c.h.b16 %v2829
    %v2953 = vunpack.c.l.b16 %v2830
    %v2954 = vunpack.c.h.b16 %v2830
    %v2955 = vunpack.c.l.b16 %v2831
    %v2956 = vunpack.c.h.b16 %v2831
    %v2957 = vunpack.c.l.b16 %v2832
    %v2958 = vunpack.c.h.b16 %v2832
    %v2959 = vunpack.c.l.b16 %v2833
    %v2960 = vunpack.c.h.b16 %v2833
    %v2961 = vunpack.c.l.b16 %v2834
    %v2962 = vunpack.c.h.b16 %v2834
    %v2963 = vunpack.c.l.b16 %v2835
    %v2964 = vunpack.c.h.b16 %v2835
    %v2965 = vunpack.c.l.b16 %v2836
    %v2966 = vunpack.c.h.b16 %v2836
    %v2967 = vunpack.c.l.b16 %v2837
    %v2968 = vunpack.c.h.b16 %v2837
    %v2969 = vunpack.c.l.b16 %v2838
    %v2970 = vunpack.c.h.b16 %v2838
    %v2971 = vunpack.c.l.b16 %v2839
    %v2972 = vunpack.c.h.b16 %v2839
    %v2973 = vunpack.c.l.b16 %v2840
    %v2974 = vunpack.c.h.b16 %v2840
    %v2975 = vunpack.c.l.b16 %v2841
    %v2976 = vunpack.c.h.b16 %v2841
    %v2977 = vunpack.c.l.b16 %v2842
    %v2978 = vunpack.c.h.b16 %v2842
    %v2979 = vunpack.c.l.b16 %v2843
    %v2980 = vunpack.c.h.b16 %v2843
    %v2981 = vunpack.c.l.b16 %v2844
    %v2982 = vunpack.c.h.b16 %v2844
    %v2983 = vunpack.c.l.b16 %v2845
    %v2984 = vunpack.c.h.b16 %v2845
    %v2985 = vunpack.c.l.b16 %v2846
    %v2986 = vunpack.c.h.b16 %v2846
    %v2987 = vunpack.c.l.b16 %v2847
    %v2988 = vunpack.c.h.b16 %v2847
    %v2989 = vunpack.c.l.b16 %v2848
    %v2990 = vunpack.c.h.b16 %v2848
    %v2991 = vunpack.c.l.b16 %v2849
    %v2992 = vunpack.c.h.b16 %v2849
    %v2993 = vunpack.c.l.b16 %v2850
    %v2994 = vunpack.c.h.b16 %v2850
    %v2995 = vunpack.c.l.b16 %v2851
    %v2996 = vunpack.c.h.b16 %v2851
    %v2997 = vunpack.c.l.b16 %v2852
    %v2998 = vunpack.c.h.b16 %v2852
    %v2999 = vunpack.c.l.b16 %v2853
    %v3000 = vunpack.c.h.b16 %v2853
    %v3001 = vunpack.c.l.b16 %v2854
    %v3002 = vunpack.c.h.b16 %v2854
    %v3003 = vunpack.c.l.b16 %v2855
    %v3004 = vunpack.c.h.b16 %v2855
    %v3005 = vunpack.c.l.b16 %v2856
    %v3006 = vunpack.c.h.b16 %v2856
    %v3007 = vunpack.c.l.b16 %v2857
    %v3008 = vunpack.c.h.b16 %v2857
    %v3009 = vunpack.c.l.b16 %v2858
    %v3010 = vunpack.c.h.b16 %v2858
    %v3011 = vunpack.c.l.b16 %v2859
    %v3012 = vunpack.c.h.b16 %v2859
    %v3013 = vunpack.c.l.b16 %v2860
    %v3014 = vunpack.c.h.b16 %v2860
    %v3015 = vpack.c.b16 %v2953, %v2951
    %v3016 = vpack.c.b16 %v2954, %v2952
    %v3017 = vpack.c.b16 %v2957, %v2955
    %v3018 = vpack.c.b16 %v2958, %v2956
    %v3019 = vpack.c.b16 %v2961, %v2959
    %v3020 = vpack.c.b16 %v2962, %v2960
    %v3021 = vpack.c.b16 %v2965, %v2963
    %v3022 = vpack.c.b16 %v2966, %v2964
    %v3023 = vpack.c.b16 %v2969, %v2967
    %v3024 = vpack.c.b16 %v2970, %v2968
    %v3025 = vpack.c.b16 %v2973, %v2971
    %v3026 = vpack.c.b16 %v2974, %v2972
    %v3027 = vpack.c.b16 %v2977, %v2975
    %v3028 = vpack.c.b16 %v2978, %v2976
    %v3029 = vpack.c.b16 %v2981, %v2979
    %v3030 = vpack.c.b16 %v2982, %v2980
    %v3031 = vpack.c.b16 %v2985, %v2983
    %v3032 = vpack.c.b16 %v2986, %v2984
    %v3033 = vpack.c.b16 %v2989, %v2987
    %v3034 = vpack.c.b16 %v2990, %v2988
    %v3035 = vpack.c.b16 %v2993, %v2991
    %v3036 = vpack.c.b16 %v2994, %v2992
    %v3037 = vpack.c.b16 %v2997, %v2995
    %v3038 = vpack.c.b16 %v2998, %v2996
    %v3039 = vpack.c.b16 %v3001, %v2999
    %v3040 = vpack.c.b16 %v3002, %v3000
    %v3041 = vpack.c.b16 %v3005, %v3003
    %v3042 = vpack.c.b16 %v3006, %v3004
    %v3043 = vpack.c.b16 %v3009, %v3007
    %v3044 = vpack.c.b16 %v3010, %v3008
    %v3045 = vpack.c.b16 %v3013, %v3011
    %v3046 = vpack.c.b16 %v3014, %v3012
    %3079 = vmatpush.bf16.msra.mxu0 %v3029
    %3080 = vmatpush.bf16.msra.mxu0 %v3027
    %3081 = vmatpush.bf16.msra.mxu0 %v3025
    %3082 = vmatpush.bf16.msra.mxu0 %v3023
    %3083 = vmatpush.bf16.msra.mxu0 %v3021
    %3084 = vmatpush.bf16.msra.mxu0 %v3019
    %3085 = vmatpush.bf16.msra.mxu0 %v3017
    %3086 = vmatpush.bf16.msra.mxu0 %v3015
    %3087 = vmatmul.bf16.gmra.mxu0 %v2872
    %v3088 = vpop.f32.mrf.mxu0
    %v3089 = vadd.f32 0.0, %v3088
    %v3090 = vpop.f32.mrf.mxu0
    %v3091 = vadd.f32 0.0, %v3090
    %3092 = vmatmul.bf16.gmra.mxu0 %v2888
    %v3093 = vpop.f32.mrf.mxu0
    %v3094 = vadd.f32 0.0, %v3093
    %v3095 = vpop.f32.mrf.mxu0
    %v3096 = vadd.f32 0.0, %v3095
    %3097 = vmatmul.bf16.gmra.mxu0 %v2901
    %v3098 = vpop.f32.mrf.mxu0
    %v3099 = vadd.f32 0.0, %v3098
    %v3100 = vpop.f32.mrf.mxu0
    %v3101 = vadd.f32 0.0, %v3100
    %3102 = vmatmul.bf16.gmra.mxu0 %v2900
    %v3103 = vpop.f32.mrf.mxu0
    %v3104 = vadd.f32 0.0, %v3103
    %v3105 = vpop.f32.mrf.mxu0
    %3106 = vdwg.mxu0
    %3107 = vmatpush.bf16.msra.mxu0 %v3045
    %3108 = vmatpush.bf16.msra.mxu0 %v3043
    %3109 = vmatpush.bf16.msra.mxu0 %v3041
    %3110 = vmatpush.bf16.msra.mxu0 %v3039
    %3111 = vmatpush.bf16.msra.mxu0 %v3037
    %3112 = vmatpush.bf16.msra.mxu0 %v3035
    %3113 = vmatpush.bf16.msra.mxu0 %v3033
    %3114 = vmatpush.bf16.msra.mxu0 %v3031
    %3115 = vmatmul.bf16.gmra.mxu0 %v2884
    %v3116 = vpop.f32.mrf.mxu0
    %v3117 = vadd.f32 %v3089, %v3116
    %v3118 = vpop.f32.mrf.mxu0
    %v3119 = vadd.f32 %v3091, %v3118
    %3120 = vmatmul.bf16.gmra.mxu0 %v2892
    %v3121 = vpop.f32.mrf.mxu0
    %v3122 = vadd.f32 %v3094, %v3121
    %v3123 = vpop.f32.mrf.mxu0
    %v3124 = vadd.f32 %v3096, %v3123
    %3125 = vmatmul.bf16.gmra.mxu0 %v2910
    %v3126 = vpop.f32.mrf.mxu0
    %v3127 = vadd.f32 %v3099, %v3126
    %v3128 = vpop.f32.mrf.mxu0
    %v3129 = vadd.f32 %v3101, %v3128
    %3130 = vmatmul.bf16.gmra.mxu0 %v2909
    %v3131 = vpop.f32.mrf.mxu0
    %v3132 = vadd.f32 %v3104, %v3131
    %v3133 = vpop.f32.mrf.mxu0
    %3134 = vdwg.mxu0
    %3135 = vmatpush.bf16.msra.mxu0 %v3030
    %3136 = vmatpush.bf16.msra.mxu0 %v3028
    %3137 = vmatpush.bf16.msra.mxu0 %v3026
    %3138 = vmatpush.bf16.msra.mxu0 %v3024
    %3139 = vmatpush.bf16.msra.mxu0 %v3022
    %3140 = vmatpush.bf16.msra.mxu0 %v3020
    %3141 = vmatpush.bf16.msra.mxu0 %v3018
    %3142 = vmatpush.bf16.msra.mxu0 %v3016
    %3143 = vmatmul.bf16.gmra.mxu0 %v2872
    %v3144 = vpop.f32.mrf.mxu0
    %v3145 = vadd.f32 0.0, %v3144
    %v3146 = vpop.f32.mrf.mxu0
    %v3147 = vadd.f32 0.0, %v3146
    %3148 = vmatmul.bf16.gmra.mxu0 %v2888
    %v3149 = vpop.f32.mrf.mxu0
    %v3150 = vadd.f32 0.0, %v3149
    %v3151 = vpop.f32.mrf.mxu0
    %v3152 = vadd.f32 0.0, %v3151
    %3153 = vmatmul.bf16.gmra.mxu0 %v2901
    %v3154 = vpop.f32.mrf.mxu0
    %v3155 = vadd.f32 0.0, %v3154
    %v3156 = vpop.f32.mrf.mxu0
    %v3157 = vadd.f32 0.0, %v3156
    %3158 = vmatmul.bf16.gmra.mxu0 %v2900
    %v3159 = vpop.f32.mrf.mxu0
    %v3160 = vadd.f32 0.0, %v3159
    %v3161 = vpop.f32.mrf.mxu0
    %3162 = vdwg.mxu0
    %3163 = vmatpush.bf16.msra.mxu0 %v3046
    %3164 = vmatpush.bf16.msra.mxu0 %v3044
    %3165 = vmatpush.bf16.msra.mxu0 %v3042
    %3166 = vmatpush.bf16.msra.mxu0 %v3040
    %3167 = vmatpush.bf16.msra.mxu0 %v3038
    %3168 = vmatpush.bf16.msra.mxu0 %v3036
    %3169 = vmatpush.bf16.msra.mxu0 %v3034
    %3170 = vmatpush.bf16.msra.mxu0 %v3032
    %3171 = vmatmul.bf16.gmra.mxu0 %v2884
    %v3172 = vpop.f32.mrf.mxu0
    %v3173 = vadd.f32 %v3145, %v3172
    %v3174 = vpop.f32.mrf.mxu0
    %v3175 = vadd.f32 %v3147, %v3174
    %3176 = vmatmul.bf16.gmra.mxu0 %v2892
    %v3177 = vpop.f32.mrf.mxu0
    %v3178 = vadd.f32 %v3150, %v3177
    %v3179 = vpop.f32.mrf.mxu0
    %v3180 = vadd.f32 %v3152, %v3179
    %3181 = vmatmul.bf16.gmra.mxu0 %v2910
    %v3182 = vpop.f32.mrf.mxu0
    %v3183 = vadd.f32 %v3155, %v3182
    %v3184 = vpop.f32.mrf.mxu0
    %v3185 = vadd.f32 %v3157, %v3184
    %3186 = vmatmul.bf16.gmra.mxu0 %v2909
    %v3187 = vpop.f32.mrf.mxu0
    %v3188 = vadd.f32 %v3160, %v3187
    %v3189 = vpop.f32.mrf.mxu0
    %3190 = vdwg.mxu0
    %v3191 = vadd.f32 %v2806, %v3117
    %v3192 = vadd.f32 %v2807, %v3173
    %v3193 = vadd.f32 %v2808, %v3119
    %v3194 = vadd.f32 %v2809, %v3175
    %v3195 = vadd.f32 %v2810, %v3122
    %v3196 = vadd.f32 %v2811, %v3178
    %v3197 = vadd.f32 %v2812, %v3124
    %v3198 = vadd.f32 %v2813, %v3180
    %v3199 = vadd.f32 %v2814, %v3127
    %v3200 = vadd.f32 %v2815, %v3183
    %v3201 = vadd.f32 %v2816, %v3129
    %v3202 = vadd.f32 %v2817, %v3185
    %v3203 = vadd.f32 %v2818, %v3132
    %v3204 = vadd.f32 %v2819, %v3188
    %v3205 = vld [vmem:[#allocation16] sm:$0xff]
    %v3206 = vld [vmem:[#allocation16 + $0x8] sm:$0xff]
    %v3207 = vld [vmem:[#allocation16 + $0x10] sm:$0xff]
    %v3208 = vld [vmem:[#allocation16 + $0x18] sm:$0xff]
    %v3209 = vld [vmem:[#allocation16 + $0x20] sm:$0xff]
    %v3210 = vld [vmem:[#allocation16 + $0x28] sm:$0xff]
    %v3211 = vld [vmem:[#allocation16 + $0x30] sm:$0x3]
    %3213 = vset.pattern.permute.xlu0 0
    %3214 = vperm.xlu0 %3213, %v3205
    %v3215 = vpop.permute.xlu0 %3214
    %3218 = vset.pattern.permute.xlu0 0
    %3219 = vperm.xlu0 %3218, %v3206
    %v3220 = vpop.permute.xlu0 %3219
    %3223 = vset.pattern.permute.xlu0 0
    %3224 = vperm.xlu0 %3223, %v3207
    %v3225 = vpop.permute.xlu0 %3224
    %3228 = vset.pattern.permute.xlu0 0
    %3229 = vperm.xlu0 %3228, %v3208
    %v3230 = vpop.permute.xlu0 %3229
    %3233 = vset.pattern.permute.xlu0 0
    %3234 = vperm.xlu0 %3233, %v3209
    %v3235 = vpop.permute.xlu0 %3234
    %3238 = vset.pattern.permute.xlu0 0
    %3239 = vperm.xlu0 %3238, %v3210
    %v3240 = vpop.permute.xlu0 %3239
    %3243 = vset.pattern.permute.xlu0 0
    %3244 = vperm.xlu0 %3243, %v3211
    %v3245 = vpop.permute.xlu0 %3244
    %v3247 = vmul.f32 %v3191, %v3215
    %v3248 = vmul.f32 %v3192, %v3215
    %v3249 = vmul.f32 %v3193, %v3220
    %v3250 = vmul.f32 %v3194, %v3220
    %v3251 = vmul.f32 %v3195, %v3225
    %v3252 = vmul.f32 %v3196, %v3225
    %v3253 = vmul.f32 %v3197, %v3230
    %v3254 = vmul.f32 %v3198, %v3230
    %v3255 = vmul.f32 %v3199, %v3235
    %v3256 = vmul.f32 %v3200, %v3235
    %v3257 = vmul.f32 %v3201, %v3240
    %v3258 = vmul.f32 %v3202, %v3240
    %v3259 = vmul.f32 %v3203, %v3245
    %v3260 = vmul.f32 %v3204, %v3245
    %v3261 = vadd.f32 %v3247, %v3249
    %v3262 = vadd.f32 %v3261, %v3251
    %v3263 = vadd.f32 %v3262, %v3253
    %v3264 = vadd.f32 %v3263, %v3255
    %v3265 = vadd.f32 %v3264, %v3257
    %vm3266 = vcmask 1041408
    %v3267 = vsel %vm3266, %v3259, 0.0
    %v3268 = vadd.f32 %v3265, %v3267
    %v3269 = vrot.slane %v3268, 4
    %v3270 = vadd.f32 %v3268, %v3269
    %v3271 = vrot.slane %v3270, 2
    %v3272 = vadd.f32 %v3270, %v3271
    %v3273 = vrot.slane %v3272, 1
    %v3274 = vadd.f32 %v3272, %v3273
    %v3275 = vadd.f32 %v3248, %v3250
    %v3276 = vadd.f32 %v3275, %v3252
    %v3277 = vadd.f32 %v3276, %v3254
    %v3278 = vadd.f32 %v3277, %v3256
    %v3279 = vadd.f32 %v3278, %v3258
    %v3280 = vsel %vm3266, %v3260, 0.0
    %v3281 = vadd.f32 %v3279, %v3280
    %v3282 = vrot.slane %v3281, 4
    %v3283 = vadd.f32 %v3281, %v3282
    %v3284 = vrot.slane %v3283, 2
    %v3285 = vadd.f32 %v3283, %v3284
    %v3286 = vrot.slane %v3285, 1
    %v3287 = vadd.f32 %v3285, %v3286
    %v3288 = vmul.f32 %v3247, %v3247
    %v3289 = vmul.f32 %v3248, %v3248
    %v3290 = vmul.f32 %v3249, %v3249
    %v3291 = vmul.f32 %v3250, %v3250
    %v3292 = vmul.f32 %v3251, %v3251
    %v3293 = vmul.f32 %v3252, %v3252
    %v3294 = vmul.f32 %v3253, %v3253
    %v3295 = vmul.f32 %v3254, %v3254
    %v3296 = vmul.f32 %v3255, %v3255
    %v3297 = vmul.f32 %v3256, %v3256
    %v3298 = vmul.f32 %v3257, %v3257
    %v3299 = vmul.f32 %v3258, %v3258
    %v3300 = vmul.f32 %v3259, %v3259
    %v3301 = vmul.f32 %v3260, %v3260
    %v3302 = vadd.f32 %v3288, %v3290
    %v3303 = vadd.f32 %v3302, %v3292
    %v3304 = vadd.f32 %v3303, %v3294
    %v3305 = vadd.f32 %v3304, %v3296
    %v3306 = vadd.f32 %v3305, %v3298
    %v3307 = vsel %vm3266, %v3300, 0.0
    %v3308 = vadd.f32 %v3306, %v3307
    %v3309 = vrot.slane %v3308, 4
    %v3310 = vadd.f32 %v3308, %v3309
    %v3311 = vrot.slane %v3310, 2
    %v3312 = vadd.f32 %v3310, %v3311
    %v3313 = vrot.slane %v3312, 1
    %v3314 = vadd.f32 %v3312, %v3313
    %v3315 = vadd.f32 %v3289, %v3291
    %v3316 = vadd.f32 %v3315, %v3293
    %v3317 = vadd.f32 %v3316, %v3295
    %v3318 = vadd.f32 %v3317, %v3297
    %v3319 = vadd.f32 %v3318, %v3299
    %v3320 = vsel %vm3266, %v3301, 0.0
    %v3321 = vadd.f32 %v3319, %v3320
    %v3322 = vrot.slane %v3321, 4
    %v3323 = vadd.f32 %v3321, %v3322
    %v3324 = vrot.slane %v3323, 2
    %v3325 = vadd.f32 %v3323, %v3324
    %v3326 = vrot.slane %v3325, 1
    %v3327 = vadd.f32 %v3325, %v3326
    %v3328 = vld [vmem:[#allocation6] sm:$0xff]
    %v3329 = vld [vmem:[#allocation6 + $0x8] sm:$0xff]
    %v3330 = vld [vmem:[#allocation6 + $0x10] sm:$0xff]
    %v3331 = vld [vmem:[#allocation6 + $0x18] sm:$0xff]
    %v3332 = vld [vmem:[#allocation6 + $0x20] sm:$0xff]
    %v3333 = vld [vmem:[#allocation6 + $0x28] sm:$0xff]
    %v3334 = vld [vmem:[#allocation6 + $0x30] sm:$0xff]
    %v3335 = vld [vmem:[#allocation6 + $0x38] sm:$0xff]
    %v3336 = vld [vmem:[#allocation6 + $0x40] sm:$0xff]
    %v3337 = vld [vmem:[#allocation6 + $0x48] sm:$0xff]
    %v3338 = vld [vmem:[#allocation6 + $0x50] sm:$0xff]
    %v3339 = vld [vmem:[#allocation6 + $0x58] sm:$0xff]
    %v3340 = vld [vmem:[#allocation6 + $0x60] sm:$0xff]
    %v3341 = vld [vmem:[#allocation6 + $0x68] sm:$0xff]
    %v3342 = vld [vmem:[#allocation6 + $0x70] sm:$0xff]
    %v3343 = vld [vmem:[#allocation6 + $0x78] sm:$0xff]
    %v3344 = vld [vmem:[#allocation6 + $0x80] sm:$0xff]
    %v3345 = vld [vmem:[#allocation6 + $0x88] sm:$0xff]
    %v3346 = vld [vmem:[#allocation6 + $0x90] sm:$0xff]
    %v3347 = vld [vmem:[#allocation6 + $0x98] sm:$0xff]
    %v3348 = vld [vmem:[#allocation6 + $0xa0] sm:$0xff]
    %v3349 = vld [vmem:[#allocation6 + $0xa8] sm:$0xff]
    %v3350 = vld [vmem:[#allocation6 + $0xb0] sm:$0xff]
    %v3351 = vld [vmem:[#allocation6 + $0xb8] sm:$0xff]
    %v3352 = vld [vmem:[#allocation6 + $0xc0] sm:$0xff]
    %v3353 = vld [vmem:[#allocation6 + $0xc8] sm:$0xff]
    %v3354 = vld [vmem:[#allocation6 + $0xd0] sm:$0xff]
    %v3355 = vld [vmem:[#allocation6 + $0xd8] sm:$0xff]
    %v3356 = vld [vmem:[#allocation6 + $0xe0] sm:$0xff]
    %v3357 = vld [vmem:[#allocation6 + $0xe8] sm:$0xff]
    %v3358 = vld [vmem:[#allocation6 + $0xf0] sm:$0xff]
    %v3359 = vld [vmem:[#allocation6 + $0xf8] sm:$0xff]
    %3360 = vmatpush.msra.mxu0 %v3343
    %3361 = vmatpush.msra.mxu0 %v3342
    %3362 = vmatpush.msra.mxu0 %v3341
    %3363 = vmatpush.msra.mxu0 %v3340
    %3364 = vmatpush.msra.mxu0 %v3339
    %3365 = vmatpush.msra.mxu0 %v3338
    %3366 = vmatpush.msra.mxu0 %v3337
    %3367 = vmatpush.msra.mxu0 %v3336
    %3368 = vmatpush.msra.mxu0 %v3335
    %3369 = vmatpush.msra.mxu0 %v3334
    %3370 = vmatpush.msra.mxu0 %v3333
    %3371 = vmatpush.msra.mxu0 %v3332
    %3372 = vmatpush.msra.mxu0 %v3331
    %3373 = vmatpush.msra.mxu0 %v3330
    %3374 = vmatpush.msra.mxu0 %v3329
    %3375 = vmatpush.msra.mxu0 %v3328
    %3376 = vmatmul.f32.gmra.mxu0 %v3274
    %v3377 = vpop.f32.mrf.mxu0
    %v3378 = vadd.f32 0.0, %v3377
    %3379 = vdwg.mxu0
    %3380 = vmatpush.msra.mxu0 %v3359
    %3381 = vmatpush.msra.mxu0 %v3358
    %3382 = vmatpush.msra.mxu0 %v3357
    %3383 = vmatpush.msra.mxu0 %v3356
    %3384 = vmatpush.msra.mxu0 %v3355
    %3385 = vmatpush.msra.mxu0 %v3354
    %3386 = vmatpush.msra.mxu0 %v3353
    %3387 = vmatpush.msra.mxu0 %v3352
    %3388 = vmatpush.msra.mxu0 %v3351
    %3389 = vmatpush.msra.mxu0 %v3350
    %3390 = vmatpush.msra.mxu0 %v3349
    %3391 = vmatpush.msra.mxu0 %v3348
    %3392 = vmatpush.msra.mxu0 %v3347
    %3393 = vmatpush.msra.mxu0 %v3346
    %3394 = vmatpush.msra.mxu0 %v3345
    %3395 = vmatpush.msra.mxu0 %v3344
    %3396 = vmatmul.f32.gmra.mxu0 %v3287
    %v3397 = vpop.f32.mrf.mxu0
    %v3398 = vadd.f32 %v3378, %v3397
    %3399 = vdwg.mxu0
    %v3400 = vmul.f32 %v3398, 0.0010330578
    %3401 = vmatpush.msra.mxu0 %v3343
    %3402 = vmatpush.msra.mxu0 %v3342
    %3403 = vmatpush.msra.mxu0 %v3341
    %3404 = vmatpush.msra.mxu0 %v3340
    %3405 = vmatpush.msra.mxu0 %v3339
    %3406 = vmatpush.msra.mxu0 %v3338
    %3407 = vmatpush.msra.mxu0 %v3337
    %3408 = vmatpush.msra.mxu0 %v3336
    %3409 = vmatpush.msra.mxu0 %v3335
    %3410 = vmatpush.msra.mxu0 %v3334
    %3411 = vmatpush.msra.mxu0 %v3333
    %3412 = vmatpush.msra.mxu0 %v3332
    %3413 = vmatpush.msra.mxu0 %v3331
    %3414 = vmatpush.msra.mxu0 %v3330
    %3415 = vmatpush.msra.mxu0 %v3329
    %3416 = vmatpush.msra.mxu0 %v3328
    %3417 = vmatmul.f32.gmra.mxu0 %v3314
    %v3418 = vpop.f32.mrf.mxu0
    %v3419 = vadd.f32 0.0, %v3418
    %3420 = vdwg.mxu0
    %3421 = vmatpush.msra.mxu0 %v3359
    %3422 = vmatpush.msra.mxu0 %v3358
    %3423 = vmatpush.msra.mxu0 %v3357
    %3424 = vmatpush.msra.mxu0 %v3356
    %3425 = vmatpush.msra.mxu0 %v3355
    %3426 = vmatpush.msra.mxu0 %v3354
    %3427 = vmatpush.msra.mxu0 %v3353
    %3428 = vmatpush.msra.mxu0 %v3352
    %3429 = vmatpush.msra.mxu0 %v3351
    %3430 = vmatpush.msra.mxu0 %v3350
    %3431 = vmatpush.msra.mxu0 %v3349
    %3432 = vmatpush.msra.mxu0 %v3348
    %3433 = vmatpush.msra.mxu0 %v3347
    %3434 = vmatpush.msra.mxu0 %v3346
    %3435 = vmatpush.msra.mxu0 %v3345
    %3436 = vmatpush.msra.mxu0 %v3344
    %3437 = vmatmul.f32.gmra.mxu0 %v3327
    %v3438 = vpop.f32.mrf.mxu0
    %v3439 = vadd.f32 %v3419, %v3438
    %3440 = vdwg.mxu0
    %v3441 = vmul.f32 %v3439, 0.0010330578
    %v3442 = vmul.f32 %v3400, %v3400
    %v3443 = vsub.f32 %v3441, %v3442
    %v3444 = vmax.f32 %v3443, 0.0
    %v3445 = vadd.f32 %v3444, 1e-05
    %v3446 = vrsqrt.pop %v3445
    %v3447 = vmul.f32 %v3446, %v3445
    %v3448 = vmul.f32 %v3447, %v3446
    %v3449 = vmul.f32 0.5, %v3448
    %v3450 = vsub.f32 1.5, %v3449
    %v3451 = vmul.f32 %v3446, %v3450
    %vm3452 = vweird.f32 %v3445
    %vm3453 = vweird.f32 %v3446
    %vm3454 = vmor %vm3452, %vm3453
    %v3455 = vsel %vm3454, %v3446, %v3451
    %v3456 = vld [vmem:[#allocation11] sm:$0xff]
    %v3457 = vld [vmem:[#allocation11 + $0x8] sm:$0xff]
    %vm3458 = vcmask 64512
    %v3460 = vsel %vm3458, %v3400, 0
    %3462 = vmatpush.msra.mxu0 0.0
    %3463 = vmatpush.msra.mxu0 0.0
    %3464 = vmatpush.msra.mxu0 0.0
    %3465 = vmatpush.msra.mxu0 0.0
    %3466 = vmatpush.msra.mxu0 0.0
    %3467 = vmatpush.msra.mxu0 0.0
    %3468 = vmatpush.msra.mxu0 0.0
    %3469 = vmatpush.msra.mxu0 0.0
    %3470 = vmatpush.msra.mxu0 0.0
    %3471 = vmatpush.msra.mxu0 0.0
    %3472 = vmatpush.msra.mxu0 0.0
    %3473 = vmatpush.msra.mxu0 0.0
    %3474 = vmatpush.msra.mxu0 0.0
    %3475 = vmatpush.msra.mxu0 0.0
    %3476 = vmatpush.msra.mxu0 0.0
    %3477 = vmatpush.msra.mxu0 %v3456
    %3478 = vmatmul.f32.gmra.mxu0 %v3460
    %v3479 = vpop.f32.mrf.mxu0
    %v3480 = vadd.f32 0.0, %v3479
    %3481 = vdwg.mxu0
    %3482 = vmatpush.msra.mxu0 0.0
    %3483 = vmatpush.msra.mxu0 0.0
    %3484 = vmatpush.msra.mxu0 0.0
    %3485 = vmatpush.msra.mxu0 0.0
    %3486 = vmatpush.msra.mxu0 0.0
    %3487 = vmatpush.msra.mxu0 0.0
    %3488 = vmatpush.msra.mxu0 0.0
    %3489 = vmatpush.msra.mxu0 0.0
    %3490 = vmatpush.msra.mxu0 0.0
    %3491 = vmatpush.msra.mxu0 0.0
    %3492 = vmatpush.msra.mxu0 0.0
    %3493 = vmatpush.msra.mxu0 0.0
    %3494 = vmatpush.msra.mxu0 0.0
    %3495 = vmatpush.msra.mxu0 0.0
    %3496 = vmatpush.msra.mxu0 0.0
    %3497 = vmatpush.msra.mxu0 %v3457
    %3498 = vmatmul.f32.gmra.mxu0 %v3460
    %v3499 = vpop.f32.mrf.mxu0
    %v3500 = vadd.f32 0.0, %v3499
    %3501 = vdwg.mxu0
    %v3503 = vsel %vm3458, %v3455, 0
    %3505 = vmatpush.msra.mxu0 0.0
    %3506 = vmatpush.msra.mxu0 0.0
    %3507 = vmatpush.msra.mxu0 0.0
    %3508 = vmatpush.msra.mxu0 0.0
    %3509 = vmatpush.msra.mxu0 0.0
    %3510 = vmatpush.msra.mxu0 0.0
    %3511 = vmatpush.msra.mxu0 0.0
    %3512 = vmatpush.msra.mxu0 0.0
    %3513 = vmatpush.msra.mxu0 0.0
    %3514 = vmatpush.msra.mxu0 0.0
    %3515 = vmatpush.msra.mxu0 0.0
    %3516 = vmatpush.msra.mxu0 0.0
    %3517 = vmatpush.msra.mxu0 0.0
    %3518 = vmatpush.msra.mxu0 0.0
    %3519 = vmatpush.msra.mxu0 0.0
    %3520 = vmatpush.msra.mxu0 %v3456
    %3521 = vmatmul.f32.gmra.mxu0 %v3503
    %v3522 = vpop.f32.mrf.mxu0
    %v3523 = vadd.f32 0.0, %v3522
    %3524 = vdwg.mxu0
    %3525 = vmatpush.msra.mxu0 0.0
    %3526 = vmatpush.msra.mxu0 0.0
    %3527 = vmatpush.msra.mxu0 0.0
    %3528 = vmatpush.msra.mxu0 0.0
    %3529 = vmatpush.msra.mxu0 0.0
    %3530 = vmatpush.msra.mxu0 0.0
    %3531 = vmatpush.msra.mxu0 0.0
    %3532 = vmatpush.msra.mxu0 0.0
    %3533 = vmatpush.msra.mxu0 0.0
    %3534 = vmatpush.msra.mxu0 0.0
    %3535 = vmatpush.msra.mxu0 0.0
    %3536 = vmatpush.msra.mxu0 0.0
    %3537 = vmatpush.msra.mxu0 0.0
    %3538 = vmatpush.msra.mxu0 0.0
    %3539 = vmatpush.msra.mxu0 0.0
    %3540 = vmatpush.msra.mxu0 %v3457
    %3541 = vmatmul.f32.gmra.mxu0 %v3503
    %v3542 = vpop.f32.mrf.mxu0
    %v3543 = vadd.f32 0.0, %v3542
    %3544 = vdwg.mxu0
    %v3545 = vperm.slane %v3480, 0
    %v3546 = vperm.slane %v3500, 0
    %v3547 = vsub.f32 %v3247, %v3545
    %v3548 = vsub.f32 %v3248, %v3546
    %v3549 = vsub.f32 %v3249, %v3545
    %v3550 = vsub.f32 %v3250, %v3546
    %v3551 = vsub.f32 %v3251, %v3545
    %v3552 = vsub.f32 %v3252, %v3546
    %v3553 = vsub.f32 %v3253, %v3545
    %v3554 = vsub.f32 %v3254, %v3546
    %v3555 = vsub.f32 %v3255, %v3545
    %v3556 = vsub.f32 %v3256, %v3546
    %v3557 = vsub.f32 %v3257, %v3545
    %v3558 = vsub.f32 %v3258, %v3546
    %v3559 = vsub.f32 %v3259, %v3545
    %v3560 = vsub.f32 %v3260, %v3546
    %v3561 = vperm.slane %v3523, 0
    %v3562 = vperm.slane %v3543, 0
    %v3563 = vmul.f32 %v3547, %v3561
    %v3564 = vmul.f32 %v3548, %v3562
    %v3565 = vmul.f32 %v3549, %v3561
    %v3566 = vmul.f32 %v3550, %v3562
    %v3567 = vmul.f32 %v3551, %v3561
    %v3568 = vmul.f32 %v3552, %v3562
    %v3569 = vmul.f32 %v3553, %v3561
    %v3570 = vmul.f32 %v3554, %v3562
    %v3571 = vmul.f32 %v3555, %v3561
    %v3572 = vmul.f32 %v3556, %v3562
    %v3573 = vmul.f32 %v3557, %v3561
    %v3574 = vmul.f32 %v3558, %v3562
    %v3575 = vmul.f32 %v3559, %v3561
    %v3576 = vmul.f32 %v3560, %v3562
    %v3577 = vmul.f32 %v3563, %v3215
    %v3578 = vmul.f32 %v3564, %v3215
    %v3579 = vmul.f32 %v3565, %v3220
    %v3580 = vmul.f32 %v3566, %v3220
    %v3581 = vmul.f32 %v3567, %v3225
    %v3582 = vmul.f32 %v3568, %v3225
    %v3583 = vmul.f32 %v3569, %v3230
    %v3584 = vmul.f32 %v3570, %v3230
    %v3585 = vmul.f32 %v3571, %v3235
    %v3586 = vmul.f32 %v3572, %v3235
    %v3587 = vmul.f32 %v3573, %v3240
    %v3588 = vmul.f32 %v3574, %v3240
    %v3589 = vmul.f32 %v3575, %v3245
    %v3590 = vmul.f32 %v3576, %v3245
    %v3591 = vmul.f32 %v3577, 0.2
    %v3592 = vmul.f32 %v3578, 0.2
    %v3593 = vmul.f32 %v3579, 0.2
    %v3594 = vmul.f32 %v3580, 0.2
    %v3595 = vmul.f32 %v3581, 0.2
    %v3596 = vmul.f32 %v3582, 0.2
    %v3597 = vmul.f32 %v3583, 0.2
    %v3598 = vmul.f32 %v3584, 0.2
    %v3599 = vmul.f32 %v3585, 0.2
    %v3600 = vmul.f32 %v3586, 0.2
    %v3601 = vmul.f32 %v3587, 0.2
    %v3602 = vmul.f32 %v3588, 0.2
    %v3603 = vmul.f32 %v3589, 0.2
    %v3604 = vmul.f32 %v3590, 0.2
    %v3605 = vmax.f32 %v3577, %v3591
    %v3606 = vmax.f32 %v3578, %v3592
    %v3607 = vmax.f32 %v3579, %v3593
    %v3608 = vmax.f32 %v3580, %v3594
    %v3609 = vmax.f32 %v3581, %v3595
    %v3610 = vmax.f32 %v3582, %v3596
    %v3611 = vmax.f32 %v3583, %v3597
    %v3612 = vmax.f32 %v3584, %v3598
    %v3613 = vmax.f32 %v3585, %v3599
    %v3614 = vmax.f32 %v3586, %v3600
    %v3615 = vmax.f32 %v3587, %v3601
    %v3616 = vmax.f32 %v3588, %v3602
    %v3617 = vmax.f32 %v3589, %v3603
    %v3618 = vmax.f32 %v3590, %v3604
    %3619 = vst [vmem:[#allocation5] sm:$0xff] %v3605
    %3620 = vst [vmem:[#allocation5 + $0x8] sm:$0xff] %v3606
    %3621 = vst [vmem:[#allocation5 + $0x10] sm:$0xff] %v3607
    %3622 = vst [vmem:[#allocation5 + $0x18] sm:$0xff] %v3608
    %3623 = vst [vmem:[#allocation5 + $0x20] sm:$0xff] %v3609
    %3624 = vst [vmem:[#allocation5 + $0x28] sm:$0xff] %v3610
    %3625 = vst [vmem:[#allocation5 + $0x30] sm:$0xff] %v3611
    %3626 = vst [vmem:[#allocation5 + $0x38] sm:$0xff] %v3612
    %3627 = vst [vmem:[#allocation5 + $0x40] sm:$0xff] %v3613
    %3628 = vst [vmem:[#allocation5 + $0x48] sm:$0xff] %v3614
    %3629 = vst [vmem:[#allocation5 + $0x50] sm:$0xff] %v3615
    %3630 = vst [vmem:[#allocation5 + $0x58] sm:$0xff] %v3616
    %3631 = vst [vmem:[#allocation5 + $0x60] sm:$0x3] %v3617
    %3632 = vst [vmem:[#allocation5 + $0x68] sm:$0x3] %v3618
    %s3633 = sshll.u32 %s253, 4
    %3634 = dma.done %s205, %s3633
    %v3635 = vld [vmem:[#allocation5] sm:$0xff]
    %v3636 = vld [vmem:[#allocation5 + $0x8] sm:$0xff]
    %v3637 = vld [vmem:[#allocation5 + $0x10] sm:$0xff]
    %v3638 = vld [vmem:[#allocation5 + $0x18] sm:$0xff]
    %v3639 = vld [vmem:[#allocation5 + $0x20] sm:$0xff]
    %v3640 = vld [vmem:[#allocation5 + $0x28] sm:$0xff]
    %v3641 = vld [vmem:[#allocation5 + $0x30] sm:$0xff]
    %v3642 = vld [vmem:[#allocation5 + $0x38] sm:$0xff]
    %v3643 = vld [vmem:[#allocation5 + $0x40] sm:$0xff]
    %v3644 = vld [vmem:[#allocation5 + $0x48] sm:$0xff]
    %v3645 = vld [vmem:[#allocation5 + $0x50] sm:$0x7f]
    %v3646 = vld [vmem:[#allocation5 + $0x58] sm:$0x7f]
    %v3647 = vpack.c.bf16 %v3637, %v3635
    %v3648 = vpack.c.bf16 %v3638, %v3636
    %v3649 = vpack.c.bf16 %v3641, %v3639
    %v3650 = vpack.c.bf16 %v3642, %v3640
    %v3651 = vpack.c.bf16 %v3645, %v3643
    %v3652 = vpack.c.bf16 %v3646, %v3644
    %v3653 = vld [vmem:[%s204] sm:$0xff]
    %v3654 = vld [vmem:[%s204 + $0x8] sm:$0xff]
    %v3655 = vld [vmem:[%s204 + $0x10] sm:$0xff]
    %v3656 = vld [vmem:[%s204 + $0x18] sm:$0xff]
    %v3657 = vld [vmem:[%s204 + $0x20] sm:$0xff]
    %v3658 = vld [vmem:[%s204 + $0x28] sm:$0xff]
    %v3659 = vld [vmem:[%s204 + $0x30] sm:$0xff]
    %v3660 = vld [vmem:[%s204 + $0x38] sm:$0xff]
    %v3661 = vld [vmem:[%s204 + $0x40] sm:$0xff]
    %v3662 = vld [vmem:[%s204 + $0x48] sm:$0xff]
    %v3663 = vld [vmem:[%s204 + $0x50] sm:$0xff]
    %v3664 = vld [vmem:[%s204 + $0x58] sm:$0xff]
    %v3665 = vld [vmem:[%s204 + $0x60] sm:$0xff]
    %v3666 = vld [vmem:[%s204 + $0x68] sm:$0xff]
    %v3667 = vld [vmem:[%s204 + $0x70] sm:$0xff]
    %v3668 = vld [vmem:[%s204 + $0x78] sm:$0xff]
    %v3669 = vld [vmem:[%s204 + $0x80] sm:$0xff]
    %v3670 = vld [vmem:[%s204 + $0x88] sm:$0xff]
    %v3671 = vld [vmem:[%s204 + $0x90] sm:$0xff]
    %v3672 = vld [vmem:[%s204 + $0x98] sm:$0xff]
    %v3673 = vld [vmem:[%s204 + $0xa0] sm:$0xff]
    %v3674 = vld [vmem:[%s204 + $0xa8] sm:$0xff]
    %v3675 = vld [vmem:[%s204 + $0xb0] sm:$0xff]
    %v3676 = vld [vmem:[%s204 + $0xb8] sm:$0xff]
    %v3677 = vld [vmem:[%s204 + $0xc0] sm:$0xff]
    %v3678 = vld [vmem:[%s204 + $0xc8] sm:$0xff]
    %v3679 = vld [vmem:[%s204 + $0xd0] sm:$0xff]
    %v3680 = vld [vmem:[%s204 + $0xd8] sm:$0xff]
    %v3681 = vld [vmem:[%s204 + $0xe0] sm:$0xff]
    %v3682 = vld [vmem:[%s204 + $0xe8] sm:$0xff]
    %v3683 = vld [vmem:[%s204 + $0xf0] sm:$0xff]
    %v3684 = vld [vmem:[%s204 + $0xf8] sm:$0xff]
    %v3685 = vld [vmem:[#allocation5] sm:$0xfe]
    %v3686 = vld [vmem:[#allocation5 + $0x8] sm:$0xfe]
    %v3687 = vld [vmem:[#allocation5 + $0x50] sm:$0xff]
    %v3688 = vld [vmem:[#allocation5 + $0x58] sm:$0xff]
    %v3689 = vpack.c.bf16 %v3637, %v3685
    %v3690 = vpack.c.bf16 %v3638, %v3686
    %v3691 = vpack.c.bf16 %v3687, %v3643
    %v3692 = vpack.c.bf16 %v3688, %v3644
    %s3693 = scalar_lea.vmem [#allocation2], 2304
    %v3694 = vld [vmem:[%s3693] sm:$0xff]
    %v3695 = vld [vmem:[%s3693 + $0x8] sm:$0xff]
    %v3696 = vld [vmem:[%s3693 + $0x10] sm:$0xff]
    %v3697 = vld [vmem:[%s3693 + $0x18] sm:$0xff]
    %v3698 = vld [vmem:[%s3693 + $0x20] sm:$0xff]
    %v3699 = vld [vmem:[%s3693 + $0x28] sm:$0xff]
    %v3700 = vld [vmem:[%s3693 + $0x30] sm:$0xff]
    %v3701 = vld [vmem:[%s3693 + $0x38] sm:$0xff]
    %v3702 = vld [vmem:[%s3693 + $0x40] sm:$0xff]
    %v3703 = vld [vmem:[%s3693 + $0x48] sm:$0xff]
    %v3704 = vld [vmem:[%s3693 + $0x50] sm:$0xff]
    %v3705 = vld [vmem:[%s3693 + $0x58] sm:$0xff]
    %v3706 = vld [vmem:[%s3693 + $0x60] sm:$0xff]
    %v3707 = vld [vmem:[%s3693 + $0x68] sm:$0xff]
    %v3708 = vld [vmem:[%s3693 + $0x70] sm:$0xff]
    %v3709 = vld [vmem:[%s3693 + $0x78] sm:$0xff]
    %v3710 = vld [vmem:[%s3693 + $0x80] sm:$0xff]
    %v3711 = vld [vmem:[%s3693 + $0x88] sm:$0xff]
    %v3712 = vld [vmem:[%s3693 + $0x90] sm:$0xff]
    %v3713 = vld [vmem:[%s3693 + $0x98] sm:$0xff]
    %v3714 = vld [vmem:[%s3693 + $0xa0] sm:$0xff]
    %v3715 = vld [vmem:[%s3693 + $0xa8] sm:$0xff]
    %v3716 = vld [vmem:[%s3693 + $0xb0] sm:$0xff]
    %v3717 = vld [vmem:[%s3693 + $0xb8] sm:$0xff]
    %v3718 = vld [vmem:[%s3693 + $0xc0] sm:$0xff]
    %v3719 = vld [vmem:[%s3693 + $0xc8] sm:$0xff]
    %v3720 = vld [vmem:[%s3693 + $0xd0] sm:$0xff]
    %v3721 = vld [vmem:[%s3693 + $0xd8] sm:$0xff]
    %v3722 = vld [vmem:[%s3693 + $0xe0] sm:$0xff]
    %v3723 = vld [vmem:[%s3693 + $0xe8] sm:$0xff]
    %v3724 = vld [vmem:[%s3693 + $0xf0] sm:$0xff]
    %v3725 = vld [vmem:[%s3693 + $0xf8] sm:$0xff]
    %v3727 = vshrl.u32 %v3689, 16
    %v3729 = vshll.u32 %v3689, 16
    %v3731 = vrot.slane %v3729, 1
    %v3732 = vor.u32 %v3727, %v3731
    %v3734 = vshll.u32 %v3649, 16
    %v3736 = vrot.slane %v3734, 1
    %v3737 = vsel %vm351, %v3732, %v3736
    %v3739 = vshrl.u32 %v3690, 16
    %v3741 = vshll.u32 %v3690, 16
    %v3743 = vrot.slane %v3741, 1
    %v3744 = vor.u32 %v3739, %v3743
    %v3746 = vshll.u32 %v3650, 16
    %v3748 = vrot.slane %v3746, 1
    %v3749 = vsel %vm351, %v3744, %v3748
    %v3750 = vshrl.u32 %v3649, 16
    %v3752 = vor.u32 %v3750, %v3736
    %v3754 = vshll.u32 %v3691, 16
    %v3756 = vrot.slane %v3754, 1
    %v3757 = vsel %vm351, %v3752, %v3756
    %v3758 = vshrl.u32 %v3650, 16
    %v3760 = vor.u32 %v3758, %v3748
    %v3762 = vshll.u32 %v3692, 16
    %v3764 = vrot.slane %v3762, 1
    %v3765 = vsel %vm351, %v3760, %v3764
    %v3766 = vshrl.u32 %v3691, 16
    %v3768 = vor.u32 %v3766, %v3756
    %v3769 = vshrl.u32 %v3692, 16
    %v3771 = vor.u32 %v3769, %v3764
    %v3810 = vunpack.c.l.b16 %v3694
    %v3811 = vunpack.c.h.b16 %v3694
    %v3812 = vunpack.c.l.b16 %v3695
    %v3813 = vunpack.c.h.b16 %v3695
    %v3814 = vunpack.c.l.b16 %v3696
    %v3815 = vunpack.c.h.b16 %v3696
    %v3816 = vunpack.c.l.b16 %v3697
    %v3817 = vunpack.c.h.b16 %v3697
    %v3818 = vunpack.c.l.b16 %v3698
    %v3819 = vunpack.c.h.b16 %v3698
    %v3820 = vunpack.c.l.b16 %v3699
    %v3821 = vunpack.c.h.b16 %v3699
    %v3822 = vunpack.c.l.b16 %v3700
    %v3823 = vunpack.c.h.b16 %v3700
    %v3824 = vunpack.c.l.b16 %v3701
    %v3825 = vunpack.c.h.b16 %v3701
    %v3826 = vunpack.c.l.b16 %v3702
    %v3827 = vunpack.c.h.b16 %v3702
    %v3828 = vunpack.c.l.b16 %v3703
    %v3829 = vunpack.c.h.b16 %v3703
    %v3830 = vunpack.c.l.b16 %v3704
    %v3831 = vunpack.c.h.b16 %v3704
    %v3832 = vunpack.c.l.b16 %v3705
    %v3833 = vunpack.c.h.b16 %v3705
    %v3834 = vunpack.c.l.b16 %v3706
    %v3835 = vunpack.c.h.b16 %v3706
    %v3836 = vunpack.c.l.b16 %v3707
    %v3837 = vunpack.c.h.b16 %v3707
    %v3838 = vunpack.c.l.b16 %v3708
    %v3839 = vunpack.c.h.b16 %v3708
    %v3840 = vunpack.c.l.b16 %v3709
    %v3841 = vunpack.c.h.b16 %v3709
    %v3842 = vunpack.c.l.b16 %v3710
    %v3843 = vunpack.c.h.b16 %v3710
    %v3844 = vunpack.c.l.b16 %v3711
    %v3845 = vunpack.c.h.b16 %v3711
    %v3846 = vunpack.c.l.b16 %v3712
    %v3847 = vunpack.c.h.b16 %v3712
    %v3848 = vunpack.c.l.b16 %v3713
    %v3849 = vunpack.c.h.b16 %v3713
    %v3850 = vunpack.c.l.b16 %v3714
    %v3851 = vunpack.c.h.b16 %v3714
    %v3852 = vunpack.c.l.b16 %v3715
    %v3853 = vunpack.c.h.b16 %v3715
    %v3854 = vunpack.c.l.b16 %v3716
    %v3855 = vunpack.c.h.b16 %v3716
    %v3856 = vunpack.c.l.b16 %v3717
    %v3857 = vunpack.c.h.b16 %v3717
    %v3858 = vunpack.c.l.b16 %v3718
    %v3859 = vunpack.c.h.b16 %v3718
    %v3860 = vunpack.c.l.b16 %v3719
    %v3861 = vunpack.c.h.b16 %v3719
    %v3862 = vunpack.c.l.b16 %v3720
    %v3863 = vunpack.c.h.b16 %v3720
    %v3864 = vunpack.c.l.b16 %v3721
    %v3865 = vunpack.c.h.b16 %v3721
    %v3866 = vunpack.c.l.b16 %v3722
    %v3867 = vunpack.c.h.b16 %v3722
    %v3868 = vunpack.c.l.b16 %v3723
    %v3869 = vunpack.c.h.b16 %v3723
    %v3870 = vunpack.c.l.b16 %v3724
    %v3871 = vunpack.c.h.b16 %v3724
    %v3872 = vunpack.c.l.b16 %v3725
    %v3873 = vunpack.c.h.b16 %v3725
    %v3874 = vpack.c.b16 %v3812, %v3810
    %v3875 = vpack.c.b16 %v3813, %v3811
    %v3876 = vpack.c.b16 %v3816, %v3814
    %v3877 = vpack.c.b16 %v3817, %v3815
    %v3878 = vpack.c.b16 %v3820, %v3818
    %v3879 = vpack.c.b16 %v3821, %v3819
    %v3880 = vpack.c.b16 %v3824, %v3822
    %v3881 = vpack.c.b16 %v3825, %v3823
    %v3882 = vpack.c.b16 %v3828, %v3826
    %v3883 = vpack.c.b16 %v3829, %v3827
    %v3884 = vpack.c.b16 %v3832, %v3830
    %v3885 = vpack.c.b16 %v3833, %v3831
    %v3886 = vpack.c.b16 %v3836, %v3834
    %v3887 = vpack.c.b16 %v3837, %v3835
    %v3888 = vpack.c.b16 %v3840, %v3838
    %v3889 = vpack.c.b16 %v3841, %v3839
    %v3890 = vpack.c.b16 %v3844, %v3842
    %v3891 = vpack.c.b16 %v3845, %v3843
    %v3892 = vpack.c.b16 %v3848, %v3846
    %v3893 = vpack.c.b16 %v3849, %v3847
    %v3894 = vpack.c.b16 %v3852, %v3850
    %v3895 = vpack.c.b16 %v3853, %v3851
    %v3896 = vpack.c.b16 %v3856, %v3854
    %v3897 = vpack.c.b16 %v3857, %v3855
    %v3898 = vpack.c.b16 %v3860, %v3858
    %v3899 = vpack.c.b16 %v3861, %v3859
    %v3900 = vpack.c.b16 %v3864, %v3862
    %v3901 = vpack.c.b16 %v3865, %v3863
    %v3902 = vpack.c.b16 %v3868, %v3866
    %v3903 = vpack.c.b16 %v3869, %v3867
    %v3904 = vpack.c.b16 %v3872, %v3870
    %v3905 = vpack.c.b16 %v3873, %v3871
    %3938 = vmatpush.bf16.msra.mxu0 %v3888
    %3939 = vmatpush.bf16.msra.mxu0 %v3886
    %3940 = vmatpush.bf16.msra.mxu0 %v3884
    %3941 = vmatpush.bf16.msra.mxu0 %v3882
    %3942 = vmatpush.bf16.msra.mxu0 %v3880
    %3943 = vmatpush.bf16.msra.mxu0 %v3878
    %3944 = vmatpush.bf16.msra.mxu0 %v3876
    %3945 = vmatpush.bf16.msra.mxu0 %v3874
    %3946 = vmatmul.bf16.gmra.mxu0 %v3737
    %v3947 = vpop.f32.mrf.mxu0
    %v3948 = vadd.f32 0.0, %v3947
    %v3949 = vpop.f32.mrf.mxu0
    %v3950 = vadd.f32 0.0, %v3949
    %3951 = vmatmul.bf16.gmra.mxu0 %v3757
    %v3952 = vpop.f32.mrf.mxu0
    %v3953 = vadd.f32 0.0, %v3952
    %v3954 = vpop.f32.mrf.mxu0
    %v3955 = vadd.f32 0.0, %v3954
    %3956 = vmatmul.bf16.gmra.mxu0 %v3768
    %v3957 = vpop.f32.mrf.mxu0
    %v3958 = vadd.f32 0.0, %v3957
    %v3959 = vpop.f32.mrf.mxu0
    %v3960 = vadd.f32 0.0, %v3959
    %3961 = vdwg.mxu0
    %3962 = vmatpush.bf16.msra.mxu0 %v3904
    %3963 = vmatpush.bf16.msra.mxu0 %v3902
    %3964 = vmatpush.bf16.msra.mxu0 %v3900
    %3965 = vmatpush.bf16.msra.mxu0 %v3898
    %3966 = vmatpush.bf16.msra.mxu0 %v3896
    %3967 = vmatpush.bf16.msra.mxu0 %v3894
    %3968 = vmatpush.bf16.msra.mxu0 %v3892
    %3969 = vmatpush.bf16.msra.mxu0 %v3890
    %3970 = vmatmul.bf16.gmra.mxu0 %v3749
    %v3971 = vpop.f32.mrf.mxu0
    %v3972 = vadd.f32 %v3948, %v3971
    %v3973 = vpop.f32.mrf.mxu0
    %v3974 = vadd.f32 %v3950, %v3973
    %3975 = vmatmul.bf16.gmra.mxu0 %v3765
    %v3976 = vpop.f32.mrf.mxu0
    %v3977 = vadd.f32 %v3953, %v3976
    %v3978 = vpop.f32.mrf.mxu0
    %v3979 = vadd.f32 %v3955, %v3978
    %3980 = vmatmul.bf16.gmra.mxu0 %v3771
    %v3981 = vpop.f32.mrf.mxu0
    %v3982 = vadd.f32 %v3958, %v3981
    %v3983 = vpop.f32.mrf.mxu0
    %v3984 = vadd.f32 %v3960, %v3983
    %3985 = vdwg.mxu0
    %3986 = vmatpush.bf16.msra.mxu0 %v3889
    %3987 = vmatpush.bf16.msra.mxu0 %v3887
    %3988 = vmatpush.bf16.msra.mxu0 %v3885
    %3989 = vmatpush.bf16.msra.mxu0 %v3883
    %3990 = vmatpush.bf16.msra.mxu0 %v3881
    %3991 = vmatpush.bf16.msra.mxu0 %v3879
    %3992 = vmatpush.bf16.msra.mxu0 %v3877
    %3993 = vmatpush.bf16.msra.mxu0 %v3875
    %3994 = vmatmul.bf16.gmra.mxu0 %v3737
    %v3995 = vpop.f32.mrf.mxu0
    %v3996 = vadd.f32 0.0, %v3995
    %v3997 = vpop.f32.mrf.mxu0
    %v3998 = vadd.f32 0.0, %v3997
    %3999 = vmatmul.bf16.gmra.mxu0 %v3757
    %v4000 = vpop.f32.mrf.mxu0
    %v4001 = vadd.f32 0.0, %v4000
    %v4002 = vpop.f32.mrf.mxu0
    %v4003 = vadd.f32 0.0, %v4002
    %4004 = vmatmul.bf16.gmra.mxu0 %v3768
    %v4005 = vpop.f32.mrf.mxu0
    %v4006 = vadd.f32 0.0, %v4005
    %v4007 = vpop.f32.mrf.mxu0
    %v4008 = vadd.f32 0.0, %v4007
    %4009 = vdwg.mxu0
    %4010 = vmatpush.bf16.msra.mxu0 %v3905
    %4011 = vmatpush.bf16.msra.mxu0 %v3903
    %4012 = vmatpush.bf16.msra.mxu0 %v3901
    %4013 = vmatpush.bf16.msra.mxu0 %v3899
    %4014 = vmatpush.bf16.msra.mxu0 %v3897
    %4015 = vmatpush.bf16.msra.mxu0 %v3895
    %4016 = vmatpush.bf16.msra.mxu0 %v3893
    %4017 = vmatpush.bf16.msra.mxu0 %v3891
    %4018 = vmatmul.bf16.gmra.mxu0 %v3749
    %v4019 = vpop.f32.mrf.mxu0
    %v4020 = vadd.f32 %v3996, %v4019
    %v4021 = vpop.f32.mrf.mxu0
    %v4022 = vadd.f32 %v3998, %v4021
    %4023 = vmatmul.bf16.gmra.mxu0 %v3765
    %v4024 = vpop.f32.mrf.mxu0
    %v4025 = vadd.f32 %v4001, %v4024
    %v4026 = vpop.f32.mrf.mxu0
    %v4027 = vadd.f32 %v4003, %v4026
    %4028 = vmatmul.bf16.gmra.mxu0 %v3771
    %v4029 = vpop.f32.mrf.mxu0
    %v4030 = vadd.f32 %v4006, %v4029
    %v4031 = vpop.f32.mrf.mxu0
    %v4032 = vadd.f32 %v4008, %v4031
    %4033 = vdwg.mxu0
    %v4066 = vunpack.c.l.b16 %v3653
    %v4067 = vunpack.c.h.b16 %v3653
    %v4068 = vunpack.c.l.b16 %v3654
    %v4069 = vunpack.c.h.b16 %v3654
    %v4070 = vunpack.c.l.b16 %v3655
    %v4071 = vunpack.c.h.b16 %v3655
    %v4072 = vunpack.c.l.b16 %v3656
    %v4073 = vunpack.c.h.b16 %v3656
    %v4074 = vunpack.c.l.b16 %v3657
    %v4075 = vunpack.c.h.b16 %v3657
    %v4076 = vunpack.c.l.b16 %v3658
    %v4077 = vunpack.c.h.b16 %v3658
    %v4078 = vunpack.c.l.b16 %v3659
    %v4079 = vunpack.c.h.b16 %v3659
    %v4080 = vunpack.c.l.b16 %v3660
    %v4081 = vunpack.c.h.b16 %v3660
    %v4082 = vunpack.c.l.b16 %v3661
    %v4083 = vunpack.c.h.b16 %v3661
    %v4084 = vunpack.c.l.b16 %v3662
    %v4085 = vunpack.c.h.b16 %v3662
    %v4086 = vunpack.c.l.b16 %v3663
    %v4087 = vunpack.c.h.b16 %v3663
    %v4088 = vunpack.c.l.b16 %v3664
    %v4089 = vunpack.c.h.b16 %v3664
    %v4090 = vunpack.c.l.b16 %v3665
    %v4091 = vunpack.c.h.b16 %v3665
    %v4092 = vunpack.c.l.b16 %v3666
    %v4093 = vunpack.c.h.b16 %v3666
    %v4094 = vunpack.c.l.b16 %v3667
    %v4095 = vunpack.c.h.b16 %v3667
    %v4096 = vunpack.c.l.b16 %v3668
    %v4097 = vunpack.c.h.b16 %v3668
    %v4098 = vunpack.c.l.b16 %v3669
    %v4099 = vunpack.c.h.b16 %v3669
    %v4100 = vunpack.c.l.b16 %v3670
    %v4101 = vunpack.c.h.b16 %v3670
    %v4102 = vunpack.c.l.b16 %v3671
    %v4103 = vunpack.c.h.b16 %v3671
    %v4104 = vunpack.c.l.b16 %v3672
    %v4105 = vunpack.c.h.b16 %v3672
    %v4106 = vunpack.c.l.b16 %v3673
    %v4107 = vunpack.c.h.b16 %v3673
    %v4108 = vunpack.c.l.b16 %v3674
    %v4109 = vunpack.c.h.b16 %v3674
    %v4110 = vunpack.c.l.b16 %v3675
    %v4111 = vunpack.c.h.b16 %v3675
    %v4112 = vunpack.c.l.b16 %v3676
    %v4113 = vunpack.c.h.b16 %v3676
    %v4114 = vunpack.c.l.b16 %v3677
    %v4115 = vunpack.c.h.b16 %v3677
    %v4116 = vunpack.c.l.b16 %v3678
    %v4117 = vunpack.c.h.b16 %v3678
    %v4118 = vunpack.c.l.b16 %v3679
    %v4119 = vunpack.c.h.b16 %v3679
    %v4120 = vunpack.c.l.b16 %v3680
    %v4121 = vunpack.c.h.b16 %v3680
    %v4122 = vunpack.c.l.b16 %v3681
    %v4123 = vunpack.c.h.b16 %v3681
    %v4124 = vunpack.c.l.b16 %v3682
    %v4125 = vunpack.c.h.b16 %v3682
    %v4126 = vunpack.c.l.b16 %v3683
    %v4127 = vunpack.c.h.b16 %v3683
    %v4128 = vunpack.c.l.b16 %v3684
    %v4129 = vunpack.c.h.b16 %v3684
    %v4130 = vpack.c.b16 %v4068, %v4066
    %v4131 = vpack.c.b16 %v4069, %v4067
    %v4132 = vpack.c.b16 %v4072, %v4070
    %v4133 = vpack.c.b16 %v4073, %v4071
    %v4134 = vpack.c.b16 %v4076, %v4074
    %v4135 = vpack.c.b16 %v4077, %v4075
    %v4136 = vpack.c.b16 %v4080, %v4078
    %v4137 = vpack.c.b16 %v4081, %v4079
    %v4138 = vpack.c.b16 %v4084, %v4082
    %v4139 = vpack.c.b16 %v4085, %v4083
    %v4140 = vpack.c.b16 %v4088, %v4086
    %v4141 = vpack.c.b16 %v4089, %v4087
    %v4142 = vpack.c.b16 %v4092, %v4090
    %v4143 = vpack.c.b16 %v4093, %v4091
    %v4144 = vpack.c.b16 %v4096, %v4094
    %v4145 = vpack.c.b16 %v4097, %v4095
    %v4146 = vpack.c.b16 %v4100, %v4098
    %v4147 = vpack.c.b16 %v4101, %v4099
    %v4148 = vpack.c.b16 %v4104, %v4102
    %v4149 = vpack.c.b16 %v4105, %v4103
    %v4150 = vpack.c.b16 %v4108, %v4106
    %v4151 = vpack.c.b16 %v4109, %v4107
    %v4152 = vpack.c.b16 %v4112, %v4110
    %v4153 = vpack.c.b16 %v4113, %v4111
    %v4154 = vpack.c.b16 %v4116, %v4114
    %v4155 = vpack.c.b16 %v4117, %v4115
    %v4156 = vpack.c.b16 %v4120, %v4118
    %v4157 = vpack.c.b16 %v4121, %v4119
    %v4158 = vpack.c.b16 %v4124, %v4122
    %v4159 = vpack.c.b16 %v4125, %v4123
    %v4160 = vpack.c.b16 %v4128, %v4126
    %v4161 = vpack.c.b16 %v4129, %v4127
    %4194 = vmatpush.bf16.msra.mxu0 %v4144
    %4195 = vmatpush.bf16.msra.mxu0 %v4142
    %4196 = vmatpush.bf16.msra.mxu0 %v4140
    %4197 = vmatpush.bf16.msra.mxu0 %v4138
    %4198 = vmatpush.bf16.msra.mxu0 %v4136
    %4199 = vmatpush.bf16.msra.mxu0 %v4134
    %4200 = vmatpush.bf16.msra.mxu0 %v4132
    %4201 = vmatpush.bf16.msra.mxu0 %v4130
    %4202 = vmatmul.bf16.gmra.mxu0 %v3647
    %v4203 = vpop.f32.mrf.mxu0
    %v4204 = vadd.f32 %v3972, %v4203
    %v4205 = vpop.f32.mrf.mxu0
    %v4206 = vadd.f32 %v3974, %v4205
    %4207 = vmatmul.bf16.gmra.mxu0 %v3649
    %v4208 = vpop.f32.mrf.mxu0
    %v4209 = vadd.f32 %v3977, %v4208
    %v4210 = vpop.f32.mrf.mxu0
    %v4211 = vadd.f32 %v3979, %v4210
    %4212 = vmatmul.bf16.gmra.mxu0 %v3651
    %v4213 = vpop.f32.mrf.mxu0
    %v4214 = vadd.f32 %v3982, %v4213
    %v4215 = vpop.f32.mrf.mxu0
    %v4216 = vadd.f32 %v3984, %v4215
    %4217 = vdwg.mxu0
    %4218 = vmatpush.bf16.msra.mxu0 %v4160
    %4219 = vmatpush.bf16.msra.mxu0 %v4158
    %4220 = vmatpush.bf16.msra.mxu0 %v4156
    %4221 = vmatpush.bf16.msra.mxu0 %v4154
    %4222 = vmatpush.bf16.msra.mxu0 %v4152
    %4223 = vmatpush.bf16.msra.mxu0 %v4150
    %4224 = vmatpush.bf16.msra.mxu0 %v4148
    %4225 = vmatpush.bf16.msra.mxu0 %v4146
    %4226 = vmatmul.bf16.gmra.mxu0 %v3648
    %v4227 = vpop.f32.mrf.mxu0
    %v4228 = vadd.f32 %v4204, %v4227
    %v4229 = vpop.f32.mrf.mxu0
    %v4230 = vadd.f32 %v4206, %v4229
    %4231 = vmatmul.bf16.gmra.mxu0 %v3650
    %v4232 = vpop.f32.mrf.mxu0
    %v4233 = vadd.f32 %v4209, %v4232
    %v4234 = vpop.f32.mrf.mxu0
    %v4235 = vadd.f32 %v4211, %v4234
    %4236 = vmatmul.bf16.gmra.mxu0 %v3652
    %v4237 = vpop.f32.mrf.mxu0
    %v4238 = vadd.f32 %v4214, %v4237
    %v4239 = vpop.f32.mrf.mxu0
    %v4240 = vadd.f32 %v4216, %v4239
    %4241 = vdwg.mxu0
    %4242 = vmatpush.bf16.msra.mxu0 %v4145
    %4243 = vmatpush.bf16.msra.mxu0 %v4143
    %4244 = vmatpush.bf16.msra.mxu0 %v4141
    %4245 = vmatpush.bf16.msra.mxu0 %v4139
    %4246 = vmatpush.bf16.msra.mxu0 %v4137
    %4247 = vmatpush.bf16.msra.mxu0 %v4135
    %4248 = vmatpush.bf16.msra.mxu0 %v4133
    %4249 = vmatpush.bf16.msra.mxu0 %v4131
    %4250 = vmatmul.bf16.gmra.mxu0 %v3647
    %v4251 = vpop.f32.mrf.mxu0
    %v4252 = vadd.f32 %v4020, %v4251
    %v4253 = vpop.f32.mrf.mxu0
    %v4254 = vadd.f32 %v4022, %v4253
    %4255 = vmatmul.bf16.gmra.mxu0 %v3649
    %v4256 = vpop.f32.mrf.mxu0
    %v4257 = vadd.f32 %v4025, %v4256
    %v4258 = vpop.f32.mrf.mxu0
    %v4259 = vadd.f32 %v4027, %v4258
    %4260 = vmatmul.bf16.gmra.mxu0 %v3651
    %v4261 = vpop.f32.mrf.mxu0
    %v4262 = vadd.f32 %v4030, %v4261
    %v4263 = vpop.f32.mrf.mxu0
    %v4264 = vadd.f32 %v4032, %v4263
    %4265 = vdwg.mxu0
    %4266 = vmatpush.bf16.msra.mxu0 %v4161
    %4267 = vmatpush.bf16.msra.mxu0 %v4159
    %4268 = vmatpush.bf16.msra.mxu0 %v4157
    %4269 = vmatpush.bf16.msra.mxu0 %v4155
    %4270 = vmatpush.bf16.msra.mxu0 %v4153
    %4271 = vmatpush.bf16.msra.mxu0 %v4151
    %4272 = vmatpush.bf16.msra.mxu0 %v4149
    %4273 = vmatpush.bf16.msra.mxu0 %v4147
    %4274 = vmatmul.bf16.gmra.mxu0 %v3648
    %v4275 = vpop.f32.mrf.mxu0
    %v4276 = vadd.f32 %v4252, %v4275
    %v4277 = vpop.f32.mrf.mxu0
    %v4278 = vadd.f32 %v4254, %v4277
    %4279 = vmatmul.bf16.gmra.mxu0 %v3650
    %v4280 = vpop.f32.mrf.mxu0
    %v4281 = vadd.f32 %v4257, %v4280
    %v4282 = vpop.f32.mrf.mxu0
    %v4283 = vadd.f32 %v4259, %v4282
    %4284 = vmatmul.bf16.gmra.mxu0 %v3652
    %v4285 = vpop.f32.mrf.mxu0
    %v4286 = vadd.f32 %v4262, %v4285
    %v4287 = vpop.f32.mrf.mxu0
    %v4288 = vadd.f32 %v4264, %v4287
    %4289 = vdwg.mxu0
    %v4290 = vld [vmem:[#allocation5] sm:$0xfc]
    %v4291 = vld [vmem:[#allocation5 + $0x8] sm:$0xfc]
    %v4292 = vld [vmem:[#allocation5 + $0x10] sm:$0xff]
    %v4293 = vld [vmem:[#allocation5 + $0x18] sm:$0xff]
    %v4294 = vld [vmem:[#allocation5 + $0x20] sm:$0xff]
    %v4295 = vld [vmem:[#allocation5 + $0x28] sm:$0xff]
    %v4296 = vld [vmem:[#allocation5 + $0x30] sm:$0xff]
    %v4297 = vld [vmem:[#allocation5 + $0x38] sm:$0xff]
    %v4298 = vld [vmem:[#allocation5 + $0x40] sm:$0xff]
    %v4299 = vld [vmem:[#allocation5 + $0x48] sm:$0xff]
    %v4300 = vld [vmem:[#allocation5 + $0x50] sm:$0xff]
    %v4301 = vld [vmem:[#allocation5 + $0x58] sm:$0xff]
    %v4302 = vld [vmem:[#allocation5 + $0x60] sm:$0x1]
    %v4303 = vld [vmem:[#allocation5 + $0x68] sm:$0x1]
    %v4304 = vpack.c.bf16 %v4292, %v4290
    %v4305 = vpack.c.bf16 %v4293, %v4291
    %v4306 = vpack.c.bf16 %v4296, %v4294
    %v4307 = vpack.c.bf16 %v4297, %v4295
    %v4308 = vpack.c.bf16 %v4300, %v4298
    %v4309 = vpack.c.bf16 %v4301, %v4299
    %v4310 = vpack.c.bf16 %v4302, %v4302
    %v4311 = vpack.c.bf16 %v4303, %v4303
    %s4312 = scalar_lea.vmem [#allocation2], 2560
    %v4313 = vld [vmem:[%s4312] sm:$0xff]
    %v4314 = vld [vmem:[%s4312 + $0x8] sm:$0xff]
    %v4315 = vld [vmem:[%s4312 + $0x10] sm:$0xff]
    %v4316 = vld [vmem:[%s4312 + $0x18] sm:$0xff]
    %v4317 = vld [vmem:[%s4312 + $0x20] sm:$0xff]
    %v4318 = vld [vmem:[%s4312 + $0x28] sm:$0xff]
    %v4319 = vld [vmem:[%s4312 + $0x30] sm:$0xff]
    %v4320 = vld [vmem:[%s4312 + $0x38] sm:$0xff]
    %v4321 = vld [vmem:[%s4312 + $0x40] sm:$0xff]
    %v4322 = vld [vmem:[%s4312 + $0x48] sm:$0xff]
    %v4323 = vld [vmem:[%s4312 + $0x50] sm:$0xff]
    %v4324 = vld [vmem:[%s4312 + $0x58] sm:$0xff]
    %v4325 = vld [vmem:[%s4312 + $0x60] sm:$0xff]
    %v4326 = vld [vmem:[%s4312 + $0x68] sm:$0xff]
    %v4327 = vld [vmem:[%s4312 + $0x70] sm:$0xff]
    %v4328 = vld [vmem:[%s4312 + $0x78] sm:$0xff]
    %v4329 = vld [vmem:[%s4312 + $0x80] sm:$0xff]
    %v4330 = vld [vmem:[%s4312 + $0x88] sm:$0xff]
    %v4331 = vld [vmem:[%s4312 + $0x90] sm:$0xff]
    %v4332 = vld [vmem:[%s4312 + $0x98] sm:$0xff]
    %v4333 = vld [vmem:[%s4312 + $0xa0] sm:$0xff]
    %v4334 = vld [vmem:[%s4312 + $0xa8] sm:$0xff]
    %v4335 = vld [vmem:[%s4312 + $0xb0] sm:$0xff]
    %v4336 = vld [vmem:[%s4312 + $0xb8] sm:$0xff]
    %v4337 = vld [vmem:[%s4312 + $0xc0] sm:$0xff]
    %v4338 = vld [vmem:[%s4312 + $0xc8] sm:$0xff]
    %v4339 = vld [vmem:[%s4312 + $0xd0] sm:$0xff]
    %v4340 = vld [vmem:[%s4312 + $0xd8] sm:$0xff]
    %v4341 = vld [vmem:[%s4312 + $0xe0] sm:$0xff]
    %v4342 = vld [vmem:[%s4312 + $0xe8] sm:$0xff]
    %v4343 = vld [vmem:[%s4312 + $0xf0] sm:$0xff]
    %v4344 = vld [vmem:[%s4312 + $0xf8] sm:$0xff]
    %v4353 = vrot.slane %v4304, 1
    %v4354 = vrot.slane %v4306, 1
    %v4355 = vsel %vm1015, %v4353, %v4354
    %v4356 = vrot.slane %v4305, 1
    %v4357 = vrot.slane %v4307, 1
    %v4358 = vsel %vm1015, %v4356, %v4357
    %v4359 = vrot.slane %v4308, 1
    %v4360 = vsel %vm1015, %v4354, %v4359
    %v4361 = vrot.slane %v4309, 1
    %v4362 = vsel %vm1015, %v4357, %v4361
    %v4363 = vrot.slane %v4310, 1
    %v4364 = vsel %vm1015, %v4359, %v4363
    %v4365 = vrot.slane %v4311, 1
    %v4366 = vsel %vm1015, %v4361, %v4365
    %v4405 = vunpack.c.l.b16 %v4313
    %v4406 = vunpack.c.h.b16 %v4313
    %v4407 = vunpack.c.l.b16 %v4314
    %v4408 = vunpack.c.h.b16 %v4314
    %v4409 = vunpack.c.l.b16 %v4315
    %v4410 = vunpack.c.h.b16 %v4315
    %v4411 = vunpack.c.l.b16 %v4316
    %v4412 = vunpack.c.h.b16 %v4316
    %v4413 = vunpack.c.l.b16 %v4317
    %v4414 = vunpack.c.h.b16 %v4317
    %v4415 = vunpack.c.l.b16 %v4318
    %v4416 = vunpack.c.h.b16 %v4318
    %v4417 = vunpack.c.l.b16 %v4319
    %v4418 = vunpack.c.h.b16 %v4319
    %v4419 = vunpack.c.l.b16 %v4320
    %v4420 = vunpack.c.h.b16 %v4320
    %v4421 = vunpack.c.l.b16 %v4321
    %v4422 = vunpack.c.h.b16 %v4321
    %v4423 = vunpack.c.l.b16 %v4322
    %v4424 = vunpack.c.h.b16 %v4322
    %v4425 = vunpack.c.l.b16 %v4323
    %v4426 = vunpack.c.h.b16 %v4323
    %v4427 = vunpack.c.l.b16 %v4324
    %v4428 = vunpack.c.h.b16 %v4324
    %v4429 = vunpack.c.l.b16 %v4325
    %v4430 = vunpack.c.h.b16 %v4325
    %v4431 = vunpack.c.l.b16 %v4326
    %v4432 = vunpack.c.h.b16 %v4326
    %v4433 = vunpack.c.l.b16 %v4327
    %v4434 = vunpack.c.h.b16 %v4327
    %v4435 = vunpack.c.l.b16 %v4328
    %v4436 = vunpack.c.h.b16 %v4328
    %v4437 = vunpack.c.l.b16 %v4329
    %v4438 = vunpack.c.h.b16 %v4329
    %v4439 = vunpack.c.l.b16 %v4330
    %v4440 = vunpack.c.h.b16 %v4330
    %v4441 = vunpack.c.l.b16 %v4331
    %v4442 = vunpack.c.h.b16 %v4331
    %v4443 = vunpack.c.l.b16 %v4332
    %v4444 = vunpack.c.h.b16 %v4332
    %v4445 = vunpack.c.l.b16 %v4333
    %v4446 = vunpack.c.h.b16 %v4333
    %v4447 = vunpack.c.l.b16 %v4334
    %v4448 = vunpack.c.h.b16 %v4334
    %v4449 = vunpack.c.l.b16 %v4335
    %v4450 = vunpack.c.h.b16 %v4335
    %v4451 = vunpack.c.l.b16 %v4336
    %v4452 = vunpack.c.h.b16 %v4336
    %v4453 = vunpack.c.l.b16 %v4337
    %v4454 = vunpack.c.h.b16 %v4337
    %v4455 = vunpack.c.l.b16 %v4338
    %v4456 = vunpack.c.h.b16 %v4338
    %v4457 = vunpack.c.l.b16 %v4339
    %v4458 = vunpack.c.h.b16 %v4339
    %v4459 = vunpack.c.l.b16 %v4340
    %v4460 = vunpack.c.h.b16 %v4340
    %v4461 = vunpack.c.l.b16 %v4341
    %v4462 = vunpack.c.h.b16 %v4341
    %v4463 = vunpack.c.l.b16 %v4342
    %v4464 = vunpack.c.h.b16 %v4342
    %v4465 = vunpack.c.l.b16 %v4343
    %v4466 = vunpack.c.h.b16 %v4343
    %v4467 = vunpack.c.l.b16 %v4344
    %v4468 = vunpack.c.h.b16 %v4344
    %v4469 = vpack.c.b16 %v4407, %v4405
    %v4470 = vpack.c.b16 %v4408, %v4406
    %v4471 = vpack.c.b16 %v4411, %v4409
    %v4472 = vpack.c.b16 %v4412, %v4410
    %v4473 = vpack.c.b16 %v4415, %v4413
    %v4474 = vpack.c.b16 %v4416, %v4414
    %v4475 = vpack.c.b16 %v4419, %v4417
    %v4476 = vpack.c.b16 %v4420, %v4418
    %v4477 = vpack.c.b16 %v4423, %v4421
    %v4478 = vpack.c.b16 %v4424, %v4422
    %v4479 = vpack.c.b16 %v4427, %v4425
    %v4480 = vpack.c.b16 %v4428, %v4426
    %v4481 = vpack.c.b16 %v4431, %v4429
    %v4482 = vpack.c.b16 %v4432, %v4430
    %v4483 = vpack.c.b16 %v4435, %v4433
    %v4484 = vpack.c.b16 %v4436, %v4434
    %v4485 = vpack.c.b16 %v4439, %v4437
    %v4486 = vpack.c.b16 %v4440, %v4438
    %v4487 = vpack.c.b16 %v4443, %v4441
    %v4488 = vpack.c.b16 %v4444, %v4442
    %v4489 = vpack.c.b16 %v4447, %v4445
    %v4490 = vpack.c.b16 %v4448, %v4446
    %v4491 = vpack.c.b16 %v4451, %v4449
    %v4492 = vpack.c.b16 %v4452, %v4450
    %v4493 = vpack.c.b16 %v4455, %v4453
    %v4494 = vpack.c.b16 %v4456, %v4454
    %v4495 = vpack.c.b16 %v4459, %v4457
    %v4496 = vpack.c.b16 %v4460, %v4458
    %v4497 = vpack.c.b16 %v4463, %v4461
    %v4498 = vpack.c.b16 %v4464, %v4462
    %v4499 = vpack.c.b16 %v4467, %v4465
    %v4500 = vpack.c.b16 %v4468, %v4466
    %4533 = vmatpush.bf16.msra.mxu0 %v4483
    %4534 = vmatpush.bf16.msra.mxu0 %v4481
    %4535 = vmatpush.bf16.msra.mxu0 %v4479
    %4536 = vmatpush.bf16.msra.mxu0 %v4477
    %4537 = vmatpush.bf16.msra.mxu0 %v4475
    %4538 = vmatpush.bf16.msra.mxu0 %v4473
    %4539 = vmatpush.bf16.msra.mxu0 %v4471
    %4540 = vmatpush.bf16.msra.mxu0 %v4469
    %4541 = vmatmul.bf16.gmra.mxu0 %v4355
    %v4542 = vpop.f32.mrf.mxu0
    %v4543 = vadd.f32 0.0, %v4542
    %v4544 = vpop.f32.mrf.mxu0
    %v4545 = vadd.f32 0.0, %v4544
    %4546 = vmatmul.bf16.gmra.mxu0 %v4360
    %v4547 = vpop.f32.mrf.mxu0
    %v4548 = vadd.f32 0.0, %v4547
    %v4549 = vpop.f32.mrf.mxu0
    %v4550 = vadd.f32 0.0, %v4549
    %4551 = vmatmul.bf16.gmra.mxu0 %v4364
    %v4552 = vpop.f32.mrf.mxu0
    %v4553 = vadd.f32 0.0, %v4552
    %v4554 = vpop.f32.mrf.mxu0
    %v4555 = vadd.f32 0.0, %v4554
    %4556 = vdwg.mxu0
    %4557 = vmatpush.bf16.msra.mxu0 %v4499
    %4558 = vmatpush.bf16.msra.mxu0 %v4497
    %4559 = vmatpush.bf16.msra.mxu0 %v4495
    %4560 = vmatpush.bf16.msra.mxu0 %v4493
    %4561 = vmatpush.bf16.msra.mxu0 %v4491
    %4562 = vmatpush.bf16.msra.mxu0 %v4489
    %4563 = vmatpush.bf16.msra.mxu0 %v4487
    %4564 = vmatpush.bf16.msra.mxu0 %v4485
    %4565 = vmatmul.bf16.gmra.mxu0 %v4358
    %v4566 = vpop.f32.mrf.mxu0
    %v4567 = vadd.f32 %v4543, %v4566
    %v4568 = vpop.f32.mrf.mxu0
    %v4569 = vadd.f32 %v4545, %v4568
    %4570 = vmatmul.bf16.gmra.mxu0 %v4362
    %v4571 = vpop.f32.mrf.mxu0
    %v4572 = vadd.f32 %v4548, %v4571
    %v4573 = vpop.f32.mrf.mxu0
    %v4574 = vadd.f32 %v4550, %v4573
    %4575 = vmatmul.bf16.gmra.mxu0 %v4366
    %v4576 = vpop.f32.mrf.mxu0
    %v4577 = vadd.f32 %v4553, %v4576
    %v4578 = vpop.f32.mrf.mxu0
    %v4579 = vadd.f32 %v4555, %v4578
    %4580 = vdwg.mxu0
    %4581 = vmatpush.bf16.msra.mxu0 %v4484
    %4582 = vmatpush.bf16.msra.mxu0 %v4482
    %4583 = vmatpush.bf16.msra.mxu0 %v4480
    %4584 = vmatpush.bf16.msra.mxu0 %v4478
    %4585 = vmatpush.bf16.msra.mxu0 %v4476
    %4586 = vmatpush.bf16.msra.mxu0 %v4474
    %4587 = vmatpush.bf16.msra.mxu0 %v4472
    %4588 = vmatpush.bf16.msra.mxu0 %v4470
    %4589 = vmatmul.bf16.gmra.mxu0 %v4355
    %v4590 = vpop.f32.mrf.mxu0
    %v4591 = vadd.f32 0.0, %v4590
    %v4592 = vpop.f32.mrf.mxu0
    %v4593 = vadd.f32 0.0, %v4592
    %4594 = vmatmul.bf16.gmra.mxu0 %v4360
    %v4595 = vpop.f32.mrf.mxu0
    %v4596 = vadd.f32 0.0, %v4595
    %v4597 = vpop.f32.mrf.mxu0
    %v4598 = vadd.f32 0.0, %v4597
    %4599 = vmatmul.bf16.gmra.mxu0 %v4364
    %v4600 = vpop.f32.mrf.mxu0
    %v4601 = vadd.f32 0.0, %v4600
    %v4602 = vpop.f32.mrf.mxu0
    %v4603 = vadd.f32 0.0, %v4602
    %4604 = vdwg.mxu0
    %4605 = vmatpush.bf16.msra.mxu0 %v4500
    %4606 = vmatpush.bf16.msra.mxu0 %v4498
    %4607 = vmatpush.bf16.msra.mxu0 %v4496
    %4608 = vmatpush.bf16.msra.mxu0 %v4494
    %4609 = vmatpush.bf16.msra.mxu0 %v4492
    %4610 = vmatpush.bf16.msra.mxu0 %v4490
    %4611 = vmatpush.bf16.msra.mxu0 %v4488
    %4612 = vmatpush.bf16.msra.mxu0 %v4486
    %4613 = vmatmul.bf16.gmra.mxu0 %v4358
    %v4614 = vpop.f32.mrf.mxu0
    %v4615 = vadd.f32 %v4591, %v4614
    %v4616 = vpop.f32.mrf.mxu0
    %v4617 = vadd.f32 %v4593, %v4616
    %4618 = vmatmul.bf16.gmra.mxu0 %v4362
    %v4619 = vpop.f32.mrf.mxu0
    %v4620 = vadd.f32 %v4596, %v4619
    %v4621 = vpop.f32.mrf.mxu0
    %v4622 = vadd.f32 %v4598, %v4621
    %4623 = vmatmul.bf16.gmra.mxu0 %v4366
    %v4624 = vpop.f32.mrf.mxu0
    %v4625 = vadd.f32 %v4601, %v4624
    %v4626 = vpop.f32.mrf.mxu0
    %v4627 = vadd.f32 %v4603, %v4626
    %4628 = vdwg.mxu0
    %v4629 = vadd.f32 %v4228, %v4567
    %v4630 = vadd.f32 %v4276, %v4615
    %v4631 = vadd.f32 %v4230, %v4569
    %v4632 = vadd.f32 %v4278, %v4617
    %v4633 = vadd.f32 %v4233, %v4572
    %v4634 = vadd.f32 %v4281, %v4620
    %v4635 = vadd.f32 %v4235, %v4574
    %v4636 = vadd.f32 %v4283, %v4622
    %v4637 = vadd.f32 %v4238, %v4577
    %v4638 = vadd.f32 %v4286, %v4625
    %v4639 = vadd.f32 %v4240, %v4579
    %v4640 = vadd.f32 %v4288, %v4627
    %v4641 = vld [vmem:[#allocation5] sm:$0xf8]
    %v4642 = vld [vmem:[#allocation5 + $0x8] sm:$0xf8]
    %v4643 = vld [vmem:[#allocation5 + $0x60] sm:$0x3]
    %v4644 = vld [vmem:[#allocation5 + $0x68] sm:$0x3]
    %v4645 = vpack.c.bf16 %v4292, %v4641
    %v4646 = vpack.c.bf16 %v4293, %v4642
    %v4647 = vpack.c.bf16 %v4643, %v4643
    %v4648 = vpack.c.bf16 %v4644, %v4644
    %s4649 = scalar_lea.vmem [#allocation2], 2816
    %v4650 = vld [vmem:[%s4649] sm:$0xff]
    %v4651 = vld [vmem:[%s4649 + $0x8] sm:$0xff]
    %v4652 = vld [vmem:[%s4649 + $0x10] sm:$0xff]
    %v4653 = vld [vmem:[%s4649 + $0x18] sm:$0xff]
    %v4654 = vld [vmem:[%s4649 + $0x20] sm:$0xff]
    %v4655 = vld [vmem:[%s4649 + $0x28] sm:$0xff]
    %v4656 = vld [vmem:[%s4649 + $0x30] sm:$0xff]
    %v4657 = vld [vmem:[%s4649 + $0x38] sm:$0xff]
    %v4658 = vld [vmem:[%s4649 + $0x40] sm:$0xff]
    %v4659 = vld [vmem:[%s4649 + $0x48] sm:$0xff]
    %v4660 = vld [vmem:[%s4649 + $0x50] sm:$0xff]
    %v4661 = vld [vmem:[%s4649 + $0x58] sm:$0xff]
    %v4662 = vld [vmem:[%s4649 + $0x60] sm:$0xff]
    %v4663 = vld [vmem:[%s4649 + $0x68] sm:$0xff]
    %v4664 = vld [vmem:[%s4649 + $0x70] sm:$0xff]
    %v4665 = vld [vmem:[%s4649 + $0x78] sm:$0xff]
    %v4666 = vld [vmem:[%s4649 + $0x80] sm:$0xff]
    %v4667 = vld [vmem:[%s4649 + $0x88] sm:$0xff]
    %v4668 = vld [vmem:[%s4649 + $0x90] sm:$0xff]
    %v4669 = vld [vmem:[%s4649 + $0x98] sm:$0xff]
    %v4670 = vld [vmem:[%s4649 + $0xa0] sm:$0xff]
    %v4671 = vld [vmem:[%s4649 + $0xa8] sm:$0xff]
    %v4672 = vld [vmem:[%s4649 + $0xb0] sm:$0xff]
    %v4673 = vld [vmem:[%s4649 + $0xb8] sm:$0xff]
    %v4674 = vld [vmem:[%s4649 + $0xc0] sm:$0xff]
    %v4675 = vld [vmem:[%s4649 + $0xc8] sm:$0xff]
    %v4676 = vld [vmem:[%s4649 + $0xd0] sm:$0xff]
    %v4677 = vld [vmem:[%s4649 + $0xd8] sm:$0xff]
    %v4678 = vld [vmem:[%s4649 + $0xe0] sm:$0xff]
    %v4679 = vld [vmem:[%s4649 + $0xe8] sm:$0xff]
    %v4680 = vld [vmem:[%s4649 + $0xf0] sm:$0xff]
    %v4681 = vld [vmem:[%s4649 + $0xf8] sm:$0xff]
    %v4683 = vshrl.u32 %v4645, 16
    %v4685 = vrot.slane %v4683, 1
    %v4686 = vshll.u32 %v4645, 16
    %v4688 = vrot.slane %v4686, 2
    %v4689 = vor.u32 %v4685, %v4688
    %v4691 = vshrl.u32 %v4306, 16
    %v4693 = vrot.slane %v4691, 1
    %v4694 = vshll.u32 %v4306, 16
    %v4696 = vrot.slane %v4694, 2
    %v4697 = vor.u32 %v4693, %v4696
    %v4698 = vsel %vm1365, %v4689, %v4697
    %v4700 = vshrl.u32 %v4646, 16
    %v4702 = vrot.slane %v4700, 1
    %v4703 = vshll.u32 %v4646, 16
    %v4705 = vrot.slane %v4703, 2
    %v4706 = vor.u32 %v4702, %v4705
    %v4708 = vshrl.u32 %v4307, 16
    %v4710 = vrot.slane %v4708, 1
    %v4711 = vshll.u32 %v4307, 16
    %v4713 = vrot.slane %v4711, 2
    %v4714 = vor.u32 %v4710, %v4713
    %v4715 = vsel %vm1365, %v4706, %v4714
    %v4717 = vshrl.u32 %v4308, 16
    %v4719 = vrot.slane %v4717, 1
    %v4720 = vshll.u32 %v4308, 16
    %v4722 = vrot.slane %v4720, 2
    %v4723 = vor.u32 %v4719, %v4722
    %v4724 = vsel %vm1365, %v4697, %v4723
    %v4726 = vshrl.u32 %v4309, 16
    %v4728 = vrot.slane %v4726, 1
    %v4729 = vshll.u32 %v4309, 16
    %v4731 = vrot.slane %v4729, 2
    %v4732 = vor.u32 %v4728, %v4731
    %v4733 = vsel %vm1365, %v4714, %v4732
    %v4735 = vshrl.u32 %v4647, 16
    %v4737 = vrot.slane %v4735, 1
    %v4738 = vshll.u32 %v4647, 16
    %v4740 = vrot.slane %v4738, 2
    %v4741 = vor.u32 %v4737, %v4740
    %v4742 = vsel %vm1365, %v4723, %v4741
    %v4744 = vshrl.u32 %v4648, 16
    %v4746 = vrot.slane %v4744, 1
    %v4747 = vshll.u32 %v4648, 16
    %v4749 = vrot.slane %v4747, 2
    %v4750 = vor.u32 %v4746, %v4749
    %v4751 = vsel %vm1365, %v4732, %v4750
    %v4790 = vunpack.c.l.b16 %v4650
    %v4791 = vunpack.c.h.b16 %v4650
    %v4792 = vunpack.c.l.b16 %v4651
    %v4793 = vunpack.c.h.b16 %v4651
    %v4794 = vunpack.c.l.b16 %v4652
    %v4795 = vunpack.c.h.b16 %v4652
    %v4796 = vunpack.c.l.b16 %v4653
    %v4797 = vunpack.c.h.b16 %v4653
    %v4798 = vunpack.c.l.b16 %v4654
    %v4799 = vunpack.c.h.b16 %v4654
    %v4800 = vunpack.c.l.b16 %v4655
    %v4801 = vunpack.c.h.b16 %v4655
    %v4802 = vunpack.c.l.b16 %v4656
    %v4803 = vunpack.c.h.b16 %v4656
    %v4804 = vunpack.c.l.b16 %v4657
    %v4805 = vunpack.c.h.b16 %v4657
    %v4806 = vunpack.c.l.b16 %v4658
    %v4807 = vunpack.c.h.b16 %v4658
    %v4808 = vunpack.c.l.b16 %v4659
    %v4809 = vunpack.c.h.b16 %v4659
    %v4810 = vunpack.c.l.b16 %v4660
    %v4811 = vunpack.c.h.b16 %v4660
    %v4812 = vunpack.c.l.b16 %v4661
    %v4813 = vunpack.c.h.b16 %v4661
    %v4814 = vunpack.c.l.b16 %v4662
    %v4815 = vunpack.c.h.b16 %v4662
    %v4816 = vunpack.c.l.b16 %v4663
    %v4817 = vunpack.c.h.b16 %v4663
    %v4818 = vunpack.c.l.b16 %v4664
    %v4819 = vunpack.c.h.b16 %v4664
    %v4820 = vunpack.c.l.b16 %v4665
    %v4821 = vunpack.c.h.b16 %v4665
    %v4822 = vunpack.c.l.b16 %v4666
    %v4823 = vunpack.c.h.b16 %v4666
    %v4824 = vunpack.c.l.b16 %v4667
    %v4825 = vunpack.c.h.b16 %v4667
    %v4826 = vunpack.c.l.b16 %v4668
    %v4827 = vunpack.c.h.b16 %v4668
    %v4828 = vunpack.c.l.b16 %v4669
    %v4829 = vunpack.c.h.b16 %v4669
    %v4830 = vunpack.c.l.b16 %v4670
    %v4831 = vunpack.c.h.b16 %v4670
    %v4832 = vunpack.c.l.b16 %v4671
    %v4833 = vunpack.c.h.b16 %v4671
    %v4834 = vunpack.c.l.b16 %v4672
    %v4835 = vunpack.c.h.b16 %v4672
    %v4836 = vunpack.c.l.b16 %v4673
    %v4837 = vunpack.c.h.b16 %v4673
    %v4838 = vunpack.c.l.b16 %v4674
    %v4839 = vunpack.c.h.b16 %v4674
    %v4840 = vunpack.c.l.b16 %v4675
    %v4841 = vunpack.c.h.b16 %v4675
    %v4842 = vunpack.c.l.b16 %v4676
    %v4843 = vunpack.c.h.b16 %v4676
    %v4844 = vunpack.c.l.b16 %v4677
    %v4845 = vunpack.c.h.b16 %v4677
    %v4846 = vunpack.c.l.b16 %v4678
    %v4847 = vunpack.c.h.b16 %v4678
    %v4848 = vunpack.c.l.b16 %v4679
    %v4849 = vunpack.c.h.b16 %v4679
    %v4850 = vunpack.c.l.b16 %v4680
    %v4851 = vunpack.c.h.b16 %v4680
    %v4852 = vunpack.c.l.b16 %v4681
    %v4853 = vunpack.c.h.b16 %v4681
    %v4854 = vpack.c.b16 %v4792, %v4790
    %v4855 = vpack.c.b16 %v4793, %v4791
    %v4856 = vpack.c.b16 %v4796, %v4794
    %v4857 = vpack.c.b16 %v4797, %v4795
    %v4858 = vpack.c.b16 %v4800, %v4798
    %v4859 = vpack.c.b16 %v4801, %v4799
    %v4860 = vpack.c.b16 %v4804, %v4802
    %v4861 = vpack.c.b16 %v4805, %v4803
    %v4862 = vpack.c.b16 %v4808, %v4806
    %v4863 = vpack.c.b16 %v4809, %v4807
    %v4864 = vpack.c.b16 %v4812, %v4810
    %v4865 = vpack.c.b16 %v4813, %v4811
    %v4866 = vpack.c.b16 %v4816, %v4814
    %v4867 = vpack.c.b16 %v4817, %v4815
    %v4868 = vpack.c.b16 %v4820, %v4818
    %v4869 = vpack.c.b16 %v4821, %v4819
    %v4870 = vpack.c.b16 %v4824, %v4822
    %v4871 = vpack.c.b16 %v4825, %v4823
    %v4872 = vpack.c.b16 %v4828, %v4826
    %v4873 = vpack.c.b16 %v4829, %v4827
    %v4874 = vpack.c.b16 %v4832, %v4830
    %v4875 = vpack.c.b16 %v4833, %v4831
    %v4876 = vpack.c.b16 %v4836, %v4834
    %v4877 = vpack.c.b16 %v4837, %v4835
    %v4878 = vpack.c.b16 %v4840, %v4838
    %v4879 = vpack.c.b16 %v4841, %v4839
    %v4880 = vpack.c.b16 %v4844, %v4842
    %v4881 = vpack.c.b16 %v4845, %v4843
    %v4882 = vpack.c.b16 %v4848, %v4846
    %v4883 = vpack.c.b16 %v4849, %v4847
    %v4884 = vpack.c.b16 %v4852, %v4850
    %v4885 = vpack.c.b16 %v4853, %v4851
    %4918 = vmatpush.bf16.msra.mxu0 %v4868
    %4919 = vmatpush.bf16.msra.mxu0 %v4866
    %4920 = vmatpush.bf16.msra.mxu0 %v4864
    %4921 = vmatpush.bf16.msra.mxu0 %v4862
    %4922 = vmatpush.bf16.msra.mxu0 %v4860
    %4923 = vmatpush.bf16.msra.mxu0 %v4858
    %4924 = vmatpush.bf16.msra.mxu0 %v4856
    %4925 = vmatpush.bf16.msra.mxu0 %v4854
    %4926 = vmatmul.bf16.gmra.mxu0 %v4698
    %v4927 = vpop.f32.mrf.mxu0
    %v4928 = vadd.f32 0.0, %v4927
    %v4929 = vpop.f32.mrf.mxu0
    %v4930 = vadd.f32 0.0, %v4929
    %4931 = vmatmul.bf16.gmra.mxu0 %v4724
    %v4932 = vpop.f32.mrf.mxu0
    %v4933 = vadd.f32 0.0, %v4932
    %v4934 = vpop.f32.mrf.mxu0
    %v4935 = vadd.f32 0.0, %v4934
    %4936 = vmatmul.bf16.gmra.mxu0 %v4742
    %v4937 = vpop.f32.mrf.mxu0
    %v4938 = vadd.f32 0.0, %v4937
    %v4939 = vpop.f32.mrf.mxu0
    %v4940 = vadd.f32 0.0, %v4939
    %4941 = vdwg.mxu0
    %4942 = vmatpush.bf16.msra.mxu0 %v4884
    %4943 = vmatpush.bf16.msra.mxu0 %v4882
    %4944 = vmatpush.bf16.msra.mxu0 %v4880
    %4945 = vmatpush.bf16.msra.mxu0 %v4878
    %4946 = vmatpush.bf16.msra.mxu0 %v4876
    %4947 = vmatpush.bf16.msra.mxu0 %v4874
    %4948 = vmatpush.bf16.msra.mxu0 %v4872
    %4949 = vmatpush.bf16.msra.mxu0 %v4870
    %4950 = vmatmul.bf16.gmra.mxu0 %v4715
    %v4951 = vpop.f32.mrf.mxu0
    %v4952 = vadd.f32 %v4928, %v4951
    %v4953 = vpop.f32.mrf.mxu0
    %v4954 = vadd.f32 %v4930, %v4953
    %4955 = vmatmul.bf16.gmra.mxu0 %v4733
    %v4956 = vpop.f32.mrf.mxu0
    %v4957 = vadd.f32 %v4933, %v4956
    %v4958 = vpop.f32.mrf.mxu0
    %v4959 = vadd.f32 %v4935, %v4958
    %4960 = vmatmul.bf16.gmra.mxu0 %v4751
    %v4961 = vpop.f32.mrf.mxu0
    %v4962 = vadd.f32 %v4938, %v4961
    %v4963 = vpop.f32.mrf.mxu0
    %v4964 = vadd.f32 %v4940, %v4963
    %4965 = vdwg.mxu0
    %4966 = vmatpush.bf16.msra.mxu0 %v4869
    %4967 = vmatpush.bf16.msra.mxu0 %v4867
    %4968 = vmatpush.bf16.msra.mxu0 %v4865
    %4969 = vmatpush.bf16.msra.mxu0 %v4863
    %4970 = vmatpush.bf16.msra.mxu0 %v4861
    %4971 = vmatpush.bf16.msra.mxu0 %v4859
    %4972 = vmatpush.bf16.msra.mxu0 %v4857
    %4973 = vmatpush.bf16.msra.mxu0 %v4855
    %4974 = vmatmul.bf16.gmra.mxu0 %v4698
    %v4975 = vpop.f32.mrf.mxu0
    %v4976 = vadd.f32 0.0, %v4975
    %v4977 = vpop.f32.mrf.mxu0
    %v4978 = vadd.f32 0.0, %v4977
    %4979 = vmatmul.bf16.gmra.mxu0 %v4724
    %v4980 = vpop.f32.mrf.mxu0
    %v4981 = vadd.f32 0.0, %v4980
    %v4982 = vpop.f32.mrf.mxu0
    %v4983 = vadd.f32 0.0, %v4982
    %4984 = vmatmul.bf16.gmra.mxu0 %v4742
    %v4985 = vpop.f32.mrf.mxu0
    %v4986 = vadd.f32 0.0, %v4985
    %v4987 = vpop.f32.mrf.mxu0
    %v4988 = vadd.f32 0.0, %v4987
    %4989 = vdwg.mxu0
    %4990 = vmatpush.bf16.msra.mxu0 %v4885
    %4991 = vmatpush.bf16.msra.mxu0 %v4883
    %4992 = vmatpush.bf16.msra.mxu0 %v4881
    %4993 = vmatpush.bf16.msra.mxu0 %v4879
    %4994 = vmatpush.bf16.msra.mxu0 %v4877
    %4995 = vmatpush.bf16.msra.mxu0 %v4875
    %4996 = vmatpush.bf16.msra.mxu0 %v4873
    %4997 = vmatpush.bf16.msra.mxu0 %v4871
    %4998 = vmatmul.bf16.gmra.mxu0 %v4715
    %v4999 = vpop.f32.mrf.mxu0
    %v5000 = vadd.f32 %v4976, %v4999
    %v5001 = vpop.f32.mrf.mxu0
    %v5002 = vadd.f32 %v4978, %v5001
    %5003 = vmatmul.bf16.gmra.mxu0 %v4733
    %v5004 = vpop.f32.mrf.mxu0
    %v5005 = vadd.f32 %v4981, %v5004
    %v5006 = vpop.f32.mrf.mxu0
    %v5007 = vadd.f32 %v4983, %v5006
    %5008 = vmatmul.bf16.gmra.mxu0 %v4751
    %v5009 = vpop.f32.mrf.mxu0
    %v5010 = vadd.f32 %v4986, %v5009
    %v5011 = vpop.f32.mrf.mxu0
    %v5012 = vadd.f32 %v4988, %v5011
    %5013 = vdwg.mxu0
    %v5014 = vadd.f32 %v4629, %v4952
    %v5015 = vadd.f32 %v4630, %v5000
    %v5016 = vadd.f32 %v4631, %v4954
    %v5017 = vadd.f32 %v4632, %v5002
    %v5018 = vadd.f32 %v4633, %v4957
    %v5019 = vadd.f32 %v4634, %v5005
    %v5020 = vadd.f32 %v4635, %v4959
    %v5021 = vadd.f32 %v4636, %v5007
    %v5022 = vadd.f32 %v4637, %v4962
    %v5023 = vadd.f32 %v4638, %v5010
    %v5024 = vadd.f32 %v4639, %v4964
    %v5025 = vadd.f32 %v4640, %v5012
    %v5026 = vld [vmem:[#allocation17] sm:$0xff]
    %v5027 = vld [vmem:[#allocation17 + $0x8] sm:$0xff]
    %v5028 = vld [vmem:[#allocation17 + $0x10] sm:$0xff]
    %v5029 = vld [vmem:[#allocation17 + $0x18] sm:$0xff]
    %v5030 = vld [vmem:[#allocation17 + $0x20] sm:$0xff]
    %v5031 = vld [vmem:[#allocation17 + $0x28] sm:$0x7f]
    %5033 = vset.pattern.permute.xlu0 0
    %5034 = vperm.xlu0 %5033, %v5026
    %v5035 = vpop.permute.xlu0 %5034
    %5038 = vset.pattern.permute.xlu0 0
    %5039 = vperm.xlu0 %5038, %v5027
    %v5040 = vpop.permute.xlu0 %5039
    %5043 = vset.pattern.permute.xlu0 0
    %5044 = vperm.xlu0 %5043, %v5028
    %v5045 = vpop.permute.xlu0 %5044
    %5048 = vset.pattern.permute.xlu0 0
    %5049 = vperm.xlu0 %5048, %v5029
    %v5050 = vpop.permute.xlu0 %5049
    %5053 = vset.pattern.permute.xlu0 0
    %5054 = vperm.xlu0 %5053, %v5030
    %v5055 = vpop.permute.xlu0 %5054
    %5058 = vset.pattern.permute.xlu0 0
    %5059 = vperm.xlu0 %5058, %v5031
    %v5060 = vpop.permute.xlu0 %5059
    %v5062 = vmul.f32 %v5014, %v5035
    %v5063 = vmul.f32 %v5015, %v5035
    %v5064 = vmul.f32 %v5016, %v5040
    %v5065 = vmul.f32 %v5017, %v5040
    %v5066 = vmul.f32 %v5018, %v5045
    %v5067 = vmul.f32 %v5019, %v5045
    %v5068 = vmul.f32 %v5020, %v5050
    %v5069 = vmul.f32 %v5021, %v5050
    %v5070 = vmul.f32 %v5022, %v5055
    %v5071 = vmul.f32 %v5023, %v5055
    %v5072 = vmul.f32 %v5024, %v5060
    %v5073 = vmul.f32 %v5025, %v5060
    %v5074 = vadd.f32 %v5062, %v5064
    %v5075 = vadd.f32 %v5074, %v5066
    %v5076 = vadd.f32 %v5075, %v5068
    %v5077 = vadd.f32 %v5076, %v5070
    %vm5078 = vcmask 1046528
    %v5079 = vsel %vm5078, %v5072, 0.0
    %v5080 = vadd.f32 %v5077, %v5079
    %v5081 = vrot.slane %v5080, 4
    %v5082 = vadd.f32 %v5080, %v5081
    %v5083 = vrot.slane %v5082, 2
    %v5084 = vadd.f32 %v5082, %v5083
    %v5085 = vrot.slane %v5084, 1
    %v5086 = vadd.f32 %v5084, %v5085
    %v5087 = vadd.f32 %v5063, %v5065
    %v5088 = vadd.f32 %v5087, %v5067
    %v5089 = vadd.f32 %v5088, %v5069
    %v5090 = vadd.f32 %v5089, %v5071
    %v5091 = vsel %vm5078, %v5073, 0.0
    %v5092 = vadd.f32 %v5090, %v5091
    %v5093 = vrot.slane %v5092, 4
    %v5094 = vadd.f32 %v5092, %v5093
    %v5095 = vrot.slane %v5094, 2
    %v5096 = vadd.f32 %v5094, %v5095
    %v5097 = vrot.slane %v5096, 1
    %v5098 = vadd.f32 %v5096, %v5097
    %v5099 = vmul.f32 %v5062, %v5062
    %v5100 = vmul.f32 %v5063, %v5063
    %v5101 = vmul.f32 %v5064, %v5064
    %v5102 = vmul.f32 %v5065, %v5065
    %v5103 = vmul.f32 %v5066, %v5066
    %v5104 = vmul.f32 %v5067, %v5067
    %v5105 = vmul.f32 %v5068, %v5068
    %v5106 = vmul.f32 %v5069, %v5069
    %v5107 = vmul.f32 %v5070, %v5070
    %v5108 = vmul.f32 %v5071, %v5071
    %v5109 = vmul.f32 %v5072, %v5072
    %v5110 = vmul.f32 %v5073, %v5073
    %v5111 = vadd.f32 %v5099, %v5101
    %v5112 = vadd.f32 %v5111, %v5103
    %v5113 = vadd.f32 %v5112, %v5105
    %v5114 = vadd.f32 %v5113, %v5107
    %v5115 = vsel %vm5078, %v5109, 0.0
    %v5116 = vadd.f32 %v5114, %v5115
    %v5117 = vrot.slane %v5116, 4
    %v5118 = vadd.f32 %v5116, %v5117
    %v5119 = vrot.slane %v5118, 2
    %v5120 = vadd.f32 %v5118, %v5119
    %v5121 = vrot.slane %v5120, 1
    %v5122 = vadd.f32 %v5120, %v5121
    %v5123 = vadd.f32 %v5100, %v5102
    %v5124 = vadd.f32 %v5123, %v5104
    %v5125 = vadd.f32 %v5124, %v5106
    %v5126 = vadd.f32 %v5125, %v5108
    %v5127 = vsel %vm5078, %v5110, 0.0
    %v5128 = vadd.f32 %v5126, %v5127
    %v5129 = vrot.slane %v5128, 4
    %v5130 = vadd.f32 %v5128, %v5129
    %v5131 = vrot.slane %v5130, 2
    %v5132 = vadd.f32 %v5130, %v5131
    %v5133 = vrot.slane %v5132, 1
    %v5134 = vadd.f32 %v5132, %v5133
    %v5135 = vld [vmem:[#allocation8] sm:$0xff]
    %v5136 = vld [vmem:[#allocation8 + $0x8] sm:$0xff]
    %v5137 = vld [vmem:[#allocation8 + $0x10] sm:$0xff]
    %v5138 = vld [vmem:[#allocation8 + $0x18] sm:$0xff]
    %v5139 = vld [vmem:[#allocation8 + $0x20] sm:$0xff]
    %v5140 = vld [vmem:[#allocation8 + $0x28] sm:$0xff]
    %v5141 = vld [vmem:[#allocation8 + $0x30] sm:$0xff]
    %v5142 = vld [vmem:[#allocation8 + $0x38] sm:$0xff]
    %v5143 = vld [vmem:[#allocation8 + $0x40] sm:$0xff]
    %v5144 = vld [vmem:[#allocation8 + $0x48] sm:$0xff]
    %v5145 = vld [vmem:[#allocation8 + $0x50] sm:$0xff]
    %v5146 = vld [vmem:[#allocation8 + $0x58] sm:$0xff]
    %v5147 = vld [vmem:[#allocation8 + $0x60] sm:$0xff]
    %v5148 = vld [vmem:[#allocation8 + $0x68] sm:$0xff]
    %v5149 = vld [vmem:[#allocation8 + $0x70] sm:$0xff]
    %v5150 = vld [vmem:[#allocation8 + $0x78] sm:$0xff]
    %v5151 = vld [vmem:[#allocation8 + $0x80] sm:$0xff]
    %v5152 = vld [vmem:[#allocation8 + $0x88] sm:$0xff]
    %v5153 = vld [vmem:[#allocation8 + $0x90] sm:$0xff]
    %v5154 = vld [vmem:[#allocation8 + $0x98] sm:$0xff]
    %v5155 = vld [vmem:[#allocation8 + $0xa0] sm:$0xff]
    %v5156 = vld [vmem:[#allocation8 + $0xa8] sm:$0xff]
    %v5157 = vld [vmem:[#allocation8 + $0xb0] sm:$0xff]
    %v5158 = vld [vmem:[#allocation8 + $0xb8] sm:$0xff]
    %v5159 = vld [vmem:[#allocation8 + $0xc0] sm:$0xff]
    %v5160 = vld [vmem:[#allocation8 + $0xc8] sm:$0xff]
    %v5161 = vld [vmem:[#allocation8 + $0xd0] sm:$0xff]
    %v5162 = vld [vmem:[#allocation8 + $0xd8] sm:$0xff]
    %v5163 = vld [vmem:[#allocation8 + $0xe0] sm:$0xff]
    %v5164 = vld [vmem:[#allocation8 + $0xe8] sm:$0xff]
    %v5165 = vld [vmem:[#allocation8 + $0xf0] sm:$0xff]
    %v5166 = vld [vmem:[#allocation8 + $0xf8] sm:$0xff]
    %5167 = vmatpush.msra.mxu0 %v5150
    %5168 = vmatpush.msra.mxu0 %v5149
    %5169 = vmatpush.msra.mxu0 %v5148
    %5170 = vmatpush.msra.mxu0 %v5147
    %5171 = vmatpush.msra.mxu0 %v5146
    %5172 = vmatpush.msra.mxu0 %v5145
    %5173 = vmatpush.msra.mxu0 %v5144
    %5174 = vmatpush.msra.mxu0 %v5143
    %5175 = vmatpush.msra.mxu0 %v5142
    %5176 = vmatpush.msra.mxu0 %v5141
    %5177 = vmatpush.msra.mxu0 %v5140
    %5178 = vmatpush.msra.mxu0 %v5139
    %5179 = vmatpush.msra.mxu0 %v5138
    %5180 = vmatpush.msra.mxu0 %v5137
    %5181 = vmatpush.msra.mxu0 %v5136
    %5182 = vmatpush.msra.mxu0 %v5135
    %5183 = vmatmul.f32.gmra.mxu0 %v5086
    %v5184 = vpop.f32.mrf.mxu0
    %v5185 = vadd.f32 0.0, %v5184
    %5186 = vdwg.mxu0
    %5187 = vmatpush.msra.mxu0 %v5166
    %5188 = vmatpush.msra.mxu0 %v5165
    %5189 = vmatpush.msra.mxu0 %v5164
    %5190 = vmatpush.msra.mxu0 %v5163
    %5191 = vmatpush.msra.mxu0 %v5162
    %5192 = vmatpush.msra.mxu0 %v5161
    %5193 = vmatpush.msra.mxu0 %v5160
    %5194 = vmatpush.msra.mxu0 %v5159
    %5195 = vmatpush.msra.mxu0 %v5158
    %5196 = vmatpush.msra.mxu0 %v5157
    %5197 = vmatpush.msra.mxu0 %v5156
    %5198 = vmatpush.msra.mxu0 %v5155
    %5199 = vmatpush.msra.mxu0 %v5154
    %5200 = vmatpush.msra.mxu0 %v5153
    %5201 = vmatpush.msra.mxu0 %v5152
    %5202 = vmatpush.msra.mxu0 %v5151
    %5203 = vmatmul.f32.gmra.mxu0 %v5098
    %v5204 = vpop.f32.mrf.mxu0
    %v5205 = vadd.f32 %v5185, %v5204
    %5206 = vdwg.mxu0
    %v5207 = vmul.f32 %v5205, 0.005
    %5208 = vmatpush.msra.mxu0 %v5150
    %5209 = vmatpush.msra.mxu0 %v5149
    %5210 = vmatpush.msra.mxu0 %v5148
    %5211 = vmatpush.msra.mxu0 %v5147
    %5212 = vmatpush.msra.mxu0 %v5146
    %5213 = vmatpush.msra.mxu0 %v5145
    %5214 = vmatpush.msra.mxu0 %v5144
    %5215 = vmatpush.msra.mxu0 %v5143
    %5216 = vmatpush.msra.mxu0 %v5142
    %5217 = vmatpush.msra.mxu0 %v5141
    %5218 = vmatpush.msra.mxu0 %v5140
    %5219 = vmatpush.msra.mxu0 %v5139
    %5220 = vmatpush.msra.mxu0 %v5138
    %5221 = vmatpush.msra.mxu0 %v5137
    %5222 = vmatpush.msra.mxu0 %v5136
    %5223 = vmatpush.msra.mxu0 %v5135
    %5224 = vmatmul.f32.gmra.mxu0 %v5122
    %v5225 = vpop.f32.mrf.mxu0
    %v5226 = vadd.f32 0.0, %v5225
    %5227 = vdwg.mxu0
    %5228 = vmatpush.msra.mxu0 %v5166
    %5229 = vmatpush.msra.mxu0 %v5165
    %5230 = vmatpush.msra.mxu0 %v5164
    %5231 = vmatpush.msra.mxu0 %v5163
    %5232 = vmatpush.msra.mxu0 %v5162
    %5233 = vmatpush.msra.mxu0 %v5161
    %5234 = vmatpush.msra.mxu0 %v5160
    %5235 = vmatpush.msra.mxu0 %v5159
    %5236 = vmatpush.msra.mxu0 %v5158
    %5237 = vmatpush.msra.mxu0 %v5157
    %5238 = vmatpush.msra.mxu0 %v5156
    %5239 = vmatpush.msra.mxu0 %v5155
    %5240 = vmatpush.msra.mxu0 %v5154
    %5241 = vmatpush.msra.mxu0 %v5153
    %5242 = vmatpush.msra.mxu0 %v5152
    %5243 = vmatpush.msra.mxu0 %v5151
    %5244 = vmatmul.f32.gmra.mxu0 %v5134
    %v5245 = vpop.f32.mrf.mxu0
    %v5246 = vadd.f32 %v5226, %v5245
    %5247 = vdwg.mxu0
    %v5248 = vmul.f32 %v5246, 0.005
    %v5249 = vmul.f32 %v5207, %v5207
    %v5250 = vsub.f32 %v5248, %v5249
    %v5251 = vmax.f32 %v5250, 0.0
    %v5252 = vadd.f32 %v5251, 1e-05
    %v5253 = vrsqrt.pop %v5252
    %v5254 = vmul.f32 %v5253, %v5252
    %v5255 = vmul.f32 %v5254, %v5253
    %v5256 = vmul.f32 0.5, %v5255
    %v5257 = vsub.f32 1.5, %v5256
    %v5258 = vmul.f32 %v5253, %v5257
    %vm5259 = vweird.f32 %v5252
    %vm5260 = vweird.f32 %v5253
    %vm5261 = vmor %vm5259, %vm5260
    %v5262 = vsel %vm5261, %v5253, %v5258
    %v5263 = vld [vmem:[#allocation13] sm:$0xff]
    %v5264 = vld [vmem:[#allocation13 + $0x8] sm:$0xff]
    %v5265 = vld [vmem:[#allocation13 + $0x10] sm:$0xff]
    %v5266 = vld [vmem:[#allocation13 + $0x18] sm:$0xff]
    %vm5267 = vcmask 130048
    %v5269 = vsel %vm5267, %v5207, 0
    %5271 = vmatpush.msra.mxu0 0.0
    %5272 = vmatpush.msra.mxu0 0.0
    %5273 = vmatpush.msra.mxu0 0.0
    %5274 = vmatpush.msra.mxu0 0.0
    %5275 = vmatpush.msra.mxu0 0.0
    %5276 = vmatpush.msra.mxu0 0.0
    %5277 = vmatpush.msra.mxu0 0.0
    %5278 = vmatpush.msra.mxu0 0.0
    %5279 = vmatpush.msra.mxu0 0.0
    %5280 = vmatpush.msra.mxu0 0.0
    %5281 = vmatpush.msra.mxu0 0.0
    %5282 = vmatpush.msra.mxu0 0.0
    %5283 = vmatpush.msra.mxu0 0.0
    %5284 = vmatpush.msra.mxu0 0.0
    %5285 = vmatpush.msra.mxu0 %v5265
    %5286 = vmatpush.msra.mxu0 %v5263
    %5287 = vmatmul.f32.gmra.mxu0 %v5269
    %v5288 = vpop.f32.mrf.mxu0
    %v5289 = vadd.f32 0.0, %v5288
    %5290 = vdwg.mxu0
    %5291 = vmatpush.msra.mxu0 0.0
    %5292 = vmatpush.msra.mxu0 0.0
    %5293 = vmatpush.msra.mxu0 0.0
    %5294 = vmatpush.msra.mxu0 0.0
    %5295 = vmatpush.msra.mxu0 0.0
    %5296 = vmatpush.msra.mxu0 0.0
    %5297 = vmatpush.msra.mxu0 0.0
    %5298 = vmatpush.msra.mxu0 0.0
    %5299 = vmatpush.msra.mxu0 0.0
    %5300 = vmatpush.msra.mxu0 0.0
    %5301 = vmatpush.msra.mxu0 0.0
    %5302 = vmatpush.msra.mxu0 0.0
    %5303 = vmatpush.msra.mxu0 0.0
    %5304 = vmatpush.msra.mxu0 0.0
    %5305 = vmatpush.msra.mxu0 %v5266
    %5306 = vmatpush.msra.mxu0 %v5264
    %5307 = vmatmul.f32.gmra.mxu0 %v5269
    %v5308 = vpop.f32.mrf.mxu0
    %v5309 = vadd.f32 0.0, %v5308
    %5310 = vdwg.mxu0
    %v5312 = vsel %vm5267, %v5262, 0
    %5314 = vmatpush.msra.mxu0 0.0
    %5315 = vmatpush.msra.mxu0 0.0
    %5316 = vmatpush.msra.mxu0 0.0
    %5317 = vmatpush.msra.mxu0 0.0
    %5318 = vmatpush.msra.mxu0 0.0
    %5319 = vmatpush.msra.mxu0 0.0
    %5320 = vmatpush.msra.mxu0 0.0
    %5321 = vmatpush.msra.mxu0 0.0
    %5322 = vmatpush.msra.mxu0 0.0
    %5323 = vmatpush.msra.mxu0 0.0
    %5324 = vmatpush.msra.mxu0 0.0
    %5325 = vmatpush.msra.mxu0 0.0
    %5326 = vmatpush.msra.mxu0 0.0
    %5327 = vmatpush.msra.mxu0 0.0
    %5328 = vmatpush.msra.mxu0 %v5265
    %5329 = vmatpush.msra.mxu0 %v5263
    %5330 = vmatmul.f32.gmra.mxu0 %v5312
    %v5331 = vpop.f32.mrf.mxu0
    %v5332 = vadd.f32 0.0, %v5331
    %5333 = vdwg.mxu0
    %5334 = vmatpush.msra.mxu0 0.0
    %5335 = vmatpush.msra.mxu0 0.0
    %5336 = vmatpush.msra.mxu0 0.0
    %5337 = vmatpush.msra.mxu0 0.0
    %5338 = vmatpush.msra.mxu0 0.0
    %5339 = vmatpush.msra.mxu0 0.0
    %5340 = vmatpush.msra.mxu0 0.0
    %5341 = vmatpush.msra.mxu0 0.0
    %5342 = vmatpush.msra.mxu0 0.0
    %5343 = vmatpush.msra.mxu0 0.0
    %5344 = vmatpush.msra.mxu0 0.0
    %5345 = vmatpush.msra.mxu0 0.0
    %5346 = vmatpush.msra.mxu0 0.0
    %5347 = vmatpush.msra.mxu0 0.0
    %5348 = vmatpush.msra.mxu0 %v5266
    %5349 = vmatpush.msra.mxu0 %v5264
    %5350 = vmatmul.f32.gmra.mxu0 %v5312
    %v5351 = vpop.f32.mrf.mxu0
    %v5352 = vadd.f32 0.0, %v5351
    %5353 = vdwg.mxu0
    %v5354 = vperm.slane %v5289, 0
    %v5355 = vperm.slane %v5309, 0
    %v5356 = vsub.f32 %v5062, %v5354
    %v5357 = vsub.f32 %v5063, %v5355
    %v5358 = vsub.f32 %v5064, %v5354
    %v5359 = vsub.f32 %v5065, %v5355
    %v5360 = vsub.f32 %v5066, %v5354
    %v5361 = vsub.f32 %v5067, %v5355
    %v5362 = vsub.f32 %v5068, %v5354
    %v5363 = vsub.f32 %v5069, %v5355
    %v5364 = vsub.f32 %v5070, %v5354
    %v5365 = vsub.f32 %v5071, %v5355
    %v5366 = vsub.f32 %v5072, %v5354
    %v5367 = vsub.f32 %v5073, %v5355
    %v5368 = vperm.slane %v5332, 0
    %v5369 = vperm.slane %v5352, 0
    %v5370 = vmul.f32 %v5356, %v5368
    %v5371 = vmul.f32 %v5357, %v5369
    %v5372 = vmul.f32 %v5358, %v5368
    %v5373 = vmul.f32 %v5359, %v5369
    %v5374 = vmul.f32 %v5360, %v5368
    %v5375 = vmul.f32 %v5361, %v5369
    %v5376 = vmul.f32 %v5362, %v5368
    %v5377 = vmul.f32 %v5363, %v5369
    %v5378 = vmul.f32 %v5364, %v5368
    %v5379 = vmul.f32 %v5365, %v5369
    %v5380 = vmul.f32 %v5366, %v5368
    %v5381 = vmul.f32 %v5367, %v5369
    %v5382 = vmul.f32 %v5370, %v5035
    %v5383 = vmul.f32 %v5371, %v5035
    %v5384 = vmul.f32 %v5372, %v5040
    %v5385 = vmul.f32 %v5373, %v5040
    %v5386 = vmul.f32 %v5374, %v5045
    %v5387 = vmul.f32 %v5375, %v5045
    %v5388 = vmul.f32 %v5376, %v5050
    %v5389 = vmul.f32 %v5377, %v5050
    %v5390 = vmul.f32 %v5378, %v5055
    %v5391 = vmul.f32 %v5379, %v5055
    %v5392 = vmul.f32 %v5380, %v5060
    %v5393 = vmul.f32 %v5381, %v5060
    %v5394 = vmul.f32 %v5382, 0.2
    %v5395 = vmul.f32 %v5383, 0.2
    %v5396 = vmul.f32 %v5384, 0.2
    %v5397 = vmul.f32 %v5385, 0.2
    %v5398 = vmul.f32 %v5386, 0.2
    %v5399 = vmul.f32 %v5387, 0.2
    %v5400 = vmul.f32 %v5388, 0.2
    %v5401 = vmul.f32 %v5389, 0.2
    %v5402 = vmul.f32 %v5390, 0.2
    %v5403 = vmul.f32 %v5391, 0.2
    %v5404 = vmul.f32 %v5392, 0.2
    %v5405 = vmul.f32 %v5393, 0.2
    %v5406 = vmax.f32 %v5382, %v5394
    %v5407 = vmax.f32 %v5383, %v5395
    %v5408 = vmax.f32 %v5384, %v5396
    %v5409 = vmax.f32 %v5385, %v5397
    %v5410 = vmax.f32 %v5386, %v5398
    %v5411 = vmax.f32 %v5387, %v5399
    %v5412 = vmax.f32 %v5388, %v5400
    %v5413 = vmax.f32 %v5389, %v5401
    %v5414 = vmax.f32 %v5390, %v5402
    %v5415 = vmax.f32 %v5391, %v5403
    %v5416 = vmax.f32 %v5392, %v5404
    %v5417 = vmax.f32 %v5393, %v5405
    %5418 = vst [vmem:[#allocation4] sm:$0xff] %v5406
    %5419 = vst [vmem:[#allocation4 + $0x8] sm:$0xff] %v5407
    %5420 = vst [vmem:[#allocation4 + $0x10] sm:$0xff] %v5408
    %5421 = vst [vmem:[#allocation4 + $0x18] sm:$0xff] %v5409
    %5422 = vst [vmem:[#allocation4 + $0x20] sm:$0xff] %v5410
    %5423 = vst [vmem:[#allocation4 + $0x28] sm:$0xff] %v5411
    %5424 = vst [vmem:[#allocation4 + $0x30] sm:$0xff] %v5412
    %5425 = vst [vmem:[#allocation4 + $0x38] sm:$0xff] %v5413
    %5426 = vst [vmem:[#allocation4 + $0x40] sm:$0xff] %v5414
    %5427 = vst [vmem:[#allocation4 + $0x48] sm:$0xff] %v5415
    %5428 = vst [vmem:[#allocation4 + $0x50] sm:$0x7f] %v5416
    %5429 = vst [vmem:[#allocation4 + $0x58] sm:$0x7f] %v5417
    %s5430 = sshll.u32 %s253, 4
    %5431 = dma.done %s221, %s5430
    %v5432 = vld [vmem:[#allocation4] sm:$0xff]
    %v5433 = vld [vmem:[#allocation4 + $0x8] sm:$0xff]
    %v5434 = vld [vmem:[#allocation4 + $0x10] sm:$0xff]
    %v5435 = vld [vmem:[#allocation4 + $0x18] sm:$0xff]
    %v5436 = vld [vmem:[#allocation4 + $0x20] sm:$0xff]
    %v5437 = vld [vmem:[#allocation4 + $0x28] sm:$0xff]
    %v5438 = vld [vmem:[#allocation4 + $0x30] sm:$0xff]
    %v5439 = vld [vmem:[#allocation4 + $0x38] sm:$0xff]
    %v5440 = vld [vmem:[#allocation4 + $0x40] sm:$0xff]
    %v5441 = vld [vmem:[#allocation4 + $0x48] sm:$0xff]
    %v5442 = vld [vmem:[#allocation4 + $0x50] sm:$0x1]
    %v5443 = vld [vmem:[#allocation4 + $0x58] sm:$0x1]
    %v5444 = vpack.c.bf16 %v5434, %v5432
    %v5445 = vpack.c.bf16 %v5435, %v5433
    %v5446 = vpack.c.bf16 %v5438, %v5436
    %v5447 = vpack.c.bf16 %v5439, %v5437
    %v5448 = vpack.c.bf16 %v5442, %v5440
    %v5449 = vpack.c.bf16 %v5443, %v5441
    %v5450 = vld [vmem:[%s220] sm:$0xff]
    %v5451 = vld [vmem:[%s220 + $0x8] sm:$0xff]
    %v5452 = vld [vmem:[%s220 + $0x10] sm:$0xff]
    %v5453 = vld [vmem:[%s220 + $0x18] sm:$0xff]
    %v5454 = vld [vmem:[%s220 + $0x20] sm:$0xff]
    %v5455 = vld [vmem:[%s220 + $0x28] sm:$0xff]
    %v5456 = vld [vmem:[%s220 + $0x30] sm:$0xff]
    %v5457 = vld [vmem:[%s220 + $0x38] sm:$0xff]
    %v5458 = vld [vmem:[%s220 + $0x40] sm:$0xff]
    %v5459 = vld [vmem:[%s220 + $0x48] sm:$0xff]
    %v5460 = vld [vmem:[%s220 + $0x50] sm:$0xff]
    %v5461 = vld [vmem:[%s220 + $0x58] sm:$0xff]
    %v5462 = vld [vmem:[%s220 + $0x60] sm:$0xff]
    %v5463 = vld [vmem:[%s220 + $0x68] sm:$0xff]
    %v5464 = vld [vmem:[%s220 + $0x70] sm:$0xff]
    %v5465 = vld [vmem:[%s220 + $0x78] sm:$0xff]
    %v5466 = vld [vmem:[%s220 + $0x80] sm:$0xff]
    %v5467 = vld [vmem:[%s220 + $0x88] sm:$0xff]
    %v5468 = vld [vmem:[%s220 + $0x90] sm:$0xff]
    %v5469 = vld [vmem:[%s220 + $0x98] sm:$0xff]
    %v5470 = vld [vmem:[%s220 + $0xa0] sm:$0xff]
    %v5471 = vld [vmem:[%s220 + $0xa8] sm:$0xff]
    %v5472 = vld [vmem:[%s220 + $0xb0] sm:$0xff]
    %v5473 = vld [vmem:[%s220 + $0xb8] sm:$0xff]
    %v5474 = vld [vmem:[%s220 + $0xc0] sm:$0xff]
    %v5475 = vld [vmem:[%s220 + $0xc8] sm:$0xff]
    %v5476 = vld [vmem:[%s220 + $0xd0] sm:$0xff]
    %v5477 = vld [vmem:[%s220 + $0xd8] sm:$0xff]
    %v5478 = vld [vmem:[%s220 + $0xe0] sm:$0xff]
    %v5479 = vld [vmem:[%s220 + $0xe8] sm:$0xff]
    %v5480 = vld [vmem:[%s220 + $0xf0] sm:$0xff]
    %v5481 = vld [vmem:[%s220 + $0xf8] sm:$0xff]
    %v5482 = vld [vmem:[#allocation4] sm:$0xfc]
    %v5483 = vld [vmem:[#allocation4 + $0x8] sm:$0xfc]
    %v5484 = vld [vmem:[#allocation4 + $0x50] sm:$0x7]
    %v5485 = vld [vmem:[#allocation4 + $0x58] sm:$0x7]
    %v5486 = vpack.c.bf16 %v5434, %v5482
    %v5487 = vpack.c.bf16 %v5435, %v5483
    %v5488 = vpack.c.bf16 %v5484, %v5440
    %v5489 = vpack.c.bf16 %v5485, %v5441
    %s5490 = scalar_lea.vmem [#allocation2], 3328
    %v5491 = vld [vmem:[%s5490] sm:$0xff]
    %v5492 = vld [vmem:[%s5490 + $0x8] sm:$0xff]
    %v5493 = vld [vmem:[%s5490 + $0x10] sm:$0xff]
    %v5494 = vld [vmem:[%s5490 + $0x18] sm:$0xff]
    %v5495 = vld [vmem:[%s5490 + $0x20] sm:$0xff]
    %v5496 = vld [vmem:[%s5490 + $0x28] sm:$0xff]
    %v5497 = vld [vmem:[%s5490 + $0x30] sm:$0xff]
    %v5498 = vld [vmem:[%s5490 + $0x38] sm:$0xff]
    %v5499 = vld [vmem:[%s5490 + $0x40] sm:$0xff]
    %v5500 = vld [vmem:[%s5490 + $0x48] sm:$0xff]
    %v5501 = vld [vmem:[%s5490 + $0x50] sm:$0xff]
    %v5502 = vld [vmem:[%s5490 + $0x58] sm:$0xff]
    %v5503 = vld [vmem:[%s5490 + $0x60] sm:$0xff]
    %v5504 = vld [vmem:[%s5490 + $0x68] sm:$0xff]
    %v5505 = vld [vmem:[%s5490 + $0x70] sm:$0xff]
    %v5506 = vld [vmem:[%s5490 + $0x78] sm:$0xff]
    %v5507 = vld [vmem:[%s5490 + $0x80] sm:$0xff]
    %v5508 = vld [vmem:[%s5490 + $0x88] sm:$0xff]
    %v5509 = vld [vmem:[%s5490 + $0x90] sm:$0xff]
    %v5510 = vld [vmem:[%s5490 + $0x98] sm:$0xff]
    %v5511 = vld [vmem:[%s5490 + $0xa0] sm:$0xff]
    %v5512 = vld [vmem:[%s5490 + $0xa8] sm:$0xff]
    %v5513 = vld [vmem:[%s5490 + $0xb0] sm:$0xff]
    %v5514 = vld [vmem:[%s5490 + $0xb8] sm:$0xff]
    %v5515 = vld [vmem:[%s5490 + $0xc0] sm:$0xff]
    %v5516 = vld [vmem:[%s5490 + $0xc8] sm:$0xff]
    %v5517 = vld [vmem:[%s5490 + $0xd0] sm:$0xff]
    %v5518 = vld [vmem:[%s5490 + $0xd8] sm:$0xff]
    %v5519 = vld [vmem:[%s5490 + $0xe0] sm:$0xff]
    %v5520 = vld [vmem:[%s5490 + $0xe8] sm:$0xff]
    %v5521 = vld [vmem:[%s5490 + $0xf0] sm:$0xff]
    %v5522 = vld [vmem:[%s5490 + $0xf8] sm:$0xff]
    %v5529 = vrot.slane %v5486, 1
    %v5530 = vrot.slane %v5446, 1
    %v5531 = vsel %vm1015, %v5529, %v5530
    %v5532 = vrot.slane %v5487, 1
    %v5533 = vrot.slane %v5447, 1
    %v5534 = vsel %vm1015, %v5532, %v5533
    %v5535 = vrot.slane %v5488, 1
    %v5536 = vsel %vm1015, %v5530, %v5535
    %v5537 = vrot.slane %v5489, 1
    %v5538 = vsel %vm1015, %v5533, %v5537
    %v5577 = vunpack.c.l.b16 %v5491
    %v5578 = vunpack.c.h.b16 %v5491
    %v5579 = vunpack.c.l.b16 %v5492
    %v5580 = vunpack.c.h.b16 %v5492
    %v5581 = vunpack.c.l.b16 %v5493
    %v5582 = vunpack.c.h.b16 %v5493
    %v5583 = vunpack.c.l.b16 %v5494
    %v5584 = vunpack.c.h.b16 %v5494
    %v5585 = vunpack.c.l.b16 %v5495
    %v5586 = vunpack.c.h.b16 %v5495
    %v5587 = vunpack.c.l.b16 %v5496
    %v5588 = vunpack.c.h.b16 %v5496
    %v5589 = vunpack.c.l.b16 %v5497
    %v5590 = vunpack.c.h.b16 %v5497
    %v5591 = vunpack.c.l.b16 %v5498
    %v5592 = vunpack.c.h.b16 %v5498
    %v5593 = vunpack.c.l.b16 %v5499
    %v5594 = vunpack.c.h.b16 %v5499
    %v5595 = vunpack.c.l.b16 %v5500
    %v5596 = vunpack.c.h.b16 %v5500
    %v5597 = vunpack.c.l.b16 %v5501
    %v5598 = vunpack.c.h.b16 %v5501
    %v5599 = vunpack.c.l.b16 %v5502
    %v5600 = vunpack.c.h.b16 %v5502
    %v5601 = vunpack.c.l.b16 %v5503
    %v5602 = vunpack.c.h.b16 %v5503
    %v5603 = vunpack.c.l.b16 %v5504
    %v5604 = vunpack.c.h.b16 %v5504
    %v5605 = vunpack.c.l.b16 %v5505
    %v5606 = vunpack.c.h.b16 %v5505
    %v5607 = vunpack.c.l.b16 %v5506
    %v5608 = vunpack.c.h.b16 %v5506
    %v5609 = vunpack.c.l.b16 %v5507
    %v5610 = vunpack.c.h.b16 %v5507
    %v5611 = vunpack.c.l.b16 %v5508
    %v5612 = vunpack.c.h.b16 %v5508
    %v5613 = vunpack.c.l.b16 %v5509
    %v5614 = vunpack.c.h.b16 %v5509
    %v5615 = vunpack.c.l.b16 %v5510
    %v5616 = vunpack.c.h.b16 %v5510
    %v5617 = vunpack.c.l.b16 %v5511
    %v5618 = vunpack.c.h.b16 %v5511
    %v5619 = vunpack.c.l.b16 %v5512
    %v5620 = vunpack.c.h.b16 %v5512
    %v5621 = vunpack.c.l.b16 %v5513
    %v5622 = vunpack.c.h.b16 %v5513
    %v5623 = vunpack.c.l.b16 %v5514
    %v5624 = vunpack.c.h.b16 %v5514
    %v5625 = vunpack.c.l.b16 %v5515
    %v5626 = vunpack.c.h.b16 %v5515
    %v5627 = vunpack.c.l.b16 %v5516
    %v5628 = vunpack.c.h.b16 %v5516
    %v5629 = vunpack.c.l.b16 %v5517
    %v5630 = vunpack.c.h.b16 %v5517
    %v5631 = vunpack.c.l.b16 %v5518
    %v5632 = vunpack.c.h.b16 %v5518
    %v5633 = vunpack.c.l.b16 %v5519
    %v5634 = vunpack.c.h.b16 %v5519
    %v5635 = vunpack.c.l.b16 %v5520
    %v5636 = vunpack.c.h.b16 %v5520
    %v5637 = vunpack.c.l.b16 %v5521
    %v5638 = vunpack.c.h.b16 %v5521
    %v5639 = vunpack.c.l.b16 %v5522
    %v5640 = vunpack.c.h.b16 %v5522
    %v5641 = vpack.c.b16 %v5579, %v5577
    %v5642 = vpack.c.b16 %v5580, %v5578
    %v5643 = vpack.c.b16 %v5583, %v5581
    %v5644 = vpack.c.b16 %v5584, %v5582
    %v5645 = vpack.c.b16 %v5587, %v5585
    %v5646 = vpack.c.b16 %v5588, %v5586
    %v5647 = vpack.c.b16 %v5591, %v5589
    %v5648 = vpack.c.b16 %v5592, %v5590
    %v5649 = vpack.c.b16 %v5595, %v5593
    %v5650 = vpack.c.b16 %v5596, %v5594
    %v5651 = vpack.c.b16 %v5599, %v5597
    %v5652 = vpack.c.b16 %v5600, %v5598
    %v5653 = vpack.c.b16 %v5603, %v5601
    %v5654 = vpack.c.b16 %v5604, %v5602
    %v5655 = vpack.c.b16 %v5607, %v5605
    %v5656 = vpack.c.b16 %v5608, %v5606
    %v5657 = vpack.c.b16 %v5611, %v5609
    %v5658 = vpack.c.b16 %v5612, %v5610
    %v5659 = vpack.c.b16 %v5615, %v5613
    %v5660 = vpack.c.b16 %v5616, %v5614
    %v5661 = vpack.c.b16 %v5619, %v5617
    %v5662 = vpack.c.b16 %v5620, %v5618
    %v5663 = vpack.c.b16 %v5623, %v5621
    %v5664 = vpack.c.b16 %v5624, %v5622
    %v5665 = vpack.c.b16 %v5627, %v5625
    %v5666 = vpack.c.b16 %v5628, %v5626
    %v5667 = vpack.c.b16 %v5631, %v5629
    %v5668 = vpack.c.b16 %v5632, %v5630
    %v5669 = vpack.c.b16 %v5635, %v5633
    %v5670 = vpack.c.b16 %v5636, %v5634
    %v5671 = vpack.c.b16 %v5639, %v5637
    %v5672 = vpack.c.b16 %v5640, %v5638
    %5705 = vmatpush.bf16.msra.mxu0 %v5655
    %5706 = vmatpush.bf16.msra.mxu0 %v5653
    %5707 = vmatpush.bf16.msra.mxu0 %v5651
    %5708 = vmatpush.bf16.msra.mxu0 %v5649
    %5709 = vmatpush.bf16.msra.mxu0 %v5647
    %5710 = vmatpush.bf16.msra.mxu0 %v5645
    %5711 = vmatpush.bf16.msra.mxu0 %v5643
    %5712 = vmatpush.bf16.msra.mxu0 %v5641
    %5713 = vmatmul.bf16.gmra.mxu0 %v5531
    %v5714 = vpop.f32.mrf.mxu0
    %v5715 = vadd.f32 0.0, %v5714
    %v5716 = vpop.f32.mrf.mxu0
    %v5717 = vadd.f32 0.0, %v5716
    %5718 = vmatmul.bf16.gmra.mxu0 %v5536
    %v5719 = vpop.f32.mrf.mxu0
    %v5720 = vadd.f32 0.0, %v5719
    %v5721 = vpop.f32.mrf.mxu0
    %v5722 = vadd.f32 0.0, %v5721
    %5723 = vmatmul.bf16.gmra.mxu0 %v5535
    %v5724 = vpop.f32.mrf.mxu0
    %v5725 = vadd.f32 0.0, %v5724
    %v5726 = vpop.f32.mrf.mxu0
    %v5727 = vadd.f32 0.0, %v5726
    %5728 = vdwg.mxu0
    %5729 = vmatpush.bf16.msra.mxu0 %v5671
    %5730 = vmatpush.bf16.msra.mxu0 %v5669
    %5731 = vmatpush.bf16.msra.mxu0 %v5667
    %5732 = vmatpush.bf16.msra.mxu0 %v5665
    %5733 = vmatpush.bf16.msra.mxu0 %v5663
    %5734 = vmatpush.bf16.msra.mxu0 %v5661
    %5735 = vmatpush.bf16.msra.mxu0 %v5659
    %5736 = vmatpush.bf16.msra.mxu0 %v5657
    %5737 = vmatmul.bf16.gmra.mxu0 %v5534
    %v5738 = vpop.f32.mrf.mxu0
    %v5739 = vadd.f32 %v5715, %v5738
    %v5740 = vpop.f32.mrf.mxu0
    %v5741 = vadd.f32 %v5717, %v5740
    %5742 = vmatmul.bf16.gmra.mxu0 %v5538
    %v5743 = vpop.f32.mrf.mxu0
    %v5744 = vadd.f32 %v5720, %v5743
    %v5745 = vpop.f32.mrf.mxu0
    %v5746 = vadd.f32 %v5722, %v5745
    %5747 = vmatmul.bf16.gmra.mxu0 %v5537
    %v5748 = vpop.f32.mrf.mxu0
    %v5749 = vadd.f32 %v5725, %v5748
    %v5750 = vpop.f32.mrf.mxu0
    %v5751 = vadd.f32 %v5727, %v5750
    %5752 = vdwg.mxu0
    %5753 = vmatpush.bf16.msra.mxu0 %v5656
    %5754 = vmatpush.bf16.msra.mxu0 %v5654
    %5755 = vmatpush.bf16.msra.mxu0 %v5652
    %5756 = vmatpush.bf16.msra.mxu0 %v5650
    %5757 = vmatpush.bf16.msra.mxu0 %v5648
    %5758 = vmatpush.bf16.msra.mxu0 %v5646
    %5759 = vmatpush.bf16.msra.mxu0 %v5644
    %5760 = vmatpush.bf16.msra.mxu0 %v5642
    %5761 = vmatmul.bf16.gmra.mxu0 %v5531
    %v5762 = vpop.f32.mrf.mxu0
    %v5763 = vadd.f32 0.0, %v5762
    %v5764 = vpop.f32.mrf.mxu0
    %v5765 = vadd.f32 0.0, %v5764
    %5766 = vmatmul.bf16.gmra.mxu0 %v5536
    %v5767 = vpop.f32.mrf.mxu0
    %v5768 = vadd.f32 0.0, %v5767
    %v5769 = vpop.f32.mrf.mxu0
    %v5770 = vadd.f32 0.0, %v5769
    %5771 = vmatmul.bf16.gmra.mxu0 %v5535
    %v5772 = vpop.f32.mrf.mxu0
    %v5773 = vadd.f32 0.0, %v5772
    %v5774 = vpop.f32.mrf.mxu0
    %v5775 = vadd.f32 0.0, %v5774
    %5776 = vdwg.mxu0
    %5777 = vmatpush.bf16.msra.mxu0 %v5672
    %5778 = vmatpush.bf16.msra.mxu0 %v5670
    %5779 = vmatpush.bf16.msra.mxu0 %v5668
    %5780 = vmatpush.bf16.msra.mxu0 %v5666
    %5781 = vmatpush.bf16.msra.mxu0 %v5664
    %5782 = vmatpush.bf16.msra.mxu0 %v5662
    %5783 = vmatpush.bf16.msra.mxu0 %v5660
    %5784 = vmatpush.bf16.msra.mxu0 %v5658
    %5785 = vmatmul.bf16.gmra.mxu0 %v5534
    %v5786 = vpop.f32.mrf.mxu0
    %v5787 = vadd.f32 %v5763, %v5786
    %v5788 = vpop.f32.mrf.mxu0
    %v5789 = vadd.f32 %v5765, %v5788
    %5790 = vmatmul.bf16.gmra.mxu0 %v5538
    %v5791 = vpop.f32.mrf.mxu0
    %v5792 = vadd.f32 %v5768, %v5791
    %v5793 = vpop.f32.mrf.mxu0
    %v5794 = vadd.f32 %v5770, %v5793
    %5795 = vmatmul.bf16.gmra.mxu0 %v5537
    %v5796 = vpop.f32.mrf.mxu0
    %v5797 = vadd.f32 %v5773, %v5796
    %v5798 = vpop.f32.mrf.mxu0
    %v5799 = vadd.f32 %v5775, %v5798
    %5800 = vdwg.mxu0
    %v5833 = vunpack.c.l.b16 %v5450
    %v5834 = vunpack.c.h.b16 %v5450
    %v5835 = vunpack.c.l.b16 %v5451
    %v5836 = vunpack.c.h.b16 %v5451
    %v5837 = vunpack.c.l.b16 %v5452
    %v5838 = vunpack.c.h.b16 %v5452
    %v5839 = vunpack.c.l.b16 %v5453
    %v5840 = vunpack.c.h.b16 %v5453
    %v5841 = vunpack.c.l.b16 %v5454
    %v5842 = vunpack.c.h.b16 %v5454
    %v5843 = vunpack.c.l.b16 %v5455
    %v5844 = vunpack.c.h.b16 %v5455
    %v5845 = vunpack.c.l.b16 %v5456
    %v5846 = vunpack.c.h.b16 %v5456
    %v5847 = vunpack.c.l.b16 %v5457
    %v5848 = vunpack.c.h.b16 %v5457
    %v5849 = vunpack.c.l.b16 %v5458
    %v5850 = vunpack.c.h.b16 %v5458
    %v5851 = vunpack.c.l.b16 %v5459
    %v5852 = vunpack.c.h.b16 %v5459
    %v5853 = vunpack.c.l.b16 %v5460
    %v5854 = vunpack.c.h.b16 %v5460
    %v5855 = vunpack.c.l.b16 %v5461
    %v5856 = vunpack.c.h.b16 %v5461
    %v5857 = vunpack.c.l.b16 %v5462
    %v5858 = vunpack.c.h.b16 %v5462
    %v5859 = vunpack.c.l.b16 %v5463
    %v5860 = vunpack.c.h.b16 %v5463
    %v5861 = vunpack.c.l.b16 %v5464
    %v5862 = vunpack.c.h.b16 %v5464
    %v5863 = vunpack.c.l.b16 %v5465
    %v5864 = vunpack.c.h.b16 %v5465
    %v5865 = vunpack.c.l.b16 %v5466
    %v5866 = vunpack.c.h.b16 %v5466
    %v5867 = vunpack.c.l.b16 %v5467
    %v5868 = vunpack.c.h.b16 %v5467
    %v5869 = vunpack.c.l.b16 %v5468
    %v5870 = vunpack.c.h.b16 %v5468
    %v5871 = vunpack.c.l.b16 %v5469
    %v5872 = vunpack.c.h.b16 %v5469
    %v5873 = vunpack.c.l.b16 %v5470
    %v5874 = vunpack.c.h.b16 %v5470
    %v5875 = vunpack.c.l.b16 %v5471
    %v5876 = vunpack.c.h.b16 %v5471
    %v5877 = vunpack.c.l.b16 %v5472
    %v5878 = vunpack.c.h.b16 %v5472
    %v5879 = vunpack.c.l.b16 %v5473
    %v5880 = vunpack.c.h.b16 %v5473
    %v5881 = vunpack.c.l.b16 %v5474
    %v5882 = vunpack.c.h.b16 %v5474
    %v5883 = vunpack.c.l.b16 %v5475
    %v5884 = vunpack.c.h.b16 %v5475
    %v5885 = vunpack.c.l.b16 %v5476
    %v5886 = vunpack.c.h.b16 %v5476
    %v5887 = vunpack.c.l.b16 %v5477
    %v5888 = vunpack.c.h.b16 %v5477
    %v5889 = vunpack.c.l.b16 %v5478
    %v5890 = vunpack.c.h.b16 %v5478
    %v5891 = vunpack.c.l.b16 %v5479
    %v5892 = vunpack.c.h.b16 %v5479
    %v5893 = vunpack.c.l.b16 %v5480
    %v5894 = vunpack.c.h.b16 %v5480
    %v5895 = vunpack.c.l.b16 %v5481
    %v5896 = vunpack.c.h.b16 %v5481
    %v5897 = vpack.c.b16 %v5835, %v5833
    %v5898 = vpack.c.b16 %v5836, %v5834
    %v5899 = vpack.c.b16 %v5839, %v5837
    %v5900 = vpack.c.b16 %v5840, %v5838
    %v5901 = vpack.c.b16 %v5843, %v5841
    %v5902 = vpack.c.b16 %v5844, %v5842
    %v5903 = vpack.c.b16 %v5847, %v5845
    %v5904 = vpack.c.b16 %v5848, %v5846
    %v5905 = vpack.c.b16 %v5851, %v5849
    %v5906 = vpack.c.b16 %v5852, %v5850
    %v5907 = vpack.c.b16 %v5855, %v5853
    %v5908 = vpack.c.b16 %v5856, %v5854
    %v5909 = vpack.c.b16 %v5859, %v5857
    %v5910 = vpack.c.b16 %v5860, %v5858
    %v5911 = vpack.c.b16 %v5863, %v5861
    %v5912 = vpack.c.b16 %v5864, %v5862
    %v5913 = vpack.c.b16 %v5867, %v5865
    %v5914 = vpack.c.b16 %v5868, %v5866
    %v5915 = vpack.c.b16 %v5871, %v5869
    %v5916 = vpack.c.b16 %v5872, %v5870
    %v5917 = vpack.c.b16 %v5875, %v5873
    %v5918 = vpack.c.b16 %v5876, %v5874
    %v5919 = vpack.c.b16 %v5879, %v5877
    %v5920 = vpack.c.b16 %v5880, %v5878
    %v5921 = vpack.c.b16 %v5883, %v5881
    %v5922 = vpack.c.b16 %v5884, %v5882
    %v5923 = vpack.c.b16 %v5887, %v5885
    %v5924 = vpack.c.b16 %v5888, %v5886
    %v5925 = vpack.c.b16 %v5891, %v5889
    %v5926 = vpack.c.b16 %v5892, %v5890
    %v5927 = vpack.c.b16 %v5895, %v5893
    %v5928 = vpack.c.b16 %v5896, %v5894
    %5961 = vmatpush.bf16.msra.mxu0 %v5911
    %5962 = vmatpush.bf16.msra.mxu0 %v5909
    %5963 = vmatpush.bf16.msra.mxu0 %v5907
    %5964 = vmatpush.bf16.msra.mxu0 %v5905
    %5965 = vmatpush.bf16.msra.mxu0 %v5903
    %5966 = vmatpush.bf16.msra.mxu0 %v5901
    %5967 = vmatpush.bf16.msra.mxu0 %v5899
    %5968 = vmatpush.bf16.msra.mxu0 %v5897
    %5969 = vmatmul.bf16.gmra.mxu0 %v5444
    %v5970 = vpop.f32.mrf.mxu0
    %v5971 = vadd.f32 %v5739, %v5970
    %v5972 = vpop.f32.mrf.mxu0
    %v5973 = vadd.f32 %v5741, %v5972
    %5974 = vmatmul.bf16.gmra.mxu0 %v5446
    %v5975 = vpop.f32.mrf.mxu0
    %v5976 = vadd.f32 %v5744, %v5975
    %v5977 = vpop.f32.mrf.mxu0
    %v5978 = vadd.f32 %v5746, %v5977
    %5979 = vmatmul.bf16.gmra.mxu0 %v5448
    %v5980 = vpop.f32.mrf.mxu0
    %v5981 = vadd.f32 %v5749, %v5980
    %v5982 = vpop.f32.mrf.mxu0
    %v5983 = vadd.f32 %v5751, %v5982
    %5984 = vdwg.mxu0
    %5985 = vmatpush.bf16.msra.mxu0 %v5927
    %5986 = vmatpush.bf16.msra.mxu0 %v5925
    %5987 = vmatpush.bf16.msra.mxu0 %v5923
    %5988 = vmatpush.bf16.msra.mxu0 %v5921
    %5989 = vmatpush.bf16.msra.mxu0 %v5919
    %5990 = vmatpush.bf16.msra.mxu0 %v5917
    %5991 = vmatpush.bf16.msra.mxu0 %v5915
    %5992 = vmatpush.bf16.msra.mxu0 %v5913
    %5993 = vmatmul.bf16.gmra.mxu0 %v5445
    %v5994 = vpop.f32.mrf.mxu0
    %v5995 = vadd.f32 %v5971, %v5994
    %v5996 = vpop.f32.mrf.mxu0
    %v5997 = vadd.f32 %v5973, %v5996
    %5998 = vmatmul.bf16.gmra.mxu0 %v5447
    %v5999 = vpop.f32.mrf.mxu0
    %v6000 = vadd.f32 %v5976, %v5999
    %v6001 = vpop.f32.mrf.mxu0
    %v6002 = vadd.f32 %v5978, %v6001
    %6003 = vmatmul.bf16.gmra.mxu0 %v5449
    %v6004 = vpop.f32.mrf.mxu0
    %v6005 = vadd.f32 %v5981, %v6004
    %v6006 = vpop.f32.mrf.mxu0
    %v6007 = vadd.f32 %v5983, %v6006
    %6008 = vdwg.mxu0
    %6009 = vmatpush.bf16.msra.mxu0 %v5912
    %6010 = vmatpush.bf16.msra.mxu0 %v5910
    %6011 = vmatpush.bf16.msra.mxu0 %v5908
    %6012 = vmatpush.bf16.msra.mxu0 %v5906
    %6013 = vmatpush.bf16.msra.mxu0 %v5904
    %6014 = vmatpush.bf16.msra.mxu0 %v5902
    %6015 = vmatpush.bf16.msra.mxu0 %v5900
    %6016 = vmatpush.bf16.msra.mxu0 %v5898
    %6017 = vmatmul.bf16.gmra.mxu0 %v5444
    %v6018 = vpop.f32.mrf.mxu0
    %v6019 = vadd.f32 %v5787, %v6018
    %v6020 = vpop.f32.mrf.mxu0
    %v6021 = vadd.f32 %v5789, %v6020
    %6022 = vmatmul.bf16.gmra.mxu0 %v5446
    %v6023 = vpop.f32.mrf.mxu0
    %v6024 = vadd.f32 %v5792, %v6023
    %v6025 = vpop.f32.mrf.mxu0
    %v6026 = vadd.f32 %v5794, %v6025
    %6027 = vmatmul.bf16.gmra.mxu0 %v5448
    %v6028 = vpop.f32.mrf.mxu0
    %v6029 = vadd.f32 %v5797, %v6028
    %v6030 = vpop.f32.mrf.mxu0
    %v6031 = vadd.f32 %v5799, %v6030
    %6032 = vdwg.mxu0
    %6033 = vmatpush.bf16.msra.mxu0 %v5928
    %6034 = vmatpush.bf16.msra.mxu0 %v5926
    %6035 = vmatpush.bf16.msra.mxu0 %v5924
    %6036 = vmatpush.bf16.msra.mxu0 %v5922
    %6037 = vmatpush.bf16.msra.mxu0 %v5920
    %6038 = vmatpush.bf16.msra.mxu0 %v5918
    %6039 = vmatpush.bf16.msra.mxu0 %v5916
    %6040 = vmatpush.bf16.msra.mxu0 %v5914
    %6041 = vmatmul.bf16.gmra.mxu0 %v5445
    %v6042 = vpop.f32.mrf.mxu0
    %v6043 = vadd.f32 %v6019, %v6042
    %v6044 = vpop.f32.mrf.mxu0
    %v6045 = vadd.f32 %v6021, %v6044
    %6046 = vmatmul.bf16.gmra.mxu0 %v5447
    %v6047 = vpop.f32.mrf.mxu0
    %v6048 = vadd.f32 %v6024, %v6047
    %v6049 = vpop.f32.mrf.mxu0
    %v6050 = vadd.f32 %v6026, %v6049
    %6051 = vmatmul.bf16.gmra.mxu0 %v5449
    %v6052 = vpop.f32.mrf.mxu0
    %v6053 = vadd.f32 %v6029, %v6052
    %v6054 = vpop.f32.mrf.mxu0
    %v6055 = vadd.f32 %v6031, %v6054
    %6056 = vdwg.mxu0
    %v6057 = vld [vmem:[#allocation4] sm:$0xf0]
    %v6058 = vld [vmem:[#allocation4 + $0x8] sm:$0xf0]
    %v6059 = vld [vmem:[#allocation4 + $0x50] sm:$0x1f]
    %v6060 = vld [vmem:[#allocation4 + $0x58] sm:$0x1f]
    %v6061 = vpack.c.bf16 %v5434, %v6057
    %v6062 = vpack.c.bf16 %v5435, %v6058
    %v6063 = vpack.c.bf16 %v6059, %v5440
    %v6064 = vpack.c.bf16 %v6060, %v5441
    %s6065 = scalar_lea.vmem [#allocation2], 3584
    %v6066 = vld [vmem:[%s6065] sm:$0xff]
    %v6067 = vld [vmem:[%s6065 + $0x8] sm:$0xff]
    %v6068 = vld [vmem:[%s6065 + $0x10] sm:$0xff]
    %v6069 = vld [vmem:[%s6065 + $0x18] sm:$0xff]
    %v6070 = vld [vmem:[%s6065 + $0x20] sm:$0xff]
    %v6071 = vld [vmem:[%s6065 + $0x28] sm:$0xff]
    %v6072 = vld [vmem:[%s6065 + $0x30] sm:$0xff]
    %v6073 = vld [vmem:[%s6065 + $0x38] sm:$0xff]
    %v6074 = vld [vmem:[%s6065 + $0x40] sm:$0xff]
    %v6075 = vld [vmem:[%s6065 + $0x48] sm:$0xff]
    %v6076 = vld [vmem:[%s6065 + $0x50] sm:$0xff]
    %v6077 = vld [vmem:[%s6065 + $0x58] sm:$0xff]
    %v6078 = vld [vmem:[%s6065 + $0x60] sm:$0xff]
    %v6079 = vld [vmem:[%s6065 + $0x68] sm:$0xff]
    %v6080 = vld [vmem:[%s6065 + $0x70] sm:$0xff]
    %v6081 = vld [vmem:[%s6065 + $0x78] sm:$0xff]
    %v6082 = vld [vmem:[%s6065 + $0x80] sm:$0xff]
    %v6083 = vld [vmem:[%s6065 + $0x88] sm:$0xff]
    %v6084 = vld [vmem:[%s6065 + $0x90] sm:$0xff]
    %v6085 = vld [vmem:[%s6065 + $0x98] sm:$0xff]
    %v6086 = vld [vmem:[%s6065 + $0xa0] sm:$0xff]
    %v6087 = vld [vmem:[%s6065 + $0xa8] sm:$0xff]
    %v6088 = vld [vmem:[%s6065 + $0xb0] sm:$0xff]
    %v6089 = vld [vmem:[%s6065 + $0xb8] sm:$0xff]
    %v6090 = vld [vmem:[%s6065 + $0xc0] sm:$0xff]
    %v6091 = vld [vmem:[%s6065 + $0xc8] sm:$0xff]
    %v6092 = vld [vmem:[%s6065 + $0xd0] sm:$0xff]
    %v6093 = vld [vmem:[%s6065 + $0xd8] sm:$0xff]
    %v6094 = vld [vmem:[%s6065 + $0xe0] sm:$0xff]
    %v6095 = vld [vmem:[%s6065 + $0xe8] sm:$0xff]
    %v6096 = vld [vmem:[%s6065 + $0xf0] sm:$0xff]
    %v6097 = vld [vmem:[%s6065 + $0xf8] sm:$0xff]
    %vm6102 = vcmask 1045504
    %v6103 = vrot.slane %v6061, 2
    %v6104 = vrot.slane %v5446, 2
    %v6105 = vsel %vm6102, %v6103, %v6104
    %v6106 = vrot.slane %v6062, 2
    %v6107 = vrot.slane %v5447, 2
    %v6108 = vsel %vm6102, %v6106, %v6107
    %v6109 = vrot.slane %v6063, 2
    %v6110 = vsel %vm6102, %v6104, %v6109
    %v6111 = vrot.slane %v6064, 2
    %v6112 = vsel %vm6102, %v6107, %v6111
    %v6151 = vunpack.c.l.b16 %v6066
    %v6152 = vunpack.c.h.b16 %v6066
    %v6153 = vunpack.c.l.b16 %v6067
    %v6154 = vunpack.c.h.b16 %v6067
    %v6155 = vunpack.c.l.b16 %v6068
    %v6156 = vunpack.c.h.b16 %v6068
    %v6157 = vunpack.c.l.b16 %v6069
    %v6158 = vunpack.c.h.b16 %v6069
    %v6159 = vunpack.c.l.b16 %v6070
    %v6160 = vunpack.c.h.b16 %v6070
    %v6161 = vunpack.c.l.b16 %v6071
    %v6162 = vunpack.c.h.b16 %v6071
    %v6163 = vunpack.c.l.b16 %v6072
    %v6164 = vunpack.c.h.b16 %v6072
    %v6165 = vunpack.c.l.b16 %v6073
    %v6166 = vunpack.c.h.b16 %v6073
    %v6167 = vunpack.c.l.b16 %v6074
    %v6168 = vunpack.c.h.b16 %v6074
    %v6169 = vunpack.c.l.b16 %v6075
    %v6170 = vunpack.c.h.b16 %v6075
    %v6171 = vunpack.c.l.b16 %v6076
    %v6172 = vunpack.c.h.b16 %v6076
    %v6173 = vunpack.c.l.b16 %v6077
    %v6174 = vunpack.c.h.b16 %v6077
    %v6175 = vunpack.c.l.b16 %v6078
    %v6176 = vunpack.c.h.b16 %v6078
    %v6177 = vunpack.c.l.b16 %v6079
    %v6178 = vunpack.c.h.b16 %v6079
    %v6179 = vunpack.c.l.b16 %v6080
    %v6180 = vunpack.c.h.b16 %v6080
    %v6181 = vunpack.c.l.b16 %v6081
    %v6182 = vunpack.c.h.b16 %v6081
    %v6183 = vunpack.c.l.b16 %v6082
    %v6184 = vunpack.c.h.b16 %v6082
    %v6185 = vunpack.c.l.b16 %v6083
    %v6186 = vunpack.c.h.b16 %v6083
    %v6187 = vunpack.c.l.b16 %v6084
    %v6188 = vunpack.c.h.b16 %v6084
    %v6189 = vunpack.c.l.b16 %v6085
    %v6190 = vunpack.c.h.b16 %v6085
    %v6191 = vunpack.c.l.b16 %v6086
    %v6192 = vunpack.c.h.b16 %v6086
    %v6193 = vunpack.c.l.b16 %v6087
    %v6194 = vunpack.c.h.b16 %v6087
    %v6195 = vunpack.c.l.b16 %v6088
    %v6196 = vunpack.c.h.b16 %v6088
    %v6197 = vunpack.c.l.b16 %v6089
    %v6198 = vunpack.c.h.b16 %v6089
    %v6199 = vunpack.c.l.b16 %v6090
    %v6200 = vunpack.c.h.b16 %v6090
    %v6201 = vunpack.c.l.b16 %v6091
    %v6202 = vunpack.c.h.b16 %v6091
    %v6203 = vunpack.c.l.b16 %v6092
    %v6204 = vunpack.c.h.b16 %v6092
    %v6205 = vunpack.c.l.b16 %v6093
    %v6206 = vunpack.c.h.b16 %v6093
    %v6207 = vunpack.c.l.b16 %v6094
    %v6208 = vunpack.c.h.b16 %v6094
    %v6209 = vunpack.c.l.b16 %v6095
    %v6210 = vunpack.c.h.b16 %v6095
    %v6211 = vunpack.c.l.b16 %v6096
    %v6212 = vunpack.c.h.b16 %v6096
    %v6213 = vunpack.c.l.b16 %v6097
    %v6214 = vunpack.c.h.b16 %v6097
    %v6215 = vpack.c.b16 %v6153, %v6151
    %v6216 = vpack.c.b16 %v6154, %v6152
    %v6217 = vpack.c.b16 %v6157, %v6155
    %v6218 = vpack.c.b16 %v6158, %v6156
    %v6219 = vpack.c.b16 %v6161, %v6159
    %v6220 = vpack.c.b16 %v6162, %v6160
    %v6221 = vpack.c.b16 %v6165, %v6163
    %v6222 = vpack.c.b16 %v6166, %v6164
    %v6223 = vpack.c.b16 %v6169, %v6167
    %v6224 = vpack.c.b16 %v6170, %v6168
    %v6225 = vpack.c.b16 %v6173, %v6171
    %v6226 = vpack.c.b16 %v6174, %v6172
    %v6227 = vpack.c.b16 %v6177, %v6175
    %v6228 = vpack.c.b16 %v6178, %v6176
    %v6229 = vpack.c.b16 %v6181, %v6179
    %v6230 = vpack.c.b16 %v6182, %v6180
    %v6231 = vpack.c.b16 %v6185, %v6183
    %v6232 = vpack.c.b16 %v6186, %v6184
    %v6233 = vpack.c.b16 %v6189, %v6187
    %v6234 = vpack.c.b16 %v6190, %v6188
    %v6235 = vpack.c.b16 %v6193, %v6191
    %v6236 = vpack.c.b16 %v6194, %v6192
    %v6237 = vpack.c.b16 %v6197, %v6195
    %v6238 = vpack.c.b16 %v6198, %v6196
    %v6239 = vpack.c.b16 %v6201, %v6199
    %v6240 = vpack.c.b16 %v6202, %v6200
    %v6241 = vpack.c.b16 %v6205, %v6203
    %v6242 = vpack.c.b16 %v6206, %v6204
    %v6243 = vpack.c.b16 %v6209, %v6207
    %v6244 = vpack.c.b16 %v6210, %v6208
    %v6245 = vpack.c.b16 %v6213, %v6211
    %v6246 = vpack.c.b16 %v6214, %v6212
    %6279 = vmatpush.bf16.msra.mxu0 %v6229
    %6280 = vmatpush.bf16.msra.mxu0 %v6227
    %6281 = vmatpush.bf16.msra.mxu0 %v6225
    %6282 = vmatpush.bf16.msra.mxu0 %v6223
    %6283 = vmatpush.bf16.msra.mxu0 %v6221
    %6284 = vmatpush.bf16.msra.mxu0 %v6219
    %6285 = vmatpush.bf16.msra.mxu0 %v6217
    %6286 = vmatpush.bf16.msra.mxu0 %v6215
    %6287 = vmatmul.bf16.gmra.mxu0 %v6105
    %v6288 = vpop.f32.mrf.mxu0
    %v6289 = vadd.f32 0.0, %v6288
    %v6290 = vpop.f32.mrf.mxu0
    %v6291 = vadd.f32 0.0, %v6290
    %6292 = vmatmul.bf16.gmra.mxu0 %v6110
    %v6293 = vpop.f32.mrf.mxu0
    %v6294 = vadd.f32 0.0, %v6293
    %v6295 = vpop.f32.mrf.mxu0
    %v6296 = vadd.f32 0.0, %v6295
    %6297 = vmatmul.bf16.gmra.mxu0 %v6109
    %v6298 = vpop.f32.mrf.mxu0
    %v6299 = vadd.f32 0.0, %v6298
    %v6300 = vpop.f32.mrf.mxu0
    %v6301 = vadd.f32 0.0, %v6300
    %6302 = vdwg.mxu0
    %6303 = vmatpush.bf16.msra.mxu0 %v6245
    %6304 = vmatpush.bf16.msra.mxu0 %v6243
    %6305 = vmatpush.bf16.msra.mxu0 %v6241
    %6306 = vmatpush.bf16.msra.mxu0 %v6239
    %6307 = vmatpush.bf16.msra.mxu0 %v6237
    %6308 = vmatpush.bf16.msra.mxu0 %v6235
    %6309 = vmatpush.bf16.msra.mxu0 %v6233
    %6310 = vmatpush.bf16.msra.mxu0 %v6231
    %6311 = vmatmul.bf16.gmra.mxu0 %v6108
    %v6312 = vpop.f32.mrf.mxu0
    %v6313 = vadd.f32 %v6289, %v6312
    %v6314 = vpop.f32.mrf.mxu0
    %v6315 = vadd.f32 %v6291, %v6314
    %6316 = vmatmul.bf16.gmra.mxu0 %v6112
    %v6317 = vpop.f32.mrf.mxu0
    %v6318 = vadd.f32 %v6294, %v6317
    %v6319 = vpop.f32.mrf.mxu0
    %v6320 = vadd.f32 %v6296, %v6319
    %6321 = vmatmul.bf16.gmra.mxu0 %v6111
    %v6322 = vpop.f32.mrf.mxu0
    %v6323 = vadd.f32 %v6299, %v6322
    %v6324 = vpop.f32.mrf.mxu0
    %v6325 = vadd.f32 %v6301, %v6324
    %6326 = vdwg.mxu0
    %6327 = vmatpush.bf16.msra.mxu0 %v6230
    %6328 = vmatpush.bf16.msra.mxu0 %v6228
    %6329 = vmatpush.bf16.msra.mxu0 %v6226
    %6330 = vmatpush.bf16.msra.mxu0 %v6224
    %6331 = vmatpush.bf16.msra.mxu0 %v6222
    %6332 = vmatpush.bf16.msra.mxu0 %v6220
    %6333 = vmatpush.bf16.msra.mxu0 %v6218
    %6334 = vmatpush.bf16.msra.mxu0 %v6216
    %6335 = vmatmul.bf16.gmra.mxu0 %v6105
    %v6336 = vpop.f32.mrf.mxu0
    %v6337 = vadd.f32 0.0, %v6336
    %v6338 = vpop.f32.mrf.mxu0
    %v6339 = vadd.f32 0.0, %v6338
    %6340 = vmatmul.bf16.gmra.mxu0 %v6110
    %v6341 = vpop.f32.mrf.mxu0
    %v6342 = vadd.f32 0.0, %v6341
    %v6343 = vpop.f32.mrf.mxu0
    %v6344 = vadd.f32 0.0, %v6343
    %6345 = vmatmul.bf16.gmra.mxu0 %v6109
    %v6346 = vpop.f32.mrf.mxu0
    %v6347 = vadd.f32 0.0, %v6346
    %v6348 = vpop.f32.mrf.mxu0
    %v6349 = vadd.f32 0.0, %v6348
    %6350 = vdwg.mxu0
    %6351 = vmatpush.bf16.msra.mxu0 %v6246
    %6352 = vmatpush.bf16.msra.mxu0 %v6244
    %6353 = vmatpush.bf16.msra.mxu0 %v6242
    %6354 = vmatpush.bf16.msra.mxu0 %v6240
    %6355 = vmatpush.bf16.msra.mxu0 %v6238
    %6356 = vmatpush.bf16.msra.mxu0 %v6236
    %6357 = vmatpush.bf16.msra.mxu0 %v6234
    %6358 = vmatpush.bf16.msra.mxu0 %v6232
    %6359 = vmatmul.bf16.gmra.mxu0 %v6108
    %v6360 = vpop.f32.mrf.mxu0
    %v6361 = vadd.f32 %v6337, %v6360
    %v6362 = vpop.f32.mrf.mxu0
    %v6363 = vadd.f32 %v6339, %v6362
    %6364 = vmatmul.bf16.gmra.mxu0 %v6112
    %v6365 = vpop.f32.mrf.mxu0
    %v6366 = vadd.f32 %v6342, %v6365
    %v6367 = vpop.f32.mrf.mxu0
    %v6368 = vadd.f32 %v6344, %v6367
    %6369 = vmatmul.bf16.gmra.mxu0 %v6111
    %v6370 = vpop.f32.mrf.mxu0
    %v6371 = vadd.f32 %v6347, %v6370
    %v6372 = vpop.f32.mrf.mxu0
    %v6373 = vadd.f32 %v6349, %v6372
    %6374 = vdwg.mxu0
    %v6375 = vadd.f32 %v5995, %v6313
    %v6376 = vadd.f32 %v6043, %v6361
    %v6377 = vadd.f32 %v5997, %v6315
    %v6378 = vadd.f32 %v6045, %v6363
    %v6379 = vadd.f32 %v6000, %v6318
    %v6380 = vadd.f32 %v6048, %v6366
    %v6381 = vadd.f32 %v6002, %v6320
    %v6382 = vadd.f32 %v6050, %v6368
    %v6383 = vadd.f32 %v6005, %v6323
    %v6384 = vadd.f32 %v6053, %v6371
    %v6385 = vadd.f32 %v6007, %v6325
    %v6386 = vadd.f32 %v6055, %v6373
    %v6387 = vld [vmem:[#allocation4] sm:$0xc0]
    %v6388 = vld [vmem:[#allocation4 + $0x8] sm:$0xc0]
    %v6389 = vld [vmem:[#allocation4 + $0x50] sm:$0x7f]
    %v6390 = vld [vmem:[#allocation4 + $0x58] sm:$0x7f]
    %v6391 = vpack.c.bf16 %v5434, %v6387
    %v6392 = vpack.c.bf16 %v5435, %v6388
    %v6393 = vpack.c.bf16 %v6389, %v5440
    %v6394 = vpack.c.bf16 %v6390, %v5441
    %s6395 = scalar_lea.vmem [#allocation2], 3840
    %v6396 = vld [vmem:[%s6395] sm:$0xff]
    %v6397 = vld [vmem:[%s6395 + $0x8] sm:$0xff]
    %v6398 = vld [vmem:[%s6395 + $0x10] sm:$0xff]
    %v6399 = vld [vmem:[%s6395 + $0x18] sm:$0xff]
    %v6400 = vld [vmem:[%s6395 + $0x20] sm:$0xff]
    %v6401 = vld [vmem:[%s6395 + $0x28] sm:$0xff]
    %v6402 = vld [vmem:[%s6395 + $0x30] sm:$0xff]
    %v6403 = vld [vmem:[%s6395 + $0x38] sm:$0xff]
    %v6404 = vld [vmem:[%s6395 + $0x40] sm:$0xff]
    %v6405 = vld [vmem:[%s6395 + $0x48] sm:$0xff]
    %v6406 = vld [vmem:[%s6395 + $0x50] sm:$0xff]
    %v6407 = vld [vmem:[%s6395 + $0x58] sm:$0xff]
    %v6408 = vld [vmem:[%s6395 + $0x60] sm:$0xff]
    %v6409 = vld [vmem:[%s6395 + $0x68] sm:$0xff]
    %v6410 = vld [vmem:[%s6395 + $0x70] sm:$0xff]
    %v6411 = vld [vmem:[%s6395 + $0x78] sm:$0xff]
    %v6412 = vld [vmem:[%s6395 + $0x80] sm:$0xff]
    %v6413 = vld [vmem:[%s6395 + $0x88] sm:$0xff]
    %v6414 = vld [vmem:[%s6395 + $0x90] sm:$0xff]
    %v6415 = vld [vmem:[%s6395 + $0x98] sm:$0xff]
    %v6416 = vld [vmem:[%s6395 + $0xa0] sm:$0xff]
    %v6417 = vld [vmem:[%s6395 + $0xa8] sm:$0xff]
    %v6418 = vld [vmem:[%s6395 + $0xb0] sm:$0xff]
    %v6419 = vld [vmem:[%s6395 + $0xb8] sm:$0xff]
    %v6420 = vld [vmem:[%s6395 + $0xc0] sm:$0xff]
    %v6421 = vld [vmem:[%s6395 + $0xc8] sm:$0xff]
    %v6422 = vld [vmem:[%s6395 + $0xd0] sm:$0xff]
    %v6423 = vld [vmem:[%s6395 + $0xd8] sm:$0xff]
    %v6424 = vld [vmem:[%s6395 + $0xe0] sm:$0xff]
    %v6425 = vld [vmem:[%s6395 + $0xe8] sm:$0xff]
    %v6426 = vld [vmem:[%s6395 + $0xf0] sm:$0xff]
    %v6427 = vld [vmem:[%s6395 + $0xf8] sm:$0xff]
    %vm6432 = vcmask 1044480
    %v6433 = vrot.slane %v6391, 3
    %v6434 = vrot.slane %v5446, 3
    %v6435 = vsel %vm6432, %v6433, %v6434
    %v6436 = vrot.slane %v6392, 3
    %v6437 = vrot.slane %v5447, 3
    %v6438 = vsel %vm6432, %v6436, %v6437
    %v6439 = vrot.slane %v6393, 3
    %v6440 = vsel %vm6432, %v6434, %v6439
    %v6441 = vrot.slane %v6394, 3
    %v6442 = vsel %vm6432, %v6437, %v6441
    %v6481 = vunpack.c.l.b16 %v6396
    %v6482 = vunpack.c.h.b16 %v6396
    %v6483 = vunpack.c.l.b16 %v6397
    %v6484 = vunpack.c.h.b16 %v6397
    %v6485 = vunpack.c.l.b16 %v6398
    %v6486 = vunpack.c.h.b16 %v6398
    %v6487 = vunpack.c.l.b16 %v6399
    %v6488 = vunpack.c.h.b16 %v6399
    %v6489 = vunpack.c.l.b16 %v6400
    %v6490 = vunpack.c.h.b16 %v6400
    %v6491 = vunpack.c.l.b16 %v6401
    %v6492 = vunpack.c.h.b16 %v6401
    %v6493 = vunpack.c.l.b16 %v6402
    %v6494 = vunpack.c.h.b16 %v6402
    %v6495 = vunpack.c.l.b16 %v6403
    %v6496 = vunpack.c.h.b16 %v6403
    %v6497 = vunpack.c.l.b16 %v6404
    %v6498 = vunpack.c.h.b16 %v6404
    %v6499 = vunpack.c.l.b16 %v6405
    %v6500 = vunpack.c.h.b16 %v6405
    %v6501 = vunpack.c.l.b16 %v6406
    %v6502 = vunpack.c.h.b16 %v6406
    %v6503 = vunpack.c.l.b16 %v6407
    %v6504 = vunpack.c.h.b16 %v6407
    %v6505 = vunpack.c.l.b16 %v6408
    %v6506 = vunpack.c.h.b16 %v6408
    %v6507 = vunpack.c.l.b16 %v6409
    %v6508 = vunpack.c.h.b16 %v6409
    %v6509 = vunpack.c.l.b16 %v6410
    %v6510 = vunpack.c.h.b16 %v6410
    %v6511 = vunpack.c.l.b16 %v6411
    %v6512 = vunpack.c.h.b16 %v6411
    %v6513 = vunpack.c.l.b16 %v6412
    %v6514 = vunpack.c.h.b16 %v6412
    %v6515 = vunpack.c.l.b16 %v6413
    %v6516 = vunpack.c.h.b16 %v6413
    %v6517 = vunpack.c.l.b16 %v6414
    %v6518 = vunpack.c.h.b16 %v6414
    %v6519 = vunpack.c.l.b16 %v6415
    %v6520 = vunpack.c.h.b16 %v6415
    %v6521 = vunpack.c.l.b16 %v6416
    %v6522 = vunpack.c.h.b16 %v6416
    %v6523 = vunpack.c.l.b16 %v6417
    %v6524 = vunpack.c.h.b16 %v6417
    %v6525 = vunpack.c.l.b16 %v6418
    %v6526 = vunpack.c.h.b16 %v6418
    %v6527 = vunpack.c.l.b16 %v6419
    %v6528 = vunpack.c.h.b16 %v6419
    %v6529 = vunpack.c.l.b16 %v6420
    %v6530 = vunpack.c.h.b16 %v6420
    %v6531 = vunpack.c.l.b16 %v6421
    %v6532 = vunpack.c.h.b16 %v6421
    %v6533 = vunpack.c.l.b16 %v6422
    %v6534 = vunpack.c.h.b16 %v6422
    %v6535 = vunpack.c.l.b16 %v6423
    %v6536 = vunpack.c.h.b16 %v6423
    %v6537 = vunpack.c.l.b16 %v6424
    %v6538 = vunpack.c.h.b16 %v6424
    %v6539 = vunpack.c.l.b16 %v6425
    %v6540 = vunpack.c.h.b16 %v6425
    %v6541 = vunpack.c.l.b16 %v6426
    %v6542 = vunpack.c.h.b16 %v6426
    %v6543 = vunpack.c.l.b16 %v6427
    %v6544 = vunpack.c.h.b16 %v6427
    %v6545 = vpack.c.b16 %v6483, %v6481
    %v6546 = vpack.c.b16 %v6484, %v6482
    %v6547 = vpack.c.b16 %v6487, %v6485
    %v6548 = vpack.c.b16 %v6488, %v6486
    %v6549 = vpack.c.b16 %v6491, %v6489
    %v6550 = vpack.c.b16 %v6492, %v6490
    %v6551 = vpack.c.b16 %v6495, %v6493
    %v6552 = vpack.c.b16 %v6496, %v6494
    %v6553 = vpack.c.b16 %v6499, %v6497
    %v6554 = vpack.c.b16 %v6500, %v6498
    %v6555 = vpack.c.b16 %v6503, %v6501
    %v6556 = vpack.c.b16 %v6504, %v6502
    %v6557 = vpack.c.b16 %v6507, %v6505
    %v6558 = vpack.c.b16 %v6508, %v6506
    %v6559 = vpack.c.b16 %v6511, %v6509
    %v6560 = vpack.c.b16 %v6512, %v6510
    %v6561 = vpack.c.b16 %v6515, %v6513
    %v6562 = vpack.c.b16 %v6516, %v6514
    %v6563 = vpack.c.b16 %v6519, %v6517
    %v6564 = vpack.c.b16 %v6520, %v6518
    %v6565 = vpack.c.b16 %v6523, %v6521
    %v6566 = vpack.c.b16 %v6524, %v6522
    %v6567 = vpack.c.b16 %v6527, %v6525
    %v6568 = vpack.c.b16 %v6528, %v6526
    %v6569 = vpack.c.b16 %v6531, %v6529
    %v6570 = vpack.c.b16 %v6532, %v6530
    %v6571 = vpack.c.b16 %v6535, %v6533
    %v6572 = vpack.c.b16 %v6536, %v6534
    %v6573 = vpack.c.b16 %v6539, %v6537
    %v6574 = vpack.c.b16 %v6540, %v6538
    %v6575 = vpack.c.b16 %v6543, %v6541
    %v6576 = vpack.c.b16 %v6544, %v6542
    %6609 = vmatpush.bf16.msra.mxu0 %v6559
    %6610 = vmatpush.bf16.msra.mxu0 %v6557
    %6611 = vmatpush.bf16.msra.mxu0 %v6555
    %6612 = vmatpush.bf16.msra.mxu0 %v6553
    %6613 = vmatpush.bf16.msra.mxu0 %v6551
    %6614 = vmatpush.bf16.msra.mxu0 %v6549
    %6615 = vmatpush.bf16.msra.mxu0 %v6547
    %6616 = vmatpush.bf16.msra.mxu0 %v6545
    %6617 = vmatmul.bf16.gmra.mxu0 %v6435
    %v6618 = vpop.f32.mrf.mxu0
    %v6619 = vadd.f32 0.0, %v6618
    %v6620 = vpop.f32.mrf.mxu0
    %v6621 = vadd.f32 0.0, %v6620
    %6622 = vmatmul.bf16.gmra.mxu0 %v6440
    %v6623 = vpop.f32.mrf.mxu0
    %v6624 = vadd.f32 0.0, %v6623
    %v6625 = vpop.f32.mrf.mxu0
    %v6626 = vadd.f32 0.0, %v6625
    %6627 = vmatmul.bf16.gmra.mxu0 %v6439
    %v6628 = vpop.f32.mrf.mxu0
    %v6629 = vadd.f32 0.0, %v6628
    %v6630 = vpop.f32.mrf.mxu0
    %v6631 = vadd.f32 0.0, %v6630
    %6632 = vdwg.mxu0
    %6633 = vmatpush.bf16.msra.mxu0 %v6575
    %6634 = vmatpush.bf16.msra.mxu0 %v6573
    %6635 = vmatpush.bf16.msra.mxu0 %v6571
    %6636 = vmatpush.bf16.msra.mxu0 %v6569
    %6637 = vmatpush.bf16.msra.mxu0 %v6567
    %6638 = vmatpush.bf16.msra.mxu0 %v6565
    %6639 = vmatpush.bf16.msra.mxu0 %v6563
    %6640 = vmatpush.bf16.msra.mxu0 %v6561
    %6641 = vmatmul.bf16.gmra.mxu0 %v6438
    %v6642 = vpop.f32.mrf.mxu0
    %v6643 = vadd.f32 %v6619, %v6642
    %v6644 = vpop.f32.mrf.mxu0
    %v6645 = vadd.f32 %v6621, %v6644
    %6646 = vmatmul.bf16.gmra.mxu0 %v6442
    %v6647 = vpop.f32.mrf.mxu0
    %v6648 = vadd.f32 %v6624, %v6647
    %v6649 = vpop.f32.mrf.mxu0
    %v6650 = vadd.f32 %v6626, %v6649
    %6651 = vmatmul.bf16.gmra.mxu0 %v6441
    %v6652 = vpop.f32.mrf.mxu0
    %v6653 = vadd.f32 %v6629, %v6652
    %v6654 = vpop.f32.mrf.mxu0
    %v6655 = vadd.f32 %v6631, %v6654
    %6656 = vdwg.mxu0
    %6657 = vmatpush.bf16.msra.mxu0 %v6560
    %6658 = vmatpush.bf16.msra.mxu0 %v6558
    %6659 = vmatpush.bf16.msra.mxu0 %v6556
    %6660 = vmatpush.bf16.msra.mxu0 %v6554
    %6661 = vmatpush.bf16.msra.mxu0 %v6552
    %6662 = vmatpush.bf16.msra.mxu0 %v6550
    %6663 = vmatpush.bf16.msra.mxu0 %v6548
    %6664 = vmatpush.bf16.msra.mxu0 %v6546
    %6665 = vmatmul.bf16.gmra.mxu0 %v6435
    %v6666 = vpop.f32.mrf.mxu0
    %v6667 = vadd.f32 0.0, %v6666
    %v6668 = vpop.f32.mrf.mxu0
    %v6669 = vadd.f32 0.0, %v6668
    %6670 = vmatmul.bf16.gmra.mxu0 %v6440
    %v6671 = vpop.f32.mrf.mxu0
    %v6672 = vadd.f32 0.0, %v6671
    %v6673 = vpop.f32.mrf.mxu0
    %v6674 = vadd.f32 0.0, %v6673
    %6675 = vmatmul.bf16.gmra.mxu0 %v6439
    %v6676 = vpop.f32.mrf.mxu0
    %v6677 = vadd.f32 0.0, %v6676
    %v6678 = vpop.f32.mrf.mxu0
    %v6679 = vadd.f32 0.0, %v6678
    %6680 = vdwg.mxu0
    %6681 = vmatpush.bf16.msra.mxu0 %v6576
    %6682 = vmatpush.bf16.msra.mxu0 %v6574
    %6683 = vmatpush.bf16.msra.mxu0 %v6572
    %6684 = vmatpush.bf16.msra.mxu0 %v6570
    %6685 = vmatpush.bf16.msra.mxu0 %v6568
    %6686 = vmatpush.bf16.msra.mxu0 %v6566
    %6687 = vmatpush.bf16.msra.mxu0 %v6564
    %6688 = vmatpush.bf16.msra.mxu0 %v6562
    %6689 = vmatmul.bf16.gmra.mxu0 %v6438
    %v6690 = vpop.f32.mrf.mxu0
    %v6691 = vadd.f32 %v6667, %v6690
    %v6692 = vpop.f32.mrf.mxu0
    %v6693 = vadd.f32 %v6669, %v6692
    %6694 = vmatmul.bf16.gmra.mxu0 %v6442
    %v6695 = vpop.f32.mrf.mxu0
    %v6696 = vadd.f32 %v6672, %v6695
    %v6697 = vpop.f32.mrf.mxu0
    %v6698 = vadd.f32 %v6674, %v6697
    %6699 = vmatmul.bf16.gmra.mxu0 %v6441
    %v6700 = vpop.f32.mrf.mxu0
    %v6701 = vadd.f32 %v6677, %v6700
    %v6702 = vpop.f32.mrf.mxu0
    %v6703 = vadd.f32 %v6679, %v6702
    %6704 = vdwg.mxu0
    %v6705 = vadd.f32 %v6375, %v6643
    %v6706 = vadd.f32 %v6376, %v6691
    %v6707 = vadd.f32 %v6377, %v6645
    %v6708 = vadd.f32 %v6378, %v6693
    %v6709 = vadd.f32 %v6379, %v6648
    %v6710 = vadd.f32 %v6380, %v6696
    %v6711 = vadd.f32 %v6381, %v6650
    %v6712 = vadd.f32 %v6382, %v6698
    %v6713 = vadd.f32 %v6383, %v6653
    %v6714 = vadd.f32 %v6384, %v6701
    %v6715 = vadd.f32 %v6385, %v6655
    %v6716 = vadd.f32 %v6386, %v6703
    %v6717 = vld [vmem:[#allocation19] sm:$0xff]
    %v6718 = vld [vmem:[#allocation19 + $0x8] sm:$0xff]
    %v6719 = vld [vmem:[#allocation19 + $0x10] sm:$0xff]
    %v6720 = vld [vmem:[#allocation19 + $0x18] sm:$0xff]
    %v6721 = vld [vmem:[#allocation19 + $0x20] sm:$0xff]
    %v6722 = vld [vmem:[#allocation19 + $0x28] sm:$0x1]
    %6724 = vset.pattern.permute.xlu0 0
    %6725 = vperm.xlu0 %6724, %v6717
    %v6726 = vpop.permute.xlu0 %6725
    %6729 = vset.pattern.permute.xlu0 0
    %6730 = vperm.xlu0 %6729, %v6718
    %v6731 = vpop.permute.xlu0 %6730
    %6734 = vset.pattern.permute.xlu0 0
    %6735 = vperm.xlu0 %6734, %v6719
    %v6736 = vpop.permute.xlu0 %6735
    %6739 = vset.pattern.permute.xlu0 0
    %6740 = vperm.xlu0 %6739, %v6720
    %v6741 = vpop.permute.xlu0 %6740
    %6744 = vset.pattern.permute.xlu0 0
    %6745 = vperm.xlu0 %6744, %v6721
    %v6746 = vpop.permute.xlu0 %6745
    %6749 = vset.pattern.permute.xlu0 0
    %6750 = vperm.xlu0 %6749, %v6722
    %v6751 = vpop.permute.xlu0 %6750
    %v6753 = vmul.f32 %v6705, %v6726
    %v6754 = vmul.f32 %v6706, %v6726
    %v6755 = vmul.f32 %v6707, %v6731
    %v6756 = vmul.f32 %v6708, %v6731
    %v6757 = vmul.f32 %v6709, %v6736
    %v6758 = vmul.f32 %v6710, %v6736
    %v6759 = vmul.f32 %v6711, %v6741
    %v6760 = vmul.f32 %v6712, %v6741
    %v6761 = vmul.f32 %v6713, %v6746
    %v6762 = vmul.f32 %v6714, %v6746
    %v6763 = vmul.f32 %v6715, %v6751
    %v6764 = vmul.f32 %v6716, %v6751
    %v6765 = vadd.f32 %v6753, %v6755
    %v6766 = vadd.f32 %v6765, %v6757
    %v6767 = vadd.f32 %v6766, %v6759
    %v6768 = vadd.f32 %v6767, %v6761
    %vm6769 = vcmask 1040384
    %v6770 = vsel %vm6769, %v6763, 0.0
    %v6771 = vadd.f32 %v6768, %v6770
    %v6772 = vrot.slane %v6771, 4
    %v6773 = vadd.f32 %v6771, %v6772
    %v6774 = vrot.slane %v6773, 2
    %v6775 = vadd.f32 %v6773, %v6774
    %v6776 = vrot.slane %v6775, 1
    %v6777 = vadd.f32 %v6775, %v6776
    %v6778 = vadd.f32 %v6754, %v6756
    %v6779 = vadd.f32 %v6778, %v6758
    %v6780 = vadd.f32 %v6779, %v6760
    %v6781 = vadd.f32 %v6780, %v6762
    %v6782 = vsel %vm6769, %v6764, 0.0
    %v6783 = vadd.f32 %v6781, %v6782
    %v6784 = vrot.slane %v6783, 4
    %v6785 = vadd.f32 %v6783, %v6784
    %v6786 = vrot.slane %v6785, 2
    %v6787 = vadd.f32 %v6785, %v6786
    %v6788 = vrot.slane %v6787, 1
    %v6789 = vadd.f32 %v6787, %v6788
    %v6790 = vmul.f32 %v6753, %v6753
    %v6791 = vmul.f32 %v6754, %v6754
    %v6792 = vmul.f32 %v6755, %v6755
    %v6793 = vmul.f32 %v6756, %v6756
    %v6794 = vmul.f32 %v6757, %v6757
    %v6795 = vmul.f32 %v6758, %v6758
    %v6796 = vmul.f32 %v6759, %v6759
    %v6797 = vmul.f32 %v6760, %v6760
    %v6798 = vmul.f32 %v6761, %v6761
    %v6799 = vmul.f32 %v6762, %v6762
    %v6800 = vmul.f32 %v6763, %v6763
    %v6801 = vmul.f32 %v6764, %v6764
    %v6802 = vadd.f32 %v6790, %v6792
    %v6803 = vadd.f32 %v6802, %v6794
    %v6804 = vadd.f32 %v6803, %v6796
    %v6805 = vadd.f32 %v6804, %v6798
    %v6806 = vsel %vm6769, %v6800, 0.0
    %v6807 = vadd.f32 %v6805, %v6806
    %v6808 = vrot.slane %v6807, 4
    %v6809 = vadd.f32 %v6807, %v6808
    %v6810 = vrot.slane %v6809, 2
    %v6811 = vadd.f32 %v6809, %v6810
    %v6812 = vrot.slane %v6811, 1
    %v6813 = vadd.f32 %v6811, %v6812
    %v6814 = vadd.f32 %v6791, %v6793
    %v6815 = vadd.f32 %v6814, %v6795
    %v6816 = vadd.f32 %v6815, %v6797
    %v6817 = vadd.f32 %v6816, %v6799
    %v6818 = vsel %vm6769, %v6801, 0.0
    %v6819 = vadd.f32 %v6817, %v6818
    %v6820 = vrot.slane %v6819, 4
    %v6821 = vadd.f32 %v6819, %v6820
    %v6822 = vrot.slane %v6821, 2
    %v6823 = vadd.f32 %v6821, %v6822
    %v6824 = vrot.slane %v6823, 1
    %v6825 = vadd.f32 %v6823, %v6824
    %v6826 = vld [vmem:[#allocation10] sm:$0xff]
    %v6827 = vld [vmem:[#allocation10 + $0x8] sm:$0xff]
    %v6828 = vld [vmem:[#allocation10 + $0x10] sm:$0xff]
    %v6829 = vld [vmem:[#allocation10 + $0x18] sm:$0xff]
    %v6830 = vld [vmem:[#allocation10 + $0x20] sm:$0xff]
    %v6831 = vld [vmem:[#allocation10 + $0x28] sm:$0xff]
    %v6832 = vld [vmem:[#allocation10 + $0x30] sm:$0xff]
    %v6833 = vld [vmem:[#allocation10 + $0x38] sm:$0xff]
    %v6834 = vld [vmem:[#allocation10 + $0x40] sm:$0xff]
    %v6835 = vld [vmem:[#allocation10 + $0x48] sm:$0xff]
    %v6836 = vld [vmem:[#allocation10 + $0x50] sm:$0xff]
    %v6837 = vld [vmem:[#allocation10 + $0x58] sm:$0xff]
    %v6838 = vld [vmem:[#allocation10 + $0x60] sm:$0xff]
    %v6839 = vld [vmem:[#allocation10 + $0x68] sm:$0xff]
    %v6840 = vld [vmem:[#allocation10 + $0x70] sm:$0xff]
    %v6841 = vld [vmem:[#allocation10 + $0x78] sm:$0xff]
    %v6842 = vld [vmem:[#allocation10 + $0x80] sm:$0xff]
    %v6843 = vld [vmem:[#allocation10 + $0x88] sm:$0xff]
    %v6844 = vld [vmem:[#allocation10 + $0x90] sm:$0xff]
    %v6845 = vld [vmem:[#allocation10 + $0x98] sm:$0xff]
    %v6846 = vld [vmem:[#allocation10 + $0xa0] sm:$0xff]
    %v6847 = vld [vmem:[#allocation10 + $0xa8] sm:$0xff]
    %v6848 = vld [vmem:[#allocation10 + $0xb0] sm:$0xff]
    %v6849 = vld [vmem:[#allocation10 + $0xb8] sm:$0xff]
    %v6850 = vld [vmem:[#allocation10 + $0xc0] sm:$0xff]
    %v6851 = vld [vmem:[#allocation10 + $0xc8] sm:$0xff]
    %v6852 = vld [vmem:[#allocation10 + $0xd0] sm:$0xff]
    %v6853 = vld [vmem:[#allocation10 + $0xd8] sm:$0xff]
    %v6854 = vld [vmem:[#allocation10 + $0xe0] sm:$0xff]
    %v6855 = vld [vmem:[#allocation10 + $0xe8] sm:$0xff]
    %v6856 = vld [vmem:[#allocation10 + $0xf0] sm:$0xff]
    %v6857 = vld [vmem:[#allocation10 + $0xf8] sm:$0xff]
    %6858 = vmatpush.msra.mxu0 %v6841
    %6859 = vmatpush.msra.mxu0 %v6840
    %6860 = vmatpush.msra.mxu0 %v6839
    %6861 = vmatpush.msra.mxu0 %v6838
    %6862 = vmatpush.msra.mxu0 %v6837
    %6863 = vmatpush.msra.mxu0 %v6836
    %6864 = vmatpush.msra.mxu0 %v6835
    %6865 = vmatpush.msra.mxu0 %v6834
    %6866 = vmatpush.msra.mxu0 %v6833
    %6867 = vmatpush.msra.mxu0 %v6832
    %6868 = vmatpush.msra.mxu0 %v6831
    %6869 = vmatpush.msra.mxu0 %v6830
    %6870 = vmatpush.msra.mxu0 %v6829
    %6871 = vmatpush.msra.mxu0 %v6828
    %6872 = vmatpush.msra.mxu0 %v6827
    %6873 = vmatpush.msra.mxu0 %v6826
    %6874 = vmatmul.f32.gmra.mxu0 %v6777
    %v6875 = vpop.f32.mrf.mxu0
    %v6876 = vadd.f32 0.0, %v6875
    %6877 = vdwg.mxu0
    %6878 = vmatpush.msra.mxu0 %v6857
    %6879 = vmatpush.msra.mxu0 %v6856
    %6880 = vmatpush.msra.mxu0 %v6855
    %6881 = vmatpush.msra.mxu0 %v6854
    %6882 = vmatpush.msra.mxu0 %v6853
    %6883 = vmatpush.msra.mxu0 %v6852
    %6884 = vmatpush.msra.mxu0 %v6851
    %6885 = vmatpush.msra.mxu0 %v6850
    %6886 = vmatpush.msra.mxu0 %v6849
    %6887 = vmatpush.msra.mxu0 %v6848
    %6888 = vmatpush.msra.mxu0 %v6847
    %6889 = vmatpush.msra.mxu0 %v6846
    %6890 = vmatpush.msra.mxu0 %v6845
    %6891 = vmatpush.msra.mxu0 %v6844
    %6892 = vmatpush.msra.mxu0 %v6843
    %6893 = vmatpush.msra.mxu0 %v6842
    %6894 = vmatmul.f32.gmra.mxu0 %v6789
    %v6895 = vpop.f32.mrf.mxu0
    %v6896 = vadd.f32 %v6876, %v6895
    %6897 = vdwg.mxu0
    %v6898 = vmul.f32 %v6896, 0.03125
    %6899 = vmatpush.msra.mxu0 %v6841
    %6900 = vmatpush.msra.mxu0 %v6840
    %6901 = vmatpush.msra.mxu0 %v6839
    %6902 = vmatpush.msra.mxu0 %v6838
    %6903 = vmatpush.msra.mxu0 %v6837
    %6904 = vmatpush.msra.mxu0 %v6836
    %6905 = vmatpush.msra.mxu0 %v6835
    %6906 = vmatpush.msra.mxu0 %v6834
    %6907 = vmatpush.msra.mxu0 %v6833
    %6908 = vmatpush.msra.mxu0 %v6832
    %6909 = vmatpush.msra.mxu0 %v6831
    %6910 = vmatpush.msra.mxu0 %v6830
    %6911 = vmatpush.msra.mxu0 %v6829
    %6912 = vmatpush.msra.mxu0 %v6828
    %6913 = vmatpush.msra.mxu0 %v6827
    %6914 = vmatpush.msra.mxu0 %v6826
    %6915 = vmatmul.f32.gmra.mxu0 %v6813
    %v6916 = vpop.f32.mrf.mxu0
    %v6917 = vadd.f32 0.0, %v6916
    %6918 = vdwg.mxu0
    %6919 = vmatpush.msra.mxu0 %v6857
    %6920 = vmatpush.msra.mxu0 %v6856
    %6921 = vmatpush.msra.mxu0 %v6855
    %6922 = vmatpush.msra.mxu0 %v6854
    %6923 = vmatpush.msra.mxu0 %v6853
    %6924 = vmatpush.msra.mxu0 %v6852
    %6925 = vmatpush.msra.mxu0 %v6851
    %6926 = vmatpush.msra.mxu0 %v6850
    %6927 = vmatpush.msra.mxu0 %v6849
    %6928 = vmatpush.msra.mxu0 %v6848
    %6929 = vmatpush.msra.mxu0 %v6847
    %6930 = vmatpush.msra.mxu0 %v6846
    %6931 = vmatpush.msra.mxu0 %v6845
    %6932 = vmatpush.msra.mxu0 %v6844
    %6933 = vmatpush.msra.mxu0 %v6843
    %6934 = vmatpush.msra.mxu0 %v6842
    %6935 = vmatmul.f32.gmra.mxu0 %v6825
    %v6936 = vpop.f32.mrf.mxu0
    %v6937 = vadd.f32 %v6917, %v6936
    %6938 = vdwg.mxu0
    %v6939 = vmul.f32 %v6937, 0.03125
    %v6940 = vmul.f32 %v6898, %v6898
    %v6941 = vsub.f32 %v6939, %v6940
    %v6942 = vmax.f32 %v6941, 0.0
    %v6943 = vadd.f32 %v6942, 1e-05
    %v6944 = vrsqrt.pop %v6943
    %v6945 = vmul.f32 %v6944, %v6943
    %v6946 = vmul.f32 %v6945, %v6944
    %v6947 = vmul.f32 0.5, %v6946
    %v6948 = vsub.f32 1.5, %v6947
    %v6949 = vmul.f32 %v6944, %v6948
    %vm6950 = vweird.f32 %v6943
    %vm6951 = vweird.f32 %v6944
    %vm6952 = vmor %vm6950, %vm6951
    %v6953 = vsel %vm6952, %v6944, %v6949
    %v6954 = vld [vmem:[#allocation14] sm:$0xff]
    %v6955 = vld [vmem:[#allocation14 + $0x8] sm:$0xff]
    %v6956 = vld [vmem:[#allocation14 + $0x10] sm:$0xff]
    %v6957 = vld [vmem:[#allocation14 + $0x18] sm:$0xff]
    %v6958 = vld [vmem:[#allocation14 + $0x20] sm:$0xff]
    %v6959 = vld [vmem:[#allocation14 + $0x28] sm:$0xff]
    %v6960 = vld [vmem:[#allocation14 + $0x30] sm:$0xff]
    %v6961 = vld [vmem:[#allocation14 + $0x38] sm:$0xff]
    %vm6962 = vcmask 261120
    %v6964 = vsel %vm6962, %v6898, 0
    %6966 = vmatpush.msra.mxu0 0.0
    %6967 = vmatpush.msra.mxu0 0.0
    %6968 = vmatpush.msra.mxu0 0.0
    %6969 = vmatpush.msra.mxu0 0.0
    %6970 = vmatpush.msra.mxu0 0.0
    %6971 = vmatpush.msra.mxu0 0.0
    %6972 = vmatpush.msra.mxu0 0.0
    %6973 = vmatpush.msra.mxu0 0.0
    %6974 = vmatpush.msra.mxu0 0.0
    %6975 = vmatpush.msra.mxu0 0.0
    %6976 = vmatpush.msra.mxu0 0.0
    %6977 = vmatpush.msra.mxu0 0.0
    %6978 = vmatpush.msra.mxu0 %v6960
    %6979 = vmatpush.msra.mxu0 %v6958
    %6980 = vmatpush.msra.mxu0 %v6956
    %6981 = vmatpush.msra.mxu0 %v6954
    %6982 = vmatmul.f32.gmra.mxu0 %v6964
    %v6983 = vpop.f32.mrf.mxu0
    %v6984 = vadd.f32 0.0, %v6983
    %6985 = vdwg.mxu0
    %6986 = vmatpush.msra.mxu0 0.0
    %6987 = vmatpush.msra.mxu0 0.0
    %6988 = vmatpush.msra.mxu0 0.0
    %6989 = vmatpush.msra.mxu0 0.0
    %6990 = vmatpush.msra.mxu0 0.0
    %6991 = vmatpush.msra.mxu0 0.0
    %6992 = vmatpush.msra.mxu0 0.0
    %6993 = vmatpush.msra.mxu0 0.0
    %6994 = vmatpush.msra.mxu0 0.0
    %6995 = vmatpush.msra.mxu0 0.0
    %6996 = vmatpush.msra.mxu0 0.0
    %6997 = vmatpush.msra.mxu0 0.0
    %6998 = vmatpush.msra.mxu0 %v6961
    %6999 = vmatpush.msra.mxu0 %v6959
    %7000 = vmatpush.msra.mxu0 %v6957
    %7001 = vmatpush.msra.mxu0 %v6955
    %7002 = vmatmul.f32.gmra.mxu0 %v6964
    %v7003 = vpop.f32.mrf.mxu0
    %v7004 = vadd.f32 0.0, %v7003
    %7005 = vdwg.mxu0
    %v7007 = vsel %vm6962, %v6953, 0
    %7009 = vmatpush.msra.mxu0 0.0
    %7010 = vmatpush.msra.mxu0 0.0
    %7011 = vmatpush.msra.mxu0 0.0
    %7012 = vmatpush.msra.mxu0 0.0
    %7013 = vmatpush.msra.mxu0 0.0
    %7014 = vmatpush.msra.mxu0 0.0
    %7015 = vmatpush.msra.mxu0 0.0
    %7016 = vmatpush.msra.mxu0 0.0
    %7017 = vmatpush.msra.mxu0 0.0
    %7018 = vmatpush.msra.mxu0 0.0
    %7019 = vmatpush.msra.mxu0 0.0
    %7020 = vmatpush.msra.mxu0 0.0
    %7021 = vmatpush.msra.mxu0 %v6960
    %7022 = vmatpush.msra.mxu0 %v6958
    %7023 = vmatpush.msra.mxu0 %v6956
    %7024 = vmatpush.msra.mxu0 %v6954
    %7025 = vmatmul.f32.gmra.mxu0 %v7007
    %v7026 = vpop.f32.mrf.mxu0
    %v7027 = vadd.f32 0.0, %v7026
    %7028 = vdwg.mxu0
    %7029 = vmatpush.msra.mxu0 0.0
    %7030 = vmatpush.msra.mxu0 0.0
    %7031 = vmatpush.msra.mxu0 0.0
    %7032 = vmatpush.msra.mxu0 0.0
    %7033 = vmatpush.msra.mxu0 0.0
    %7034 = vmatpush.msra.mxu0 0.0
    %7035 = vmatpush.msra.mxu0 0.0
    %7036 = vmatpush.msra.mxu0 0.0
    %7037 = vmatpush.msra.mxu0 0.0
    %7038 = vmatpush.msra.mxu0 0.0
    %7039 = vmatpush.msra.mxu0 0.0
    %7040 = vmatpush.msra.mxu0 0.0
    %7041 = vmatpush.msra.mxu0 %v6961
    %7042 = vmatpush.msra.mxu0 %v6959
    %7043 = vmatpush.msra.mxu0 %v6957
    %7044 = vmatpush.msra.mxu0 %v6955
    %7045 = vmatmul.f32.gmra.mxu0 %v7007
    %v7046 = vpop.f32.mrf.mxu0
    %v7047 = vadd.f32 0.0, %v7046
    %7048 = vdwg.mxu0
    %v7049 = vperm.slane %v6984, 0
    %v7050 = vperm.slane %v7004, 0
    %v7051 = vsub.f32 %v6753, %v7049
    %v7052 = vsub.f32 %v6754, %v7050
    %v7053 = vsub.f32 %v6755, %v7049
    %v7054 = vsub.f32 %v6756, %v7050
    %v7055 = vsub.f32 %v6757, %v7049
    %v7056 = vsub.f32 %v6758, %v7050
    %v7057 = vsub.f32 %v6759, %v7049
    %v7058 = vsub.f32 %v6760, %v7050
    %v7059 = vsub.f32 %v6761, %v7049
    %v7060 = vsub.f32 %v6762, %v7050
    %v7061 = vsub.f32 %v6763, %v7049
    %v7062 = vsub.f32 %v6764, %v7050
    %v7063 = vperm.slane %v7027, 0
    %v7064 = vperm.slane %v7047, 0
    %v7065 = vmul.f32 %v7051, %v7063
    %v7066 = vmul.f32 %v7052, %v7064
    %v7067 = vmul.f32 %v7053, %v7063
    %v7068 = vmul.f32 %v7054, %v7064
    %v7069 = vmul.f32 %v7055, %v7063
    %v7070 = vmul.f32 %v7056, %v7064
    %v7071 = vmul.f32 %v7057, %v7063
    %v7072 = vmul.f32 %v7058, %v7064
    %v7073 = vmul.f32 %v7059, %v7063
    %v7074 = vmul.f32 %v7060, %v7064
    %v7075 = vmul.f32 %v7061, %v7063
    %v7076 = vmul.f32 %v7062, %v7064
    %v7077 = vmul.f32 %v7065, %v6726
    %v7078 = vmul.f32 %v7066, %v6726
    %v7079 = vmul.f32 %v7067, %v6731
    %v7080 = vmul.f32 %v7068, %v6731
    %v7081 = vmul.f32 %v7069, %v6736
    %v7082 = vmul.f32 %v7070, %v6736
    %v7083 = vmul.f32 %v7071, %v6741
    %v7084 = vmul.f32 %v7072, %v6741
    %v7085 = vmul.f32 %v7073, %v6746
    %v7086 = vmul.f32 %v7074, %v6746
    %v7087 = vmul.f32 %v7075, %v6751
    %v7088 = vmul.f32 %v7076, %v6751
    %v7089 = vmul.f32 %v7077, 0.2
    %v7090 = vmul.f32 %v7078, 0.2
    %v7091 = vmul.f32 %v7079, 0.2
    %v7092 = vmul.f32 %v7080, 0.2
    %v7093 = vmul.f32 %v7081, 0.2
    %v7094 = vmul.f32 %v7082, 0.2
    %v7095 = vmul.f32 %v7083, 0.2
    %v7096 = vmul.f32 %v7084, 0.2
    %v7097 = vmul.f32 %v7085, 0.2
    %v7098 = vmul.f32 %v7086, 0.2
    %v7099 = vmul.f32 %v7087, 0.2
    %v7100 = vmul.f32 %v7088, 0.2
    %v7101 = vmax.f32 %v7077, %v7089
    %v7102 = vmax.f32 %v7078, %v7090
    %v7103 = vmax.f32 %v7079, %v7091
    %v7104 = vmax.f32 %v7080, %v7092
    %v7105 = vmax.f32 %v7081, %v7093
    %v7106 = vmax.f32 %v7082, %v7094
    %v7107 = vmax.f32 %v7083, %v7095
    %v7108 = vmax.f32 %v7084, %v7096
    %v7109 = vmax.f32 %v7085, %v7097
    %v7110 = vmax.f32 %v7086, %v7098
    %v7111 = vmax.f32 %v7087, %v7099
    %v7112 = vmax.f32 %v7088, %v7100
    %7113 = vst [vmem:[#allocation5] sm:$0xff] %v7101
    %7114 = vst [vmem:[#allocation5 + $0x8] sm:$0xff] %v7102
    %7115 = vst [vmem:[#allocation5 + $0x10] sm:$0xff] %v7103
    %7116 = vst [vmem:[#allocation5 + $0x18] sm:$0xff] %v7104
    %7117 = vst [vmem:[#allocation5 + $0x20] sm:$0xff] %v7105
    %7118 = vst [vmem:[#allocation5 + $0x28] sm:$0xff] %v7106
    %7119 = vst [vmem:[#allocation5 + $0x30] sm:$0xff] %v7107
    %7120 = vst [vmem:[#allocation5 + $0x38] sm:$0xff] %v7108
    %7121 = vst [vmem:[#allocation5 + $0x40] sm:$0xff] %v7109
    %7122 = vst [vmem:[#allocation5 + $0x48] sm:$0xff] %v7110
    %7123 = vst [vmem:[#allocation5 + $0x50] sm:$0x1] %v7111
    %7124 = vst [vmem:[#allocation5 + $0x58] sm:$0x1] %v7112
    %s7125 = sshll.u32 %s253, 4
    %7126 = dma.done %s237, %s7125
    %v7127 = vld [vmem:[#allocation5] sm:$0xff]
    %v7128 = vld [vmem:[#allocation5 + $0x8] sm:$0xff]
    %v7129 = vld [vmem:[#allocation5 + $0x10] sm:$0xff]
    %v7130 = vld [vmem:[#allocation5 + $0x18] sm:$0xff]
    %v7131 = vld [vmem:[#allocation5 + $0x20] sm:$0xff]
    %v7132 = vld [vmem:[#allocation5 + $0x28] sm:$0xff]
    %v7133 = vld [vmem:[#allocation5 + $0x30] sm:$0x1f]
    %v7134 = vld [vmem:[#allocation5 + $0x38] sm:$0x1f]
    %v7135 = vpack.c.bf16 %v7129, %v7127
    %v7136 = vpack.c.bf16 %v7130, %v7128
    %v7137 = vpack.c.bf16 %v7133, %v7131
    %v7138 = vpack.c.bf16 %v7134, %v7132
    %v7139 = vld [vmem:[%s236] sm:$0xff]
    %v7140 = vld [vmem:[%s236 + $0x8] sm:$0xff]
    %v7141 = vld [vmem:[%s236 + $0x10] sm:$0xff]
    %v7142 = vld [vmem:[%s236 + $0x18] sm:$0xff]
    %v7143 = vld [vmem:[%s236 + $0x20] sm:$0xff]
    %v7144 = vld [vmem:[%s236 + $0x28] sm:$0xff]
    %v7145 = vld [vmem:[%s236 + $0x30] sm:$0xff]
    %v7146 = vld [vmem:[%s236 + $0x38] sm:$0xff]
    %v7147 = vld [vmem:[%s236 + $0x40] sm:$0xff]
    %v7148 = vld [vmem:[%s236 + $0x48] sm:$0xff]
    %v7149 = vld [vmem:[%s236 + $0x50] sm:$0xff]
    %v7150 = vld [vmem:[%s236 + $0x58] sm:$0xff]
    %v7151 = vld [vmem:[%s236 + $0x60] sm:$0xff]
    %v7152 = vld [vmem:[%s236 + $0x68] sm:$0xff]
    %v7153 = vld [vmem:[%s236 + $0x70] sm:$0xff]
    %v7154 = vld [vmem:[%s236 + $0x78] sm:$0xff]
    %v7155 = vld [vmem:[%s236 + $0x80] sm:$0xff]
    %v7156 = vld [vmem:[%s236 + $0x88] sm:$0xff]
    %v7157 = vld [vmem:[%s236 + $0x90] sm:$0xff]
    %v7158 = vld [vmem:[%s236 + $0x98] sm:$0xff]
    %v7159 = vld [vmem:[%s236 + $0xa0] sm:$0xff]
    %v7160 = vld [vmem:[%s236 + $0xa8] sm:$0xff]
    %v7161 = vld [vmem:[%s236 + $0xb0] sm:$0xff]
    %v7162 = vld [vmem:[%s236 + $0xb8] sm:$0xff]
    %v7163 = vld [vmem:[%s236 + $0xc0] sm:$0xff]
    %v7164 = vld [vmem:[%s236 + $0xc8] sm:$0xff]
    %v7165 = vld [vmem:[%s236 + $0xd0] sm:$0xff]
    %v7166 = vld [vmem:[%s236 + $0xd8] sm:$0xff]
    %v7167 = vld [vmem:[%s236 + $0xe0] sm:$0xff]
    %v7168 = vld [vmem:[%s236 + $0xe8] sm:$0xff]
    %v7169 = vld [vmem:[%s236 + $0xf0] sm:$0xff]
    %v7170 = vld [vmem:[%s236 + $0xf8] sm:$0xff]
    %v7171 = vld [vmem:[#allocation5] sm:$0xf0]
    %v7172 = vld [vmem:[#allocation5 + $0x8] sm:$0xf0]
    %v7173 = vld [vmem:[#allocation5 + $0x30] sm:$0xff]
    %v7174 = vld [vmem:[#allocation5 + $0x38] sm:$0xff]
    %v7175 = vld [vmem:[#allocation5 + $0x40] sm:$0x1]
    %v7176 = vld [vmem:[#allocation5 + $0x48] sm:$0x1]
    %v7177 = vpack.c.bf16 %v7129, %v7171
    %v7178 = vpack.c.bf16 %v7130, %v7172
    %v7179 = vpack.c.bf16 %v7173, %v7131
    %v7180 = vpack.c.bf16 %v7174, %v7132
    %v7181 = vpack.c.bf16 %v7175, %v7175
    %v7182 = vpack.c.bf16 %v7176, %v7176
    %s7183 = scalar_lea.vmem [#allocation2], 4352
    %v7184 = vld [vmem:[%s7183] sm:$0xff]
    %v7185 = vld [vmem:[%s7183 + $0x8] sm:$0xff]
    %v7186 = vld [vmem:[%s7183 + $0x10] sm:$0xff]
    %v7187 = vld [vmem:[%s7183 + $0x18] sm:$0xff]
    %v7188 = vld [vmem:[%s7183 + $0x20] sm:$0xff]
    %v7189 = vld [vmem:[%s7183 + $0x28] sm:$0xff]
    %v7190 = vld [vmem:[%s7183 + $0x30] sm:$0xff]
    %v7191 = vld [vmem:[%s7183 + $0x38] sm:$0xff]
    %v7192 = vld [vmem:[%s7183 + $0x40] sm:$0xff]
    %v7193 = vld [vmem:[%s7183 + $0x48] sm:$0xff]
    %v7194 = vld [vmem:[%s7183 + $0x50] sm:$0xff]
    %v7195 = vld [vmem:[%s7183 + $0x58] sm:$0xff]
    %v7196 = vld [vmem:[%s7183 + $0x60] sm:$0xff]
    %v7197 = vld [vmem:[%s7183 + $0x68] sm:$0xff]
    %v7198 = vld [vmem:[%s7183 + $0x70] sm:$0xff]
    %v7199 = vld [vmem:[%s7183 + $0x78] sm:$0xff]
    %v7200 = vld [vmem:[%s7183 + $0x80] sm:$0xff]
    %v7201 = vld [vmem:[%s7183 + $0x88] sm:$0xff]
    %v7202 = vld [vmem:[%s7183 + $0x90] sm:$0xff]
    %v7203 = vld [vmem:[%s7183 + $0x98] sm:$0xff]
    %v7204 = vld [vmem:[%s7183 + $0xa0] sm:$0xff]
    %v7205 = vld [vmem:[%s7183 + $0xa8] sm:$0xff]
    %v7206 = vld [vmem:[%s7183 + $0xb0] sm:$0xff]
    %v7207 = vld [vmem:[%s7183 + $0xb8] sm:$0xff]
    %v7208 = vld [vmem:[%s7183 + $0xc0] sm:$0xff]
    %v7209 = vld [vmem:[%s7183 + $0xc8] sm:$0xff]
    %v7210 = vld [vmem:[%s7183 + $0xd0] sm:$0xff]
    %v7211 = vld [vmem:[%s7183 + $0xd8] sm:$0xff]
    %v7212 = vld [vmem:[%s7183 + $0xe0] sm:$0xff]
    %v7213 = vld [vmem:[%s7183 + $0xe8] sm:$0xff]
    %v7214 = vld [vmem:[%s7183 + $0xf0] sm:$0xff]
    %v7215 = vld [vmem:[%s7183 + $0xf8] sm:$0xff]
    %v7222 = vrot.slane %v7177, 2
    %v7223 = vrot.slane %v7179, 2
    %v7224 = vsel %vm6102, %v7222, %v7223
    %v7225 = vrot.slane %v7178, 2
    %v7226 = vrot.slane %v7180, 2
    %v7227 = vsel %vm6102, %v7225, %v7226
    %v7228 = vrot.slane %v7181, 2
    %v7229 = vsel %vm6102, %v7223, %v7228
    %v7230 = vrot.slane %v7182, 2
    %v7231 = vsel %vm6102, %v7226, %v7230
    %v7268 = vunpack.c.l.b16 %v7184
    %v7269 = vunpack.c.h.b16 %v7184
    %v7270 = vunpack.c.l.b16 %v7185
    %v7271 = vunpack.c.h.b16 %v7185
    %v7272 = vunpack.c.l.b16 %v7186
    %v7273 = vunpack.c.h.b16 %v7186
    %v7274 = vunpack.c.l.b16 %v7187
    %v7275 = vunpack.c.h.b16 %v7187
    %v7276 = vunpack.c.l.b16 %v7188
    %v7277 = vunpack.c.h.b16 %v7188
    %v7278 = vunpack.c.l.b16 %v7189
    %v7279 = vunpack.c.h.b16 %v7189
    %v7280 = vunpack.c.l.b16 %v7190
    %v7281 = vunpack.c.h.b16 %v7190
    %v7282 = vunpack.c.l.b16 %v7191
    %v7283 = vunpack.c.h.b16 %v7191
    %v7284 = vunpack.c.l.b16 %v7192
    %v7285 = vunpack.c.h.b16 %v7192
    %v7286 = vunpack.c.l.b16 %v7193
    %v7287 = vunpack.c.h.b16 %v7193
    %v7288 = vunpack.c.l.b16 %v7194
    %v7289 = vunpack.c.h.b16 %v7194
    %v7290 = vunpack.c.l.b16 %v7195
    %v7291 = vunpack.c.h.b16 %v7195
    %v7292 = vunpack.c.l.b16 %v7196
    %v7293 = vunpack.c.h.b16 %v7196
    %v7294 = vunpack.c.l.b16 %v7197
    %v7295 = vunpack.c.h.b16 %v7197
    %v7296 = vunpack.c.l.b16 %v7198
    %v7297 = vunpack.c.h.b16 %v7198
    %v7298 = vunpack.c.l.b16 %v7199
    %v7299 = vunpack.c.h.b16 %v7199
    %v7300 = vunpack.c.l.b16 %v7200
    %v7301 = vunpack.c.h.b16 %v7200
    %v7302 = vunpack.c.l.b16 %v7201
    %v7303 = vunpack.c.h.b16 %v7201
    %v7304 = vunpack.c.l.b16 %v7202
    %v7305 = vunpack.c.h.b16 %v7202
    %v7306 = vunpack.c.l.b16 %v7203
    %v7307 = vunpack.c.h.b16 %v7203
    %v7308 = vunpack.c.l.b16 %v7204
    %v7309 = vunpack.c.h.b16 %v7204
    %v7310 = vunpack.c.l.b16 %v7205
    %v7311 = vunpack.c.h.b16 %v7205
    %v7312 = vunpack.c.l.b16 %v7206
    %v7313 = vunpack.c.h.b16 %v7206
    %v7314 = vunpack.c.l.b16 %v7207
    %v7315 = vunpack.c.h.b16 %v7207
    %v7316 = vunpack.c.l.b16 %v7208
    %v7317 = vunpack.c.h.b16 %v7208
    %v7318 = vunpack.c.l.b16 %v7209
    %v7319 = vunpack.c.h.b16 %v7209
    %v7320 = vunpack.c.l.b16 %v7210
    %v7321 = vunpack.c.h.b16 %v7210
    %v7322 = vunpack.c.l.b16 %v7211
    %v7323 = vunpack.c.h.b16 %v7211
    %v7324 = vunpack.c.l.b16 %v7212
    %v7325 = vunpack.c.h.b16 %v7212
    %v7326 = vunpack.c.l.b16 %v7213
    %v7327 = vunpack.c.h.b16 %v7213
    %v7328 = vunpack.c.l.b16 %v7214
    %v7329 = vunpack.c.h.b16 %v7214
    %v7330 = vunpack.c.l.b16 %v7215
    %v7331 = vunpack.c.h.b16 %v7215
    %v7332 = vpack.c.b16 %v7270, %v7268
    %v7333 = vpack.c.b16 %v7271, %v7269
    %v7334 = vpack.c.b16 %v7274, %v7272
    %v7335 = vpack.c.b16 %v7275, %v7273
    %v7336 = vpack.c.b16 %v7278, %v7276
    %v7337 = vpack.c.b16 %v7279, %v7277
    %v7338 = vpack.c.b16 %v7282, %v7280
    %v7339 = vpack.c.b16 %v7283, %v7281
    %v7340 = vpack.c.b16 %v7286, %v7284
    %v7341 = vpack.c.b16 %v7287, %v7285
    %v7342 = vpack.c.b16 %v7290, %v7288
    %v7343 = vpack.c.b16 %v7291, %v7289
    %v7344 = vpack.c.b16 %v7294, %v7292
    %v7345 = vpack.c.b16 %v7295, %v7293
    %v7346 = vpack.c.b16 %v7298, %v7296
    %v7347 = vpack.c.b16 %v7299, %v7297
    %v7348 = vpack.c.b16 %v7302, %v7300
    %v7349 = vpack.c.b16 %v7303, %v7301
    %v7350 = vpack.c.b16 %v7306, %v7304
    %v7351 = vpack.c.b16 %v7307, %v7305
    %v7352 = vpack.c.b16 %v7310, %v7308
    %v7353 = vpack.c.b16 %v7311, %v7309
    %v7354 = vpack.c.b16 %v7314, %v7312
    %v7355 = vpack.c.b16 %v7315, %v7313
    %v7356 = vpack.c.b16 %v7318, %v7316
    %v7357 = vpack.c.b16 %v7319, %v7317
    %v7358 = vpack.c.b16 %v7322, %v7320
    %v7359 = vpack.c.b16 %v7323, %v7321
    %v7360 = vpack.c.b16 %v7326, %v7324
    %v7361 = vpack.c.b16 %v7327, %v7325
    %v7362 = vpack.c.b16 %v7330, %v7328
    %v7363 = vpack.c.b16 %v7331, %v7329
    %7396 = vmatpush.bf16.msra.mxu0 %v7346
    %7397 = vmatpush.bf16.msra.mxu0 %v7344
    %7398 = vmatpush.bf16.msra.mxu0 %v7342
    %7399 = vmatpush.bf16.msra.mxu0 %v7340
    %7400 = vmatpush.bf16.msra.mxu0 %v7338
    %7401 = vmatpush.bf16.msra.mxu0 %v7336
    %7402 = vmatpush.bf16.msra.mxu0 %v7334
    %7403 = vmatpush.bf16.msra.mxu0 %v7332
    %7404 = vmatmul.bf16.gmra.mxu0 %v7224
    %v7405 = vpop.f32.mrf.mxu0
    %v7406 = vadd.f32 0.0, %v7405
    %v7407 = vpop.f32.mrf.mxu0
    %v7408 = vadd.f32 0.0, %v7407
    %7409 = vmatmul.bf16.gmra.mxu0 %v7229
    %v7410 = vpop.f32.mrf.mxu0
    %v7411 = vadd.f32 0.0, %v7410
    %v7412 = vpop.f32.mrf.mxu0
    %v7413 = vadd.f32 0.0, %v7412
    %7414 = vdwg.mxu0
    %7415 = vmatpush.bf16.msra.mxu0 %v7362
    %7416 = vmatpush.bf16.msra.mxu0 %v7360
    %7417 = vmatpush.bf16.msra.mxu0 %v7358
    %7418 = vmatpush.bf16.msra.mxu0 %v7356
    %7419 = vmatpush.bf16.msra.mxu0 %v7354
    %7420 = vmatpush.bf16.msra.mxu0 %v7352
    %7421 = vmatpush.bf16.msra.mxu0 %v7350
    %7422 = vmatpush.bf16.msra.mxu0 %v7348
    %7423 = vmatmul.bf16.gmra.mxu0 %v7227
    %v7424 = vpop.f32.mrf.mxu0
    %v7425 = vadd.f32 %v7406, %v7424
    %v7426 = vpop.f32.mrf.mxu0
    %v7427 = vadd.f32 %v7408, %v7426
    %7428 = vmatmul.bf16.gmra.mxu0 %v7231
    %v7429 = vpop.f32.mrf.mxu0
    %v7430 = vadd.f32 %v7411, %v7429
    %v7431 = vpop.f32.mrf.mxu0
    %v7432 = vadd.f32 %v7413, %v7431
    %7433 = vdwg.mxu0
    %7434 = vmatpush.bf16.msra.mxu0 %v7347
    %7435 = vmatpush.bf16.msra.mxu0 %v7345
    %7436 = vmatpush.bf16.msra.mxu0 %v7343
    %7437 = vmatpush.bf16.msra.mxu0 %v7341
    %7438 = vmatpush.bf16.msra.mxu0 %v7339
    %7439 = vmatpush.bf16.msra.mxu0 %v7337
    %7440 = vmatpush.bf16.msra.mxu0 %v7335
    %7441 = vmatpush.bf16.msra.mxu0 %v7333
    %7442 = vmatmul.bf16.gmra.mxu0 %v7224
    %v7443 = vpop.f32.mrf.mxu0
    %v7444 = vadd.f32 0.0, %v7443
    %v7445 = vpop.f32.mrf.mxu0
    %v7446 = vadd.f32 0.0, %v7445
    %7447 = vmatmul.bf16.gmra.mxu0 %v7229
    %v7448 = vpop.f32.mrf.mxu0
    %v7449 = vadd.f32 0.0, %v7448
    %v7450 = vpop.f32.mrf.mxu0
    %v7451 = vadd.f32 0.0, %v7450
    %7452 = vdwg.mxu0
    %7453 = vmatpush.bf16.msra.mxu0 %v7363
    %7454 = vmatpush.bf16.msra.mxu0 %v7361
    %7455 = vmatpush.bf16.msra.mxu0 %v7359
    %7456 = vmatpush.bf16.msra.mxu0 %v7357
    %7457 = vmatpush.bf16.msra.mxu0 %v7355
    %7458 = vmatpush.bf16.msra.mxu0 %v7353
    %7459 = vmatpush.bf16.msra.mxu0 %v7351
    %7460 = vmatpush.bf16.msra.mxu0 %v7349
    %7461 = vmatmul.bf16.gmra.mxu0 %v7227
    %v7462 = vpop.f32.mrf.mxu0
    %v7463 = vadd.f32 %v7444, %v7462
    %v7464 = vpop.f32.mrf.mxu0
    %v7465 = vadd.f32 %v7446, %v7464
    %7466 = vmatmul.bf16.gmra.mxu0 %v7231
    %v7467 = vpop.f32.mrf.mxu0
    %v7468 = vadd.f32 %v7449, %v7467
    %v7469 = vpop.f32.mrf.mxu0
    %v7470 = vadd.f32 %v7451, %v7469
    %7471 = vdwg.mxu0
    %v7504 = vunpack.c.l.b16 %v7139
    %v7505 = vunpack.c.h.b16 %v7139
    %v7506 = vunpack.c.l.b16 %v7140
    %v7507 = vunpack.c.h.b16 %v7140
    %v7508 = vunpack.c.l.b16 %v7141
    %v7509 = vunpack.c.h.b16 %v7141
    %v7510 = vunpack.c.l.b16 %v7142
    %v7511 = vunpack.c.h.b16 %v7142
    %v7512 = vunpack.c.l.b16 %v7143
    %v7513 = vunpack.c.h.b16 %v7143
    %v7514 = vunpack.c.l.b16 %v7144
    %v7515 = vunpack.c.h.b16 %v7144
    %v7516 = vunpack.c.l.b16 %v7145
    %v7517 = vunpack.c.h.b16 %v7145
    %v7518 = vunpack.c.l.b16 %v7146
    %v7519 = vunpack.c.h.b16 %v7146
    %v7520 = vunpack.c.l.b16 %v7147
    %v7521 = vunpack.c.h.b16 %v7147
    %v7522 = vunpack.c.l.b16 %v7148
    %v7523 = vunpack.c.h.b16 %v7148
    %v7524 = vunpack.c.l.b16 %v7149
    %v7525 = vunpack.c.h.b16 %v7149
    %v7526 = vunpack.c.l.b16 %v7150
    %v7527 = vunpack.c.h.b16 %v7150
    %v7528 = vunpack.c.l.b16 %v7151
    %v7529 = vunpack.c.h.b16 %v7151
    %v7530 = vunpack.c.l.b16 %v7152
    %v7531 = vunpack.c.h.b16 %v7152
    %v7532 = vunpack.c.l.b16 %v7153
    %v7533 = vunpack.c.h.b16 %v7153
    %v7534 = vunpack.c.l.b16 %v7154
    %v7535 = vunpack.c.h.b16 %v7154
    %v7536 = vunpack.c.l.b16 %v7155
    %v7537 = vunpack.c.h.b16 %v7155
    %v7538 = vunpack.c.l.b16 %v7156
    %v7539 = vunpack.c.h.b16 %v7156
    %v7540 = vunpack.c.l.b16 %v7157
    %v7541 = vunpack.c.h.b16 %v7157
    %v7542 = vunpack.c.l.b16 %v7158
    %v7543 = vunpack.c.h.b16 %v7158
    %v7544 = vunpack.c.l.b16 %v7159
    %v7545 = vunpack.c.h.b16 %v7159
    %v7546 = vunpack.c.l.b16 %v7160
    %v7547 = vunpack.c.h.b16 %v7160
    %v7548 = vunpack.c.l.b16 %v7161
    %v7549 = vunpack.c.h.b16 %v7161
    %v7550 = vunpack.c.l.b16 %v7162
    %v7551 = vunpack.c.h.b16 %v7162
    %v7552 = vunpack.c.l.b16 %v7163
    %v7553 = vunpack.c.h.b16 %v7163
    %v7554 = vunpack.c.l.b16 %v7164
    %v7555 = vunpack.c.h.b16 %v7164
    %v7556 = vunpack.c.l.b16 %v7165
    %v7557 = vunpack.c.h.b16 %v7165
    %v7558 = vunpack.c.l.b16 %v7166
    %v7559 = vunpack.c.h.b16 %v7166
    %v7560 = vunpack.c.l.b16 %v7167
    %v7561 = vunpack.c.h.b16 %v7167
    %v7562 = vunpack.c.l.b16 %v7168
    %v7563 = vunpack.c.h.b16 %v7168
    %v7564 = vunpack.c.l.b16 %v7169
    %v7565 = vunpack.c.h.b16 %v7169
    %v7566 = vunpack.c.l.b16 %v7170
    %v7567 = vunpack.c.h.b16 %v7170
    %v7568 = vpack.c.b16 %v7506, %v7504
    %v7569 = vpack.c.b16 %v7507, %v7505
    %v7570 = vpack.c.b16 %v7510, %v7508
    %v7571 = vpack.c.b16 %v7511, %v7509
    %v7572 = vpack.c.b16 %v7514, %v7512
    %v7573 = vpack.c.b16 %v7515, %v7513
    %v7574 = vpack.c.b16 %v7518, %v7516
    %v7575 = vpack.c.b16 %v7519, %v7517
    %v7576 = vpack.c.b16 %v7522, %v7520
    %v7577 = vpack.c.b16 %v7523, %v7521
    %v7578 = vpack.c.b16 %v7526, %v7524
    %v7579 = vpack.c.b16 %v7527, %v7525
    %v7580 = vpack.c.b16 %v7530, %v7528
    %v7581 = vpack.c.b16 %v7531, %v7529
    %v7582 = vpack.c.b16 %v7534, %v7532
    %v7583 = vpack.c.b16 %v7535, %v7533
    %v7584 = vpack.c.b16 %v7538, %v7536
    %v7585 = vpack.c.b16 %v7539, %v7537
    %v7586 = vpack.c.b16 %v7542, %v7540
    %v7587 = vpack.c.b16 %v7543, %v7541
    %v7588 = vpack.c.b16 %v7546, %v7544
    %v7589 = vpack.c.b16 %v7547, %v7545
    %v7590 = vpack.c.b16 %v7550, %v7548
    %v7591 = vpack.c.b16 %v7551, %v7549
    %v7592 = vpack.c.b16 %v7554, %v7552
    %v7593 = vpack.c.b16 %v7555, %v7553
    %v7594 = vpack.c.b16 %v7558, %v7556
    %v7595 = vpack.c.b16 %v7559, %v7557
    %v7596 = vpack.c.b16 %v7562, %v7560
    %v7597 = vpack.c.b16 %v7563, %v7561
    %v7598 = vpack.c.b16 %v7566, %v7564
    %v7599 = vpack.c.b16 %v7567, %v7565
    %7632 = vmatpush.bf16.msra.mxu0 %v7582
    %7633 = vmatpush.bf16.msra.mxu0 %v7580
    %7634 = vmatpush.bf16.msra.mxu0 %v7578
    %7635 = vmatpush.bf16.msra.mxu0 %v7576
    %7636 = vmatpush.bf16.msra.mxu0 %v7574
    %7637 = vmatpush.bf16.msra.mxu0 %v7572
    %7638 = vmatpush.bf16.msra.mxu0 %v7570
    %7639 = vmatpush.bf16.msra.mxu0 %v7568
    %7640 = vmatmul.bf16.gmra.mxu0 %v7135
    %v7641 = vpop.f32.mrf.mxu0
    %v7642 = vadd.f32 %v7425, %v7641
    %v7643 = vpop.f32.mrf.mxu0
    %v7644 = vadd.f32 %v7427, %v7643
    %7645 = vmatmul.bf16.gmra.mxu0 %v7137
    %v7646 = vpop.f32.mrf.mxu0
    %v7647 = vadd.f32 %v7430, %v7646
    %v7648 = vpop.f32.mrf.mxu0
    %v7649 = vadd.f32 %v7432, %v7648
    %7650 = vdwg.mxu0
    %7651 = vmatpush.bf16.msra.mxu0 %v7598
    %7652 = vmatpush.bf16.msra.mxu0 %v7596
    %7653 = vmatpush.bf16.msra.mxu0 %v7594
    %7654 = vmatpush.bf16.msra.mxu0 %v7592
    %7655 = vmatpush.bf16.msra.mxu0 %v7590
    %7656 = vmatpush.bf16.msra.mxu0 %v7588
    %7657 = vmatpush.bf16.msra.mxu0 %v7586
    %7658 = vmatpush.bf16.msra.mxu0 %v7584
    %7659 = vmatmul.bf16.gmra.mxu0 %v7136
    %v7660 = vpop.f32.mrf.mxu0
    %v7661 = vadd.f32 %v7642, %v7660
    %v7662 = vpop.f32.mrf.mxu0
    %v7663 = vadd.f32 %v7644, %v7662
    %7664 = vmatmul.bf16.gmra.mxu0 %v7138
    %v7665 = vpop.f32.mrf.mxu0
    %v7666 = vadd.f32 %v7647, %v7665
    %v7667 = vpop.f32.mrf.mxu0
    %v7668 = vadd.f32 %v7649, %v7667
    %7669 = vdwg.mxu0
    %7670 = vmatpush.bf16.msra.mxu0 %v7583
    %7671 = vmatpush.bf16.msra.mxu0 %v7581
    %7672 = vmatpush.bf16.msra.mxu0 %v7579
    %7673 = vmatpush.bf16.msra.mxu0 %v7577
    %7674 = vmatpush.bf16.msra.mxu0 %v7575
    %7675 = vmatpush.bf16.msra.mxu0 %v7573
    %7676 = vmatpush.bf16.msra.mxu0 %v7571
    %7677 = vmatpush.bf16.msra.mxu0 %v7569
    %7678 = vmatmul.bf16.gmra.mxu0 %v7135
    %v7679 = vpop.f32.mrf.mxu0
    %v7680 = vadd.f32 %v7463, %v7679
    %v7681 = vpop.f32.mrf.mxu0
    %v7682 = vadd.f32 %v7465, %v7681
    %7683 = vmatmul.bf16.gmra.mxu0 %v7137
    %v7684 = vpop.f32.mrf.mxu0
    %v7685 = vadd.f32 %v7468, %v7684
    %v7686 = vpop.f32.mrf.mxu0
    %v7687 = vadd.f32 %v7470, %v7686
    %7688 = vdwg.mxu0
    %7689 = vmatpush.bf16.msra.mxu0 %v7599
    %7690 = vmatpush.bf16.msra.mxu0 %v7597
    %7691 = vmatpush.bf16.msra.mxu0 %v7595
    %7692 = vmatpush.bf16.msra.mxu0 %v7593
    %7693 = vmatpush.bf16.msra.mxu0 %v7591
    %7694 = vmatpush.bf16.msra.mxu0 %v7589
    %7695 = vmatpush.bf16.msra.mxu0 %v7587
    %7696 = vmatpush.bf16.msra.mxu0 %v7585
    %7697 = vmatmul.bf16.gmra.mxu0 %v7136
    %v7698 = vpop.f32.mrf.mxu0
    %v7699 = vadd.f32 %v7680, %v7698
    %v7700 = vpop.f32.mrf.mxu0
    %v7701 = vadd.f32 %v7682, %v7700
    %7702 = vmatmul.bf16.gmra.mxu0 %v7138
    %v7703 = vpop.f32.mrf.mxu0
    %v7704 = vadd.f32 %v7685, %v7703
    %v7705 = vpop.f32.mrf.mxu0
    %v7706 = vadd.f32 %v7687, %v7705
    %7707 = vdwg.mxu0
    %v7708 = vld [vmem:[#allocation5 + $0x40] sm:$0x1f]
    %v7709 = vld [vmem:[#allocation5 + $0x48] sm:$0x1f]
    %v7710 = vpack.c.bf16 %v7131, %v7129
    %v7711 = vpack.c.bf16 %v7132, %v7130
    %v7712 = vpack.c.bf16 %v7708, %v7173
    %v7713 = vpack.c.bf16 %v7709, %v7174
    %s7714 = scalar_lea.vmem [#allocation2], 4608
    %v7715 = vld [vmem:[%s7714] sm:$0xff]
    %v7716 = vld [vmem:[%s7714 + $0x8] sm:$0xff]
    %v7717 = vld [vmem:[%s7714 + $0x10] sm:$0xff]
    %v7718 = vld [vmem:[%s7714 + $0x18] sm:$0xff]
    %v7719 = vld [vmem:[%s7714 + $0x20] sm:$0xff]
    %v7720 = vld [vmem:[%s7714 + $0x28] sm:$0xff]
    %v7721 = vld [vmem:[%s7714 + $0x30] sm:$0xff]
    %v7722 = vld [vmem:[%s7714 + $0x38] sm:$0xff]
    %v7723 = vld [vmem:[%s7714 + $0x40] sm:$0xff]
    %v7724 = vld [vmem:[%s7714 + $0x48] sm:$0xff]
    %v7725 = vld [vmem:[%s7714 + $0x50] sm:$0xff]
    %v7726 = vld [vmem:[%s7714 + $0x58] sm:$0xff]
    %v7727 = vld [vmem:[%s7714 + $0x60] sm:$0xff]
    %v7728 = vld [vmem:[%s7714 + $0x68] sm:$0xff]
    %v7729 = vld [vmem:[%s7714 + $0x70] sm:$0xff]
    %v7730 = vld [vmem:[%s7714 + $0x78] sm:$0xff]
    %v7731 = vld [vmem:[%s7714 + $0x80] sm:$0xff]
    %v7732 = vld [vmem:[%s7714 + $0x88] sm:$0xff]
    %v7733 = vld [vmem:[%s7714 + $0x90] sm:$0xff]
    %v7734 = vld [vmem:[%s7714 + $0x98] sm:$0xff]
    %v7735 = vld [vmem:[%s7714 + $0xa0] sm:$0xff]
    %v7736 = vld [vmem:[%s7714 + $0xa8] sm:$0xff]
    %v7737 = vld [vmem:[%s7714 + $0xb0] sm:$0xff]
    %v7738 = vld [vmem:[%s7714 + $0xb8] sm:$0xff]
    %v7739 = vld [vmem:[%s7714 + $0xc0] sm:$0xff]
    %v7740 = vld [vmem:[%s7714 + $0xc8] sm:$0xff]
    %v7741 = vld [vmem:[%s7714 + $0xd0] sm:$0xff]
    %v7742 = vld [vmem:[%s7714 + $0xd8] sm:$0xff]
    %v7743 = vld [vmem:[%s7714 + $0xe0] sm:$0xff]
    %v7744 = vld [vmem:[%s7714 + $0xe8] sm:$0xff]
    %v7745 = vld [vmem:[%s7714 + $0xf0] sm:$0xff]
    %v7746 = vld [vmem:[%s7714 + $0xf8] sm:$0xff]
    %v7779 = vunpack.c.l.b16 %v7715
    %v7780 = vunpack.c.h.b16 %v7715
    %v7781 = vunpack.c.l.b16 %v7716
    %v7782 = vunpack.c.h.b16 %v7716
    %v7783 = vunpack.c.l.b16 %v7717
    %v7784 = vunpack.c.h.b16 %v7717
    %v7785 = vunpack.c.l.b16 %v7718
    %v7786 = vunpack.c.h.b16 %v7718
    %v7787 = vunpack.c.l.b16 %v7719
    %v7788 = vunpack.c.h.b16 %v7719
    %v7789 = vunpack.c.l.b16 %v7720
    %v7790 = vunpack.c.h.b16 %v7720
    %v7791 = vunpack.c.l.b16 %v7721
    %v7792 = vunpack.c.h.b16 %v7721
    %v7793 = vunpack.c.l.b16 %v7722
    %v7794 = vunpack.c.h.b16 %v7722
    %v7795 = vunpack.c.l.b16 %v7723
    %v7796 = vunpack.c.h.b16 %v7723
    %v7797 = vunpack.c.l.b16 %v7724
    %v7798 = vunpack.c.h.b16 %v7724
    %v7799 = vunpack.c.l.b16 %v7725
    %v7800 = vunpack.c.h.b16 %v7725
    %v7801 = vunpack.c.l.b16 %v7726
    %v7802 = vunpack.c.h.b16 %v7726
    %v7803 = vunpack.c.l.b16 %v7727
    %v7804 = vunpack.c.h.b16 %v7727
    %v7805 = vunpack.c.l.b16 %v7728
    %v7806 = vunpack.c.h.b16 %v7728
    %v7807 = vunpack.c.l.b16 %v7729
    %v7808 = vunpack.c.h.b16 %v7729
    %v7809 = vunpack.c.l.b16 %v7730
    %v7810 = vunpack.c.h.b16 %v7730
    %v7811 = vunpack.c.l.b16 %v7731
    %v7812 = vunpack.c.h.b16 %v7731
    %v7813 = vunpack.c.l.b16 %v7732
    %v7814 = vunpack.c.h.b16 %v7732
    %v7815 = vunpack.c.l.b16 %v7733
    %v7816 = vunpack.c.h.b16 %v7733
    %v7817 = vunpack.c.l.b16 %v7734
    %v7818 = vunpack.c.h.b16 %v7734
    %v7819 = vunpack.c.l.b16 %v7735
    %v7820 = vunpack.c.h.b16 %v7735
    %v7821 = vunpack.c.l.b16 %v7736
    %v7822 = vunpack.c.h.b16 %v7736
    %v7823 = vunpack.c.l.b16 %v7737
    %v7824 = vunpack.c.h.b16 %v7737
    %v7825 = vunpack.c.l.b16 %v7738
    %v7826 = vunpack.c.h.b16 %v7738
    %v7827 = vunpack.c.l.b16 %v7739
    %v7828 = vunpack.c.h.b16 %v7739
    %v7829 = vunpack.c.l.b16 %v7740
    %v7830 = vunpack.c.h.b16 %v7740
    %v7831 = vunpack.c.l.b16 %v7741
    %v7832 = vunpack.c.h.b16 %v7741
    %v7833 = vunpack.c.l.b16 %v7742
    %v7834 = vunpack.c.h.b16 %v7742
    %v7835 = vunpack.c.l.b16 %v7743
    %v7836 = vunpack.c.h.b16 %v7743
    %v7837 = vunpack.c.l.b16 %v7744
    %v7838 = vunpack.c.h.b16 %v7744
    %v7839 = vunpack.c.l.b16 %v7745
    %v7840 = vunpack.c.h.b16 %v7745
    %v7841 = vunpack.c.l.b16 %v7746
    %v7842 = vunpack.c.h.b16 %v7746
    %v7843 = vpack.c.b16 %v7781, %v7779
    %v7844 = vpack.c.b16 %v7782, %v7780
    %v7845 = vpack.c.b16 %v7785, %v7783
    %v7846 = vpack.c.b16 %v7786, %v7784
    %v7847 = vpack.c.b16 %v7789, %v7787
    %v7848 = vpack.c.b16 %v7790, %v7788
    %v7849 = vpack.c.b16 %v7793, %v7791
    %v7850 = vpack.c.b16 %v7794, %v7792
    %v7851 = vpack.c.b16 %v7797, %v7795
    %v7852 = vpack.c.b16 %v7798, %v7796
    %v7853 = vpack.c.b16 %v7801, %v7799
    %v7854 = vpack.c.b16 %v7802, %v7800
    %v7855 = vpack.c.b16 %v7805, %v7803
    %v7856 = vpack.c.b16 %v7806, %v7804
    %v7857 = vpack.c.b16 %v7809, %v7807
    %v7858 = vpack.c.b16 %v7810, %v7808
    %v7859 = vpack.c.b16 %v7813, %v7811
    %v7860 = vpack.c.b16 %v7814, %v7812
    %v7861 = vpack.c.b16 %v7817, %v7815
    %v7862 = vpack.c.b16 %v7818, %v7816
    %v7863 = vpack.c.b16 %v7821, %v7819
    %v7864 = vpack.c.b16 %v7822, %v7820
    %v7865 = vpack.c.b16 %v7825, %v7823
    %v7866 = vpack.c.b16 %v7826, %v7824
    %v7867 = vpack.c.b16 %v7829, %v7827
    %v7868 = vpack.c.b16 %v7830, %v7828
    %v7869 = vpack.c.b16 %v7833, %v7831
    %v7870 = vpack.c.b16 %v7834, %v7832
    %v7871 = vpack.c.b16 %v7837, %v7835
    %v7872 = vpack.c.b16 %v7838, %v7836
    %v7873 = vpack.c.b16 %v7841, %v7839
    %v7874 = vpack.c.b16 %v7842, %v7840
    %7907 = vmatpush.bf16.msra.mxu0 %v7857
    %7908 = vmatpush.bf16.msra.mxu0 %v7855
    %7909 = vmatpush.bf16.msra.mxu0 %v7853
    %7910 = vmatpush.bf16.msra.mxu0 %v7851
    %7911 = vmatpush.bf16.msra.mxu0 %v7849
    %7912 = vmatpush.bf16.msra.mxu0 %v7847
    %7913 = vmatpush.bf16.msra.mxu0 %v7845
    %7914 = vmatpush.bf16.msra.mxu0 %v7843
    %7915 = vmatmul.bf16.gmra.mxu0 %v7710
    %v7916 = vpop.f32.mrf.mxu0
    %v7917 = vadd.f32 0.0, %v7916
    %v7918 = vpop.f32.mrf.mxu0
    %v7919 = vadd.f32 0.0, %v7918
    %7920 = vmatmul.bf16.gmra.mxu0 %v7712
    %v7921 = vpop.f32.mrf.mxu0
    %v7922 = vadd.f32 0.0, %v7921
    %v7923 = vpop.f32.mrf.mxu0
    %v7924 = vadd.f32 0.0, %v7923
    %7925 = vdwg.mxu0
    %7926 = vmatpush.bf16.msra.mxu0 %v7873
    %7927 = vmatpush.bf16.msra.mxu0 %v7871
    %7928 = vmatpush.bf16.msra.mxu0 %v7869
    %7929 = vmatpush.bf16.msra.mxu0 %v7867
    %7930 = vmatpush.bf16.msra.mxu0 %v7865
    %7931 = vmatpush.bf16.msra.mxu0 %v7863
    %7932 = vmatpush.bf16.msra.mxu0 %v7861
    %7933 = vmatpush.bf16.msra.mxu0 %v7859
    %7934 = vmatmul.bf16.gmra.mxu0 %v7711
    %v7935 = vpop.f32.mrf.mxu0
    %v7936 = vadd.f32 %v7917, %v7935
    %v7937 = vpop.f32.mrf.mxu0
    %v7938 = vadd.f32 %v7919, %v7937
    %7939 = vmatmul.bf16.gmra.mxu0 %v7713
    %v7940 = vpop.f32.mrf.mxu0
    %v7941 = vadd.f32 %v7922, %v7940
    %v7942 = vpop.f32.mrf.mxu0
    %v7943 = vadd.f32 %v7924, %v7942
    %7944 = vdwg.mxu0
    %7945 = vmatpush.bf16.msra.mxu0 %v7858
    %7946 = vmatpush.bf16.msra.mxu0 %v7856
    %7947 = vmatpush.bf16.msra.mxu0 %v7854
    %7948 = vmatpush.bf16.msra.mxu0 %v7852
    %7949 = vmatpush.bf16.msra.mxu0 %v7850
    %7950 = vmatpush.bf16.msra.mxu0 %v7848
    %7951 = vmatpush.bf16.msra.mxu0 %v7846
    %7952 = vmatpush.bf16.msra.mxu0 %v7844
    %7953 = vmatmul.bf16.gmra.mxu0 %v7710
    %v7954 = vpop.f32.mrf.mxu0
    %v7955 = vadd.f32 0.0, %v7954
    %v7956 = vpop.f32.mrf.mxu0
    %v7957 = vadd.f32 0.0, %v7956
    %7958 = vmatmul.bf16.gmra.mxu0 %v7712
    %v7959 = vpop.f32.mrf.mxu0
    %v7960 = vadd.f32 0.0, %v7959
    %v7961 = vpop.f32.mrf.mxu0
    %v7962 = vadd.f32 0.0, %v7961
    %7963 = vdwg.mxu0
    %7964 = vmatpush.bf16.msra.mxu0 %v7874
    %7965 = vmatpush.bf16.msra.mxu0 %v7872
    %7966 = vmatpush.bf16.msra.mxu0 %v7870
    %7967 = vmatpush.bf16.msra.mxu0 %v7868
    %7968 = vmatpush.bf16.msra.mxu0 %v7866
    %7969 = vmatpush.bf16.msra.mxu0 %v7864
    %7970 = vmatpush.bf16.msra.mxu0 %v7862
    %7971 = vmatpush.bf16.msra.mxu0 %v7860
    %7972 = vmatmul.bf16.gmra.mxu0 %v7711
    %v7973 = vpop.f32.mrf.mxu0
    %v7974 = vadd.f32 %v7955, %v7973
    %v7975 = vpop.f32.mrf.mxu0
    %v7976 = vadd.f32 %v7957, %v7975
    %7977 = vmatmul.bf16.gmra.mxu0 %v7713
    %v7978 = vpop.f32.mrf.mxu0
    %v7979 = vadd.f32 %v7960, %v7978
    %v7980 = vpop.f32.mrf.mxu0
    %v7981 = vadd.f32 %v7962, %v7980
    %7982 = vdwg.mxu0
    %v7983 = vadd.f32 %v7661, %v7936
    %v7984 = vadd.f32 %v7699, %v7974
    %v7985 = vadd.f32 %v7663, %v7938
    %v7986 = vadd.f32 %v7701, %v7976
    %v7987 = vadd.f32 %v7666, %v7941
    %v7988 = vadd.f32 %v7704, %v7979
    %v7989 = vadd.f32 %v7668, %v7943
    %v7990 = vadd.f32 %v7706, %v7981
    %v7991 = vld [vmem:[#allocation5 + $0x10] sm:$0xf0]
    %v7992 = vld [vmem:[#allocation5 + $0x18] sm:$0xf0]
    %v7993 = vld [vmem:[#allocation5 + $0x20] sm:$0xff]
    %v7994 = vld [vmem:[#allocation5 + $0x28] sm:$0xff]
    %v7995 = vld [vmem:[#allocation5 + $0x30] sm:$0xff]
    %v7996 = vld [vmem:[#allocation5 + $0x38] sm:$0xff]
    %v7997 = vld [vmem:[#allocation5 + $0x40] sm:$0xff]
    %v7998 = vld [vmem:[#allocation5 + $0x48] sm:$0xff]
    %v7999 = vld [vmem:[#allocation5 + $0x50] sm:$0x1]
    %v8000 = vld [vmem:[#allocation5 + $0x58] sm:$0x1]
    %v8001 = vpack.c.bf16 %v7993, %v7991
    %v8002 = vpack.c.bf16 %v7994, %v7992
    %v8003 = vpack.c.bf16 %v7997, %v7995
    %v8004 = vpack.c.bf16 %v7998, %v7996
    %v8005 = vpack.c.bf16 %v7999, %v7999
    %v8006 = vpack.c.bf16 %v8000, %v8000
    %s8007 = scalar_lea.vmem [#allocation2], 4864
    %v8008 = vld [vmem:[%s8007] sm:$0xff]
    %v8009 = vld [vmem:[%s8007 + $0x8] sm:$0xff]
    %v8010 = vld [vmem:[%s8007 + $0x10] sm:$0xff]
    %v8011 = vld [vmem:[%s8007 + $0x18] sm:$0xff]
    %v8012 = vld [vmem:[%s8007 + $0x20] sm:$0xff]
    %v8013 = vld [vmem:[%s8007 + $0x28] sm:$0xff]
    %v8014 = vld [vmem:[%s8007 + $0x30] sm:$0xff]
    %v8015 = vld [vmem:[%s8007 + $0x38] sm:$0xff]
    %v8016 = vld [vmem:[%s8007 + $0x40] sm:$0xff]
    %v8017 = vld [vmem:[%s8007 + $0x48] sm:$0xff]
    %v8018 = vld [vmem:[%s8007 + $0x50] sm:$0xff]
    %v8019 = vld [vmem:[%s8007 + $0x58] sm:$0xff]
    %v8020 = vld [vmem:[%s8007 + $0x60] sm:$0xff]
    %v8021 = vld [vmem:[%s8007 + $0x68] sm:$0xff]
    %v8022 = vld [vmem:[%s8007 + $0x70] sm:$0xff]
    %v8023 = vld [vmem:[%s8007 + $0x78] sm:$0xff]
    %v8024 = vld [vmem:[%s8007 + $0x80] sm:$0xff]
    %v8025 = vld [vmem:[%s8007 + $0x88] sm:$0xff]
    %v8026 = vld [vmem:[%s8007 + $0x90] sm:$0xff]
    %v8027 = vld [vmem:[%s8007 + $0x98] sm:$0xff]
    %v8028 = vld [vmem:[%s8007 + $0xa0] sm:$0xff]
    %v8029 = vld [vmem:[%s8007 + $0xa8] sm:$0xff]
    %v8030 = vld [vmem:[%s8007 + $0xb0] sm:$0xff]
    %v8031 = vld [vmem:[%s8007 + $0xb8] sm:$0xff]
    %v8032 = vld [vmem:[%s8007 + $0xc0] sm:$0xff]
    %v8033 = vld [vmem:[%s8007 + $0xc8] sm:$0xff]
    %v8034 = vld [vmem:[%s8007 + $0xd0] sm:$0xff]
    %v8035 = vld [vmem:[%s8007 + $0xd8] sm:$0xff]
    %v8036 = vld [vmem:[%s8007 + $0xe0] sm:$0xff]
    %v8037 = vld [vmem:[%s8007 + $0xe8] sm:$0xff]
    %v8038 = vld [vmem:[%s8007 + $0xf0] sm:$0xff]
    %v8039 = vld [vmem:[%s8007 + $0xf8] sm:$0xff]
    %v8046 = vrot.slane %v8001, 2
    %v8047 = vrot.slane %v8003, 2
    %v8048 = vsel %vm6102, %v8046, %v8047
    %v8049 = vrot.slane %v8002, 2
    %v8050 = vrot.slane %v8004, 2
    %v8051 = vsel %vm6102, %v8049, %v8050
    %v8052 = vrot.slane %v8005, 2
    %v8053 = vsel %vm6102, %v8047, %v8052
    %v8054 = vrot.slane %v8006, 2
    %v8055 = vsel %vm6102, %v8050, %v8054
    %v8092 = vunpack.c.l.b16 %v8008
    %v8093 = vunpack.c.h.b16 %v8008
    %v8094 = vunpack.c.l.b16 %v8009
    %v8095 = vunpack.c.h.b16 %v8009
    %v8096 = vunpack.c.l.b16 %v8010
    %v8097 = vunpack.c.h.b16 %v8010
    %v8098 = vunpack.c.l.b16 %v8011
    %v8099 = vunpack.c.h.b16 %v8011
    %v8100 = vunpack.c.l.b16 %v8012
    %v8101 = vunpack.c.h.b16 %v8012
    %v8102 = vunpack.c.l.b16 %v8013
    %v8103 = vunpack.c.h.b16 %v8013
    %v8104 = vunpack.c.l.b16 %v8014
    %v8105 = vunpack.c.h.b16 %v8014
    %v8106 = vunpack.c.l.b16 %v8015
    %v8107 = vunpack.c.h.b16 %v8015
    %v8108 = vunpack.c.l.b16 %v8016
    %v8109 = vunpack.c.h.b16 %v8016
    %v8110 = vunpack.c.l.b16 %v8017
    %v8111 = vunpack.c.h.b16 %v8017
    %v8112 = vunpack.c.l.b16 %v8018
    %v8113 = vunpack.c.h.b16 %v8018
    %v8114 = vunpack.c.l.b16 %v8019
    %v8115 = vunpack.c.h.b16 %v8019
    %v8116 = vunpack.c.l.b16 %v8020
    %v8117 = vunpack.c.h.b16 %v8020
    %v8118 = vunpack.c.l.b16 %v8021
    %v8119 = vunpack.c.h.b16 %v8021
    %v8120 = vunpack.c.l.b16 %v8022
    %v8121 = vunpack.c.h.b16 %v8022
    %v8122 = vunpack.c.l.b16 %v8023
    %v8123 = vunpack.c.h.b16 %v8023
    %v8124 = vunpack.c.l.b16 %v8024
    %v8125 = vunpack.c.h.b16 %v8024
    %v8126 = vunpack.c.l.b16 %v8025
    %v8127 = vunpack.c.h.b16 %v8025
    %v8128 = vunpack.c.l.b16 %v8026
    %v8129 = vunpack.c.h.b16 %v8026
    %v8130 = vunpack.c.l.b16 %v8027
    %v8131 = vunpack.c.h.b16 %v8027
    %v8132 = vunpack.c.l.b16 %v8028
    %v8133 = vunpack.c.h.b16 %v8028
    %v8134 = vunpack.c.l.b16 %v8029
    %v8135 = vunpack.c.h.b16 %v8029
    %v8136 = vunpack.c.l.b16 %v8030
    %v8137 = vunpack.c.h.b16 %v8030
    %v8138 = vunpack.c.l.b16 %v8031
    %v8139 = vunpack.c.h.b16 %v8031
    %v8140 = vunpack.c.l.b16 %v8032
    %v8141 = vunpack.c.h.b16 %v8032
    %v8142 = vunpack.c.l.b16 %v8033
    %v8143 = vunpack.c.h.b16 %v8033
    %v8144 = vunpack.c.l.b16 %v8034
    %v8145 = vunpack.c.h.b16 %v8034
    %v8146 = vunpack.c.l.b16 %v8035
    %v8147 = vunpack.c.h.b16 %v8035
    %v8148 = vunpack.c.l.b16 %v8036
    %v8149 = vunpack.c.h.b16 %v8036
    %v8150 = vunpack.c.l.b16 %v8037
    %v8151 = vunpack.c.h.b16 %v8037
    %v8152 = vunpack.c.l.b16 %v8038
    %v8153 = vunpack.c.h.b16 %v8038
    %v8154 = vunpack.c.l.b16 %v8039
    %v8155 = vunpack.c.h.b16 %v8039
    %v8156 = vpack.c.b16 %v8094, %v8092
    %v8157 = vpack.c.b16 %v8095, %v8093
    %v8158 = vpack.c.b16 %v8098, %v8096
    %v8159 = vpack.c.b16 %v8099, %v8097
    %v8160 = vpack.c.b16 %v8102, %v8100
    %v8161 = vpack.c.b16 %v8103, %v8101
    %v8162 = vpack.c.b16 %v8106, %v8104
    %v8163 = vpack.c.b16 %v8107, %v8105
    %v8164 = vpack.c.b16 %v8110, %v8108
    %v8165 = vpack.c.b16 %v8111, %v8109
    %v8166 = vpack.c.b16 %v8114, %v8112
    %v8167 = vpack.c.b16 %v8115, %v8113
    %v8168 = vpack.c.b16 %v8118, %v8116
    %v8169 = vpack.c.b16 %v8119, %v8117
    %v8170 = vpack.c.b16 %v8122, %v8120
    %v8171 = vpack.c.b16 %v8123, %v8121
    %v8172 = vpack.c.b16 %v8126, %v8124
    %v8173 = vpack.c.b16 %v8127, %v8125
    %v8174 = vpack.c.b16 %v8130, %v8128
    %v8175 = vpack.c.b16 %v8131, %v8129
    %v8176 = vpack.c.b16 %v8134, %v8132
    %v8177 = vpack.c.b16 %v8135, %v8133
    %v8178 = vpack.c.b16 %v8138, %v8136
    %v8179 = vpack.c.b16 %v8139, %v8137
    %v8180 = vpack.c.b16 %v8142, %v8140
    %v8181 = vpack.c.b16 %v8143, %v8141
    %v8182 = vpack.c.b16 %v8146, %v8144
    %v8183 = vpack.c.b16 %v8147, %v8145
    %v8184 = vpack.c.b16 %v8150, %v8148
    %v8185 = vpack.c.b16 %v8151, %v8149
    %v8186 = vpack.c.b16 %v8154, %v8152
    %v8187 = vpack.c.b16 %v8155, %v8153
    %8220 = vmatpush.bf16.msra.mxu0 %v8170
    %8221 = vmatpush.bf16.msra.mxu0 %v8168
    %8222 = vmatpush.bf16.msra.mxu0 %v8166
    %8223 = vmatpush.bf16.msra.mxu0 %v8164
    %8224 = vmatpush.bf16.msra.mxu0 %v8162
    %8225 = vmatpush.bf16.msra.mxu0 %v8160
    %8226 = vmatpush.bf16.msra.mxu0 %v8158
    %8227 = vmatpush.bf16.msra.mxu0 %v8156
    %8228 = vmatmul.bf16.gmra.mxu0 %v8048
    %v8229 = vpop.f32.mrf.mxu0
    %v8230 = vadd.f32 0.0, %v8229
    %v8231 = vpop.f32.mrf.mxu0
    %v8232 = vadd.f32 0.0, %v8231
    %8233 = vmatmul.bf16.gmra.mxu0 %v8053
    %v8234 = vpop.f32.mrf.mxu0
    %v8235 = vadd.f32 0.0, %v8234
    %v8236 = vpop.f32.mrf.mxu0
    %v8237 = vadd.f32 0.0, %v8236
    %8238 = vdwg.mxu0
    %8239 = vmatpush.bf16.msra.mxu0 %v8186
    %8240 = vmatpush.bf16.msra.mxu0 %v8184
    %8241 = vmatpush.bf16.msra.mxu0 %v8182
    %8242 = vmatpush.bf16.msra.mxu0 %v8180
    %8243 = vmatpush.bf16.msra.mxu0 %v8178
    %8244 = vmatpush.bf16.msra.mxu0 %v8176
    %8245 = vmatpush.bf16.msra.mxu0 %v8174
    %8246 = vmatpush.bf16.msra.mxu0 %v8172
    %8247 = vmatmul.bf16.gmra.mxu0 %v8051
    %v8248 = vpop.f32.mrf.mxu0
    %v8249 = vadd.f32 %v8230, %v8248
    %v8250 = vpop.f32.mrf.mxu0
    %v8251 = vadd.f32 %v8232, %v8250
    %8252 = vmatmul.bf16.gmra.mxu0 %v8055
    %v8253 = vpop.f32.mrf.mxu0
    %v8254 = vadd.f32 %v8235, %v8253
    %v8255 = vpop.f32.mrf.mxu0
    %v8256 = vadd.f32 %v8237, %v8255
    %8257 = vdwg.mxu0
    %8258 = vmatpush.bf16.msra.mxu0 %v8171
    %8259 = vmatpush.bf16.msra.mxu0 %v8169
    %8260 = vmatpush.bf16.msra.mxu0 %v8167
    %8261 = vmatpush.bf16.msra.mxu0 %v8165
    %8262 = vmatpush.bf16.msra.mxu0 %v8163
    %8263 = vmatpush.bf16.msra.mxu0 %v8161
    %8264 = vmatpush.bf16.msra.mxu0 %v8159
    %8265 = vmatpush.bf16.msra.mxu0 %v8157
    %8266 = vmatmul.bf16.gmra.mxu0 %v8048
    %v8267 = vpop.f32.mrf.mxu0
    %v8268 = vadd.f32 0.0, %v8267
    %v8269 = vpop.f32.mrf.mxu0
    %v8270 = vadd.f32 0.0, %v8269
    %8271 = vmatmul.bf16.gmra.mxu0 %v8053
    %v8272 = vpop.f32.mrf.mxu0
    %v8273 = vadd.f32 0.0, %v8272
    %v8274 = vpop.f32.mrf.mxu0
    %v8275 = vadd.f32 0.0, %v8274
    %8276 = vdwg.mxu0
    %8277 = vmatpush.bf16.msra.mxu0 %v8187
    %8278 = vmatpush.bf16.msra.mxu0 %v8185
    %8279 = vmatpush.bf16.msra.mxu0 %v8183
    %8280 = vmatpush.bf16.msra.mxu0 %v8181
    %8281 = vmatpush.bf16.msra.mxu0 %v8179
    %8282 = vmatpush.bf16.msra.mxu0 %v8177
    %8283 = vmatpush.bf16.msra.mxu0 %v8175
    %8284 = vmatpush.bf16.msra.mxu0 %v8173
    %8285 = vmatmul.bf16.gmra.mxu0 %v8051
    %v8286 = vpop.f32.mrf.mxu0
    %v8287 = vadd.f32 %v8268, %v8286
    %v8288 = vpop.f32.mrf.mxu0
    %v8289 = vadd.f32 %v8270, %v8288
    %8290 = vmatmul.bf16.gmra.mxu0 %v8055
    %v8291 = vpop.f32.mrf.mxu0
    %v8292 = vadd.f32 %v8273, %v8291
    %v8293 = vpop.f32.mrf.mxu0
    %v8294 = vadd.f32 %v8275, %v8293
    %8295 = vdwg.mxu0
    %v8296 = vadd.f32 %v7983, %v8249
    %v8297 = vadd.f32 %v7984, %v8287
    %v8298 = vadd.f32 %v7985, %v8251
    %v8299 = vadd.f32 %v7986, %v8289
    %v8300 = vadd.f32 %v7987, %v8254
    %v8301 = vadd.f32 %v7988, %v8292
    %v8302 = vadd.f32 %v7989, %v8256
    %v8303 = vadd.f32 %v7990, %v8294
    %8304 = vst [vmem:[%s11] sm:$0xff] %v8296
    %8305 = vst [vmem:[%s11 + $0x8] sm:$0xff] %v8297
    %8306 = vst [vmem:[%s11 + $0x10] sm:$0xff] %v8298
    %8307 = vst [vmem:[%s11 + $0x18] sm:$0xff] %v8299
    %8308 = vst [vmem:[%s11 + $0x20] sm:$0xff] %v8300
    %8309 = vst [vmem:[%s11 + $0x28] sm:$0xff] %v8301
    %8310 = vst [vmem:[%s11 + $0x30] sm:$0x1f] %v8302
    %8311 = vst [vmem:[%s11 + $0x38] sm:$0x1f] %v8303
    // Predicated region
    $region98: #{forward.1} parent=1 // pred_check
      _
    $region99: #{forward.1} parent=1 // pred_check_branch
      %8313 = sbr.rel (0) target = $region101
    $region100: #{forward.1} parent=1 // pred_region
      _
    $region101: #{forward.1} parent=1 // pred_fallthru
      _
    // Predicated region
    $region102: #{forward.1} parent=1 // pred_check
      _
    $region103: #{forward.1} parent=1 // pred_check_branch
      %8315 = sbr.rel (0) target = $region105
    $region104: #{forward.1} parent=1 // pred_region
      _
    $region105: #{forward.1} parent=1 // pred_fallthru
      _
    %8316 = vsyncpa [#allocation7], 1
    %8317 = vsyncpa [#allocation9], 1
    %8318 = vsyncpa [#allocation12], 1
    %8319 = vsyncpa [#allocation15], 1
    %8320 = vsyncpa [#allocation18], 1
  %8321 = vsyncmov [#allocation3]
  %s8322 = vpop.sfrf %8321
  %p8323 = scmp.eq.s32.totalorder %s8322, 0
  %p8324 = pneg %p8323
  %8326 = shalt.err (%p8324)
  %s8327 = scalar_lea.sflag [#allocation3], 1
  %8328 = vsyncmov %s8327
  %s8329 = vpop.sfrf %8328
  %p8330 = scmp.eq.s32.totalorder %s8329, 0
  %p8331 = pneg %p8330
  %8333 = shalt.err (%p8331)
  %s8334 = scalar_lea.sflag [#allocation3], 2
  %8335 = vsyncmov %s8334
  %s8336 = vpop.sfrf %8335
  %p8337 = scmp.eq.s32.totalorder %s8336, 0
  %p8338 = pneg %p8337
  %8340 = shalt.err (%p8338)
  %s8341 = scalar_lea.sflag [#allocation3], 3
  %8342 = vsyncmov %s8341
  %s8343 = vpop.sfrf %8342
  %p8344 = scmp.eq.s32.totalorder %s8343, 0
  %p8345 = pneg %p8344
  %8347 = shalt.err (%p8345)
  %s8348 = scalar_lea.sflag [#allocation3], 4
  %8349 = vsyncmov %s8348
  %s8350 = vpop.sfrf %8349
  %p8351 = scmp.eq.s32.totalorder %s8350, 0
  %p8352 = pneg %p8351
  %8354 = shalt.err (%p8352)

</llo_original>
